<compile_context>
chip_gen: v5e
topology: v5e:2x2
jax: 0.10.0
libtpu: 0.0.40
codegen_flags: <defaults>
</compile_context>

<pallas_src>
import functools

import jax
import jax.numpy as jnp
import numpy as np
from jax import lax
from jax.experimental import pallas as pl
from jax.experimental.pallas import tpu as pltpu

EPS = 1e-5
POOL = 4                    # MaxPool1d(4)
CONV_STRIDE = 4             # Conv1d stride
STEP = CONV_STRIDE * POOL   # input samples consumed per pooled output position (16)
TILE_M_MAX = 256            # output-row tile per grid step (multiple of 8)

# pooled positions packed per matmul row, per block:
#   block 1: 8/row -> 128-lane input rows, 256-lane output rows (lane dense)
#   blocks 2-4: 1/row -> 512/512/1024-lane input rows (outputs are tiny)
R_POOL = (8, 1, 1, 1)


def _round_up(x, m):
    return (x + m - 1) // m * m


# ----------------------------------------------------------------------------
# Pallas kernels
# ----------------------------------------------------------------------------
def _conv_bn_relu_pool(x_ref, w_ref, b_ref, *, n_shift, n_taps):
    """Fused Conv1d(stride=4) + folded-BN + ReLU + MaxPool1d(4) on one row tile.

    x_ref: (n_shift, TILE_M, R*C_in)            bf16  row-shifted input slabs
    w_ref: (POOL*n_shift, R*C_in, r_pool*C_out) bf16  shifted conv weights (BN scale folded)
    b_ref: (1, r_pool*C_out)                    f32   folded BN bias (incl. conv bias)
    returns (TILE_M, r_pool*C_out) f32 pooled activations.
    """
    bias = b_ref[...]
    xs = [x_ref[s] for s in range(n_shift)]

    def tap(j):  # conv output at pool-window offset j (already BN-scaled) + bias + ReLU
        acc = jnp.dot(xs[0], w_ref[j * n_shift],
                      preferred_element_type=jnp.float32)
        for s in range(1, n_shift):
            acc = acc + jnp.dot(xs[s], w_ref[j * n_shift + s],
                                preferred_element_type=jnp.float32)
        return jnp.maximum(acc + bias, 0.0)

    out = tap(0)
    for j in range(1, n_taps):          # MaxPool1d(4): elementwise max over the 4 taps
        out = jnp.maximum(out, tap(j))
    return out


def conv_block_kernel(x_ref, w_ref, b_ref, o_ref, *, n_shift, n_taps):
    out = _conv_bn_relu_pool(x_ref, w_ref, b_ref, n_shift=n_shift, n_taps=n_taps)
    o_ref[...] = out.astype(o_ref.dtype)


def conv_block_final_kernel(x_ref, w_ref, b_ref, wfc_ref, bfc_ref, o_ref, *,
                            n_shift, n_taps):
    """Last conv block with the Linear + log_softmax epilogue fused in."""
    feat = _conv_bn_relu_pool(x_ref, w_ref, b_ref, n_shift=n_shift, n_taps=n_taps)
    z = jnp.dot(feat.astype(wfc_ref.dtype), wfc_ref[...],
                preferred_element_type=jnp.float32) + bfc_ref[...]
    m = jnp.max(z, axis=-1, keepdims=True)
    lse = m + jnp.log(jnp.sum(jnp.exp(z - m), axis=-1, keepdims=True))
    o_ref[...] = z - lse


# ----------------------------------------------------------------------------
# Wrappers (layout plumbing: row packing, weight folding, BlockSpecs)
# ----------------------------------------------------------------------------
def _build_shifted_weights(w_scaled, r_pool, n_shift):
    """(C_out, C_in, K) -> (POOL*n_shift, R*C_in, r_pool*C_out) shifted/zero-padded weights.

    Column (q*C_out + c) of slab (j*n_shift + s) holds W[c, cin, k] at row (p*C_in + cin)
    where k = s*R + p - q*STEP - j*CONV_STRIDE (zero outside [0, K)), so that
        y[m*r_pool + q, tap j, c] = sum_s ( x_rows[m + s] @ Wsh[j, s] )[q*C_out + c]
    reproduces the strided conv at pooled position m*r_pool + q, pool tap j.
    """
    c_out, c_in, k_size = w_scaled.shape
    r_len = STEP * r_pool
    j = np.arange(POOL).reshape(POOL, 1, 1, 1)
    s = np.arange(n_shift).reshape(1, n_shift, 1, 1)
    p = np.arange(r_len).reshape(1, 1, r_len, 1)
    q = np.arange(r_pool).reshape(1, 1, 1, r_pool)
    k = s * r_len + p - q * STEP - j * CONV_STRIDE          # static index cube
    valid = (k >= 0) & (k < k_size)
    k = np.clip(k, 0, k_size - 1)
    g = jnp.transpose(w_scaled, (2, 1, 0))[k]               # (POOL,n_shift,R,r_pool,C_in,C_out)
    g = jnp.where(valid[..., None, None], g, 0.0)
    g = jnp.transpose(g, (0, 1, 2, 4, 3, 5))                # (POOL,n_shift,R,C_in,r_pool,C_out)
    return g.reshape(POOL * n_shift, r_len * c_in, r_pool * c_out)


def conv_block(h_nlc, blk, r_pool, final_fc=None):
    """One Conv1d->BN(eval)->ReLU->MaxPool block, optionally with fused Linear+log_softmax.

    h_nlc: (N, L, C_in) bf16.  Returns (N, Lp, C_out) bf16, or (N, Lp, n_cls) f32 if final.
    """
    N, L, C_in = h_nlc.shape
    C_out, _, K = blk["W"].shape
    R = STEP * r_pool
    L_conv = (L - K) // CONV_STRIDE + 1
    Lp = L_conv // POOL
    assert Lp >= 1, "input too short for this block"
    n_shift = ((r_pool - 1) * STEP + (POOL - 1) * CONV_STRIDE + K - 1) // R + 1
    M_out = -(-Lp // r_pool)
    tile_m = min(TILE_M_MAX, _round_up(M_out, 8))
    M_pad = _round_up(M_out, tile_m)
    rows_total = M_pad + n_shift - 1
    need = rows_total * R

    if need >= L:
        x = jnp.pad(h_nlc, ((0, 0), (0, need - L), (0, 0)))
    else:  # trailing samples never contribute to a valid pooled output
        x = h_nlc[:, :need, :]
    x_rows = x.reshape(N, rows_total, R * C_in)
    if n_shift == 1:
        x_sh = x_rows[:, None]
    else:
        x_sh = jnp.stack([x_rows[:, s:s + M_pad] for s in range(n_shift)], axis=1)
    x_sh = x_sh.astype(jnp.bfloat16)                        # (N, n_shift, M_pad, R*C_in)

    # Fold conv bias + eval-mode BatchNorm: scale into the weights, bias kept separate.
    scale = blk["gamma"] / jnp.sqrt(blk["r_var"] + EPS)
    w_scaled = blk["W"] * scale[:, None, None]
    bias = blk["beta"] + scale * (blk["b"] - blk["r_mean"])
    w_sh = _build_shifted_weights(w_scaled, r_pool, n_shift).astype(jnp.bfloat16)
    bias_p = jnp.tile(bias, r_pool).reshape(1, r_pool * C_out).astype(jnp.float32)

    RC = R * C_in
    QC = r_pool * C_out
    grid = (N, M_pad // tile_m)

    in_specs = [
        pl.BlockSpec((None, n_shift, tile_m, RC), lambda n, t: (n, 0, t, 0)),
        pl.BlockSpec(w_sh.shape, lambda n, t: (0, 0, 0)),   # fetched once (constant index)
        pl.BlockSpec(bias_p.shape, lambda n, t: (0, 0)),
    ]
    args = [x_sh, w_sh, bias_p]
    flops = 2 * N * M_pad * RC * QC * POOL * n_shift
    bytes_accessed = x_sh.size * 2 + w_sh.size * 2 + bias_p.size * 4
    transcendentals = 0

    if final_fc is None:
        kernel = functools.partial(conv_block_kernel, n_shift=n_shift, n_taps=POOL)
        out_shape = jax.ShapeDtypeStruct((N, M_pad, QC), jnp.bfloat16)
        out_specs = pl.BlockSpec((None, tile_m, QC), lambda n, t: (n, t, 0))
        bytes_accessed += N * M_pad * QC * 2
    else:
        assert r_pool == 1, "fused final layer assumes r_pool == 1"
        fc_w, fc_b = final_fc
        n_cls = fc_w.shape[0]
        wfc = fc_w.T.astype(jnp.bfloat16)                   # (C_out, n_cls)
        bfc = fc_b.reshape(1, n_cls).astype(jnp.float32)
        in_specs += [pl.BlockSpec(wfc.shape, lambda n, t: (0, 0)),
                     pl.BlockSpec(bfc.shape, lambda n, t: (0, 0))]
        args += [wfc, bfc]
        kernel = functools.partial(conv_block_final_kernel, n_shift=n_shift, n_taps=POOL)
        out_shape = jax.ShapeDtypeStruct((N, M_pad, n_cls), jnp.float32)
        out_specs = pl.BlockSpec((None, tile_m, n_cls), lambda n, t: (n, t, 0))
        flops += 2 * N * M_pad * QC * n_cls
        transcendentals = N * M_pad * n_cls
        bytes_accessed += wfc.size * 2 + bfc.size * 4 + N * M_pad * n_cls * 4

    out = pl.pallas_call(
        kernel,
        out_shape=out_shape,
        grid=grid,
        in_specs=in_specs,
        out_specs=out_specs,
        compiler_params=pltpu.CompilerParams(
            dimension_semantics=("parallel", "parallel")),
        cost_estimate=pl.CostEstimate(flops=flops,
                                      transcendentals=transcendentals,
                                      bytes_accessed=bytes_accessed),
    )(*args)

    if final_fc is None:
        out = out.reshape(N, M_pad * r_pool, C_out)         # free reshape (same bytes)
    return out[:, :Lp, :]


@jax.jit
def cnn_for_audio_forward(x_ncl, params):
    # x_ncl: (N, 1, L) float32, PyTorch NCL layout.
    h = jnp.transpose(x_ncl, (0, 2, 1)).astype(jnp.bfloat16)   # (N, L, C)
    blocks = params["blocks"]
    for i, blk in enumerate(blocks[:-1]):
        h = conv_block(h, blk, R_POOL[i])
    return conv_block(h, blocks[-1], R_POOL[len(blocks) - 1],
                      final_fc=(params["fc_W"], params["fc_b"]))


# ----------------------------------------------------------------------------
# Pure-JAX references (for correctness checks)
# ----------------------------------------------------------------------------
def reference_forward_matched(x_ncl, params):
    """Independent lax.conv reference with the kernel's numerics (bf16 MXU operands,
    f32 accumulation, bf16 inter-block activations)."""
    h_bf = jnp.transpose(x_ncl, (0, 2, 1)).astype(jnp.bfloat16)
    h_f32 = None
    for blk in params["blocks"]:
        scale = blk["gamma"] / jnp.sqrt(blk["r_var"] + EPS)
        w_bf = (blk["W"] * scale[:, None, None]).astype(jnp.bfloat16)
        bias = blk["beta"] + scale * (blk["b"] - blk["r_mean"])
        y = lax.conv_general_dilated(
            jnp.transpose(h_bf, (0, 2, 1)), w_bf, (CONV_STRIDE,), "VALID",
            dimension_numbers=("NCH", "OIH", "NCH"),
            preferred_element_type=jnp.float32)
        y = jnp.maximum(y + bias[None, :, None], 0.0)
        n_, c_, lc = y.shape
        lp = lc // POOL
        y = y[:, :, :lp * POOL].reshape(n_, c_, lp, POOL).max(axis=-1)
        h_f32 = jnp.transpose(y, (0, 2, 1))
        h_bf = h_f32.astype(jnp.bfloat16)
    z = jnp.einsum("nlf,fc->nlc", h_f32.astype(jnp.bfloat16),
                   params["fc_W"].T.astype(jnp.bfloat16),
                   preferred_element_type=jnp.float32) + params["fc_b"]
    return jax.nn.log_softmax(z, axis=2)


def reference_forward_f32(x_ncl, params):
    """Full-f32 PyTorch-semantics (eval-mode BN) reference."""
    h = x_ncl
    for blk in params["blocks"]:
        h = lax.conv_general_dilated(h, blk["W"], (CONV_STRIDE,), "VALID",
                                     dimension_numbers=("NCH", "OIH", "NCH"))
        h = h + blk["b"][None, :, None]
        h = (blk["gamma"][None, :, None] * (h - blk["r_mean"][None, :, None])
             / jnp.sqrt(blk["r_var"][None, :, None] + EPS) + blk["beta"][None, :, None])
        h = jnp.maximum(h, 0.0)
        n_, c_, lc = h.shape
        lp = lc // POOL
        h = h[:, :, :lp * POOL].reshape(n_, c_, lp, POOL).max(axis=-1)
    h = jnp.transpose(h, (0, 2, 1))
    z = h @ params["fc_W"].T + params["fc_b"]
    return jax.nn.log_softmax(z, axis=2)


# ----------------------------------------------------------------------------
# Deterministic parameter construction
# ----------------------------------------------------------------------------
def make_params(key, n_input=1, n_channel=32, num_classes=35):
    layer_shapes = [
        (n_channel, n_input, 80),
        (n_channel, n_channel, 3),
        (2 * n_channel, n_channel, 3),
        (2 * n_channel, 2 * n_channel, 3),
    ]
    blocks = []
    for (c_out, c_in, k) in layer_shapes:
        key, k1, k2, k3, k4, k5, k6 = jax.random.split(key, 7)
        bound = 1.0 / jnp.sqrt(float(c_in * k))
        blocks.append(dict(
            W=jax.random.uniform(k1, (c_out, c_in, k), jnp.float32, -bound, bound),
            b=jax.random.uniform(k2, (c_out,), jnp.float32, -bound, bound),
            gamma=jax.random.uniform(k3, (c_out,), jnp.float32, 0.5, 1.5),
            beta=jax.random.uniform(k4, (c_out,), jnp.float32, -0.1, 0.1),
            r_mean=jax.random.uniform(k5, (c_out,), jnp.float32, -0.2, 0.2),
            r_var=jax.random.uniform(k6, (c_out,), jnp.float32, 0.8, 1.2),
        ))
    key, k1, k2 = jax.random.split(key, 3)
    fbound = 1.0 / jnp.sqrt(float(2 * n_channel))
    fc_W = jax.random.uniform(k1, (num_classes, 2 * n_channel), jnp.float32, -fbound, fbound)
    fc_b = jax.random.uniform(k2, (num_classes,), jnp.float32, -fbound, fbound)
    return dict(blocks=blocks, fc_W=fc_W, fc_b=fc_b)


if __name__ == "__main__":
    key = jax.random.PRNGKey(0)
    key, pkey, xkey = jax.random.split(key, 3)
    params = make_params(pkey)

    # Each block downsamples ~16x (conv stride 4 * pool 4); with kernel 80 on the first
    # conv the minimum valid audio length is ~61k samples, so the example uses batch=2,
    # 1 channel, 65536 samples (~4 s of 16 kHz mono audio).
    N, C_in, L = 2, 1, 65536
    x = jax.random.normal(xkey, (N, C_in, L), dtype=jnp.float32)

    out = jax.block_until_ready(cnn_for_audio_forward(x, params))
    assert out.shape == (N, 1, 35), out.shape
    assert bool(jnp.all(jnp.isfinite(out)))

    # Tight check vs an independent lax.conv implementation with matching numerics.
    ref_bf16 = jax.block_until_ready(jax.jit(reference_forward_matched)(x, params))
    err_bf16 = float(jnp.max(jnp.abs(out - ref_bf16)))
    assert jnp.allclose(out, ref_bf16, atol=5e-3, rtol=5e-3), err_bf16

    # Sanity check vs the full-f32 PyTorch-semantics reference (bf16 MXU operands in the
    # kernel path account for the looser tolerance).
    ref_f32 = jax.block_until_ready(jax.jit(reference_forward_f32)(x, params))
    err_f32 = float(jnp.max(jnp.abs(out - ref_f32)))
    assert jnp.allclose(out, ref_f32, atol=1e-1, rtol=1e-1), err_f32

    print("KERNEL_OK")
</pallas_src>

<mosaic_0001>
module attributes {stable_mosaic.version = 11 : i64} {
  func.func @conv_block_kernel(%arg0: i32, %arg1: i32, %arg2: memref<1x2x256x128xbf16, #tpu.memory_space<vmem>>, %arg3: memref<8x128x256xbf16, #tpu.memory_space<vmem>>, %arg4: memref<1x256xf32, #tpu.memory_space<vmem>>, %arg5: memref<1x256x256xbf16, #tpu.memory_space<vmem>>) attributes {dimension_semantics = [#tpu.dimension_semantics<parallel>, #tpu.dimension_semantics<parallel>], iteration_bounds = array<i64: 2, 2>, scalar_prefetch = 0 : i64, scratch_operands = 0 : i64, tpu.core_type = #tpu.core_type<tc>, window_params = [{transform_indices = @transform_0, window_bounds = array<i64: 1, 2, 256, 128>}, {pipeline_mode = #tpu.pipeline_mode<synchronous>, transform_indices = @transform_1, window_bounds = array<i64: 8, 128, 256>}, {pipeline_mode = #tpu.pipeline_mode<synchronous>, transform_indices = @transform_2, window_bounds = array<i64: 1, 256>}, {transform_indices = @transform_3, window_bounds = array<i64: 1, 256, 256>}]} {
    %c0 = arith.constant 0 : index
    %c0_0 = arith.constant 0 : index
    %0 = vector.load %arg4[%c0, %c0_0] : memref<1x256xf32, #tpu.memory_space<vmem>>, vector<1x256xf32>
    %c0_1 = arith.constant 0 : index
    %c0_2 = arith.constant 0 : index
    %c0_3 = arith.constant 0 : index
    %c0_4 = arith.constant 0 : index
    %1 = vector.load %arg2[%c0_1, %c0_2, %c0_3, %c0_4] : memref<1x2x256x128xbf16, #tpu.memory_space<vmem>>, vector<1x1x256x128xbf16>
    %2 = vector.shape_cast %1 : vector<1x1x256x128xbf16> to vector<256x128xbf16>
    %c0_5 = arith.constant 0 : index
    %c1 = arith.constant 1 : index
    %c0_6 = arith.constant 0 : index
    %c0_7 = arith.constant 0 : index
    %3 = vector.load %arg2[%c0_5, %c1, %c0_6, %c0_7] : memref<1x2x256x128xbf16, #tpu.memory_space<vmem>>, vector<1x1x256x128xbf16>
    %4 = vector.shape_cast %3 : vector<1x1x256x128xbf16> to vector<256x128xbf16>
    %c0_8 = arith.constant 0 : index
    %c0_9 = arith.constant 0 : index
    %c0_10 = arith.constant 0 : index
    %5 = vector.load %arg3[%c0_8, %c0_9, %c0_10] : memref<8x128x256xbf16, #tpu.memory_space<vmem>>, vector<1x128x256xbf16>
    %6 = vector.shape_cast %5 : vector<1x128x256xbf16> to vector<128x256xbf16>
    %cst = arith.constant dense<0.000000e+00> : vector<256x256xf32>
    %7 = tpu.matmul %2, %6, %cst {dimension_numbers = #tpu.dot_dimension_numbers<[1], [0], [0], [1], [0, 0, 1, 1], [], []>} : vector<256x128xbf16>, vector<128x256xbf16>, vector<256x256xf32> -> vector<256x256xf32>
    %c1_11 = arith.constant 1 : index
    %c0_12 = arith.constant 0 : index
    %c0_13 = arith.constant 0 : index
    %8 = vector.load %arg3[%c1_11, %c0_12, %c0_13] : memref<8x128x256xbf16, #tpu.memory_space<vmem>>, vector<1x128x256xbf16>
    %9 = vector.shape_cast %8 : vector<1x128x256xbf16> to vector<128x256xbf16>
    %cst_14 = arith.constant dense<0.000000e+00> : vector<256x256xf32>
    %10 = tpu.matmul %4, %9, %cst_14 {dimension_numbers = #tpu.dot_dimension_numbers<[1], [0], [0], [1], [0, 0, 1, 1], [], []>} : vector<256x128xbf16>, vector<128x256xbf16>, vector<256x256xf32> -> vector<256x256xf32>
    %11 = arith.addf %7, %10 : vector<256x256xf32>
    %12 = vector.broadcast %0 : vector<1x256xf32> to vector<256x256xf32>
    %13 = arith.addf %11, %12 : vector<256x256xf32>
    %cst_15 = arith.constant 0.000000e+00 : f32
    %14 = vector.broadcast %cst_15 : f32 to vector<256x256xf32>
    %15 = arith.maximumf %13, %14 : vector<256x256xf32>
    %c2 = arith.constant 2 : index
    %c0_16 = arith.constant 0 : index
    %c0_17 = arith.constant 0 : index
    %16 = vector.load %arg3[%c2, %c0_16, %c0_17] : memref<8x128x256xbf16, #tpu.memory_space<vmem>>, vector<1x128x256xbf16>
    %17 = vector.shape_cast %16 : vector<1x128x256xbf16> to vector<128x256xbf16>
    %cst_18 = arith.constant dense<0.000000e+00> : vector<256x256xf32>
    %18 = tpu.matmul %2, %17, %cst_18 {dimension_numbers = #tpu.dot_dimension_numbers<[1], [0], [0], [1], [0, 0, 1, 1], [], []>} : vector<256x128xbf16>, vector<128x256xbf16>, vector<256x256xf32> -> vector<256x256xf32>
    %c3 = arith.constant 3 : index
    %c0_19 = arith.constant 0 : index
    %c0_20 = arith.constant 0 : index
    %19 = vector.load %arg3[%c3, %c0_19, %c0_20] : memref<8x128x256xbf16, #tpu.memory_space<vmem>>, vector<1x128x256xbf16>
    %20 = vector.shape_cast %19 : vector<1x128x256xbf16> to vector<128x256xbf16>
    %cst_21 = arith.constant dense<0.000000e+00> : vector<256x256xf32>
    %21 = tpu.matmul %4, %20, %cst_21 {dimension_numbers = #tpu.dot_dimension_numbers<[1], [0], [0], [1], [0, 0, 1, 1], [], []>} : vector<256x128xbf16>, vector<128x256xbf16>, vector<256x256xf32> -> vector<256x256xf32>
    %22 = arith.addf %18, %21 : vector<256x256xf32>
    %23 = vector.broadcast %0 : vector<1x256xf32> to vector<256x256xf32>
    %24 = arith.addf %22, %23 : vector<256x256xf32>
    %cst_22 = arith.constant 0.000000e+00 : f32
    %25 = vector.broadcast %cst_22 : f32 to vector<256x256xf32>
    %26 = arith.maximumf %24, %25 : vector<256x256xf32>
    %27 = arith.maximumf %15, %26 : vector<256x256xf32>
    %c4 = arith.constant 4 : index
    %c0_23 = arith.constant 0 : index
    %c0_24 = arith.constant 0 : index
    %28 = vector.load %arg3[%c4, %c0_23, %c0_24] : memref<8x128x256xbf16, #tpu.memory_space<vmem>>, vector<1x128x256xbf16>
    %29 = vector.shape_cast %28 : vector<1x128x256xbf16> to vector<128x256xbf16>
    %cst_25 = arith.constant dense<0.000000e+00> : vector<256x256xf32>
    %30 = tpu.matmul %2, %29, %cst_25 {dimension_numbers = #tpu.dot_dimension_numbers<[1], [0], [0], [1], [0, 0, 1, 1], [], []>} : vector<256x128xbf16>, vector<128x256xbf16>, vector<256x256xf32> -> vector<256x256xf32>
    %c5 = arith.constant 5 : index
    %c0_26 = arith.constant 0 : index
    %c0_27 = arith.constant 0 : index
    %31 = vector.load %arg3[%c5, %c0_26, %c0_27] : memref<8x128x256xbf16, #tpu.memory_space<vmem>>, vector<1x128x256xbf16>
    %32 = vector.shape_cast %31 : vector<1x128x256xbf16> to vector<128x256xbf16>
    %cst_28 = arith.constant dense<0.000000e+00> : vector<256x256xf32>
    %33 = tpu.matmul %4, %32, %cst_28 {dimension_numbers = #tpu.dot_dimension_numbers<[1], [0], [0], [1], [0, 0, 1, 1], [], []>} : vector<256x128xbf16>, vector<128x256xbf16>, vector<256x256xf32> -> vector<256x256xf32>
    %34 = arith.addf %30, %33 : vector<256x256xf32>
    %35 = vector.broadcast %0 : vector<1x256xf32> to vector<256x256xf32>
    %36 = arith.addf %34, %35 : vector<256x256xf32>
    %cst_29 = arith.constant 0.000000e+00 : f32
    %37 = vector.broadcast %cst_29 : f32 to vector<256x256xf32>
    %38 = arith.maximumf %36, %37 : vector<256x256xf32>
    %39 = arith.maximumf %27, %38 : vector<256x256xf32>
    %c6 = arith.constant 6 : index
    %c0_30 = arith.constant 0 : index
    %c0_31 = arith.constant 0 : index
    %40 = vector.load %arg3[%c6, %c0_30, %c0_31] : memref<8x128x256xbf16, #tpu.memory_space<vmem>>, vector<1x128x256xbf16>
    %41 = vector.shape_cast %40 : vector<1x128x256xbf16> to vector<128x256xbf16>
    %cst_32 = arith.constant dense<0.000000e+00> : vector<256x256xf32>
    %42 = tpu.matmul %2, %41, %cst_32 {dimension_numbers = #tpu.dot_dimension_numbers<[1], [0], [0], [1], [0, 0, 1, 1], [], []>} : vector<256x128xbf16>, vector<128x256xbf16>, vector<256x256xf32> -> vector<256x256xf32>
    %c7 = arith.constant 7 : index
    %c0_33 = arith.constant 0 : index
    %c0_34 = arith.constant 0 : index
    %43 = vector.load %arg3[%c7, %c0_33, %c0_34] : memref<8x128x256xbf16, #tpu.memory_space<vmem>>, vector<1x128x256xbf16>
    %44 = vector.shape_cast %43 : vector<1x128x256xbf16> to vector<128x256xbf16>
    %cst_35 = arith.constant dense<0.000000e+00> : vector<256x256xf32>
    %45 = tpu.matmul %4, %44, %cst_35 {dimension_numbers = #tpu.dot_dimension_numbers<[1], [0], [0], [1], [0, 0, 1, 1], [], []>} : vector<256x128xbf16>, vector<128x256xbf16>, vector<256x256xf32> -> vector<256x256xf32>
    %46 = arith.addf %42, %45 : vector<256x256xf32>
    %47 = vector.broadcast %0 : vector<1x256xf32> to vector<256x256xf32>
    %48 = arith.addf %46, %47 : vector<256x256xf32>
    %cst_36 = arith.constant 0.000000e+00 : f32
    %49 = vector.broadcast %cst_36 : f32 to vector<256x256xf32>
    %50 = arith.maximumf %48, %49 : vector<256x256xf32>
    %51 = arith.maximumf %39, %50 : vector<256x256xf32>
    %52 = arith.truncf %51 : vector<256x256xf32> to vector<256x256xbf16>
    %c0_37 = arith.constant 0 : index
    %c0_38 = arith.constant 0 : index
    %c0_39 = arith.constant 0 : index
    %53 = vector.load %arg5[%c0_37, %c0_38, %c0_39] : memref<1x256x256xbf16, #tpu.memory_space<vmem>>, vector<1x256x256xbf16>
    %54 = vector.shape_cast %53 : vector<1x256x256xbf16> to vector<256x256xbf16>
    %55 = vector.shape_cast %52 : vector<256x256xbf16> to vector<1x256x256xbf16>
    tpu.vector_store %arg5[%c0_37, %c0_38, %c0_39], %55 {strides = array<i32>} : memref<1x256x256xbf16, #tpu.memory_space<vmem>>, vector<1x256x256xbf16>,
    return
  }
  func.func @transform_0(%arg0: i32, %arg1: i32) -> (i32, i32, i32, i32) {
    %c0_i32 = arith.constant 0 : i32
    %c0_i32_0 = arith.constant 0 : i32
    %c0_i32_1 = arith.constant 0 : i32
    return %arg0, %c0_i32, %arg1, %c0_i32_0 : i32, i32, i32, i32
  }
  func.func @transform_1(%arg0: i32, %arg1: i32) -> (i32, i32, i32) {
    %c0_i32 = arith.constant 0 : i32
    %c0_i32_0 = arith.constant 0 : i32
    %c0_i32_1 = arith.constant 0 : i32
    %c0_i32_2 = arith.constant 0 : i32
    return %c0_i32, %c0_i32_0, %c0_i32_1 : i32, i32, i32
  }
  func.func @transform_2(%arg0: i32, %arg1: i32) -> (i32, i32) {
    %c0_i32 = arith.constant 0 : i32
    %c0_i32_0 = arith.constant 0 : i32
    %c0_i32_1 = arith.constant 0 : i32
    return %c0_i32, %c0_i32_0 : i32, i32
  }
  func.func @transform_3(%arg0: i32, %arg1: i32) -> (i32, i32, i32) {
    %c0_i32 = arith.constant 0 : i32
    %c0_i32_0 = arith.constant 0 : i32
    return %arg0, %arg1, %c0_i32 : i32, i32, i32
  }
}

module attributes {stable_mosaic.version = 11 : i64} {
  func.func @conv_block_kernel(%arg0: i32, %arg1: i32, %arg2: memref<1x1x256x512xbf16, #tpu.memory_space<vmem>>, %arg3: memref<4x512x32xbf16, #tpu.memory_space<vmem>>, %arg4: memref<1x32xf32, #tpu.memory_space<vmem>>, %arg5: memref<1x256x32xbf16, #tpu.memory_space<vmem>>) attributes {dimension_semantics = [#tpu.dimension_semantics<parallel>, #tpu.dimension_semantics<parallel>], iteration_bounds = array<i64: 2, 1>, scalar_prefetch = 0 : i64, scratch_operands = 0 : i64, tpu.core_type = #tpu.core_type<tc>, window_params = [{transform_indices = @transform_0, window_bounds = array<i64: 1, 1, 256, 512>}, {pipeline_mode = #tpu.pipeline_mode<synchronous>, transform_indices = @transform_1, window_bounds = array<i64: 4, 512, 32>}, {pipeline_mode = #tpu.pipeline_mode<synchronous>, transform_indices = @transform_2, window_bounds = array<i64: 1, 32>}, {transform_indices = @transform_3, window_bounds = array<i64: 1, 256, 32>}]} {
    %c0 = arith.constant 0 : index
    %c0_0 = arith.constant 0 : index
    %0 = vector.load %arg4[%c0, %c0_0] : memref<1x32xf32, #tpu.memory_space<vmem>>, vector<1x32xf32>
    %c0_1 = arith.constant 0 : index
    %c0_2 = arith.constant 0 : index
    %c0_3 = arith.constant 0 : index
    %c0_4 = arith.constant 0 : index
    %1 = vector.load %arg2[%c0_1, %c0_2, %c0_3, %c0_4] : memref<1x1x256x512xbf16, #tpu.memory_space<vmem>>, vector<1x1x256x512xbf16>
    %2 = vector.shape_cast %1 : vector<1x1x256x512xbf16> to vector<256x512xbf16>
    %c0_5 = arith.constant 0 : index
    %c0_6 = arith.constant 0 : index
    %c0_7 = arith.constant 0 : index
    %3 = vector.load %arg3[%c0_5, %c0_6, %c0_7] : memref<4x512x32xbf16, #tpu.memory_space<vmem>>, vector<1x512x32xbf16>
    %4 = vector.shape_cast %3 : vector<1x512x32xbf16> to vector<512x32xbf16>
    %cst = arith.constant dense<0.000000e+00> : vector<256x32xf32>
    %5 = tpu.matmul %2, %4, %cst {dimension_numbers = #tpu.dot_dimension_numbers<[1], [0], [0], [1], [0, 0, 1, 1], [], []>} : vector<256x512xbf16>, vector<512x32xbf16>, vector<256x32xf32> -> vector<256x32xf32>
    %6 = vector.broadcast %0 : vector<1x32xf32> to vector<256x32xf32>
    %7 = arith.addf %5, %6 : vector<256x32xf32>
    %cst_8 = arith.constant 0.000000e+00 : f32
    %8 = vector.broadcast %cst_8 : f32 to vector<256x32xf32>
    %9 = arith.maximumf %7, %8 : vector<256x32xf32>
    %c1 = arith.constant 1 : index
    %c0_9 = arith.constant 0 : index
    %c0_10 = arith.constant 0 : index
    %10 = vector.load %arg3[%c1, %c0_9, %c0_10] : memref<4x512x32xbf16, #tpu.memory_space<vmem>>, vector<1x512x32xbf16>
    %11 = vector.shape_cast %10 : vector<1x512x32xbf16> to vector<512x32xbf16>
    %cst_11 = arith.constant dense<0.000000e+00> : vector<256x32xf32>
    %12 = tpu.matmul %2, %11, %cst_11 {dimension_numbers = #tpu.dot_dimension_numbers<[1], [0], [0], [1], [0, 0, 1, 1], [], []>} : vector<256x512xbf16>, vector<512x32xbf16>, vector<256x32xf32> -> vector<256x32xf32>
    %13 = vector.broadcast %0 : vector<1x32xf32> to vector<256x32xf32>
    %14 = arith.addf %12, %13 : vector<256x32xf32>
    %cst_12 = arith.constant 0.000000e+00 : f32
    %15 = vector.broadcast %cst_12 : f32 to vector<256x32xf32>
    %16 = arith.maximumf %14, %15 : vector<256x32xf32>
    %17 = arith.maximumf %9, %16 : vector<256x32xf32>
    %c2 = arith.constant 2 : index
    %c0_13 = arith.constant 0 : index
    %c0_14 = arith.constant 0 : index
    %18 = vector.load %arg3[%c2, %c0_13, %c0_14] : memref<4x512x32xbf16, #tpu.memory_space<vmem>>, vector<1x512x32xbf16>
    %19 = vector.shape_cast %18 : vector<1x512x32xbf16> to vector<512x32xbf16>
    %cst_15 = arith.constant dense<0.000000e+00> : vector<256x32xf32>
    %20 = tpu.matmul %2, %19, %cst_15 {dimension_numbers = #tpu.dot_dimension_numbers<[1], [0], [0], [1], [0, 0, 1, 1], [], []>} : vector<256x512xbf16>, vector<512x32xbf16>, vector<256x32xf32> -> vector<256x32xf32>
    %21 = vector.broadcast %0 : vector<1x32xf32> to vector<256x32xf32>
    %22 = arith.addf %20, %21 : vector<256x32xf32>
    %cst_16 = arith.constant 0.000000e+00 : f32
    %23 = vector.broadcast %cst_16 : f32 to vector<256x32xf32>
    %24 = arith.maximumf %22, %23 : vector<256x32xf32>
    %25 = arith.maximumf %17, %24 : vector<256x32xf32>
    %c3 = arith.constant 3 : index
    %c0_17 = arith.constant 0 : index
    %c0_18 = arith.constant 0 : index
    %26 = vector.load %arg3[%c3, %c0_17, %c0_18] : memref<4x512x32xbf16, #tpu.memory_space<vmem>>, vector<1x512x32xbf16>
    %27 = vector.shape_cast %26 : vector<1x512x32xbf16> to vector<512x32xbf16>
    %cst_19 = arith.constant dense<0.000000e+00> : vector<256x32xf32>
    %28 = tpu.matmul %2, %27, %cst_19 {dimension_numbers = #tpu.dot_dimension_numbers<[1], [0], [0], [1], [0, 0, 1, 1], [], []>} : vector<256x512xbf16>, vector<512x32xbf16>, vector<256x32xf32> -> vector<256x32xf32>
    %29 = vector.broadcast %0 : vector<1x32xf32> to vector<256x32xf32>
    %30 = arith.addf %28, %29 : vector<256x32xf32>
    %cst_20 = arith.constant 0.000000e+00 : f32
    %31 = vector.broadcast %cst_20 : f32 to vector<256x32xf32>
    %32 = arith.maximumf %30, %31 : vector<256x32xf32>
    %33 = arith.maximumf %25, %32 : vector<256x32xf32>
    %34 = arith.truncf %33 : vector<256x32xf32> to vector<256x32xbf16>
    %c0_21 = arith.constant 0 : index
    %c0_22 = arith.constant 0 : index
    %c0_23 = arith.constant 0 : index
    %35 = vector.load %arg5[%c0_21, %c0_22, %c0_23] : memref<1x256x32xbf16, #tpu.memory_space<vmem>>, vector<1x256x32xbf16>
    %36 = vector.shape_cast %35 : vector<1x256x32xbf16> to vector<256x32xbf16>
    %37 = vector.shape_cast %34 : vector<256x32xbf16> to vector<1x256x32xbf16>
    tpu.vector_store %arg5[%c0_21, %c0_22, %c0_23], %37 {strides = array<i32>} : memref<1x256x32xbf16, #tpu.memory_space<vmem>>, vector<1x256x32xbf16>,
    return
  }
  func.func @transform_0(%arg0: i32, %arg1: i32) -> (i32, i32, i32, i32) {
    %c0_i32 = arith.constant 0 : i32
    %c0_i32_0 = arith.constant 0 : i32
    %c0_i32_1 = arith.constant 0 : i32
    return %arg0, %c0_i32, %arg1, %c0_i32_0 : i32, i32, i32, i32
  }
  func.func @transform_1(%arg0: i32, %arg1: i32) -> (i32, i32, i32) {
    %c0_i32 = arith.constant 0 : i32
    %c0_i32_0 = arith.constant 0 : i32
    %c0_i32_1 = arith.constant 0 : i32
    %c0_i32_2 = arith.constant 0 : i32
    return %c0_i32, %c0_i32_0, %c0_i32_1 : i32, i32, i32
  }
  func.func @transform_2(%arg0: i32, %arg1: i32) -> (i32, i32) {
    %c0_i32 = arith.constant 0 : i32
    %c0_i32_0 = arith.constant 0 : i32
    %c0_i32_1 = arith.constant 0 : i32
    return %c0_i32, %c0_i32_0 : i32, i32
  }
  func.func @transform_3(%arg0: i32, %arg1: i32) -> (i32, i32, i32) {
    %c0_i32 = arith.constant 0 : i32
    %c0_i32_0 = arith.constant 0 : i32
    return %arg0, %arg1, %c0_i32 : i32, i32, i32
  }
}

module attributes {stable_mosaic.version = 11 : i64} {
  func.func @conv_block_kernel(%arg0: i32, %arg1: i32, %arg2: memref<1x1x16x512xbf16, #tpu.memory_space<vmem>>, %arg3: memref<4x512x64xbf16, #tpu.memory_space<vmem>>, %arg4: memref<1x64xf32, #tpu.memory_space<vmem>>, %arg5: memref<1x16x64xbf16, #tpu.memory_space<vmem>>) attributes {dimension_semantics = [#tpu.dimension_semantics<parallel>, #tpu.dimension_semantics<parallel>], iteration_bounds = array<i64: 2, 1>, scalar_prefetch = 0 : i64, scratch_operands = 0 : i64, tpu.core_type = #tpu.core_type<tc>, window_params = [{transform_indices = @transform_0, window_bounds = array<i64: 1, 1, 16, 512>}, {pipeline_mode = #tpu.pipeline_mode<synchronous>, transform_indices = @transform_1, window_bounds = array<i64: 4, 512, 64>}, {pipeline_mode = #tpu.pipeline_mode<synchronous>, transform_indices = @transform_2, window_bounds = array<i64: 1, 64>}, {transform_indices = @transform_3, window_bounds = array<i64: 1, 16, 64>}]} {
    %c0 = arith.constant 0 : index
    %c0_0 = arith.constant 0 : index
    %0 = vector.load %arg4[%c0, %c0_0] : memref<1x64xf32, #tpu.memory_space<vmem>>, vector<1x64xf32>
    %c0_1 = arith.constant 0 : index
    %c0_2 = arith.constant 0 : index
    %c0_3 = arith.constant 0 : index
    %c0_4 = arith.constant 0 : index
    %1 = vector.load %arg2[%c0_1, %c0_2, %c0_3, %c0_4] : memref<1x1x16x512xbf16, #tpu.memory_space<vmem>>, vector<1x1x16x512xbf16>
    %2 = vector.shape_cast %1 : vector<1x1x16x512xbf16> to vector<16x512xbf16>
    %c0_5 = arith.constant 0 : index
    %c0_6 = arith.constant 0 : index
    %c0_7 = arith.constant 0 : index
    %3 = vector.load %arg3[%c0_5, %c0_6, %c0_7] : memref<4x512x64xbf16, #tpu.memory_space<vmem>>, vector<1x512x64xbf16>
    %4 = vector.shape_cast %3 : vector<1x512x64xbf16> to vector<512x64xbf16>
    %cst = arith.constant dense<0.000000e+00> : vector<16x64xf32>
    %5 = tpu.matmul %2, %4, %cst {dimension_numbers = #tpu.dot_dimension_numbers<[1], [0], [0], [1], [0, 0, 1, 1], [], []>} : vector<16x512xbf16>, vector<512x64xbf16>, vector<16x64xf32> -> vector<16x64xf32>
    %6 = vector.broadcast %0 : vector<1x64xf32> to vector<16x64xf32>
    %7 = arith.addf %5, %6 : vector<16x64xf32>
    %cst_8 = arith.constant 0.000000e+00 : f32
    %8 = vector.broadcast %cst_8 : f32 to vector<16x64xf32>
    %9 = arith.maximumf %7, %8 : vector<16x64xf32>
    %c1 = arith.constant 1 : index
    %c0_9 = arith.constant 0 : index
    %c0_10 = arith.constant 0 : index
    %10 = vector.load %arg3[%c1, %c0_9, %c0_10] : memref<4x512x64xbf16, #tpu.memory_space<vmem>>, vector<1x512x64xbf16>
    %11 = vector.shape_cast %10 : vector<1x512x64xbf16> to vector<512x64xbf16>
    %cst_11 = arith.constant dense<0.000000e+00> : vector<16x64xf32>
    %12 = tpu.matmul %2, %11, %cst_11 {dimension_numbers = #tpu.dot_dimension_numbers<[1], [0], [0], [1], [0, 0, 1, 1], [], []>} : vector<16x512xbf16>, vector<512x64xbf16>, vector<16x64xf32> -> vector<16x64xf32>
    %13 = vector.broadcast %0 : vector<1x64xf32> to vector<16x64xf32>
    %14 = arith.addf %12, %13 : vector<16x64xf32>
    %cst_12 = arith.constant 0.000000e+00 : f32
    %15 = vector.broadcast %cst_12 : f32 to vector<16x64xf32>
    %16 = arith.maximumf %14, %15 : vector<16x64xf32>
    %17 = arith.maximumf %9, %16 : vector<16x64xf32>
    %c2 = arith.constant 2 : index
    %c0_13 = arith.constant 0 : index
    %c0_14 = arith.constant 0 : index
    %18 = vector.load %arg3[%c2, %c0_13, %c0_14] : memref<4x512x64xbf16, #tpu.memory_space<vmem>>, vector<1x512x64xbf16>
    %19 = vector.shape_cast %18 : vector<1x512x64xbf16> to vector<512x64xbf16>
    %cst_15 = arith.constant dense<0.000000e+00> : vector<16x64xf32>
    %20 = tpu.matmul %2, %19, %cst_15 {dimension_numbers = #tpu.dot_dimension_numbers<[1], [0], [0], [1], [0, 0, 1, 1], [], []>} : vector<16x512xbf16>, vector<512x64xbf16>, vector<16x64xf32> -> vector<16x64xf32>
    %21 = vector.broadcast %0 : vector<1x64xf32> to vector<16x64xf32>
    %22 = arith.addf %20, %21 : vector<16x64xf32>
    %cst_16 = arith.constant 0.000000e+00 : f32
    %23 = vector.broadcast %cst_16 : f32 to vector<16x64xf32>
    %24 = arith.maximumf %22, %23 : vector<16x64xf32>
    %25 = arith.maximumf %17, %24 : vector<16x64xf32>
    %c3 = arith.constant 3 : index
    %c0_17 = arith.constant 0 : index
    %c0_18 = arith.constant 0 : index
    %26 = vector.load %arg3[%c3, %c0_17, %c0_18] : memref<4x512x64xbf16, #tpu.memory_space<vmem>>, vector<1x512x64xbf16>
    %27 = vector.shape_cast %26 : vector<1x512x64xbf16> to vector<512x64xbf16>
    %cst_19 = arith.constant dense<0.000000e+00> : vector<16x64xf32>
    %28 = tpu.matmul %2, %27, %cst_19 {dimension_numbers = #tpu.dot_dimension_numbers<[1], [0], [0], [1], [0, 0, 1, 1], [], []>} : vector<16x512xbf16>, vector<512x64xbf16>, vector<16x64xf32> -> vector<16x64xf32>
    %29 = vector.broadcast %0 : vector<1x64xf32> to vector<16x64xf32>
    %30 = arith.addf %28, %29 : vector<16x64xf32>
    %cst_20 = arith.constant 0.000000e+00 : f32
    %31 = vector.broadcast %cst_20 : f32 to vector<16x64xf32>
    %32 = arith.maximumf %30, %31 : vector<16x64xf32>
    %33 = arith.maximumf %25, %32 : vector<16x64xf32>
    %34 = arith.truncf %33 : vector<16x64xf32> to vector<16x64xbf16>
    %c0_21 = arith.constant 0 : index
    %c0_22 = arith.constant 0 : index
    %c0_23 = arith.constant 0 : index
    %35 = vector.load %arg5[%c0_21, %c0_22, %c0_23] : memref<1x16x64xbf16, #tpu.memory_space<vmem>>, vector<1x16x64xbf16>
    %36 = vector.shape_cast %35 : vector<1x16x64xbf16> to vector<16x64xbf16>
    %37 = vector.shape_cast %34 : vector<16x64xbf16> to vector<1x16x64xbf16>
    tpu.vector_store %arg5[%c0_21, %c0_22, %c0_23], %37 {strides = array<i32>} : memref<1x16x64xbf16, #tpu.memory_space<vmem>>, vector<1x16x64xbf16>,
    return
  }
  func.func @transform_0(%arg0: i32, %arg1: i32) -> (i32, i32, i32, i32) {
    %c0_i32 = arith.constant 0 : i32
    %c0_i32_0 = arith.constant 0 : i32
    %c0_i32_1 = arith.constant 0 : i32
    return %arg0, %c0_i32, %arg1, %c0_i32_0 : i32, i32, i32, i32
  }
  func.func @transform_1(%arg0: i32, %arg1: i32) -> (i32, i32, i32) {
    %c0_i32 = arith.constant 0 : i32
    %c0_i32_0 = arith.constant 0 : i32
    %c0_i32_1 = arith.constant 0 : i32
    %c0_i32_2 = arith.constant 0 : i32
    return %c0_i32, %c0_i32_0, %c0_i32_1 : i32, i32, i32
  }
  func.func @transform_2(%arg0: i32, %arg1: i32) -> (i32, i32) {
    %c0_i32 = arith.constant 0 : i32
    %c0_i32_0 = arith.constant 0 : i32
    %c0_i32_1 = arith.constant 0 : i32
    return %c0_i32, %c0_i32_0 : i32, i32
  }
  func.func @transform_3(%arg0: i32, %arg1: i32) -> (i32, i32, i32) {
    %c0_i32 = arith.constant 0 : i32
    %c0_i32_0 = arith.constant 0 : i32
    return %arg0, %arg1, %c0_i32 : i32, i32, i32
  }
}

module attributes {stable_mosaic.version = 11 : i64} {
  func.func @conv_block_final_kernel(%arg0: i32, %arg1: i32, %arg2: memref<1x1x8x1024xbf16, #tpu.memory_space<vmem>>, %arg3: memref<4x1024x64xbf16, #tpu.memory_space<vmem>>, %arg4: memref<1x64xf32, #tpu.memory_space<vmem>>, %arg5: memref<64x35xbf16, #tpu.memory_space<vmem>>, %arg6: memref<1x35xf32, #tpu.memory_space<vmem>>, %arg7: memref<1x8x35xf32, #tpu.memory_space<vmem>>) attributes {dimension_semantics = [#tpu.dimension_semantics<parallel>, #tpu.dimension_semantics<parallel>], iteration_bounds = array<i64: 2, 1>, scalar_prefetch = 0 : i64, scratch_operands = 0 : i64, tpu.core_type = #tpu.core_type<tc>, window_params = [{transform_indices = @transform_0, window_bounds = array<i64: 1, 1, 8, 1024>}, {pipeline_mode = #tpu.pipeline_mode<synchronous>, transform_indices = @transform_1, window_bounds = array<i64: 4, 1024, 64>}, {pipeline_mode = #tpu.pipeline_mode<synchronous>, transform_indices = @transform_2, window_bounds = array<i64: 1, 64>}, {pipeline_mode = #tpu.pipeline_mode<synchronous>, transform_indices = @transform_3, window_bounds = array<i64: 64, 35>}, {pipeline_mode = #tpu.pipeline_mode<synchronous>, transform_indices = @transform_4, window_bounds = array<i64: 1, 35>}, {transform_indices = @transform_5, window_bounds = array<i64: 1, 8, 35>}]} {
    %c0 = arith.constant 0 : index
    %c0_0 = arith.constant 0 : index
    %0 = vector.load %arg4[%c0, %c0_0] : memref<1x64xf32, #tpu.memory_space<vmem>>, vector<1x64xf32>
    %c0_1 = arith.constant 0 : index
    %c0_2 = arith.constant 0 : index
    %c0_3 = arith.constant 0 : index
    %c0_4 = arith.constant 0 : index
    %1 = vector.load %arg2[%c0_1, %c0_2, %c0_3, %c0_4] : memref<1x1x8x1024xbf16, #tpu.memory_space<vmem>>, vector<1x1x8x1024xbf16>
    %2 = vector.shape_cast %1 : vector<1x1x8x1024xbf16> to vector<8x1024xbf16>
    %c0_5 = arith.constant 0 : index
    %c0_6 = arith.constant 0 : index
    %c0_7 = arith.constant 0 : index
    %3 = vector.load %arg3[%c0_5, %c0_6, %c0_7] : memref<4x1024x64xbf16, #tpu.memory_space<vmem>>, vector<1x1024x64xbf16>
    %4 = vector.shape_cast %3 : vector<1x1024x64xbf16> to vector<1024x64xbf16>
    %cst = arith.constant dense<0.000000e+00> : vector<8x64xf32>
    %5 = tpu.matmul %2, %4, %cst {dimension_numbers = #tpu.dot_dimension_numbers<[1], [0], [0], [1], [0, 0, 1, 1], [], []>} : vector<8x1024xbf16>, vector<1024x64xbf16>, vector<8x64xf32> -> vector<8x64xf32>
    %6 = vector.broadcast %0 : vector<1x64xf32> to vector<8x64xf32>
    %7 = arith.addf %5, %6 : vector<8x64xf32>
    %cst_8 = arith.constant 0.000000e+00 : f32
    %8 = vector.broadcast %cst_8 : f32 to vector<8x64xf32>
    %9 = arith.maximumf %7, %8 : vector<8x64xf32>
    %c1 = arith.constant 1 : index
    %c0_9 = arith.constant 0 : index
    %c0_10 = arith.constant 0 : index
    %10 = vector.load %arg3[%c1, %c0_9, %c0_10] : memref<4x1024x64xbf16, #tpu.memory_space<vmem>>, vector<1x1024x64xbf16>
    %11 = vector.shape_cast %10 : vector<1x1024x64xbf16> to vector<1024x64xbf16>
    %cst_11 = arith.constant dense<0.000000e+00> : vector<8x64xf32>
    %12 = tpu.matmul %2, %11, %cst_11 {dimension_numbers = #tpu.dot_dimension_numbers<[1], [0], [0], [1], [0, 0, 1, 1], [], []>} : vector<8x1024xbf16>, vector<1024x64xbf16>, vector<8x64xf32> -> vector<8x64xf32>
    %13 = vector.broadcast %0 : vector<1x64xf32> to vector<8x64xf32>
    %14 = arith.addf %12, %13 : vector<8x64xf32>
    %cst_12 = arith.constant 0.000000e+00 : f32
    %15 = vector.broadcast %cst_12 : f32 to vector<8x64xf32>
    %16 = arith.maximumf %14, %15 : vector<8x64xf32>
    %17 = arith.maximumf %9, %16 : vector<8x64xf32>
    %c2 = arith.constant 2 : index
    %c0_13 = arith.constant 0 : index
    %c0_14 = arith.constant 0 : index
    %18 = vector.load %arg3[%c2, %c0_13, %c0_14] : memref<4x1024x64xbf16, #tpu.memory_space<vmem>>, vector<1x1024x64xbf16>
    %19 = vector.shape_cast %18 : vector<1x1024x64xbf16> to vector<1024x64xbf16>
    %cst_15 = arith.constant dense<0.000000e+00> : vector<8x64xf32>
    %20 = tpu.matmul %2, %19, %cst_15 {dimension_numbers = #tpu.dot_dimension_numbers<[1], [0], [0], [1], [0, 0, 1, 1], [], []>} : vector<8x1024xbf16>, vector<1024x64xbf16>, vector<8x64xf32> -> vector<8x64xf32>
    %21 = vector.broadcast %0 : vector<1x64xf32> to vector<8x64xf32>
    %22 = arith.addf %20, %21 : vector<8x64xf32>
    %cst_16 = arith.constant 0.000000e+00 : f32
    %23 = vector.broadcast %cst_16 : f32 to vector<8x64xf32>
    %24 = arith.maximumf %22, %23 : vector<8x64xf32>
    %25 = arith.maximumf %17, %24 : vector<8x64xf32>
    %c3 = arith.constant 3 : index
    %c0_17 = arith.constant 0 : index
    %c0_18 = arith.constant 0 : index
    %26 = vector.load %arg3[%c3, %c0_17, %c0_18] : memref<4x1024x64xbf16, #tpu.memory_space<vmem>>, vector<1x1024x64xbf16>
    %27 = vector.shape_cast %26 : vector<1x1024x64xbf16> to vector<1024x64xbf16>
    %cst_19 = arith.constant dense<0.000000e+00> : vector<8x64xf32>
    %28 = tpu.matmul %2, %27, %cst_19 {dimension_numbers = #tpu.dot_dimension_numbers<[1], [0], [0], [1], [0, 0, 1, 1], [], []>} : vector<8x1024xbf16>, vector<1024x64xbf16>, vector<8x64xf32> -> vector<8x64xf32>
    %29 = vector.broadcast %0 : vector<1x64xf32> to vector<8x64xf32>
    %30 = arith.addf %28, %29 : vector<8x64xf32>
    %cst_20 = arith.constant 0.000000e+00 : f32
    %31 = vector.broadcast %cst_20 : f32 to vector<8x64xf32>
    %32 = arith.maximumf %30, %31 : vector<8x64xf32>
    %33 = arith.maximumf %25, %32 : vector<8x64xf32>
    %34 = arith.truncf %33 : vector<8x64xf32> to vector<8x64xbf16>
    %c0_21 = arith.constant 0 : index
    %c0_22 = arith.constant 0 : index
    %35 = vector.load %arg5[%c0_21, %c0_22] : memref<64x35xbf16, #tpu.memory_space<vmem>>, vector<64x35xbf16>
    %cst_23 = arith.constant dense<0.000000e+00> : vector<8x35xf32>
    %36 = tpu.matmul %34, %35, %cst_23 {dimension_numbers = #tpu.dot_dimension_numbers<[1], [0], [0], [1], [0, 0, 1, 1], [], []>} : vector<8x64xbf16>, vector<64x35xbf16>, vector<8x35xf32> -> vector<8x35xf32>
    %c0_24 = arith.constant 0 : index
    %c0_25 = arith.constant 0 : index
    %37 = vector.load %arg6[%c0_24, %c0_25] : memref<1x35xf32, #tpu.memory_space<vmem>>, vector<1x35xf32>
    %38 = vector.broadcast %37 : vector<1x35xf32> to vector<8x35xf32>
    %39 = arith.addf %36, %38 : vector<8x35xf32>
    %cst_26 = arith.constant dense<0xFF800000> : vector<8xf32>
    %40 = vector.multi_reduction <maximumf>, %39, %cst_26 [1] : vector<8x35xf32> to vector<8xf32>
    %41 = vector.shape_cast %40 : vector<8xf32> to vector<8x1xf32>
    %42 = vector.broadcast %41 : vector<8x1xf32> to vector<8x35xf32>
    %43 = arith.subf %39, %42 : vector<8x35xf32>
    %44 = math.exp %43 : vector<8x35xf32>
    %cst_27 = arith.constant dense<0.000000e+00> : vector<8xf32>
    %45 = vector.multi_reduction <add>, %44, %cst_27 [1] : vector<8x35xf32> to vector<8xf32>
    %46 = vector.shape_cast %45 : vector<8xf32> to vector<8x1xf32>
    %47 = math.log %46 : vector<8x1xf32>
    %48 = arith.addf %41, %47 : vector<8x1xf32>
    %49 = vector.broadcast %48 : vector<8x1xf32> to vector<8x35xf32>
    %50 = arith.subf %39, %49 : vector<8x35xf32>
    %c0_28 = arith.constant 0 : index
    %c0_29 = arith.constant 0 : index
    %c0_30 = arith.constant 0 : index
    %51 = vector.load %arg7[%c0_28, %c0_29, %c0_30] : memref<1x8x35xf32, #tpu.memory_space<vmem>>, vector<1x8x35xf32>
    %52 = vector.shape_cast %51 : vector<1x8x35xf32> to vector<8x35xf32>
    %53 = vector.shape_cast %50 : vector<8x35xf32> to vector<1x8x35xf32>
    tpu.vector_store %arg7[%c0_28, %c0_29, %c0_30], %53 {strides = array<i32>} : memref<1x8x35xf32, #tpu.memory_space<vmem>>, vector<1x8x35xf32>,
    return
  }
  func.func @transform_0(%arg0: i32, %arg1: i32) -> (i32, i32, i32, i32) {
    %c0_i32 = arith.constant 0 : i32
    %c0_i32_0 = arith.constant 0 : i32
    %c0_i32_1 = arith.constant 0 : i32
    return %arg0, %c0_i32, %arg1, %c0_i32_0 : i32, i32, i32, i32
  }
  func.func @transform_1(%arg0: i32, %arg1: i32) -> (i32, i32, i32) {
    %c0_i32 = arith.constant 0 : i32
    %c0_i32_0 = arith.constant 0 : i32
    %c0_i32_1 = arith.constant 0 : i32
    %c0_i32_2 = arith.constant 0 : i32
    return %c0_i32, %c0_i32_0, %c0_i32_1 : i32, i32, i32
  }
  func.func @transform_2(%arg0: i32, %arg1: i32) -> (i32, i32) {
    %c0_i32 = arith.constant 0 : i32
    %c0_i32_0 = arith.constant 0 : i32
    %c0_i32_1 = arith.constant 0 : i32
    return %c0_i32, %c0_i32_0 : i32, i32
  }
  func.func @transform_3(%arg0: i32, %arg1: i32) -> (i32, i32) {
    %c0_i32 = arith.constant 0 : i32
    %c0_i32_0 = arith.constant 0 : i32
    %c0_i32_1 = arith.constant 0 : i32
    return %c0_i32, %c0_i32_0 : i32, i32
  }
  func.func @transform_4(%arg0: i32, %arg1: i32) -> (i32, i32) {
    %c0_i32 = arith.constant 0 : i32
    %c0_i32_0 = arith.constant 0 : i32
    %c0_i32_1 = arith.constant 0 : i32
    return %c0_i32, %c0_i32_0 : i32, i32
  }
  func.func @transform_5(%arg0: i32, %arg1: i32) -> (i32, i32, i32) {
    %c0_i32 = arith.constant 0 : i32
    %c0_i32_0 = arith.constant 0 : i32
    return %arg0, %arg1, %c0_i32 : i32, i32, i32
  }
}

</mosaic_0001>

<llo_original>
// kernel: tile.11
$region0: #{tile.11}
  #allocation0 [shape = 's32[1]{0}', space=sflag, size = 0x4, scoped, tag = 'scoped memory for tile.11']
  %s0 = inlined_call_operand.vmem [shape: f32[32], index: 0, kind: input, shape index: {}]
  %s1 = inlined_call_operand.vmem [shape: f32[8,32], index: 1, kind: output, shape index: {}]
  // Predicated region
  $region2: #{tile.11} parent=0 // pred_check
    _
  $region3: #{tile.11} parent=0 // pred_check_branch
    %3 = sbr.rel (0) target = $region5
  $region4: #{tile.11} parent=0 // pred_region
    _
  $region5: #{tile.11} parent=0 // pred_fallthru
    _
  %v4 = vld [vmem:[%s0] ss:$0 sm:$0xff]
  %5 = vst [vmem:[%s1] sm:$0xff] %v4

// kernel: tile.12
$region0: #{tile.12}
  %s0 = inlined_call_operand.vmem [shape: f32[8,32], index: 0, kind: input, shape index: {}]
  %s1 = inlined_call_operand.vmem [shape: f32[1,256], index: 1, kind: output, shape index: {}]
  $region1: #{tile.12} parent=0
    #allocation0 [shape = 'u8[8192]{0}', space=vmem, size = 0x2000, scoped, tag = 'scoped mem for output reshape']
    %s2 = smov 3
    %v3 = vld [vmem:[%s0] ss:$4 sm:%s2]
    %vm4 = vcmask 261120
    %5 = vst.msk [vmem:[#allocation0] ss:$8 sm:$0x3] %vm4, %v3
    %s6 = scalar_lea.vmem %s0, 3
    %s7 = smov 3
    %v8 = vld [vmem:[%s6] ss:$4 sm:%s7]
    %9 = vrot.lane.b32.xlu0 %v8, 96
    %v10 = vpop.permute.xlu0 %9
    %vm11 = vcmask 1048320
    %12 = vst.msk [vmem:[#allocation0] ss:$8 sm:$0x3] %vm11, %v10
    %s13 = scalar_lea.vmem %s0, 2
    %s14 = smov 3
    %v15 = vld [vmem:[%s13] ss:$4 sm:%s14]
    %16 = vrot.lane.b32.xlu0 %v15, 64
    %v17 = vpop.permute.xlu0 %16
    %vm18 = vcmask 785920
    %19 = vst.msk [vmem:[#allocation0] ss:$8 sm:$0x3] %vm18, %v17
    %s20 = scalar_lea.vmem %s0, 1
    %s21 = smov 3
    %v22 = vld [vmem:[%s20] ss:$4 sm:%s21]
    %23 = vrot.lane.b32.xlu0 %v22, 32
    %v24 = vpop.permute.xlu0 %23
    %vm25 = vcmask 523520
    %26 = vst.msk [vmem:[#allocation0] ss:$8 sm:$0x3] %vm25, %v24
    %s28 = ssub.s32 2, 1
    %v29 = vld [vmem:[#allocation0] sm:%s28]
    %s31 = ssub.s32 2, 1
    %32 = vst [vmem:[%s1] sm:%s31] %v29
    %s33 = scalar_lea.vmem [#allocation0], 8
    %v34 = vld [vmem:[%s33] sm:%s28]
    %s36 = ssub.s32 2, 1
    %s37 = scalar_lea.vmem %s1, 1
    %38 = vst [vmem:[%s37] sm:%s36] %v34

// kernel: cnn_for_audio_forward.4
$region0: #{cnn_for_audio_forward.4}
  #allocation0 [shape = 'u32[]', space=smem, size = 0x4, offset = 0x4, fixed_abs, tag = 'smem constant byte address 0x4 - core index']
  #allocation1 [shape = 'u32[72,128]{1,0:T(1,128)}', space=vmem, size = 0x9000, scoped, tag = 'internal scratch']
  %s0 = inlined_call_operand.vmem [shape: bf16[2,2,512,128], index: 0, kind: input, shape index: {}]
  %s1 = inlined_call_operand.vmem [shape: bf16[8,128,256], index: 1, kind: input, shape index: {}]
  %s2 = inlined_call_operand.vmem [shape: f32[1,256], index: 2, kind: input, shape index: {}]
  %s3 = inlined_call_operand.vmem [shape: bf16[2,512,256], index: 3, kind: output, shape index: {}]
  %s4 = sld [smem:[#allocation0]]
  $region86: #{cnn_for_audio_forward.4} parent=0
    _
  %s6 = ssub.s32 1, %s4
  %s7 = scalar_select 0, %s6, %s4
  $region1: #{cnn_for_audio_forward.4} parent=0
    #allocation2 [shape = 'u8[262144]{0}', space=vmem, size = 0x40000, scoped, tag = 'input window, operand 0']
    loop: start=0, step=1, limit=6
    $region2: #{cnn_for_audio_forward.4} parent=1 // loop_pre_header
      _
    $region3: #{cnn_for_audio_forward.4} parent=1 // loop_header
      %s9 = sphi 0, %s13
      %p10 = scmp.ge.s32.totalorder %s9, 6
      %s16 = sphi 0, %s28
      %s17 = sphi 0, %s24
      %s18 = sphi 0, %s16
      %s19 = sphi 0, %s17
      %s20 = sphi 0, %s18
      %s21 = sphi 0, %s19
      %s33 = sphi 0, %s35
      %s36 = sphi 0, %s33
      %s37 = sphi 0, %s36
      %s53 = sphi 0, %s37
      %s57 = sphi 0, %s57
      %s59 = sphi 0, %s57
      %s60 = sphi 0, %s59
      %s74 = sphi 0, %s60
      %s78 = sphi 0, %s78
      %s80 = sphi 0, %s78
      %s81 = sphi 0, %s80
      %s95 = sphi 0, %s81
      %s103 = sphi 0, %s105
      %s106 = sphi 0, %s103
      %s107 = sphi 0, %s106
      %s123 = sphi 0, %s107
    $region4: #{cnn_for_audio_forward.4} parent=1 // loop_header_branch
      %12 = sbr.rel (%p10) target = $region8
    $region5: #{cnn_for_audio_forward.4} parent=1 // loop_body
      %s14 = ssub.s32 %s9, 1
      %s15 = ssub.s32 %s9, 2
      %s22 = sadd.s32 1, %s17
      %p23 = scmp.ge.s32.totalorder %s22, 2
      %s24 = scalar_select %p23, 0, %s22
      %s25 = sadd.s32 1, %s16
      %s26 = scalar_select %p23, %s25, %s16
      %p27 = scmp.ge.s32.totalorder %s26, 2
      %s28 = scalar_select %p27, 0, %s26
      %s29 = ssub.s32 %s16, %s28
      %s30 = ssub.s32 %s17, %s24
      %s31 = sor.u32 %s29, %s30
      %p32 = scmp.eq.s32.totalorder %s31, 0
      %s34 = sadd.s32 %s33, 1
      %s35 = scalar_select %p32, %s33, %s34
      %p38 = pneg %p32
      %p39 = scmp.eq.s32.totalorder %s9, 3
      %p40 = por %p38, %p39
      %p41 = scmp.ne.s32.totalorder %s33, %s36
      %p42 = scmp.eq.s32.totalorder %s9, 0
      %p43 = por %p41, %p42
      %p44 = scmp.ne.s32.totalorder %s33, %s36
      %p45 = scmp.eq.s32.totalorder %s14, 3
      %p46 = por %p44, %p45
      %p47 = scmp.ne.s32.totalorder %s36, %s37
      %p48 = scmp.eq.s32.totalorder %s14, 0
      %p49 = por %p47, %p48
      %p50 = scmp.ne.s32.totalorder %s36, %s37
      %p51 = scmp.eq.s32.totalorder %s15, 3
      %p52 = por %p50, %p51
      %p54 = scmp.ne.s32.totalorder %s37, %s53
      %p55 = scmp.eq.s32.totalorder %s15, 0
      %p56 = por %p54, %p55
      %s58 = sadd.s32 %s57, 1
      %p61 = scmp.eq.s32.totalorder %s9, 3
      %p62 = scmp.ne.s32.totalorder %s57, %s59
      %p63 = scmp.eq.s32.totalorder %s9, 0
      %p64 = por %p62, %p63
      %p65 = scmp.ne.s32.totalorder %s57, %s59
      %p66 = scmp.eq.s32.totalorder %s14, 3
      %p67 = por %p65, %p66
      %p68 = scmp.ne.s32.totalorder %s59, %s60
      %p69 = scmp.eq.s32.totalorder %s14, 0
      %p70 = por %p68, %p69
      %p71 = scmp.ne.s32.totalorder %s59, %s60
      %p72 = scmp.eq.s32.totalorder %s15, 3
      %p73 = por %p71, %p72
      %p75 = scmp.ne.s32.totalorder %s60, %s74
      %p76 = scmp.eq.s32.totalorder %s15, 0
      %p77 = por %p75, %p76
      %s79 = sadd.s32 %s78, 1
      %p82 = scmp.eq.s32.totalorder %s9, 3
      %p83 = scmp.ne.s32.totalorder %s78, %s80
      %p84 = scmp.eq.s32.totalorder %s9, 0
      %p85 = por %p83, %p84
      %p86 = scmp.ne.s32.totalorder %s78, %s80
      %p87 = scmp.eq.s32.totalorder %s14, 3
      %p88 = por %p86, %p87
      %p89 = scmp.ne.s32.totalorder %s80, %s81
      %p90 = scmp.eq.s32.totalorder %s14, 0
      %p91 = por %p89, %p90
      %p92 = scmp.ne.s32.totalorder %s80, %s81
      %p93 = scmp.eq.s32.totalorder %s15, 3
      %p94 = por %p92, %p93
      %p96 = scmp.ne.s32.totalorder %s81, %s95
      %p97 = scmp.eq.s32.totalorder %s15, 0
      %p98 = por %p96, %p97
      %s99 = ssub.s32 %s16, %s28
      %s100 = ssub.s32 %s17, %s24
      %s101 = sor.u32 %s99, %s100
      %p102 = scmp.eq.s32.totalorder %s101, 0
      %s104 = sadd.s32 %s103, 1
      %s105 = scalar_select %p102, %s103, %s104
      %p108 = pneg %p102
      %p109 = scmp.eq.s32.totalorder %s9, 3
      %p110 = por %p108, %p109
      %p111 = scmp.ne.s32.totalorder %s103, %s106
      %p112 = scmp.eq.s32.totalorder %s9, 0
      %p113 = por %p111, %p112
      %p114 = scmp.ne.s32.totalorder %s103, %s106
      %p115 = scmp.eq.s32.totalorder %s14, 3
      %p116 = por %p114, %p115
      %p117 = scmp.ne.s32.totalorder %s106, %s107
      %p118 = scmp.eq.s32.totalorder %s14, 0
      %p119 = por %p117, %p118
      %p120 = scmp.ne.s32.totalorder %s106, %s107
      %p121 = scmp.eq.s32.totalorder %s15, 3
      %p122 = por %p120, %p121
      %p124 = scmp.ne.s32.totalorder %s107, %s123
      %p125 = scmp.eq.s32.totalorder %s15, 0
      %p126 = por %p124, %p125
      %p127 = scmp.le.s32.totalorder 1, %s9
      %p128 = scmp.lt.s32.totalorder %s9, 5
      %p129 = pnand %p127, %p128
      %p130 = pneg %p129
      // Predicated region
      $region9: #{cnn_for_audio_forward.4} parent=5 // pred_check
        _
      $region10: #{cnn_for_audio_forward.4} parent=5 // pred_check_branch
        %132 = sbr.rel (%p129) target = $region12
      $region11: #{cnn_for_audio_forward.4} parent=5 // pred_region
        %s133 = ssub.s32 %s9, 1
        // Predicated region
        $region13: #{cnn_for_audio_forward.4} parent=11 // pred_check
          %p134 = pneg %p70
        $region14: #{cnn_for_audio_forward.4} parent=11 // pred_check_branch
          %136 = sbr.rel (%p134) target = $region16
        $region15: #{cnn_for_audio_forward.4} parent=11 // pred_region
          _
        $region16: #{cnn_for_audio_forward.4} parent=11 // pred_fallthru
          _
        // Predicated region
        $region17: #{cnn_for_audio_forward.4} parent=11 // pred_check
          %p137 = pneg %p91
        $region18: #{cnn_for_audio_forward.4} parent=11 // pred_check_branch
          %139 = sbr.rel (%p137) target = $region20
        $region19: #{cnn_for_audio_forward.4} parent=11 // pred_region
          _
        $region20: #{cnn_for_audio_forward.4} parent=11 // pred_fallthru
          _
      $region12: #{cnn_for_audio_forward.4} parent=5 // pred_fallthru
        _
      %p140 = scmp.lt.s32.totalorder %s9, 4
      // Predicated region
      $region21: #{cnn_for_audio_forward.4} parent=5 // pred_check
        %p141 = pneg %p140
      $region22: #{cnn_for_audio_forward.4} parent=5 // pred_check_branch
        %143 = sbr.rel (%p141) target = $region24
      $region23: #{cnn_for_audio_forward.4} parent=5 // pred_region
        // Predicated region
        $region25: #{cnn_for_audio_forward.4} parent=23 // pred_check
          %p144 = pneg %p43
        $region26: #{cnn_for_audio_forward.4} parent=23 // pred_check_branch
          %146 = sbr.rel (%p144) target = $region28
        $region27: #{cnn_for_audio_forward.4} parent=23 // pred_region
          %s147 = sand.u32 %s33, 1
          %s148 = sand.u32 %s33, 1
          %s149 = smul.addr %s148, 256
          %s150 = scalar_lea.vmem [#allocation2], %s149
          %s151 = smul.u32 32, %s17
          %s152 = smul.addr %s16, 128
          %s153 = sadd.s32 %s151, %s152
          %s154 = smul.addr %s153, 4
          %s155 = scalar_lea.vmem %s0, %s154
          // Predicated region
          $region29: #{cnn_for_audio_forward.4} parent=27 // pred_check
            _
          $region30: #{cnn_for_audio_forward.4} parent=27 // pred_check_branch
            %157 = sbr.rel (0) target = $region32
          $region31: #{cnn_for_audio_forward.4} parent=27 // pred_region
            // Predicated region
            $region33: #{cnn_for_audio_forward.4} parent=31 // pred_check
              _
            $region34: #{cnn_for_audio_forward.4} parent=31 // pred_check_branch
              %159 = sbr.rel target = $region36
            $region35: #{cnn_for_audio_forward.4} parent=31 // pred_region
              // Predicated region
              $region48: #{cnn_for_audio_forward.4} parent=35 // pred_check
                _
              $region49: #{cnn_for_audio_forward.4} parent=35 // pred_check_branch
                %301 = sbr.rel (0) target = $region51
              $region50: #{cnn_for_audio_forward.4} parent=35 // pred_region
                loop: start=0, step=1, limit=1
                $region52: #{cnn_for_audio_forward.4} parent=50 // loop_pre_header
                  _
                $region53: #{cnn_for_audio_forward.4} parent=50 // loop_header
                  %s303 = sphi 0, %s307
                  %p304 = scmp.ge.s32.totalorder %s303, 1
                  %s308 = sphi %s155, %s155
                  %s309 = sphi %s150, %s150
                $region54: #{cnn_for_audio_forward.4} parent=50 // loop_header_branch
                  %306 = sbr.rel (%p304) target = $region58
                $region55: #{cnn_for_audio_forward.4} parent=50 // loop_body
                  _
                $region56: #{cnn_for_audio_forward.4} parent=50 // loop_footer
                  %s307 = sadd.s32 1, %s303
                $region57: #{cnn_for_audio_forward.4} parent=50 // loop_footer_branch
                  %302 = sbr.rel target = $region53
                $region58: #{cnn_for_audio_forward.4} parent=50 // loop_exit
                  _
                %s311 = ssub.s32 16, 1
                loop: start=0, step=1, limit=1
                $region59: #{cnn_for_audio_forward.4} parent=50 // loop_pre_header
                  _
                $region60: #{cnn_for_audio_forward.4} parent=50 // loop_header
                  %s313 = sphi 0, %s317
                  %p314 = scmp.ge.s32.totalorder %s313, 1
                  %s318 = sphi %s155, %s155
                  %s319 = sphi %s150, %s150
                $region61: #{cnn_for_audio_forward.4} parent=50 // loop_header_branch
                  %316 = sbr.rel (%p314) target = $region65
                $region62: #{cnn_for_audio_forward.4} parent=50 // loop_body
                  %v320 = vld [vmem:[%s318] sm:%s311]
                  %321 = vst [vmem:[%s319] sm:%s311] %v320
                  %v322 = vld [vmem:[%s318 + $0x4] sm:%s311]
                  %323 = vst [vmem:[%s319 + $0x4] sm:%s311] %v322
                  %v324 = vld [vmem:[%s318 + $0x8] sm:%s311]
                  %325 = vst [vmem:[%s319 + $0x8] sm:%s311] %v324
                  %v326 = vld [vmem:[%s318 + $0xc] sm:%s311]
                  %327 = vst [vmem:[%s319 + $0xc] sm:%s311] %v326
                  %v328 = vld [vmem:[%s318 + $0x10] sm:%s311]
                  %329 = vst [vmem:[%s319 + $0x10] sm:%s311] %v328
                  %v330 = vld [vmem:[%s318 + $0x14] sm:%s311]
                  %331 = vst [vmem:[%s319 + $0x14] sm:%s311] %v330
                  %v332 = vld [vmem:[%s318 + $0x18] sm:%s311]
                  %333 = vst [vmem:[%s319 + $0x18] sm:%s311] %v332
                  %v334 = vld [vmem:[%s318 + $0x1c] sm:%s311]
                  %335 = vst [vmem:[%s319 + $0x1c] sm:%s311] %v334
                  %v336 = vld [vmem:[%s318 + $0x20] sm:%s311]
                  %337 = vst [vmem:[%s319 + $0x20] sm:%s311] %v336
                  %v338 = vld [vmem:[%s318 + $0x24] sm:%s311]
                  %339 = vst [vmem:[%s319 + $0x24] sm:%s311] %v338
                  %v340 = vld [vmem:[%s318 + $0x28] sm:%s311]
                  %341 = vst [vmem:[%s319 + $0x28] sm:%s311] %v340
                  %v342 = vld [vmem:[%s318 + $0x2c] sm:%s311]
                  %343 = vst [vmem:[%s319 + $0x2c] sm:%s311] %v342
                  %v344 = vld [vmem:[%s318 + $0x30] sm:%s311]
                  %345 = vst [vmem:[%s319 + $0x30] sm:%s311] %v344
                  %v346 = vld [vmem:[%s318 + $0x34] sm:%s311]
                  %347 = vst [vmem:[%s319 + $0x34] sm:%s311] %v346
                  %v348 = vld [vmem:[%s318 + $0x38] sm:%s311]
                  %349 = vst [vmem:[%s319 + $0x38] sm:%s311] %v348
                  %v350 = vld [vmem:[%s318 + $0x3c] sm:%s311]
                  %351 = vst [vmem:[%s319 + $0x3c] sm:%s311] %v350
                  %v352 = vld [vmem:[%s318 + $0x40] sm:%s311]
                  %353 = vst [vmem:[%s319 + $0x40] sm:%s311] %v352
                  %v354 = vld [vmem:[%s318 + $0x44] sm:%s311]
                  %355 = vst [vmem:[%s319 + $0x44] sm:%s311] %v354
                  %v356 = vld [vmem:[%s318 + $0x48] sm:%s311]
                  %357 = vst [vmem:[%s319 + $0x48] sm:%s311] %v356
                  %v358 = vld [vmem:[%s318 + $0x4c] sm:%s311]
                  %359 = vst [vmem:[%s319 + $0x4c] sm:%s311] %v358
                  %v360 = vld [vmem:[%s318 + $0x50] sm:%s311]
                  %361 = vst [vmem:[%s319 + $0x50] sm:%s311] %v360
                  %v362 = vld [vmem:[%s318 + $0x54] sm:%s311]
                  %363 = vst [vmem:[%s319 + $0x54] sm:%s311] %v362
                  %v364 = vld [vmem:[%s318 + $0x58] sm:%s311]
                  %365 = vst [vmem:[%s319 + $0x58] sm:%s311] %v364
                  %v366 = vld [vmem:[%s318 + $0x5c] sm:%s311]
                  %367 = vst [vmem:[%s319 + $0x5c] sm:%s311] %v366
                  %v368 = vld [vmem:[%s318 + $0x60] sm:%s311]
                  %369 = vst [vmem:[%s319 + $0x60] sm:%s311] %v368
                  %v370 = vld [vmem:[%s318 + $0x64] sm:%s311]
                  %371 = vst [vmem:[%s319 + $0x64] sm:%s311] %v370
                  %v372 = vld [vmem:[%s318 + $0x68] sm:%s311]
                  %373 = vst [vmem:[%s319 + $0x68] sm:%s311] %v372
                  %v374 = vld [vmem:[%s318 + $0x6c] sm:%s311]
                  %375 = vst [vmem:[%s319 + $0x6c] sm:%s311] %v374
                  %v376 = vld [vmem:[%s318 + $0x70] sm:%s311]
                  %377 = vst [vmem:[%s319 + $0x70] sm:%s311] %v376
                  %v378 = vld [vmem:[%s318 + $0x74] sm:%s311]
                  %379 = vst [vmem:[%s319 + $0x74] sm:%s311] %v378
                  %v380 = vld [vmem:[%s318 + $0x78] sm:%s311]
                  %381 = vst [vmem:[%s319 + $0x78] sm:%s311] %v380
                  %v382 = vld [vmem:[%s318 + $0x7c] sm:%s311]
                  %383 = vst [vmem:[%s319 + $0x7c] sm:%s311] %v382
                  %v384 = vld [vmem:[%s318 + $0x100] sm:%s311]
                  %385 = vst [vmem:[%s319 + $0x80] sm:%s311] %v384
                  %v386 = vld [vmem:[%s318 + $0x104] sm:%s311]
                  %387 = vst [vmem:[%s319 + $0x84] sm:%s311] %v386
                  %v388 = vld [vmem:[%s318 + $0x108] sm:%s311]
                  %389 = vst [vmem:[%s319 + $0x88] sm:%s311] %v388
                  %v390 = vld [vmem:[%s318 + $0x10c] sm:%s311]
                  %391 = vst [vmem:[%s319 + $0x8c] sm:%s311] %v390
                  %v392 = vld [vmem:[%s318 + $0x110] sm:%s311]
                  %393 = vst [vmem:[%s319 + $0x90] sm:%s311] %v392
                  %v394 = vld [vmem:[%s318 + $0x114] sm:%s311]
                  %395 = vst [vmem:[%s319 + $0x94] sm:%s311] %v394
                  %v396 = vld [vmem:[%s318 + $0x118] sm:%s311]
                  %397 = vst [vmem:[%s319 + $0x98] sm:%s311] %v396
                  %v398 = vld [vmem:[%s318 + $0x11c] sm:%s311]
                  %399 = vst [vmem:[%s319 + $0x9c] sm:%s311] %v398
                  %v400 = vld [vmem:[%s318 + $0x120] sm:%s311]
                  %401 = vst [vmem:[%s319 + $0xa0] sm:%s311] %v400
                  %v402 = vld [vmem:[%s318 + $0x124] sm:%s311]
                  %403 = vst [vmem:[%s319 + $0xa4] sm:%s311] %v402
                  %v404 = vld [vmem:[%s318 + $0x128] sm:%s311]
                  %405 = vst [vmem:[%s319 + $0xa8] sm:%s311] %v404
                  %v406 = vld [vmem:[%s318 + $0x12c] sm:%s311]
                  %407 = vst [vmem:[%s319 + $0xac] sm:%s311] %v406
                  %v408 = vld [vmem:[%s318 + $0x130] sm:%s311]
                  %409 = vst [vmem:[%s319 + $0xb0] sm:%s311] %v408
                  %v410 = vld [vmem:[%s318 + $0x134] sm:%s311]
                  %411 = vst [vmem:[%s319 + $0xb4] sm:%s311] %v410
                  %v412 = vld [vmem:[%s318 + $0x138] sm:%s311]
                  %413 = vst [vmem:[%s319 + $0xb8] sm:%s311] %v412
                  %v414 = vld [vmem:[%s318 + $0x13c] sm:%s311]
                  %415 = vst [vmem:[%s319 + $0xbc] sm:%s311] %v414
                  %v416 = vld [vmem:[%s318 + $0x140] sm:%s311]
                  %417 = vst [vmem:[%s319 + $0xc0] sm:%s311] %v416
                  %v418 = vld [vmem:[%s318 + $0x144] sm:%s311]
                  %419 = vst [vmem:[%s319 + $0xc4] sm:%s311] %v418
                  %v420 = vld [vmem:[%s318 + $0x148] sm:%s311]
                  %421 = vst [vmem:[%s319 + $0xc8] sm:%s311] %v420
                  %v422 = vld [vmem:[%s318 + $0x14c] sm:%s311]
                  %423 = vst [vmem:[%s319 + $0xcc] sm:%s311] %v422
                  %v424 = vld [vmem:[%s318 + $0x150] sm:%s311]
                  %425 = vst [vmem:[%s319 + $0xd0] sm:%s311] %v424
                  %v426 = vld [vmem:[%s318 + $0x154] sm:%s311]
                  %427 = vst [vmem:[%s319 + $0xd4] sm:%s311] %v426
                  %v428 = vld [vmem:[%s318 + $0x158] sm:%s311]
                  %429 = vst [vmem:[%s319 + $0xd8] sm:%s311] %v428
                  %v430 = vld [vmem:[%s318 + $0x15c] sm:%s311]
                  %431 = vst [vmem:[%s319 + $0xdc] sm:%s311] %v430
                  %v432 = vld [vmem:[%s318 + $0x160] sm:%s311]
                  %433 = vst [vmem:[%s319 + $0xe0] sm:%s311] %v432
                  %v434 = vld [vmem:[%s318 + $0x164] sm:%s311]
                  %435 = vst [vmem:[%s319 + $0xe4] sm:%s311] %v434
                  %v436 = vld [vmem:[%s318 + $0x168] sm:%s311]
                  %437 = vst [vmem:[%s319 + $0xe8] sm:%s311] %v436
                  %v438 = vld [vmem:[%s318 + $0x16c] sm:%s311]
                  %439 = vst [vmem:[%s319 + $0xec] sm:%s311] %v438
                  %v440 = vld [vmem:[%s318 + $0x170] sm:%s311]
                  %441 = vst [vmem:[%s319 + $0xf0] sm:%s311] %v440
                  %v442 = vld [vmem:[%s318 + $0x174] sm:%s311]
                  %443 = vst [vmem:[%s319 + $0xf4] sm:%s311] %v442
                  %v444 = vld [vmem:[%s318 + $0x178] sm:%s311]
                  %445 = vst [vmem:[%s319 + $0xf8] sm:%s311] %v444
                  %v446 = vld [vmem:[%s318 + $0x17c] sm:%s311]
                  %447 = vst [vmem:[%s319 + $0xfc] sm:%s311] %v446
                $region63: #{cnn_for_audio_forward.4} parent=50 // loop_footer
                  %s317 = sadd.s32 1, %s313
                $region64: #{cnn_for_audio_forward.4} parent=50 // loop_footer_branch
                  %312 = sbr.rel target = $region60
                $region65: #{cnn_for_audio_forward.4} parent=50 // loop_exit
                  _
              $region51: #{cnn_for_audio_forward.4} parent=35 // pred_fallthru
                _
            $region36: #{cnn_for_audio_forward.4} parent=31 // pred_fallthru
              _
            // Predicated region
            $region37: #{cnn_for_audio_forward.4} parent=31 // pred_check
              _
            $region38: #{cnn_for_audio_forward.4} parent=31 // pred_check_branch
              %161 = sbr.rel (0) target = $region40
            $region39: #{cnn_for_audio_forward.4} parent=31 // pred_region
              %s163 = ssub.s32 16, 1
              loop: start=0, step=1, limit=1
              $region41: #{cnn_for_audio_forward.4} parent=39 // loop_pre_header
                _
              $region42: #{cnn_for_audio_forward.4} parent=39 // loop_header
                %s165 = sphi 0, %s169
                %p166 = scmp.ge.s32.totalorder %s165, 1
                %s170 = sphi %s155, %s155
                %s171 = sphi %s150, %s150
              $region43: #{cnn_for_audio_forward.4} parent=39 // loop_header_branch
                %168 = sbr.rel (%p166) target = $region47
              $region44: #{cnn_for_audio_forward.4} parent=39 // loop_body
                %v172 = vld [vmem:[%s170] sm:%s163]
                %173 = vst [vmem:[%s171] sm:%s163] %v172
                %v174 = vld [vmem:[%s170 + $0x4] sm:%s163]
                %175 = vst [vmem:[%s171 + $0x4] sm:%s163] %v174
                %v176 = vld [vmem:[%s170 + $0x8] sm:%s163]
                %177 = vst [vmem:[%s171 + $0x8] sm:%s163] %v176
                %v178 = vld [vmem:[%s170 + $0xc] sm:%s163]
                %179 = vst [vmem:[%s171 + $0xc] sm:%s163] %v178
                %v180 = vld [vmem:[%s170 + $0x10] sm:%s163]
                %181 = vst [vmem:[%s171 + $0x10] sm:%s163] %v180
                %v182 = vld [vmem:[%s170 + $0x14] sm:%s163]
                %183 = vst [vmem:[%s171 + $0x14] sm:%s163] %v182
                %v184 = vld [vmem:[%s170 + $0x18] sm:%s163]
                %185 = vst [vmem:[%s171 + $0x18] sm:%s163] %v184
                %v186 = vld [vmem:[%s170 + $0x1c] sm:%s163]
                %187 = vst [vmem:[%s171 + $0x1c] sm:%s163] %v186
                %v188 = vld [vmem:[%s170 + $0x20] sm:%s163]
                %189 = vst [vmem:[%s171 + $0x20] sm:%s163] %v188
                %v190 = vld [vmem:[%s170 + $0x24] sm:%s163]
                %191 = vst [vmem:[%s171 + $0x24] sm:%s163] %v190
                %v192 = vld [vmem:[%s170 + $0x28] sm:%s163]
                %193 = vst [vmem:[%s171 + $0x28] sm:%s163] %v192
                %v194 = vld [vmem:[%s170 + $0x2c] sm:%s163]
                %195 = vst [vmem:[%s171 + $0x2c] sm:%s163] %v194
                %v196 = vld [vmem:[%s170 + $0x30] sm:%s163]
                %197 = vst [vmem:[%s171 + $0x30] sm:%s163] %v196
                %v198 = vld [vmem:[%s170 + $0x34] sm:%s163]
                %199 = vst [vmem:[%s171 + $0x34] sm:%s163] %v198
                %v200 = vld [vmem:[%s170 + $0x38] sm:%s163]
                %201 = vst [vmem:[%s171 + $0x38] sm:%s163] %v200
                %v202 = vld [vmem:[%s170 + $0x3c] sm:%s163]
                %203 = vst [vmem:[%s171 + $0x3c] sm:%s163] %v202
                %v204 = vld [vmem:[%s170 + $0x40] sm:%s163]
                %205 = vst [vmem:[%s171 + $0x40] sm:%s163] %v204
                %v206 = vld [vmem:[%s170 + $0x44] sm:%s163]
                %207 = vst [vmem:[%s171 + $0x44] sm:%s163] %v206
                %v208 = vld [vmem:[%s170 + $0x48] sm:%s163]
                %209 = vst [vmem:[%s171 + $0x48] sm:%s163] %v208
                %v210 = vld [vmem:[%s170 + $0x4c] sm:%s163]
                %211 = vst [vmem:[%s171 + $0x4c] sm:%s163] %v210
                %v212 = vld [vmem:[%s170 + $0x50] sm:%s163]
                %213 = vst [vmem:[%s171 + $0x50] sm:%s163] %v212
                %v214 = vld [vmem:[%s170 + $0x54] sm:%s163]
                %215 = vst [vmem:[%s171 + $0x54] sm:%s163] %v214
                %v216 = vld [vmem:[%s170 + $0x58] sm:%s163]
                %217 = vst [vmem:[%s171 + $0x58] sm:%s163] %v216
                %v218 = vld [vmem:[%s170 + $0x5c] sm:%s163]
                %219 = vst [vmem:[%s171 + $0x5c] sm:%s163] %v218
                %v220 = vld [vmem:[%s170 + $0x60] sm:%s163]
                %221 = vst [vmem:[%s171 + $0x60] sm:%s163] %v220
                %v222 = vld [vmem:[%s170 + $0x64] sm:%s163]
                %223 = vst [vmem:[%s171 + $0x64] sm:%s163] %v222
                %v224 = vld [vmem:[%s170 + $0x68] sm:%s163]
                %225 = vst [vmem:[%s171 + $0x68] sm:%s163] %v224
                %v226 = vld [vmem:[%s170 + $0x6c] sm:%s163]
                %227 = vst [vmem:[%s171 + $0x6c] sm:%s163] %v226
                %v228 = vld [vmem:[%s170 + $0x70] sm:%s163]
                %229 = vst [vmem:[%s171 + $0x70] sm:%s163] %v228
                %v230 = vld [vmem:[%s170 + $0x74] sm:%s163]
                %231 = vst [vmem:[%s171 + $0x74] sm:%s163] %v230
                %v232 = vld [vmem:[%s170 + $0x78] sm:%s163]
                %233 = vst [vmem:[%s171 + $0x78] sm:%s163] %v232
                %v234 = vld [vmem:[%s170 + $0x7c] sm:%s163]
                %235 = vst [vmem:[%s171 + $0x7c] sm:%s163] %v234
                %v236 = vld [vmem:[%s170 + $0x100] sm:%s163]
                %237 = vst [vmem:[%s171 + $0x80] sm:%s163] %v236
                %v238 = vld [vmem:[%s170 + $0x104] sm:%s163]
                %239 = vst [vmem:[%s171 + $0x84] sm:%s163] %v238
                %v240 = vld [vmem:[%s170 + $0x108] sm:%s163]
                %241 = vst [vmem:[%s171 + $0x88] sm:%s163] %v240
                %v242 = vld [vmem:[%s170 + $0x10c] sm:%s163]
                %243 = vst [vmem:[%s171 + $0x8c] sm:%s163] %v242
                %v244 = vld [vmem:[%s170 + $0x110] sm:%s163]
                %245 = vst [vmem:[%s171 + $0x90] sm:%s163] %v244
                %v246 = vld [vmem:[%s170 + $0x114] sm:%s163]
                %247 = vst [vmem:[%s171 + $0x94] sm:%s163] %v246
                %v248 = vld [vmem:[%s170 + $0x118] sm:%s163]
                %249 = vst [vmem:[%s171 + $0x98] sm:%s163] %v248
                %v250 = vld [vmem:[%s170 + $0x11c] sm:%s163]
                %251 = vst [vmem:[%s171 + $0x9c] sm:%s163] %v250
                %v252 = vld [vmem:[%s170 + $0x120] sm:%s163]
                %253 = vst [vmem:[%s171 + $0xa0] sm:%s163] %v252
                %v254 = vld [vmem:[%s170 + $0x124] sm:%s163]
                %255 = vst [vmem:[%s171 + $0xa4] sm:%s163] %v254
                %v256 = vld [vmem:[%s170 + $0x128] sm:%s163]
                %257 = vst [vmem:[%s171 + $0xa8] sm:%s163] %v256
                %v258 = vld [vmem:[%s170 + $0x12c] sm:%s163]
                %259 = vst [vmem:[%s171 + $0xac] sm:%s163] %v258
                %v260 = vld [vmem:[%s170 + $0x130] sm:%s163]
                %261 = vst [vmem:[%s171 + $0xb0] sm:%s163] %v260
                %v262 = vld [vmem:[%s170 + $0x134] sm:%s163]
                %263 = vst [vmem:[%s171 + $0xb4] sm:%s163] %v262
                %v264 = vld [vmem:[%s170 + $0x138] sm:%s163]
                %265 = vst [vmem:[%s171 + $0xb8] sm:%s163] %v264
                %v266 = vld [vmem:[%s170 + $0x13c] sm:%s163]
                %267 = vst [vmem:[%s171 + $0xbc] sm:%s163] %v266
                %v268 = vld [vmem:[%s170 + $0x140] sm:%s163]
                %269 = vst [vmem:[%s171 + $0xc0] sm:%s163] %v268
                %v270 = vld [vmem:[%s170 + $0x144] sm:%s163]
                %271 = vst [vmem:[%s171 + $0xc4] sm:%s163] %v270
                %v272 = vld [vmem:[%s170 + $0x148] sm:%s163]
                %273 = vst [vmem:[%s171 + $0xc8] sm:%s163] %v272
                %v274 = vld [vmem:[%s170 + $0x14c] sm:%s163]
                %275 = vst [vmem:[%s171 + $0xcc] sm:%s163] %v274
                %v276 = vld [vmem:[%s170 + $0x150] sm:%s163]
                %277 = vst [vmem:[%s171 + $0xd0] sm:%s163] %v276
                %v278 = vld [vmem:[%s170 + $0x154] sm:%s163]
                %279 = vst [vmem:[%s171 + $0xd4] sm:%s163] %v278
                %v280 = vld [vmem:[%s170 + $0x158] sm:%s163]
                %281 = vst [vmem:[%s171 + $0xd8] sm:%s163] %v280
                %v282 = vld [vmem:[%s170 + $0x15c] sm:%s163]
                %283 = vst [vmem:[%s171 + $0xdc] sm:%s163] %v282
                %v284 = vld [vmem:[%s170 + $0x160] sm:%s163]
                %285 = vst [vmem:[%s171 + $0xe0] sm:%s163] %v284
                %v286 = vld [vmem:[%s170 + $0x164] sm:%s163]
                %287 = vst [vmem:[%s171 + $0xe4] sm:%s163] %v286
                %v288 = vld [vmem:[%s170 + $0x168] sm:%s163]
                %289 = vst [vmem:[%s171 + $0xe8] sm:%s163] %v288
                %v290 = vld [vmem:[%s170 + $0x16c] sm:%s163]
                %291 = vst [vmem:[%s171 + $0xec] sm:%s163] %v290
                %v292 = vld [vmem:[%s170 + $0x170] sm:%s163]
                %293 = vst [vmem:[%s171 + $0xf0] sm:%s163] %v292
                %v294 = vld [vmem:[%s170 + $0x174] sm:%s163]
                %295 = vst [vmem:[%s171 + $0xf4] sm:%s163] %v294
                %v296 = vld [vmem:[%s170 + $0x178] sm:%s163]
                %297 = vst [vmem:[%s171 + $0xf8] sm:%s163] %v296
                %v298 = vld [vmem:[%s170 + $0x17c] sm:%s163]
                %299 = vst [vmem:[%s171 + $0xfc] sm:%s163] %v298
              $region45: #{cnn_for_audio_forward.4} parent=39 // loop_footer
                %s169 = sadd.s32 1, %s165
              $region46: #{cnn_for_audio_forward.4} parent=39 // loop_footer_branch
                %164 = sbr.rel target = $region42
              $region47: #{cnn_for_audio_forward.4} parent=39 // loop_exit
                _
            $region40: #{cnn_for_audio_forward.4} parent=31 // pred_fallthru
              _
          $region32: #{cnn_for_audio_forward.4} parent=27 // pred_fallthru
            _
          %448 = vnop
        $region28: #{cnn_for_audio_forward.4} parent=23 // pred_fallthru
          _
      $region24: #{cnn_for_audio_forward.4} parent=5 // pred_fallthru
        _
      %p449 = scmp.le.s32.totalorder 1, %s9
      %p450 = scmp.lt.s32.totalorder %s9, 5
      %p451 = pnand %p449, %p450
      %p452 = pneg %p451
      // Predicated region
      $region66: #{cnn_for_audio_forward.4} parent=5 // pred_check
        _
      $region67: #{cnn_for_audio_forward.4} parent=5 // pred_check_branch
        %454 = sbr.rel (%p451) target = $region69
      $region68: #{cnn_for_audio_forward.4} parent=5 // pred_region
        %s455 = ssub.s32 %s9, 1
        %s456 = sand.u32 %s36, 1
        %s457 = sand.u32 %s36, 1
        %s458 = smul.addr %s457, 256
        %s459 = scalar_lea.vmem [#allocation2], %s458
        // Predicated region
        $region70: #{cnn_for_audio_forward.4} parent=68 // pred_check
          %p460 = pneg %p49
        $region71: #{cnn_for_audio_forward.4} parent=68 // pred_check_branch
          %462 = sbr.rel (%p460) target = $region73
        $region72: #{cnn_for_audio_forward.4} parent=68 // pred_region
          _
        $region73: #{cnn_for_audio_forward.4} parent=68 // pred_fallthru
          _
        %s463 = sand.u32 %s36, 1
        %s464 = sand.u32 %s36, 1
        %s465 = smul.addr %s464, 256
        %s466 = scalar_lea.vmem [#allocation2], %s465
        %p467 = pneg %p49
        %p468 = pneg %p46
        %p469 = pneg %p70
        %p470 = pneg %p67
        %p471 = pneg %p91
        %p472 = pneg %p88
        %p473 = pneg %p119
        %p474 = pneg %p116
        %s475 = smul.u32 32, %s19
        %p476 = scmp.lt.s32.totalorder %s18, 1
        %s477 = scalar_select %p476, %s18, 1
        %p478 = scmp.lt.s32.totalorder %s475, 63
        %s479 = scalar_select %p478, %s475, 63
        %s480 = smul.addr %s479, 2
        %s481 = smul.addr %s477, 128
        %s482 = sadd.s32 %s480, %s481
        %s483 = smul.addr %s482, 4
        %s484 = scalar_lea.vmem %s3, %s483
        %s485 = smul.u32 32, %s19
        %s486 = smul.u32 32, %s19
        %p487 = scmp.lt.s32.totalorder %s18, 1
        %s488 = scalar_select %p487, %s18, 1
        %p489 = scmp.lt.s32.totalorder %s486, 63
        %s490 = scalar_select %p489, %s486, 63
        %s491 = smul.addr %s490, 2
        %s492 = smul.addr %s488, 128
        %s493 = sadd.s32 %s491, %s492
        %s494 = smul.addr %s493, 4
        %s495 = scalar_lea.vmem %s3, %s494
        %s496 = smul.u32 32, %s19
        %v497 = vld [vmem:[%s2] sm:$0x3]
        %v498 = vld [vmem:[%s459] sm:$0xf]
        %v499 = vld [vmem:[%s459 + $0x4] sm:$0xf]
        %v500 = vld [vmem:[%s459 + $0x8] sm:$0xf]
        %v501 = vld [vmem:[%s459 + $0xc] sm:$0xf]
        %v502 = vld [vmem:[%s459 + $0x10] sm:$0xf]
        %v503 = vld [vmem:[%s459 + $0x14] sm:$0xf]
        %v504 = vld [vmem:[%s459 + $0x18] sm:$0xf]
        %v505 = vld [vmem:[%s459 + $0x1c] sm:$0xf]
        %v506 = vld [vmem:[%s459 + $0x20] sm:$0xf]
        %v507 = vld [vmem:[%s459 + $0x24] sm:$0xf]
        %v508 = vld [vmem:[%s459 + $0x28] sm:$0xf]
        %v509 = vld [vmem:[%s459 + $0x2c] sm:$0xf]
        %v510 = vld [vmem:[%s459 + $0x30] sm:$0xf]
        %v511 = vld [vmem:[%s459 + $0x34] sm:$0xf]
        %v512 = vld [vmem:[%s459 + $0x38] sm:$0xf]
        %v513 = vld [vmem:[%s459 + $0x3c] sm:$0xf]
        %v514 = vld [vmem:[%s459 + $0x40] sm:$0xf]
        %v515 = vld [vmem:[%s459 + $0x44] sm:$0xf]
        %v516 = vld [vmem:[%s459 + $0x48] sm:$0xf]
        %v517 = vld [vmem:[%s459 + $0x4c] sm:$0xf]
        %v518 = vld [vmem:[%s459 + $0x50] sm:$0xf]
        %v519 = vld [vmem:[%s459 + $0x54] sm:$0xf]
        %v520 = vld [vmem:[%s459 + $0x58] sm:$0xf]
        %v521 = vld [vmem:[%s459 + $0x5c] sm:$0xf]
        %v522 = vld [vmem:[%s459 + $0x60] sm:$0xf]
        %v523 = vld [vmem:[%s459 + $0x64] sm:$0xf]
        %v524 = vld [vmem:[%s459 + $0x68] sm:$0xf]
        %v525 = vld [vmem:[%s459 + $0x6c] sm:$0xf]
        %v526 = vld [vmem:[%s459 + $0x70] sm:$0xf]
        %v527 = vld [vmem:[%s459 + $0x74] sm:$0xf]
        %v528 = vld [vmem:[%s459 + $0x78] sm:$0xf]
        %v529 = vld [vmem:[%s459 + $0x7c] sm:$0xf]
        %s530 = scalar_lea.vmem %s459, 128 [#allocation2]
        %v531 = vld [vmem:[%s530] sm:$0xf]
        %v532 = vld [vmem:[%s530 + $0x4] sm:$0xf]
        %v533 = vld [vmem:[%s530 + $0x8] sm:$0xf]
        %v534 = vld [vmem:[%s530 + $0xc] sm:$0xf]
        %v535 = vld [vmem:[%s530 + $0x10] sm:$0xf]
        %v536 = vld [vmem:[%s530 + $0x14] sm:$0xf]
        %v537 = vld [vmem:[%s530 + $0x18] sm:$0xf]
        %v538 = vld [vmem:[%s530 + $0x1c] sm:$0xf]
        %v539 = vld [vmem:[%s530 + $0x20] sm:$0xf]
        %v540 = vld [vmem:[%s530 + $0x24] sm:$0xf]
        %v541 = vld [vmem:[%s530 + $0x28] sm:$0xf]
        %v542 = vld [vmem:[%s530 + $0x2c] sm:$0xf]
        %v543 = vld [vmem:[%s530 + $0x30] sm:$0xf]
        %v544 = vld [vmem:[%s530 + $0x34] sm:$0xf]
        %v545 = vld [vmem:[%s530 + $0x38] sm:$0xf]
        %v546 = vld [vmem:[%s530 + $0x3c] sm:$0xf]
        %v547 = vld [vmem:[%s530 + $0x40] sm:$0xf]
        %v548 = vld [vmem:[%s530 + $0x44] sm:$0xf]
        %v549 = vld [vmem:[%s530 + $0x48] sm:$0xf]
        %v550 = vld [vmem:[%s530 + $0x4c] sm:$0xf]
        %v551 = vld [vmem:[%s530 + $0x50] sm:$0xf]
        %v552 = vld [vmem:[%s530 + $0x54] sm:$0xf]
        %v553 = vld [vmem:[%s530 + $0x58] sm:$0xf]
        %v554 = vld [vmem:[%s530 + $0x5c] sm:$0xf]
        %v555 = vld [vmem:[%s530 + $0x60] sm:$0xf]
        %v556 = vld [vmem:[%s530 + $0x64] sm:$0xf]
        %v557 = vld [vmem:[%s530 + $0x68] sm:$0xf]
        %v558 = vld [vmem:[%s530 + $0x6c] sm:$0xf]
        %v559 = vld [vmem:[%s530 + $0x70] sm:$0xf]
        %v560 = vld [vmem:[%s530 + $0x74] sm:$0xf]
        %v561 = vld [vmem:[%s530 + $0x78] sm:$0xf]
        %v562 = vld [vmem:[%s530 + $0x7c] sm:$0xf]
        %v563 = vld [vmem:[%s1] sm:$0xff]
        %v564 = vld [vmem:[%s1 + $0x8] sm:$0xff]
        %v565 = vld [vmem:[%s1 + $0x10] sm:$0xff]
        %v566 = vld [vmem:[%s1 + $0x18] sm:$0xff]
        %v567 = vld [vmem:[%s1 + $0x20] sm:$0xff]
        %v568 = vld [vmem:[%s1 + $0x28] sm:$0xff]
        %v569 = vld [vmem:[%s1 + $0x30] sm:$0xff]
        %v570 = vld [vmem:[%s1 + $0x38] sm:$0xff]
        %v571 = vld [vmem:[%s1 + $0x40] sm:$0xff]
        %v572 = vld [vmem:[%s1 + $0x48] sm:$0xff]
        %v573 = vld [vmem:[%s1 + $0x50] sm:$0xff]
        %v574 = vld [vmem:[%s1 + $0x58] sm:$0xff]
        %v575 = vld [vmem:[%s1 + $0x60] sm:$0xff]
        %v576 = vld [vmem:[%s1 + $0x68] sm:$0xff]
        %v577 = vld [vmem:[%s1 + $0x70] sm:$0xff]
        %v578 = vld [vmem:[%s1 + $0x78] sm:$0xff]
        %s579 = scalar_lea.vmem %s1, 128
        %v580 = vld [vmem:[%s579] sm:$0xff]
        %v581 = vld [vmem:[%s579 + $0x8] sm:$0xff]
        %v582 = vld [vmem:[%s579 + $0x10] sm:$0xff]
        %v583 = vld [vmem:[%s579 + $0x18] sm:$0xff]
        %v584 = vld [vmem:[%s579 + $0x20] sm:$0xff]
        %v585 = vld [vmem:[%s579 + $0x28] sm:$0xff]
        %v586 = vld [vmem:[%s579 + $0x30] sm:$0xff]
        %v587 = vld [vmem:[%s579 + $0x38] sm:$0xff]
        %v588 = vld [vmem:[%s579 + $0x40] sm:$0xff]
        %v589 = vld [vmem:[%s579 + $0x48] sm:$0xff]
        %v590 = vld [vmem:[%s579 + $0x50] sm:$0xff]
        %v591 = vld [vmem:[%s579 + $0x58] sm:$0xff]
        %v592 = vld [vmem:[%s579 + $0x60] sm:$0xff]
        %v593 = vld [vmem:[%s579 + $0x68] sm:$0xff]
        %v594 = vld [vmem:[%s579 + $0x70] sm:$0xff]
        %v595 = vld [vmem:[%s579 + $0x78] sm:$0xff]
        %v628 = vunpack.c.l.b16 %v531
        %v629 = vunpack.c.l.b16 %v532
        %v630 = vunpack.c.l.b16 %v533
        %v631 = vunpack.c.l.b16 %v534
        %v632 = vunpack.c.l.b16 %v535
        %v633 = vunpack.c.l.b16 %v536
        %v634 = vunpack.c.l.b16 %v537
        %v635 = vunpack.c.l.b16 %v538
        %v636 = vunpack.c.l.b16 %v539
        %v637 = vunpack.c.l.b16 %v540
        %v638 = vunpack.c.l.b16 %v541
        %v639 = vunpack.c.l.b16 %v542
        %v640 = vunpack.c.l.b16 %v543
        %v641 = vunpack.c.l.b16 %v544
        %v642 = vunpack.c.l.b16 %v545
        %v643 = vunpack.c.l.b16 %v546
        %v644 = vunpack.c.l.b16 %v547
        %v645 = vunpack.c.l.b16 %v548
        %v646 = vunpack.c.l.b16 %v549
        %v647 = vunpack.c.l.b16 %v550
        %v648 = vunpack.c.l.b16 %v551
        %v649 = vunpack.c.l.b16 %v552
        %v650 = vunpack.c.l.b16 %v553
        %v651 = vunpack.c.l.b16 %v554
        %v652 = vunpack.c.l.b16 %v555
        %v653 = vunpack.c.l.b16 %v556
        %v654 = vunpack.c.l.b16 %v557
        %v655 = vunpack.c.l.b16 %v558
        %v656 = vunpack.c.l.b16 %v559
        %v657 = vunpack.c.l.b16 %v560
        %v658 = vunpack.c.l.b16 %v561
        %v659 = vunpack.c.l.b16 %v562
        %v660 = vpack.c.b16 %v629, %v628
        %v661 = vpack.c.b16 %v631, %v630
        %v662 = vpack.c.b16 %v633, %v632
        %v663 = vpack.c.b16 %v635, %v634
        %v664 = vpack.c.b16 %v637, %v636
        %v665 = vpack.c.b16 %v639, %v638
        %v666 = vpack.c.b16 %v641, %v640
        %v667 = vpack.c.b16 %v643, %v642
        %v668 = vpack.c.b16 %v645, %v644
        %v669 = vpack.c.b16 %v647, %v646
        %v670 = vpack.c.b16 %v649, %v648
        %v671 = vpack.c.b16 %v651, %v650
        %v672 = vpack.c.b16 %v653, %v652
        %v673 = vpack.c.b16 %v655, %v654
        %v674 = vpack.c.b16 %v657, %v656
        %v675 = vpack.c.b16 %v659, %v658
        %v708 = vunpack.c.l.b16 %v580
        %v709 = vunpack.c.h.b16 %v580
        %v710 = vunpack.c.l.b16 %v581
        %v711 = vunpack.c.h.b16 %v581
        %v712 = vunpack.c.l.b16 %v582
        %v713 = vunpack.c.h.b16 %v582
        %v714 = vunpack.c.l.b16 %v583
        %v715 = vunpack.c.h.b16 %v583
        %v716 = vunpack.c.l.b16 %v584
        %v717 = vunpack.c.h.b16 %v584
        %v718 = vunpack.c.l.b16 %v585
        %v719 = vunpack.c.h.b16 %v585
        %v720 = vunpack.c.l.b16 %v586
        %v721 = vunpack.c.h.b16 %v586
        %v722 = vunpack.c.l.b16 %v587
        %v723 = vunpack.c.h.b16 %v587
        %v724 = vunpack.c.l.b16 %v588
        %v725 = vunpack.c.h.b16 %v588
        %v726 = vunpack.c.l.b16 %v589
        %v727 = vunpack.c.h.b16 %v589
        %v728 = vunpack.c.l.b16 %v590
        %v729 = vunpack.c.h.b16 %v590
        %v730 = vunpack.c.l.b16 %v591
        %v731 = vunpack.c.h.b16 %v591
        %v732 = vunpack.c.l.b16 %v592
        %v733 = vunpack.c.h.b16 %v592
        %v734 = vunpack.c.l.b16 %v593
        %v735 = vunpack.c.h.b16 %v593
        %v736 = vunpack.c.l.b16 %v594
        %v737 = vunpack.c.h.b16 %v594
        %v738 = vunpack.c.l.b16 %v595
        %v739 = vunpack.c.h.b16 %v595
        %v740 = vpack.c.b16 %v710, %v708
        %v741 = vpack.c.b16 %v711, %v709
        %v742 = vpack.c.b16 %v714, %v712
        %v743 = vpack.c.b16 %v715, %v713
        %v744 = vpack.c.b16 %v718, %v716
        %v745 = vpack.c.b16 %v719, %v717
        %v746 = vpack.c.b16 %v722, %v720
        %v747 = vpack.c.b16 %v723, %v721
        %v748 = vpack.c.b16 %v726, %v724
        %v749 = vpack.c.b16 %v727, %v725
        %v750 = vpack.c.b16 %v730, %v728
        %v751 = vpack.c.b16 %v731, %v729
        %v752 = vpack.c.b16 %v734, %v732
        %v753 = vpack.c.b16 %v735, %v733
        %v754 = vpack.c.b16 %v738, %v736
        %v755 = vpack.c.b16 %v739, %v737
        %772 = vmatpush.bf16.msra.mxu0 %v754
        %773 = vmatpush.bf16.msra.mxu0 %v752
        %774 = vmatpush.bf16.msra.mxu0 %v750
        %775 = vmatpush.bf16.msra.mxu0 %v748
        %776 = vmatpush.bf16.msra.mxu0 %v746
        %777 = vmatpush.bf16.msra.mxu0 %v744
        %778 = vmatpush.bf16.msra.mxu0 %v742
        %779 = vmatpush.bf16.msra.mxu0 %v740
        %780 = vmatmul.bf16.gmra.mxu0 %v660
        %v781 = vpop.f32.mrf.mxu0
        %v782 = vadd.f32 0.0, %v781
        %v783 = vpop.f32.mrf.mxu0
        %v784 = vadd.f32 0.0, %v783
        %785 = vmatmul.bf16.gmra.mxu0 %v661
        %v786 = vpop.f32.mrf.mxu0
        %v787 = vadd.f32 0.0, %v786
        %v788 = vpop.f32.mrf.mxu0
        %v789 = vadd.f32 0.0, %v788
        %790 = vmatmul.bf16.gmra.mxu0 %v662
        %v791 = vpop.f32.mrf.mxu0
        %v792 = vadd.f32 0.0, %v791
        %v793 = vpop.f32.mrf.mxu0
        %v794 = vadd.f32 0.0, %v793
        %795 = vmatmul.bf16.gmra.mxu0 %v663
        %v796 = vpop.f32.mrf.mxu0
        %v797 = vadd.f32 0.0, %v796
        %v798 = vpop.f32.mrf.mxu0
        %v799 = vadd.f32 0.0, %v798
        %800 = vmatmul.bf16.gmra.mxu0 %v664
        %v801 = vpop.f32.mrf.mxu0
        %v802 = vadd.f32 0.0, %v801
        %v803 = vpop.f32.mrf.mxu0
        %v804 = vadd.f32 0.0, %v803
        %805 = vmatmul.bf16.gmra.mxu0 %v665
        %v806 = vpop.f32.mrf.mxu0
        %v807 = vadd.f32 0.0, %v806
        %v808 = vpop.f32.mrf.mxu0
        %v809 = vadd.f32 0.0, %v808
        %810 = vmatmul.bf16.gmra.mxu0 %v666
        %v811 = vpop.f32.mrf.mxu0
        %v812 = vadd.f32 0.0, %v811
        %v813 = vpop.f32.mrf.mxu0
        %v814 = vadd.f32 0.0, %v813
        %815 = vmatmul.bf16.gmra.mxu0 %v667
        %v816 = vpop.f32.mrf.mxu0
        %v817 = vadd.f32 0.0, %v816
        %v818 = vpop.f32.mrf.mxu0
        %v819 = vadd.f32 0.0, %v818
        %820 = vmatmul.bf16.gmra.mxu0 %v668
        %v821 = vpop.f32.mrf.mxu0
        %v822 = vadd.f32 0.0, %v821
        %v823 = vpop.f32.mrf.mxu0
        %v824 = vadd.f32 0.0, %v823
        %825 = vmatmul.bf16.gmra.mxu0 %v669
        %v826 = vpop.f32.mrf.mxu0
        %v827 = vadd.f32 0.0, %v826
        %v828 = vpop.f32.mrf.mxu0
        %v829 = vadd.f32 0.0, %v828
        %830 = vmatmul.bf16.gmra.mxu0 %v670
        %v831 = vpop.f32.mrf.mxu0
        %v832 = vadd.f32 0.0, %v831
        %v833 = vpop.f32.mrf.mxu0
        %v834 = vadd.f32 0.0, %v833
        %835 = vmatmul.bf16.gmra.mxu0 %v671
        %v836 = vpop.f32.mrf.mxu0
        %v837 = vadd.f32 0.0, %v836
        %v838 = vpop.f32.mrf.mxu0
        %v839 = vadd.f32 0.0, %v838
        %840 = vmatmul.bf16.gmra.mxu0 %v672
        %v841 = vpop.f32.mrf.mxu0
        %v842 = vadd.f32 0.0, %v841
        %v843 = vpop.f32.mrf.mxu0
        %v844 = vadd.f32 0.0, %v843
        %845 = vmatmul.bf16.gmra.mxu0 %v673
        %v846 = vpop.f32.mrf.mxu0
        %v847 = vadd.f32 0.0, %v846
        %v848 = vpop.f32.mrf.mxu0
        %v849 = vadd.f32 0.0, %v848
        %850 = vmatmul.bf16.gmra.mxu0 %v674
        %v851 = vpop.f32.mrf.mxu0
        %v852 = vadd.f32 0.0, %v851
        %v853 = vpop.f32.mrf.mxu0
        %v854 = vadd.f32 0.0, %v853
        %855 = vmatmul.bf16.gmra.mxu0 %v675
        %v856 = vpop.f32.mrf.mxu0
        %v857 = vadd.f32 0.0, %v856
        %v858 = vpop.f32.mrf.mxu0
        %v859 = vadd.f32 0.0, %v858
        %860 = vdwg.mxu0
        %861 = vmatpush.bf16.msra.mxu0 %v755
        %862 = vmatpush.bf16.msra.mxu0 %v753
        %863 = vmatpush.bf16.msra.mxu0 %v751
        %864 = vmatpush.bf16.msra.mxu0 %v749
        %865 = vmatpush.bf16.msra.mxu0 %v747
        %866 = vmatpush.bf16.msra.mxu0 %v745
        %867 = vmatpush.bf16.msra.mxu0 %v743
        %868 = vmatpush.bf16.msra.mxu0 %v741
        %869 = vmatmul.bf16.gmra.mxu0 %v660
        %v870 = vpop.f32.mrf.mxu0
        %v871 = vadd.f32 0.0, %v870
        %v872 = vpop.f32.mrf.mxu0
        %v873 = vadd.f32 0.0, %v872
        %874 = vmatmul.bf16.gmra.mxu0 %v661
        %v875 = vpop.f32.mrf.mxu0
        %v876 = vadd.f32 0.0, %v875
        %v877 = vpop.f32.mrf.mxu0
        %v878 = vadd.f32 0.0, %v877
        %879 = vmatmul.bf16.gmra.mxu0 %v662
        %v880 = vpop.f32.mrf.mxu0
        %v881 = vadd.f32 0.0, %v880
        %v882 = vpop.f32.mrf.mxu0
        %v883 = vadd.f32 0.0, %v882
        %884 = vmatmul.bf16.gmra.mxu0 %v663
        %v885 = vpop.f32.mrf.mxu0
        %v886 = vadd.f32 0.0, %v885
        %v887 = vpop.f32.mrf.mxu0
        %v888 = vadd.f32 0.0, %v887
        %889 = vmatmul.bf16.gmra.mxu0 %v664
        %v890 = vpop.f32.mrf.mxu0
        %v891 = vadd.f32 0.0, %v890
        %v892 = vpop.f32.mrf.mxu0
        %v893 = vadd.f32 0.0, %v892
        %894 = vmatmul.bf16.gmra.mxu0 %v665
        %v895 = vpop.f32.mrf.mxu0
        %v896 = vadd.f32 0.0, %v895
        %v897 = vpop.f32.mrf.mxu0
        %v898 = vadd.f32 0.0, %v897
        %899 = vmatmul.bf16.gmra.mxu0 %v666
        %v900 = vpop.f32.mrf.mxu0
        %v901 = vadd.f32 0.0, %v900
        %v902 = vpop.f32.mrf.mxu0
        %v903 = vadd.f32 0.0, %v902
        %904 = vmatmul.bf16.gmra.mxu0 %v667
        %v905 = vpop.f32.mrf.mxu0
        %v906 = vadd.f32 0.0, %v905
        %v907 = vpop.f32.mrf.mxu0
        %v908 = vadd.f32 0.0, %v907
        %909 = vmatmul.bf16.gmra.mxu0 %v668
        %v910 = vpop.f32.mrf.mxu0
        %v911 = vadd.f32 0.0, %v910
        %v912 = vpop.f32.mrf.mxu0
        %v913 = vadd.f32 0.0, %v912
        %914 = vmatmul.bf16.gmra.mxu0 %v669
        %v915 = vpop.f32.mrf.mxu0
        %v916 = vadd.f32 0.0, %v915
        %v917 = vpop.f32.mrf.mxu0
        %v918 = vadd.f32 0.0, %v917
        %919 = vmatmul.bf16.gmra.mxu0 %v670
        %v920 = vpop.f32.mrf.mxu0
        %v921 = vadd.f32 0.0, %v920
        %v922 = vpop.f32.mrf.mxu0
        %v923 = vadd.f32 0.0, %v922
        %924 = vmatmul.bf16.gmra.mxu0 %v671
        %v925 = vpop.f32.mrf.mxu0
        %v926 = vadd.f32 0.0, %v925
        %v927 = vpop.f32.mrf.mxu0
        %v928 = vadd.f32 0.0, %v927
        %929 = vmatmul.bf16.gmra.mxu0 %v672
        %v930 = vpop.f32.mrf.mxu0
        %v931 = vadd.f32 0.0, %v930
        %v932 = vpop.f32.mrf.mxu0
        %v933 = vadd.f32 0.0, %v932
        %934 = vmatmul.bf16.gmra.mxu0 %v673
        %v935 = vpop.f32.mrf.mxu0
        %v936 = vadd.f32 0.0, %v935
        %v937 = vpop.f32.mrf.mxu0
        %v938 = vadd.f32 0.0, %v937
        %939 = vmatmul.bf16.gmra.mxu0 %v674
        %v940 = vpop.f32.mrf.mxu0
        %v941 = vadd.f32 0.0, %v940
        %v942 = vpop.f32.mrf.mxu0
        %v943 = vadd.f32 0.0, %v942
        %944 = vmatmul.bf16.gmra.mxu0 %v675
        %v945 = vpop.f32.mrf.mxu0
        %v946 = vadd.f32 0.0, %v945
        %v947 = vpop.f32.mrf.mxu0
        %v948 = vadd.f32 0.0, %v947
        %949 = vdwg.mxu0
        %v982 = vunpack.c.l.b16 %v498
        %v983 = vunpack.c.l.b16 %v499
        %v984 = vunpack.c.l.b16 %v500
        %v985 = vunpack.c.l.b16 %v501
        %v986 = vunpack.c.l.b16 %v502
        %v987 = vunpack.c.l.b16 %v503
        %v988 = vunpack.c.l.b16 %v504
        %v989 = vunpack.c.l.b16 %v505
        %v990 = vunpack.c.l.b16 %v506
        %v991 = vunpack.c.l.b16 %v507
        %v992 = vunpack.c.l.b16 %v508
        %v993 = vunpack.c.l.b16 %v509
        %v994 = vunpack.c.l.b16 %v510
        %v995 = vunpack.c.l.b16 %v511
        %v996 = vunpack.c.l.b16 %v512
        %v997 = vunpack.c.l.b16 %v513
        %v998 = vunpack.c.l.b16 %v514
        %v999 = vunpack.c.l.b16 %v515
        %v1000 = vunpack.c.l.b16 %v516
        %v1001 = vunpack.c.l.b16 %v517
        %v1002 = vunpack.c.l.b16 %v518
        %v1003 = vunpack.c.l.b16 %v519
        %v1004 = vunpack.c.l.b16 %v520
        %v1005 = vunpack.c.l.b16 %v521
        %v1006 = vunpack.c.l.b16 %v522
        %v1007 = vunpack.c.l.b16 %v523
        %v1008 = vunpack.c.l.b16 %v524
        %v1009 = vunpack.c.l.b16 %v525
        %v1010 = vunpack.c.l.b16 %v526
        %v1011 = vunpack.c.l.b16 %v527
        %v1012 = vunpack.c.l.b16 %v528
        %v1013 = vunpack.c.l.b16 %v529
        %v1014 = vpack.c.b16 %v983, %v982
        %v1015 = vpack.c.b16 %v985, %v984
        %v1016 = vpack.c.b16 %v987, %v986
        %v1017 = vpack.c.b16 %v989, %v988
        %v1018 = vpack.c.b16 %v991, %v990
        %v1019 = vpack.c.b16 %v993, %v992
        %v1020 = vpack.c.b16 %v995, %v994
        %v1021 = vpack.c.b16 %v997, %v996
        %v1022 = vpack.c.b16 %v999, %v998
        %v1023 = vpack.c.b16 %v1001, %v1000
        %v1024 = vpack.c.b16 %v1003, %v1002
        %v1025 = vpack.c.b16 %v1005, %v1004
        %v1026 = vpack.c.b16 %v1007, %v1006
        %v1027 = vpack.c.b16 %v1009, %v1008
        %v1028 = vpack.c.b16 %v1011, %v1010
        %v1029 = vpack.c.b16 %v1013, %v1012
        %v1062 = vunpack.c.l.b16 %v563
        %v1063 = vunpack.c.h.b16 %v563
        %v1064 = vunpack.c.l.b16 %v564
        %v1065 = vunpack.c.h.b16 %v564
        %v1066 = vunpack.c.l.b16 %v565
        %v1067 = vunpack.c.h.b16 %v565
        %v1068 = vunpack.c.l.b16 %v566
        %v1069 = vunpack.c.h.b16 %v566
        %v1070 = vunpack.c.l.b16 %v567
        %v1071 = vunpack.c.h.b16 %v567
        %v1072 = vunpack.c.l.b16 %v568
        %v1073 = vunpack.c.h.b16 %v568
        %v1074 = vunpack.c.l.b16 %v569
        %v1075 = vunpack.c.h.b16 %v569
        %v1076 = vunpack.c.l.b16 %v570
        %v1077 = vunpack.c.h.b16 %v570
        %v1078 = vunpack.c.l.b16 %v571
        %v1079 = vunpack.c.h.b16 %v571
        %v1080 = vunpack.c.l.b16 %v572
        %v1081 = vunpack.c.h.b16 %v572
        %v1082 = vunpack.c.l.b16 %v573
        %v1083 = vunpack.c.h.b16 %v573
        %v1084 = vunpack.c.l.b16 %v574
        %v1085 = vunpack.c.h.b16 %v574
        %v1086 = vunpack.c.l.b16 %v575
        %v1087 = vunpack.c.h.b16 %v575
        %v1088 = vunpack.c.l.b16 %v576
        %v1089 = vunpack.c.h.b16 %v576
        %v1090 = vunpack.c.l.b16 %v577
        %v1091 = vunpack.c.h.b16 %v577
        %v1092 = vunpack.c.l.b16 %v578
        %v1093 = vunpack.c.h.b16 %v578
        %v1094 = vpack.c.b16 %v1064, %v1062
        %v1095 = vpack.c.b16 %v1065, %v1063
        %v1096 = vpack.c.b16 %v1068, %v1066
        %v1097 = vpack.c.b16 %v1069, %v1067
        %v1098 = vpack.c.b16 %v1072, %v1070
        %v1099 = vpack.c.b16 %v1073, %v1071
        %v1100 = vpack.c.b16 %v1076, %v1074
        %v1101 = vpack.c.b16 %v1077, %v1075
        %v1102 = vpack.c.b16 %v1080, %v1078
        %v1103 = vpack.c.b16 %v1081, %v1079
        %v1104 = vpack.c.b16 %v1084, %v1082
        %v1105 = vpack.c.b16 %v1085, %v1083
        %v1106 = vpack.c.b16 %v1088, %v1086
        %v1107 = vpack.c.b16 %v1089, %v1087
        %v1108 = vpack.c.b16 %v1092, %v1090
        %v1109 = vpack.c.b16 %v1093, %v1091
        %1126 = vmatpush.bf16.msra.mxu0 %v1108
        %1127 = vmatpush.bf16.msra.mxu0 %v1106
        %1128 = vmatpush.bf16.msra.mxu0 %v1104
        %1129 = vmatpush.bf16.msra.mxu0 %v1102
        %1130 = vmatpush.bf16.msra.mxu0 %v1100
        %1131 = vmatpush.bf16.msra.mxu0 %v1098
        %1132 = vmatpush.bf16.msra.mxu0 %v1096
        %1133 = vmatpush.bf16.msra.mxu0 %v1094
        %1134 = vmatmul.bf16.gmra.mxu0 %v1014
        %v1135 = vpop.f32.mrf.mxu0
        %v1136 = vadd.f32 %v782, %v1135
        %v1137 = vpop.f32.mrf.mxu0
        %v1138 = vadd.f32 %v784, %v1137
        %1139 = vmatmul.bf16.gmra.mxu0 %v1015
        %v1140 = vpop.f32.mrf.mxu0
        %v1141 = vadd.f32 %v787, %v1140
        %v1142 = vpop.f32.mrf.mxu0
        %v1143 = vadd.f32 %v789, %v1142
        %1144 = vmatmul.bf16.gmra.mxu0 %v1016
        %v1145 = vpop.f32.mrf.mxu0
        %v1146 = vadd.f32 %v792, %v1145
        %v1147 = vpop.f32.mrf.mxu0
        %v1148 = vadd.f32 %v794, %v1147
        %1149 = vmatmul.bf16.gmra.mxu0 %v1017
        %v1150 = vpop.f32.mrf.mxu0
        %v1151 = vadd.f32 %v797, %v1150
        %v1152 = vpop.f32.mrf.mxu0
        %v1153 = vadd.f32 %v799, %v1152
        %1154 = vmatmul.bf16.gmra.mxu0 %v1018
        %v1155 = vpop.f32.mrf.mxu0
        %v1156 = vadd.f32 %v802, %v1155
        %v1157 = vpop.f32.mrf.mxu0
        %v1158 = vadd.f32 %v804, %v1157
        %1159 = vmatmul.bf16.gmra.mxu0 %v1019
        %v1160 = vpop.f32.mrf.mxu0
        %v1161 = vadd.f32 %v807, %v1160
        %v1162 = vpop.f32.mrf.mxu0
        %v1163 = vadd.f32 %v809, %v1162
        %1164 = vmatmul.bf16.gmra.mxu0 %v1020
        %v1165 = vpop.f32.mrf.mxu0
        %v1166 = vadd.f32 %v812, %v1165
        %v1167 = vpop.f32.mrf.mxu0
        %v1168 = vadd.f32 %v814, %v1167
        %1169 = vmatmul.bf16.gmra.mxu0 %v1021
        %v1170 = vpop.f32.mrf.mxu0
        %v1171 = vadd.f32 %v817, %v1170
        %v1172 = vpop.f32.mrf.mxu0
        %v1173 = vadd.f32 %v819, %v1172
        %1174 = vmatmul.bf16.gmra.mxu0 %v1022
        %v1175 = vpop.f32.mrf.mxu0
        %v1176 = vadd.f32 %v822, %v1175
        %v1177 = vpop.f32.mrf.mxu0
        %v1178 = vadd.f32 %v824, %v1177
        %1179 = vmatmul.bf16.gmra.mxu0 %v1023
        %v1180 = vpop.f32.mrf.mxu0
        %v1181 = vadd.f32 %v827, %v1180
        %v1182 = vpop.f32.mrf.mxu0
        %v1183 = vadd.f32 %v829, %v1182
        %1184 = vmatmul.bf16.gmra.mxu0 %v1024
        %v1185 = vpop.f32.mrf.mxu0
        %v1186 = vadd.f32 %v832, %v1185
        %v1187 = vpop.f32.mrf.mxu0
        %v1188 = vadd.f32 %v834, %v1187
        %1189 = vmatmul.bf16.gmra.mxu0 %v1025
        %v1190 = vpop.f32.mrf.mxu0
        %v1191 = vadd.f32 %v837, %v1190
        %v1192 = vpop.f32.mrf.mxu0
        %v1193 = vadd.f32 %v839, %v1192
        %1194 = vmatmul.bf16.gmra.mxu0 %v1026
        %v1195 = vpop.f32.mrf.mxu0
        %v1196 = vadd.f32 %v842, %v1195
        %v1197 = vpop.f32.mrf.mxu0
        %v1198 = vadd.f32 %v844, %v1197
        %1199 = vmatmul.bf16.gmra.mxu0 %v1027
        %v1200 = vpop.f32.mrf.mxu0
        %v1201 = vadd.f32 %v847, %v1200
        %v1202 = vpop.f32.mrf.mxu0
        %v1203 = vadd.f32 %v849, %v1202
        %1204 = vmatmul.bf16.gmra.mxu0 %v1028
        %v1205 = vpop.f32.mrf.mxu0
        %v1206 = vadd.f32 %v852, %v1205
        %v1207 = vpop.f32.mrf.mxu0
        %v1208 = vadd.f32 %v854, %v1207
        %1209 = vmatmul.bf16.gmra.mxu0 %v1029
        %v1210 = vpop.f32.mrf.mxu0
        %v1211 = vadd.f32 %v857, %v1210
        %v1212 = vpop.f32.mrf.mxu0
        %v1213 = vadd.f32 %v859, %v1212
        %1214 = vdwg.mxu0
        %1215 = vmatpush.bf16.msra.mxu0 %v1109
        %1216 = vmatpush.bf16.msra.mxu0 %v1107
        %1217 = vmatpush.bf16.msra.mxu0 %v1105
        %1218 = vmatpush.bf16.msra.mxu0 %v1103
        %1219 = vmatpush.bf16.msra.mxu0 %v1101
        %1220 = vmatpush.bf16.msra.mxu0 %v1099
        %1221 = vmatpush.bf16.msra.mxu0 %v1097
        %1222 = vmatpush.bf16.msra.mxu0 %v1095
        %1223 = vmatmul.bf16.gmra.mxu0 %v1014
        %v1224 = vpop.f32.mrf.mxu0
        %v1225 = vadd.f32 %v871, %v1224
        %v1226 = vpop.f32.mrf.mxu0
        %v1227 = vadd.f32 %v873, %v1226
        %1228 = vmatmul.bf16.gmra.mxu0 %v1015
        %v1229 = vpop.f32.mrf.mxu0
        %v1230 = vadd.f32 %v876, %v1229
        %v1231 = vpop.f32.mrf.mxu0
        %v1232 = vadd.f32 %v878, %v1231
        %1233 = vmatmul.bf16.gmra.mxu0 %v1016
        %v1234 = vpop.f32.mrf.mxu0
        %v1235 = vadd.f32 %v881, %v1234
        %v1236 = vpop.f32.mrf.mxu0
        %v1237 = vadd.f32 %v883, %v1236
        %1238 = vmatmul.bf16.gmra.mxu0 %v1017
        %v1239 = vpop.f32.mrf.mxu0
        %v1240 = vadd.f32 %v886, %v1239
        %v1241 = vpop.f32.mrf.mxu0
        %v1242 = vadd.f32 %v888, %v1241
        %1243 = vmatmul.bf16.gmra.mxu0 %v1018
        %v1244 = vpop.f32.mrf.mxu0
        %v1245 = vadd.f32 %v891, %v1244
        %v1246 = vpop.f32.mrf.mxu0
        %v1247 = vadd.f32 %v893, %v1246
        %1248 = vmatmul.bf16.gmra.mxu0 %v1019
        %v1249 = vpop.f32.mrf.mxu0
        %v1250 = vadd.f32 %v896, %v1249
        %v1251 = vpop.f32.mrf.mxu0
        %v1252 = vadd.f32 %v898, %v1251
        %1253 = vmatmul.bf16.gmra.mxu0 %v1020
        %v1254 = vpop.f32.mrf.mxu0
        %v1255 = vadd.f32 %v901, %v1254
        %v1256 = vpop.f32.mrf.mxu0
        %v1257 = vadd.f32 %v903, %v1256
        %1258 = vmatmul.bf16.gmra.mxu0 %v1021
        %v1259 = vpop.f32.mrf.mxu0
        %v1260 = vadd.f32 %v906, %v1259
        %v1261 = vpop.f32.mrf.mxu0
        %v1262 = vadd.f32 %v908, %v1261
        %1263 = vmatmul.bf16.gmra.mxu0 %v1022
        %v1264 = vpop.f32.mrf.mxu0
        %v1265 = vadd.f32 %v911, %v1264
        %v1266 = vpop.f32.mrf.mxu0
        %v1267 = vadd.f32 %v913, %v1266
        %1268 = vmatmul.bf16.gmra.mxu0 %v1023
        %v1269 = vpop.f32.mrf.mxu0
        %v1270 = vadd.f32 %v916, %v1269
        %v1271 = vpop.f32.mrf.mxu0
        %v1272 = vadd.f32 %v918, %v1271
        %1273 = vmatmul.bf16.gmra.mxu0 %v1024
        %v1274 = vpop.f32.mrf.mxu0
        %v1275 = vadd.f32 %v921, %v1274
        %v1276 = vpop.f32.mrf.mxu0
        %v1277 = vadd.f32 %v923, %v1276
        %1278 = vmatmul.bf16.gmra.mxu0 %v1025
        %v1279 = vpop.f32.mrf.mxu0
        %v1280 = vadd.f32 %v926, %v1279
        %v1281 = vpop.f32.mrf.mxu0
        %v1282 = vadd.f32 %v928, %v1281
        %1283 = vmatmul.bf16.gmra.mxu0 %v1026
        %v1284 = vpop.f32.mrf.mxu0
        %v1285 = vadd.f32 %v931, %v1284
        %v1286 = vpop.f32.mrf.mxu0
        %v1287 = vadd.f32 %v933, %v1286
        %1288 = vmatmul.bf16.gmra.mxu0 %v1027
        %v1289 = vpop.f32.mrf.mxu0
        %v1290 = vadd.f32 %v936, %v1289
        %v1291 = vpop.f32.mrf.mxu0
        %v1292 = vadd.f32 %v938, %v1291
        %1293 = vmatmul.bf16.gmra.mxu0 %v1028
        %v1294 = vpop.f32.mrf.mxu0
        %v1295 = vadd.f32 %v941, %v1294
        %v1296 = vpop.f32.mrf.mxu0
        %v1297 = vadd.f32 %v943, %v1296
        %1298 = vmatmul.bf16.gmra.mxu0 %v1029
        %v1299 = vpop.f32.mrf.mxu0
        %v1300 = vadd.f32 %v946, %v1299
        %v1301 = vpop.f32.mrf.mxu0
        %v1302 = vadd.f32 %v948, %v1301
        %1303 = vdwg.mxu0
        %v1305 = vperm.slane %v497, 0
        %v1306 = vperm.slane %v497, 1
        %v1309 = vadd.f32 %v1136, %v1305
        %v1310 = vadd.f32 %v1225, %v1306
        %v1311 = vadd.f32 %v1138, %v1305
        %v1312 = vadd.f32 %v1227, %v1306
        %v1313 = vadd.f32 %v1141, %v1305
        %v1314 = vadd.f32 %v1230, %v1306
        %v1315 = vadd.f32 %v1143, %v1305
        %v1316 = vadd.f32 %v1232, %v1306
        %v1317 = vadd.f32 %v1146, %v1305
        %v1318 = vadd.f32 %v1235, %v1306
        %v1319 = vadd.f32 %v1148, %v1305
        %v1320 = vadd.f32 %v1237, %v1306
        %v1321 = vadd.f32 %v1151, %v1305
        %v1322 = vadd.f32 %v1240, %v1306
        %v1323 = vadd.f32 %v1153, %v1305
        %v1324 = vadd.f32 %v1242, %v1306
        %v1325 = vadd.f32 %v1156, %v1305
        %v1326 = vadd.f32 %v1245, %v1306
        %v1327 = vadd.f32 %v1158, %v1305
        %v1328 = vadd.f32 %v1247, %v1306
        %v1329 = vadd.f32 %v1161, %v1305
        %v1330 = vadd.f32 %v1250, %v1306
        %v1331 = vadd.f32 %v1163, %v1305
        %v1332 = vadd.f32 %v1252, %v1306
        %v1333 = vadd.f32 %v1166, %v1305
        %v1334 = vadd.f32 %v1255, %v1306
        %v1335 = vadd.f32 %v1168, %v1305
        %v1336 = vadd.f32 %v1257, %v1306
        %v1337 = vadd.f32 %v1171, %v1305
        %v1338 = vadd.f32 %v1260, %v1306
        %v1339 = vadd.f32 %v1173, %v1305
        %v1340 = vadd.f32 %v1262, %v1306
        %v1341 = vadd.f32 %v1176, %v1305
        %v1342 = vadd.f32 %v1265, %v1306
        %v1343 = vadd.f32 %v1178, %v1305
        %v1344 = vadd.f32 %v1267, %v1306
        %v1345 = vadd.f32 %v1181, %v1305
        %v1346 = vadd.f32 %v1270, %v1306
        %v1347 = vadd.f32 %v1183, %v1305
        %v1348 = vadd.f32 %v1272, %v1306
        %v1349 = vadd.f32 %v1186, %v1305
        %v1350 = vadd.f32 %v1275, %v1306
        %v1351 = vadd.f32 %v1188, %v1305
        %v1352 = vadd.f32 %v1277, %v1306
        %v1353 = vadd.f32 %v1191, %v1305
        %v1354 = vadd.f32 %v1280, %v1306
        %v1355 = vadd.f32 %v1193, %v1305
        %v1356 = vadd.f32 %v1282, %v1306
        %v1357 = vadd.f32 %v1196, %v1305
        %v1358 = vadd.f32 %v1285, %v1306
        %v1359 = vadd.f32 %v1198, %v1305
        %v1360 = vadd.f32 %v1287, %v1306
        %v1361 = vadd.f32 %v1201, %v1305
        %v1362 = vadd.f32 %v1290, %v1306
        %v1363 = vadd.f32 %v1203, %v1305
        %v1364 = vadd.f32 %v1292, %v1306
        %v1365 = vadd.f32 %v1206, %v1305
        %v1366 = vadd.f32 %v1295, %v1306
        %v1367 = vadd.f32 %v1208, %v1305
        %v1368 = vadd.f32 %v1297, %v1306
        %v1369 = vadd.f32 %v1211, %v1305
        %v1370 = vadd.f32 %v1300, %v1306
        %v1371 = vadd.f32 %v1213, %v1305
        %v1372 = vadd.f32 %v1302, %v1306
        %v1373 = vmax.f32 %v1309, 0.0
        %v1374 = vmax.f32 %v1310, 0.0
        %v1375 = vmax.f32 %v1311, 0.0
        %v1376 = vmax.f32 %v1312, 0.0
        %v1377 = vmax.f32 %v1313, 0.0
        %v1378 = vmax.f32 %v1314, 0.0
        %v1379 = vmax.f32 %v1315, 0.0
        %v1380 = vmax.f32 %v1316, 0.0
        %v1381 = vmax.f32 %v1317, 0.0
        %v1382 = vmax.f32 %v1318, 0.0
        %v1383 = vmax.f32 %v1319, 0.0
        %v1384 = vmax.f32 %v1320, 0.0
        %v1385 = vmax.f32 %v1321, 0.0
        %v1386 = vmax.f32 %v1322, 0.0
        %v1387 = vmax.f32 %v1323, 0.0
        %v1388 = vmax.f32 %v1324, 0.0
        %v1389 = vmax.f32 %v1325, 0.0
        %v1390 = vmax.f32 %v1326, 0.0
        %v1391 = vmax.f32 %v1327, 0.0
        %v1392 = vmax.f32 %v1328, 0.0
        %v1393 = vmax.f32 %v1329, 0.0
        %v1394 = vmax.f32 %v1330, 0.0
        %v1395 = vmax.f32 %v1331, 0.0
        %v1396 = vmax.f32 %v1332, 0.0
        %v1397 = vmax.f32 %v1333, 0.0
        %v1398 = vmax.f32 %v1334, 0.0
        %v1399 = vmax.f32 %v1335, 0.0
        %v1400 = vmax.f32 %v1336, 0.0
        %v1401 = vmax.f32 %v1337, 0.0
        %v1402 = vmax.f32 %v1338, 0.0
        %v1403 = vmax.f32 %v1339, 0.0
        %v1404 = vmax.f32 %v1340, 0.0
        %v1405 = vmax.f32 %v1341, 0.0
        %v1406 = vmax.f32 %v1342, 0.0
        %v1407 = vmax.f32 %v1343, 0.0
        %v1408 = vmax.f32 %v1344, 0.0
        %v1409 = vmax.f32 %v1345, 0.0
        %v1410 = vmax.f32 %v1346, 0.0
        %v1411 = vmax.f32 %v1347, 0.0
        %v1412 = vmax.f32 %v1348, 0.0
        %v1413 = vmax.f32 %v1349, 0.0
        %v1414 = vmax.f32 %v1350, 0.0
        %v1415 = vmax.f32 %v1351, 0.0
        %v1416 = vmax.f32 %v1352, 0.0
        %v1417 = vmax.f32 %v1353, 0.0
        %v1418 = vmax.f32 %v1354, 0.0
        %v1419 = vmax.f32 %v1355, 0.0
        %v1420 = vmax.f32 %v1356, 0.0
        %v1421 = vmax.f32 %v1357, 0.0
        %v1422 = vmax.f32 %v1358, 0.0
        %v1423 = vmax.f32 %v1359, 0.0
        %v1424 = vmax.f32 %v1360, 0.0
        %v1425 = vmax.f32 %v1361, 0.0
        %v1426 = vmax.f32 %v1362, 0.0
        %v1427 = vmax.f32 %v1363, 0.0
        %v1428 = vmax.f32 %v1364, 0.0
        %v1429 = vmax.f32 %v1365, 0.0
        %v1430 = vmax.f32 %v1366, 0.0
        %v1431 = vmax.f32 %v1367, 0.0
        %v1432 = vmax.f32 %v1368, 0.0
        %v1433 = vmax.f32 %v1369, 0.0
        %v1434 = vmax.f32 %v1370, 0.0
        %v1435 = vmax.f32 %v1371, 0.0
        %v1436 = vmax.f32 %v1372, 0.0
        %s1437 = scalar_lea.vmem %s1, 256
        %v1438 = vld [vmem:[%s1437] sm:$0xff]
        %v1439 = vld [vmem:[%s1437 + $0x8] sm:$0xff]
        %v1440 = vld [vmem:[%s1437 + $0x10] sm:$0xff]
        %v1441 = vld [vmem:[%s1437 + $0x18] sm:$0xff]
        %v1442 = vld [vmem:[%s1437 + $0x20] sm:$0xff]
        %v1443 = vld [vmem:[%s1437 + $0x28] sm:$0xff]
        %v1444 = vld [vmem:[%s1437 + $0x30] sm:$0xff]
        %v1445 = vld [vmem:[%s1437 + $0x38] sm:$0xff]
        %v1446 = vld [vmem:[%s1437 + $0x40] sm:$0xff]
        %v1447 = vld [vmem:[%s1437 + $0x48] sm:$0xff]
        %v1448 = vld [vmem:[%s1437 + $0x50] sm:$0xff]
        %v1449 = vld [vmem:[%s1437 + $0x58] sm:$0xff]
        %v1450 = vld [vmem:[%s1437 + $0x60] sm:$0xff]
        %v1451 = vld [vmem:[%s1437 + $0x68] sm:$0xff]
        %v1452 = vld [vmem:[%s1437 + $0x70] sm:$0xff]
        %v1453 = vld [vmem:[%s1437 + $0x78] sm:$0xff]
        %s1454 = scalar_lea.vmem %s1, 384
        %v1455 = vld [vmem:[%s1454] sm:$0xff]
        %v1456 = vld [vmem:[%s1454 + $0x8] sm:$0xff]
        %v1457 = vld [vmem:[%s1454 + $0x10] sm:$0xff]
        %v1458 = vld [vmem:[%s1454 + $0x18] sm:$0xff]
        %v1459 = vld [vmem:[%s1454 + $0x20] sm:$0xff]
        %v1460 = vld [vmem:[%s1454 + $0x28] sm:$0xff]
        %v1461 = vld [vmem:[%s1454 + $0x30] sm:$0xff]
        %v1462 = vld [vmem:[%s1454 + $0x38] sm:$0xff]
        %v1463 = vld [vmem:[%s1454 + $0x40] sm:$0xff]
        %v1464 = vld [vmem:[%s1454 + $0x48] sm:$0xff]
        %v1465 = vld [vmem:[%s1454 + $0x50] sm:$0xff]
        %v1466 = vld [vmem:[%s1454 + $0x58] sm:$0xff]
        %v1467 = vld [vmem:[%s1454 + $0x60] sm:$0xff]
        %v1468 = vld [vmem:[%s1454 + $0x68] sm:$0xff]
        %v1469 = vld [vmem:[%s1454 + $0x70] sm:$0xff]
        %v1470 = vld [vmem:[%s1454 + $0x78] sm:$0xff]
        %v1487 = vunpack.c.l.b16 %v1455
        %v1488 = vunpack.c.h.b16 %v1455
        %v1489 = vunpack.c.l.b16 %v1456
        %v1490 = vunpack.c.h.b16 %v1456
        %v1491 = vunpack.c.l.b16 %v1457
        %v1492 = vunpack.c.h.b16 %v1457
        %v1493 = vunpack.c.l.b16 %v1458
        %v1494 = vunpack.c.h.b16 %v1458
        %v1495 = vunpack.c.l.b16 %v1459
        %v1496 = vunpack.c.h.b16 %v1459
        %v1497 = vunpack.c.l.b16 %v1460
        %v1498 = vunpack.c.h.b16 %v1460
        %v1499 = vunpack.c.l.b16 %v1461
        %v1500 = vunpack.c.h.b16 %v1461
        %v1501 = vunpack.c.l.b16 %v1462
        %v1502 = vunpack.c.h.b16 %v1462
        %v1503 = vunpack.c.l.b16 %v1463
        %v1504 = vunpack.c.h.b16 %v1463
        %v1505 = vunpack.c.l.b16 %v1464
        %v1506 = vunpack.c.h.b16 %v1464
        %v1507 = vunpack.c.l.b16 %v1465
        %v1508 = vunpack.c.h.b16 %v1465
        %v1509 = vunpack.c.l.b16 %v1466
        %v1510 = vunpack.c.h.b16 %v1466
        %v1511 = vunpack.c.l.b16 %v1467
        %v1512 = vunpack.c.h.b16 %v1467
        %v1513 = vunpack.c.l.b16 %v1468
        %v1514 = vunpack.c.h.b16 %v1468
        %v1515 = vunpack.c.l.b16 %v1469
        %v1516 = vunpack.c.h.b16 %v1469
        %v1517 = vunpack.c.l.b16 %v1470
        %v1518 = vunpack.c.h.b16 %v1470
        %v1519 = vpack.c.b16 %v1489, %v1487
        %v1520 = vpack.c.b16 %v1490, %v1488
        %v1521 = vpack.c.b16 %v1493, %v1491
        %v1522 = vpack.c.b16 %v1494, %v1492
        %v1523 = vpack.c.b16 %v1497, %v1495
        %v1524 = vpack.c.b16 %v1498, %v1496
        %v1525 = vpack.c.b16 %v1501, %v1499
        %v1526 = vpack.c.b16 %v1502, %v1500
        %v1527 = vpack.c.b16 %v1505, %v1503
        %v1528 = vpack.c.b16 %v1506, %v1504
        %v1529 = vpack.c.b16 %v1509, %v1507
        %v1530 = vpack.c.b16 %v1510, %v1508
        %v1531 = vpack.c.b16 %v1513, %v1511
        %v1532 = vpack.c.b16 %v1514, %v1512
        %v1533 = vpack.c.b16 %v1517, %v1515
        %v1534 = vpack.c.b16 %v1518, %v1516
        %1551 = vmatpush.bf16.msra.mxu0 %v1533
        %1552 = vmatpush.bf16.msra.mxu0 %v1531
        %1553 = vmatpush.bf16.msra.mxu0 %v1529
        %1554 = vmatpush.bf16.msra.mxu0 %v1527
        %1555 = vmatpush.bf16.msra.mxu0 %v1525
        %1556 = vmatpush.bf16.msra.mxu0 %v1523
        %1557 = vmatpush.bf16.msra.mxu0 %v1521
        %1558 = vmatpush.bf16.msra.mxu0 %v1519
        %1559 = vmatmul.bf16.gmra.mxu0 %v660
        %v1560 = vpop.f32.mrf.mxu0
        %v1561 = vadd.f32 0.0, %v1560
        %v1562 = vpop.f32.mrf.mxu0
        %v1563 = vadd.f32 0.0, %v1562
        %1564 = vmatmul.bf16.gmra.mxu0 %v661
        %v1565 = vpop.f32.mrf.mxu0
        %v1566 = vadd.f32 0.0, %v1565
        %v1567 = vpop.f32.mrf.mxu0
        %v1568 = vadd.f32 0.0, %v1567
        %1569 = vmatmul.bf16.gmra.mxu0 %v662
        %v1570 = vpop.f32.mrf.mxu0
        %v1571 = vadd.f32 0.0, %v1570
        %v1572 = vpop.f32.mrf.mxu0
        %v1573 = vadd.f32 0.0, %v1572
        %1574 = vmatmul.bf16.gmra.mxu0 %v663
        %v1575 = vpop.f32.mrf.mxu0
        %v1576 = vadd.f32 0.0, %v1575
        %v1577 = vpop.f32.mrf.mxu0
        %v1578 = vadd.f32 0.0, %v1577
        %1579 = vmatmul.bf16.gmra.mxu0 %v664
        %v1580 = vpop.f32.mrf.mxu0
        %v1581 = vadd.f32 0.0, %v1580
        %v1582 = vpop.f32.mrf.mxu0
        %v1583 = vadd.f32 0.0, %v1582
        %1584 = vmatmul.bf16.gmra.mxu0 %v665
        %v1585 = vpop.f32.mrf.mxu0
        %v1586 = vadd.f32 0.0, %v1585
        %v1587 = vpop.f32.mrf.mxu0
        %v1588 = vadd.f32 0.0, %v1587
        %1589 = vmatmul.bf16.gmra.mxu0 %v666
        %v1590 = vpop.f32.mrf.mxu0
        %v1591 = vadd.f32 0.0, %v1590
        %v1592 = vpop.f32.mrf.mxu0
        %v1593 = vadd.f32 0.0, %v1592
        %1594 = vmatmul.bf16.gmra.mxu0 %v667
        %v1595 = vpop.f32.mrf.mxu0
        %v1596 = vadd.f32 0.0, %v1595
        %v1597 = vpop.f32.mrf.mxu0
        %v1598 = vadd.f32 0.0, %v1597
        %1599 = vmatmul.bf16.gmra.mxu0 %v668
        %v1600 = vpop.f32.mrf.mxu0
        %v1601 = vadd.f32 0.0, %v1600
        %v1602 = vpop.f32.mrf.mxu0
        %v1603 = vadd.f32 0.0, %v1602
        %1604 = vmatmul.bf16.gmra.mxu0 %v669
        %v1605 = vpop.f32.mrf.mxu0
        %v1606 = vadd.f32 0.0, %v1605
        %v1607 = vpop.f32.mrf.mxu0
        %v1608 = vadd.f32 0.0, %v1607
        %1609 = vmatmul.bf16.gmra.mxu0 %v670
        %v1610 = vpop.f32.mrf.mxu0
        %v1611 = vadd.f32 0.0, %v1610
        %v1612 = vpop.f32.mrf.mxu0
        %v1613 = vadd.f32 0.0, %v1612
        %1614 = vmatmul.bf16.gmra.mxu0 %v671
        %v1615 = vpop.f32.mrf.mxu0
        %v1616 = vadd.f32 0.0, %v1615
        %v1617 = vpop.f32.mrf.mxu0
        %v1618 = vadd.f32 0.0, %v1617
        %1619 = vmatmul.bf16.gmra.mxu0 %v672
        %v1620 = vpop.f32.mrf.mxu0
        %v1621 = vadd.f32 0.0, %v1620
        %v1622 = vpop.f32.mrf.mxu0
        %v1623 = vadd.f32 0.0, %v1622
        %1624 = vmatmul.bf16.gmra.mxu0 %v673
        %v1625 = vpop.f32.mrf.mxu0
        %v1626 = vadd.f32 0.0, %v1625
        %v1627 = vpop.f32.mrf.mxu0
        %v1628 = vadd.f32 0.0, %v1627
        %1629 = vmatmul.bf16.gmra.mxu0 %v674
        %v1630 = vpop.f32.mrf.mxu0
        %v1631 = vadd.f32 0.0, %v1630
        %v1632 = vpop.f32.mrf.mxu0
        %v1633 = vadd.f32 0.0, %v1632
        %1634 = vmatmul.bf16.gmra.mxu0 %v675
        %v1635 = vpop.f32.mrf.mxu0
        %v1636 = vadd.f32 0.0, %v1635
        %v1637 = vpop.f32.mrf.mxu0
        %v1638 = vadd.f32 0.0, %v1637
        %1639 = vdwg.mxu0
        %1640 = vmatpush.bf16.msra.mxu0 %v1534
        %1641 = vmatpush.bf16.msra.mxu0 %v1532
        %1642 = vmatpush.bf16.msra.mxu0 %v1530
        %1643 = vmatpush.bf16.msra.mxu0 %v1528
        %1644 = vmatpush.bf16.msra.mxu0 %v1526
        %1645 = vmatpush.bf16.msra.mxu0 %v1524
        %1646 = vmatpush.bf16.msra.mxu0 %v1522
        %1647 = vmatpush.bf16.msra.mxu0 %v1520
        %1648 = vmatmul.bf16.gmra.mxu0 %v660
        %v1649 = vpop.f32.mrf.mxu0
        %v1650 = vadd.f32 0.0, %v1649
        %v1651 = vpop.f32.mrf.mxu0
        %v1652 = vadd.f32 0.0, %v1651
        %1653 = vmatmul.bf16.gmra.mxu0 %v661
        %v1654 = vpop.f32.mrf.mxu0
        %v1655 = vadd.f32 0.0, %v1654
        %v1656 = vpop.f32.mrf.mxu0
        %v1657 = vadd.f32 0.0, %v1656
        %1658 = vmatmul.bf16.gmra.mxu0 %v662
        %v1659 = vpop.f32.mrf.mxu0
        %v1660 = vadd.f32 0.0, %v1659
        %v1661 = vpop.f32.mrf.mxu0
        %v1662 = vadd.f32 0.0, %v1661
        %1663 = vmatmul.bf16.gmra.mxu0 %v663
        %v1664 = vpop.f32.mrf.mxu0
        %v1665 = vadd.f32 0.0, %v1664
        %v1666 = vpop.f32.mrf.mxu0
        %v1667 = vadd.f32 0.0, %v1666
        %1668 = vmatmul.bf16.gmra.mxu0 %v664
        %v1669 = vpop.f32.mrf.mxu0
        %v1670 = vadd.f32 0.0, %v1669
        %v1671 = vpop.f32.mrf.mxu0
        %v1672 = vadd.f32 0.0, %v1671
        %1673 = vmatmul.bf16.gmra.mxu0 %v665
        %v1674 = vpop.f32.mrf.mxu0
        %v1675 = vadd.f32 0.0, %v1674
        %v1676 = vpop.f32.mrf.mxu0
        %v1677 = vadd.f32 0.0, %v1676
        %1678 = vmatmul.bf16.gmra.mxu0 %v666
        %v1679 = vpop.f32.mrf.mxu0
        %v1680 = vadd.f32 0.0, %v1679
        %v1681 = vpop.f32.mrf.mxu0
        %v1682 = vadd.f32 0.0, %v1681
        %1683 = vmatmul.bf16.gmra.mxu0 %v667
        %v1684 = vpop.f32.mrf.mxu0
        %v1685 = vadd.f32 0.0, %v1684
        %v1686 = vpop.f32.mrf.mxu0
        %v1687 = vadd.f32 0.0, %v1686
        %1688 = vmatmul.bf16.gmra.mxu0 %v668
        %v1689 = vpop.f32.mrf.mxu0
        %v1690 = vadd.f32 0.0, %v1689
        %v1691 = vpop.f32.mrf.mxu0
        %v1692 = vadd.f32 0.0, %v1691
        %1693 = vmatmul.bf16.gmra.mxu0 %v669
        %v1694 = vpop.f32.mrf.mxu0
        %v1695 = vadd.f32 0.0, %v1694
        %v1696 = vpop.f32.mrf.mxu0
        %v1697 = vadd.f32 0.0, %v1696
        %1698 = vmatmul.bf16.gmra.mxu0 %v670
        %v1699 = vpop.f32.mrf.mxu0
        %v1700 = vadd.f32 0.0, %v1699
        %v1701 = vpop.f32.mrf.mxu0
        %v1702 = vadd.f32 0.0, %v1701
        %1703 = vmatmul.bf16.gmra.mxu0 %v671
        %v1704 = vpop.f32.mrf.mxu0
        %v1705 = vadd.f32 0.0, %v1704
        %v1706 = vpop.f32.mrf.mxu0
        %v1707 = vadd.f32 0.0, %v1706
        %1708 = vmatmul.bf16.gmra.mxu0 %v672
        %v1709 = vpop.f32.mrf.mxu0
        %v1710 = vadd.f32 0.0, %v1709
        %v1711 = vpop.f32.mrf.mxu0
        %v1712 = vadd.f32 0.0, %v1711
        %1713 = vmatmul.bf16.gmra.mxu0 %v673
        %v1714 = vpop.f32.mrf.mxu0
        %v1715 = vadd.f32 0.0, %v1714
        %v1716 = vpop.f32.mrf.mxu0
        %v1717 = vadd.f32 0.0, %v1716
        %1718 = vmatmul.bf16.gmra.mxu0 %v674
        %v1719 = vpop.f32.mrf.mxu0
        %v1720 = vadd.f32 0.0, %v1719
        %v1721 = vpop.f32.mrf.mxu0
        %v1722 = vadd.f32 0.0, %v1721
        %1723 = vmatmul.bf16.gmra.mxu0 %v675
        %v1724 = vpop.f32.mrf.mxu0
        %v1725 = vadd.f32 0.0, %v1724
        %v1726 = vpop.f32.mrf.mxu0
        %v1727 = vadd.f32 0.0, %v1726
        %1728 = vdwg.mxu0
        %v1745 = vunpack.c.l.b16 %v1438
        %v1746 = vunpack.c.h.b16 %v1438
        %v1747 = vunpack.c.l.b16 %v1439
        %v1748 = vunpack.c.h.b16 %v1439
        %v1749 = vunpack.c.l.b16 %v1440
        %v1750 = vunpack.c.h.b16 %v1440
        %v1751 = vunpack.c.l.b16 %v1441
        %v1752 = vunpack.c.h.b16 %v1441
        %v1753 = vunpack.c.l.b16 %v1442
        %v1754 = vunpack.c.h.b16 %v1442
        %v1755 = vunpack.c.l.b16 %v1443
        %v1756 = vunpack.c.h.b16 %v1443
        %v1757 = vunpack.c.l.b16 %v1444
        %v1758 = vunpack.c.h.b16 %v1444
        %v1759 = vunpack.c.l.b16 %v1445
        %v1760 = vunpack.c.h.b16 %v1445
        %v1761 = vunpack.c.l.b16 %v1446
        %v1762 = vunpack.c.h.b16 %v1446
        %v1763 = vunpack.c.l.b16 %v1447
        %v1764 = vunpack.c.h.b16 %v1447
        %v1765 = vunpack.c.l.b16 %v1448
        %v1766 = vunpack.c.h.b16 %v1448
        %v1767 = vunpack.c.l.b16 %v1449
        %v1768 = vunpack.c.h.b16 %v1449
        %v1769 = vunpack.c.l.b16 %v1450
        %v1770 = vunpack.c.h.b16 %v1450
        %v1771 = vunpack.c.l.b16 %v1451
        %v1772 = vunpack.c.h.b16 %v1451
        %v1773 = vunpack.c.l.b16 %v1452
        %v1774 = vunpack.c.h.b16 %v1452
        %v1775 = vunpack.c.l.b16 %v1453
        %v1776 = vunpack.c.h.b16 %v1453
        %v1777 = vpack.c.b16 %v1747, %v1745
        %v1778 = vpack.c.b16 %v1748, %v1746
        %v1779 = vpack.c.b16 %v1751, %v1749
        %v1780 = vpack.c.b16 %v1752, %v1750
        %v1781 = vpack.c.b16 %v1755, %v1753
        %v1782 = vpack.c.b16 %v1756, %v1754
        %v1783 = vpack.c.b16 %v1759, %v1757
        %v1784 = vpack.c.b16 %v1760, %v1758
        %v1785 = vpack.c.b16 %v1763, %v1761
        %v1786 = vpack.c.b16 %v1764, %v1762
        %v1787 = vpack.c.b16 %v1767, %v1765
        %v1788 = vpack.c.b16 %v1768, %v1766
        %v1789 = vpack.c.b16 %v1771, %v1769
        %v1790 = vpack.c.b16 %v1772, %v1770
        %v1791 = vpack.c.b16 %v1775, %v1773
        %v1792 = vpack.c.b16 %v1776, %v1774
        %1809 = vmatpush.bf16.msra.mxu0 %v1791
        %1810 = vmatpush.bf16.msra.mxu0 %v1789
        %1811 = vmatpush.bf16.msra.mxu0 %v1787
        %1812 = vmatpush.bf16.msra.mxu0 %v1785
        %1813 = vmatpush.bf16.msra.mxu0 %v1783
        %1814 = vmatpush.bf16.msra.mxu0 %v1781
        %1815 = vmatpush.bf16.msra.mxu0 %v1779
        %1816 = vmatpush.bf16.msra.mxu0 %v1777
        %1817 = vmatmul.bf16.gmra.mxu0 %v1014
        %v1818 = vpop.f32.mrf.mxu0
        %v1819 = vadd.f32 %v1561, %v1818
        %v1820 = vpop.f32.mrf.mxu0
        %v1821 = vadd.f32 %v1563, %v1820
        %1822 = vmatmul.bf16.gmra.mxu0 %v1015
        %v1823 = vpop.f32.mrf.mxu0
        %v1824 = vadd.f32 %v1566, %v1823
        %v1825 = vpop.f32.mrf.mxu0
        %v1826 = vadd.f32 %v1568, %v1825
        %1827 = vmatmul.bf16.gmra.mxu0 %v1016
        %v1828 = vpop.f32.mrf.mxu0
        %v1829 = vadd.f32 %v1571, %v1828
        %v1830 = vpop.f32.mrf.mxu0
        %v1831 = vadd.f32 %v1573, %v1830
        %1832 = vmatmul.bf16.gmra.mxu0 %v1017
        %v1833 = vpop.f32.mrf.mxu0
        %v1834 = vadd.f32 %v1576, %v1833
        %v1835 = vpop.f32.mrf.mxu0
        %v1836 = vadd.f32 %v1578, %v1835
        %1837 = vmatmul.bf16.gmra.mxu0 %v1018
        %v1838 = vpop.f32.mrf.mxu0
        %v1839 = vadd.f32 %v1581, %v1838
        %v1840 = vpop.f32.mrf.mxu0
        %v1841 = vadd.f32 %v1583, %v1840
        %1842 = vmatmul.bf16.gmra.mxu0 %v1019
        %v1843 = vpop.f32.mrf.mxu0
        %v1844 = vadd.f32 %v1586, %v1843
        %v1845 = vpop.f32.mrf.mxu0
        %v1846 = vadd.f32 %v1588, %v1845
        %1847 = vmatmul.bf16.gmra.mxu0 %v1020
        %v1848 = vpop.f32.mrf.mxu0
        %v1849 = vadd.f32 %v1591, %v1848
        %v1850 = vpop.f32.mrf.mxu0
        %v1851 = vadd.f32 %v1593, %v1850
        %1852 = vmatmul.bf16.gmra.mxu0 %v1021
        %v1853 = vpop.f32.mrf.mxu0
        %v1854 = vadd.f32 %v1596, %v1853
        %v1855 = vpop.f32.mrf.mxu0
        %v1856 = vadd.f32 %v1598, %v1855
        %1857 = vmatmul.bf16.gmra.mxu0 %v1022
        %v1858 = vpop.f32.mrf.mxu0
        %v1859 = vadd.f32 %v1601, %v1858
        %v1860 = vpop.f32.mrf.mxu0
        %v1861 = vadd.f32 %v1603, %v1860
        %1862 = vmatmul.bf16.gmra.mxu0 %v1023
        %v1863 = vpop.f32.mrf.mxu0
        %v1864 = vadd.f32 %v1606, %v1863
        %v1865 = vpop.f32.mrf.mxu0
        %v1866 = vadd.f32 %v1608, %v1865
        %1867 = vmatmul.bf16.gmra.mxu0 %v1024
        %v1868 = vpop.f32.mrf.mxu0
        %v1869 = vadd.f32 %v1611, %v1868
        %v1870 = vpop.f32.mrf.mxu0
        %v1871 = vadd.f32 %v1613, %v1870
        %1872 = vmatmul.bf16.gmra.mxu0 %v1025
        %v1873 = vpop.f32.mrf.mxu0
        %v1874 = vadd.f32 %v1616, %v1873
        %v1875 = vpop.f32.mrf.mxu0
        %v1876 = vadd.f32 %v1618, %v1875
        %1877 = vmatmul.bf16.gmra.mxu0 %v1026
        %v1878 = vpop.f32.mrf.mxu0
        %v1879 = vadd.f32 %v1621, %v1878
        %v1880 = vpop.f32.mrf.mxu0
        %v1881 = vadd.f32 %v1623, %v1880
        %1882 = vmatmul.bf16.gmra.mxu0 %v1027
        %v1883 = vpop.f32.mrf.mxu0
        %v1884 = vadd.f32 %v1626, %v1883
        %v1885 = vpop.f32.mrf.mxu0
        %v1886 = vadd.f32 %v1628, %v1885
        %1887 = vmatmul.bf16.gmra.mxu0 %v1028
        %v1888 = vpop.f32.mrf.mxu0
        %v1889 = vadd.f32 %v1631, %v1888
        %v1890 = vpop.f32.mrf.mxu0
        %v1891 = vadd.f32 %v1633, %v1890
        %1892 = vmatmul.bf16.gmra.mxu0 %v1029
        %v1893 = vpop.f32.mrf.mxu0
        %v1894 = vadd.f32 %v1636, %v1893
        %v1895 = vpop.f32.mrf.mxu0
        %v1896 = vadd.f32 %v1638, %v1895
        %1897 = vdwg.mxu0
        %1898 = vmatpush.bf16.msra.mxu0 %v1792
        %1899 = vmatpush.bf16.msra.mxu0 %v1790
        %1900 = vmatpush.bf16.msra.mxu0 %v1788
        %1901 = vmatpush.bf16.msra.mxu0 %v1786
        %1902 = vmatpush.bf16.msra.mxu0 %v1784
        %1903 = vmatpush.bf16.msra.mxu0 %v1782
        %1904 = vmatpush.bf16.msra.mxu0 %v1780
        %1905 = vmatpush.bf16.msra.mxu0 %v1778
        %1906 = vmatmul.bf16.gmra.mxu0 %v1014
        %v1907 = vpop.f32.mrf.mxu0
        %v1908 = vadd.f32 %v1650, %v1907
        %v1909 = vpop.f32.mrf.mxu0
        %v1910 = vadd.f32 %v1652, %v1909
        %1911 = vmatmul.bf16.gmra.mxu0 %v1015
        %v1912 = vpop.f32.mrf.mxu0
        %v1913 = vadd.f32 %v1655, %v1912
        %v1914 = vpop.f32.mrf.mxu0
        %v1915 = vadd.f32 %v1657, %v1914
        %1916 = vmatmul.bf16.gmra.mxu0 %v1016
        %v1917 = vpop.f32.mrf.mxu0
        %v1918 = vadd.f32 %v1660, %v1917
        %v1919 = vpop.f32.mrf.mxu0
        %v1920 = vadd.f32 %v1662, %v1919
        %1921 = vmatmul.bf16.gmra.mxu0 %v1017
        %v1922 = vpop.f32.mrf.mxu0
        %v1923 = vadd.f32 %v1665, %v1922
        %v1924 = vpop.f32.mrf.mxu0
        %v1925 = vadd.f32 %v1667, %v1924
        %1926 = vmatmul.bf16.gmra.mxu0 %v1018
        %v1927 = vpop.f32.mrf.mxu0
        %v1928 = vadd.f32 %v1670, %v1927
        %v1929 = vpop.f32.mrf.mxu0
        %v1930 = vadd.f32 %v1672, %v1929
        %1931 = vmatmul.bf16.gmra.mxu0 %v1019
        %v1932 = vpop.f32.mrf.mxu0
        %v1933 = vadd.f32 %v1675, %v1932
        %v1934 = vpop.f32.mrf.mxu0
        %v1935 = vadd.f32 %v1677, %v1934
        %1936 = vmatmul.bf16.gmra.mxu0 %v1020
        %v1937 = vpop.f32.mrf.mxu0
        %v1938 = vadd.f32 %v1680, %v1937
        %v1939 = vpop.f32.mrf.mxu0
        %v1940 = vadd.f32 %v1682, %v1939
        %1941 = vmatmul.bf16.gmra.mxu0 %v1021
        %v1942 = vpop.f32.mrf.mxu0
        %v1943 = vadd.f32 %v1685, %v1942
        %v1944 = vpop.f32.mrf.mxu0
        %v1945 = vadd.f32 %v1687, %v1944
        %1946 = vmatmul.bf16.gmra.mxu0 %v1022
        %v1947 = vpop.f32.mrf.mxu0
        %v1948 = vadd.f32 %v1690, %v1947
        %v1949 = vpop.f32.mrf.mxu0
        %v1950 = vadd.f32 %v1692, %v1949
        %1951 = vmatmul.bf16.gmra.mxu0 %v1023
        %v1952 = vpop.f32.mrf.mxu0
        %v1953 = vadd.f32 %v1695, %v1952
        %v1954 = vpop.f32.mrf.mxu0
        %v1955 = vadd.f32 %v1697, %v1954
        %1956 = vmatmul.bf16.gmra.mxu0 %v1024
        %v1957 = vpop.f32.mrf.mxu0
        %v1958 = vadd.f32 %v1700, %v1957
        %v1959 = vpop.f32.mrf.mxu0
        %v1960 = vadd.f32 %v1702, %v1959
        %1961 = vmatmul.bf16.gmra.mxu0 %v1025
        %v1962 = vpop.f32.mrf.mxu0
        %v1963 = vadd.f32 %v1705, %v1962
        %v1964 = vpop.f32.mrf.mxu0
        %v1965 = vadd.f32 %v1707, %v1964
        %1966 = vmatmul.bf16.gmra.mxu0 %v1026
        %v1967 = vpop.f32.mrf.mxu0
        %v1968 = vadd.f32 %v1710, %v1967
        %v1969 = vpop.f32.mrf.mxu0
        %v1970 = vadd.f32 %v1712, %v1969
        %1971 = vmatmul.bf16.gmra.mxu0 %v1027
        %v1972 = vpop.f32.mrf.mxu0
        %v1973 = vadd.f32 %v1715, %v1972
        %v1974 = vpop.f32.mrf.mxu0
        %v1975 = vadd.f32 %v1717, %v1974
        %1976 = vmatmul.bf16.gmra.mxu0 %v1028
        %v1977 = vpop.f32.mrf.mxu0
        %v1978 = vadd.f32 %v1720, %v1977
        %v1979 = vpop.f32.mrf.mxu0
        %v1980 = vadd.f32 %v1722, %v1979
        %1981 = vmatmul.bf16.gmra.mxu0 %v1029
        %v1982 = vpop.f32.mrf.mxu0
        %v1983 = vadd.f32 %v1725, %v1982
        %v1984 = vpop.f32.mrf.mxu0
        %v1985 = vadd.f32 %v1727, %v1984
        %1986 = vdwg.mxu0
        %v1987 = vadd.f32 %v1819, %v1305
        %v1988 = vadd.f32 %v1908, %v1306
        %v1989 = vadd.f32 %v1821, %v1305
        %v1990 = vadd.f32 %v1910, %v1306
        %v1991 = vadd.f32 %v1824, %v1305
        %v1992 = vadd.f32 %v1913, %v1306
        %v1993 = vadd.f32 %v1826, %v1305
        %v1994 = vadd.f32 %v1915, %v1306
        %v1995 = vadd.f32 %v1829, %v1305
        %v1996 = vadd.f32 %v1918, %v1306
        %v1997 = vadd.f32 %v1831, %v1305
        %v1998 = vadd.f32 %v1920, %v1306
        %v1999 = vadd.f32 %v1834, %v1305
        %v2000 = vadd.f32 %v1923, %v1306
        %v2001 = vadd.f32 %v1836, %v1305
        %v2002 = vadd.f32 %v1925, %v1306
        %v2003 = vadd.f32 %v1839, %v1305
        %v2004 = vadd.f32 %v1928, %v1306
        %v2005 = vadd.f32 %v1841, %v1305
        %v2006 = vadd.f32 %v1930, %v1306
        %v2007 = vadd.f32 %v1844, %v1305
        %v2008 = vadd.f32 %v1933, %v1306
        %v2009 = vadd.f32 %v1846, %v1305
        %v2010 = vadd.f32 %v1935, %v1306
        %v2011 = vadd.f32 %v1849, %v1305
        %v2012 = vadd.f32 %v1938, %v1306
        %v2013 = vadd.f32 %v1851, %v1305
        %v2014 = vadd.f32 %v1940, %v1306
        %v2015 = vadd.f32 %v1854, %v1305
        %v2016 = vadd.f32 %v1943, %v1306
        %v2017 = vadd.f32 %v1856, %v1305
        %v2018 = vadd.f32 %v1945, %v1306
        %v2019 = vadd.f32 %v1859, %v1305
        %v2020 = vadd.f32 %v1948, %v1306
        %v2021 = vadd.f32 %v1861, %v1305
        %v2022 = vadd.f32 %v1950, %v1306
        %v2023 = vadd.f32 %v1864, %v1305
        %v2024 = vadd.f32 %v1953, %v1306
        %v2025 = vadd.f32 %v1866, %v1305
        %v2026 = vadd.f32 %v1955, %v1306
        %v2027 = vadd.f32 %v1869, %v1305
        %v2028 = vadd.f32 %v1958, %v1306
        %v2029 = vadd.f32 %v1871, %v1305
        %v2030 = vadd.f32 %v1960, %v1306
        %v2031 = vadd.f32 %v1874, %v1305
        %v2032 = vadd.f32 %v1963, %v1306
        %v2033 = vadd.f32 %v1876, %v1305
        %v2034 = vadd.f32 %v1965, %v1306
        %v2035 = vadd.f32 %v1879, %v1305
        %v2036 = vadd.f32 %v1968, %v1306
        %v2037 = vadd.f32 %v1881, %v1305
        %v2038 = vadd.f32 %v1970, %v1306
        %v2039 = vadd.f32 %v1884, %v1305
        %v2040 = vadd.f32 %v1973, %v1306
        %v2041 = vadd.f32 %v1886, %v1305
        %v2042 = vadd.f32 %v1975, %v1306
        %v2043 = vadd.f32 %v1889, %v1305
        %v2044 = vadd.f32 %v1978, %v1306
        %v2045 = vadd.f32 %v1891, %v1305
        %v2046 = vadd.f32 %v1980, %v1306
        %v2047 = vadd.f32 %v1894, %v1305
        %v2048 = vadd.f32 %v1983, %v1306
        %v2049 = vadd.f32 %v1896, %v1305
        %v2050 = vadd.f32 %v1985, %v1306
        %v2051 = vmax.f32 %v1987, 0.0
        %v2052 = vmax.f32 %v1988, 0.0
        %v2053 = vmax.f32 %v1989, 0.0
        %v2054 = vmax.f32 %v1990, 0.0
        %v2055 = vmax.f32 %v1991, 0.0
        %v2056 = vmax.f32 %v1992, 0.0
        %v2057 = vmax.f32 %v1993, 0.0
        %v2058 = vmax.f32 %v1994, 0.0
        %v2059 = vmax.f32 %v1995, 0.0
        %v2060 = vmax.f32 %v1996, 0.0
        %v2061 = vmax.f32 %v1997, 0.0
        %v2062 = vmax.f32 %v1998, 0.0
        %v2063 = vmax.f32 %v1999, 0.0
        %v2064 = vmax.f32 %v2000, 0.0
        %v2065 = vmax.f32 %v2001, 0.0
        %v2066 = vmax.f32 %v2002, 0.0
        %v2067 = vmax.f32 %v2003, 0.0
        %v2068 = vmax.f32 %v2004, 0.0
        %v2069 = vmax.f32 %v2005, 0.0
        %v2070 = vmax.f32 %v2006, 0.0
        %v2071 = vmax.f32 %v2007, 0.0
        %v2072 = vmax.f32 %v2008, 0.0
        %v2073 = vmax.f32 %v2009, 0.0
        %v2074 = vmax.f32 %v2010, 0.0
        %v2075 = vmax.f32 %v2011, 0.0
        %v2076 = vmax.f32 %v2012, 0.0
        %v2077 = vmax.f32 %v2013, 0.0
        %v2078 = vmax.f32 %v2014, 0.0
        %v2079 = vmax.f32 %v2015, 0.0
        %v2080 = vmax.f32 %v2016, 0.0
        %v2081 = vmax.f32 %v2017, 0.0
        %v2082 = vmax.f32 %v2018, 0.0
        %v2083 = vmax.f32 %v2019, 0.0
        %v2084 = vmax.f32 %v2020, 0.0
        %v2085 = vmax.f32 %v2021, 0.0
        %v2086 = vmax.f32 %v2022, 0.0
        %v2087 = vmax.f32 %v2023, 0.0
        %v2088 = vmax.f32 %v2024, 0.0
        %v2089 = vmax.f32 %v2025, 0.0
        %v2090 = vmax.f32 %v2026, 0.0
        %v2091 = vmax.f32 %v2027, 0.0
        %v2092 = vmax.f32 %v2028, 0.0
        %v2093 = vmax.f32 %v2029, 0.0
        %v2094 = vmax.f32 %v2030, 0.0
        %v2095 = vmax.f32 %v2031, 0.0
        %v2096 = vmax.f32 %v2032, 0.0
        %v2097 = vmax.f32 %v2033, 0.0
        %v2098 = vmax.f32 %v2034, 0.0
        %v2099 = vmax.f32 %v2035, 0.0
        %v2100 = vmax.f32 %v2036, 0.0
        %v2101 = vmax.f32 %v2037, 0.0
        %v2102 = vmax.f32 %v2038, 0.0
        %v2103 = vmax.f32 %v2039, 0.0
        %v2104 = vmax.f32 %v2040, 0.0
        %v2105 = vmax.f32 %v2041, 0.0
        %v2106 = vmax.f32 %v2042, 0.0
        %v2107 = vmax.f32 %v2043, 0.0
        %v2108 = vmax.f32 %v2044, 0.0
        %v2109 = vmax.f32 %v2045, 0.0
        %v2110 = vmax.f32 %v2046, 0.0
        %v2111 = vmax.f32 %v2047, 0.0
        %v2112 = vmax.f32 %v2048, 0.0
        %v2113 = vmax.f32 %v2049, 0.0
        %v2114 = vmax.f32 %v2050, 0.0
        %v2115 = vmax.f32 %v1373, %v2051
        %v2116 = vmax.f32 %v1374, %v2052
        %v2117 = vmax.f32 %v1375, %v2053
        %v2118 = vmax.f32 %v1376, %v2054
        %v2119 = vmax.f32 %v1377, %v2055
        %v2120 = vmax.f32 %v1378, %v2056
        %v2121 = vmax.f32 %v1379, %v2057
        %v2122 = vmax.f32 %v1380, %v2058
        %v2123 = vmax.f32 %v1381, %v2059
        %v2124 = vmax.f32 %v1382, %v2060
        %v2125 = vmax.f32 %v1383, %v2061
        %v2126 = vmax.f32 %v1384, %v2062
        %v2127 = vmax.f32 %v1385, %v2063
        %v2128 = vmax.f32 %v1386, %v2064
        %v2129 = vmax.f32 %v1387, %v2065
        %v2130 = vmax.f32 %v1388, %v2066
        %v2131 = vmax.f32 %v1389, %v2067
        %v2132 = vmax.f32 %v1390, %v2068
        %v2133 = vmax.f32 %v1391, %v2069
        %v2134 = vmax.f32 %v1392, %v2070
        %v2135 = vmax.f32 %v1393, %v2071
        %v2136 = vmax.f32 %v1394, %v2072
        %v2137 = vmax.f32 %v1395, %v2073
        %v2138 = vmax.f32 %v1396, %v2074
        %v2139 = vmax.f32 %v1397, %v2075
        %v2140 = vmax.f32 %v1398, %v2076
        %v2141 = vmax.f32 %v1399, %v2077
        %v2142 = vmax.f32 %v1400, %v2078
        %v2143 = vmax.f32 %v1401, %v2079
        %v2144 = vmax.f32 %v1402, %v2080
        %v2145 = vmax.f32 %v1403, %v2081
        %v2146 = vmax.f32 %v1404, %v2082
        %v2147 = vmax.f32 %v1405, %v2083
        %v2148 = vmax.f32 %v1406, %v2084
        %v2149 = vmax.f32 %v1407, %v2085
        %v2150 = vmax.f32 %v1408, %v2086
        %v2151 = vmax.f32 %v1409, %v2087
        %v2152 = vmax.f32 %v1410, %v2088
        %v2153 = vmax.f32 %v1411, %v2089
        %v2154 = vmax.f32 %v1412, %v2090
        %v2155 = vmax.f32 %v1413, %v2091
        %v2156 = vmax.f32 %v1414, %v2092
        %v2157 = vmax.f32 %v1415, %v2093
        %v2158 = vmax.f32 %v1416, %v2094
        %v2159 = vmax.f32 %v1417, %v2095
        %v2160 = vmax.f32 %v1418, %v2096
        %v2161 = vmax.f32 %v1419, %v2097
        %v2162 = vmax.f32 %v1420, %v2098
        %v2163 = vmax.f32 %v1421, %v2099
        %v2164 = vmax.f32 %v1422, %v2100
        %v2165 = vmax.f32 %v1423, %v2101
        %v2166 = vmax.f32 %v1424, %v2102
        %v2167 = vmax.f32 %v1425, %v2103
        %v2168 = vmax.f32 %v1426, %v2104
        %v2169 = vmax.f32 %v1427, %v2105
        %v2170 = vmax.f32 %v1428, %v2106
        %v2171 = vmax.f32 %v1429, %v2107
        %v2172 = vmax.f32 %v1430, %v2108
        %v2173 = vmax.f32 %v1431, %v2109
        %v2174 = vmax.f32 %v1432, %v2110
        %v2175 = vmax.f32 %v1433, %v2111
        %v2176 = vmax.f32 %v1434, %v2112
        %v2177 = vmax.f32 %v1435, %v2113
        %v2178 = vmax.f32 %v1436, %v2114
        %s2179 = scalar_lea.vmem %s1, 512
        %v2180 = vld [vmem:[%s2179] sm:$0xff]
        %v2181 = vld [vmem:[%s2179 + $0x8] sm:$0xff]
        %v2182 = vld [vmem:[%s2179 + $0x10] sm:$0xff]
        %v2183 = vld [vmem:[%s2179 + $0x18] sm:$0xff]
        %v2184 = vld [vmem:[%s2179 + $0x20] sm:$0xff]
        %v2185 = vld [vmem:[%s2179 + $0x28] sm:$0xff]
        %v2186 = vld [vmem:[%s2179 + $0x30] sm:$0xff]
        %v2187 = vld [vmem:[%s2179 + $0x38] sm:$0xff]
        %v2188 = vld [vmem:[%s2179 + $0x40] sm:$0xff]
        %v2189 = vld [vmem:[%s2179 + $0x48] sm:$0xff]
        %v2190 = vld [vmem:[%s2179 + $0x50] sm:$0xff]
        %v2191 = vld [vmem:[%s2179 + $0x58] sm:$0xff]
        %v2192 = vld [vmem:[%s2179 + $0x60] sm:$0xff]
        %v2193 = vld [vmem:[%s2179 + $0x68] sm:$0xff]
        %v2194 = vld [vmem:[%s2179 + $0x70] sm:$0xff]
        %v2195 = vld [vmem:[%s2179 + $0x78] sm:$0xff]
        %s2196 = scalar_lea.vmem %s1, 640
        %v2197 = vld [vmem:[%s2196] sm:$0xff]
        %v2198 = vld [vmem:[%s2196 + $0x8] sm:$0xff]
        %v2199 = vld [vmem:[%s2196 + $0x10] sm:$0xff]
        %v2200 = vld [vmem:[%s2196 + $0x18] sm:$0xff]
        %v2201 = vld [vmem:[%s2196 + $0x20] sm:$0xff]
        %v2202 = vld [vmem:[%s2196 + $0x28] sm:$0xff]
        %v2203 = vld [vmem:[%s2196 + $0x30] sm:$0xff]
        %v2204 = vld [vmem:[%s2196 + $0x38] sm:$0xff]
        %v2205 = vld [vmem:[%s2196 + $0x40] sm:$0xff]
        %v2206 = vld [vmem:[%s2196 + $0x48] sm:$0xff]
        %v2207 = vld [vmem:[%s2196 + $0x50] sm:$0xff]
        %v2208 = vld [vmem:[%s2196 + $0x58] sm:$0xff]
        %v2209 = vld [vmem:[%s2196 + $0x60] sm:$0xff]
        %v2210 = vld [vmem:[%s2196 + $0x68] sm:$0xff]
        %v2211 = vld [vmem:[%s2196 + $0x70] sm:$0xff]
        %v2212 = vld [vmem:[%s2196 + $0x78] sm:$0xff]
        %v2229 = vunpack.c.l.b16 %v2197
        %v2230 = vunpack.c.h.b16 %v2197
        %v2231 = vunpack.c.l.b16 %v2198
        %v2232 = vunpack.c.h.b16 %v2198
        %v2233 = vunpack.c.l.b16 %v2199
        %v2234 = vunpack.c.h.b16 %v2199
        %v2235 = vunpack.c.l.b16 %v2200
        %v2236 = vunpack.c.h.b16 %v2200
        %v2237 = vunpack.c.l.b16 %v2201
        %v2238 = vunpack.c.h.b16 %v2201
        %v2239 = vunpack.c.l.b16 %v2202
        %v2240 = vunpack.c.h.b16 %v2202
        %v2241 = vunpack.c.l.b16 %v2203
        %v2242 = vunpack.c.h.b16 %v2203
        %v2243 = vunpack.c.l.b16 %v2204
        %v2244 = vunpack.c.h.b16 %v2204
        %v2245 = vunpack.c.l.b16 %v2205
        %v2246 = vunpack.c.h.b16 %v2205
        %v2247 = vunpack.c.l.b16 %v2206
        %v2248 = vunpack.c.h.b16 %v2206
        %v2249 = vunpack.c.l.b16 %v2207
        %v2250 = vunpack.c.h.b16 %v2207
        %v2251 = vunpack.c.l.b16 %v2208
        %v2252 = vunpack.c.h.b16 %v2208
        %v2253 = vunpack.c.l.b16 %v2209
        %v2254 = vunpack.c.h.b16 %v2209
        %v2255 = vunpack.c.l.b16 %v2210
        %v2256 = vunpack.c.h.b16 %v2210
        %v2257 = vunpack.c.l.b16 %v2211
        %v2258 = vunpack.c.h.b16 %v2211
        %v2259 = vunpack.c.l.b16 %v2212
        %v2260 = vunpack.c.h.b16 %v2212
        %v2261 = vpack.c.b16 %v2231, %v2229
        %v2262 = vpack.c.b16 %v2232, %v2230
        %v2263 = vpack.c.b16 %v2235, %v2233
        %v2264 = vpack.c.b16 %v2236, %v2234
        %v2265 = vpack.c.b16 %v2239, %v2237
        %v2266 = vpack.c.b16 %v2240, %v2238
        %v2267 = vpack.c.b16 %v2243, %v2241
        %v2268 = vpack.c.b16 %v2244, %v2242
        %v2269 = vpack.c.b16 %v2247, %v2245
        %v2270 = vpack.c.b16 %v2248, %v2246
        %v2271 = vpack.c.b16 %v2251, %v2249
        %v2272 = vpack.c.b16 %v2252, %v2250
        %v2273 = vpack.c.b16 %v2255, %v2253
        %v2274 = vpack.c.b16 %v2256, %v2254
        %v2275 = vpack.c.b16 %v2259, %v2257
        %v2276 = vpack.c.b16 %v2260, %v2258
        %2293 = vmatpush.bf16.msra.mxu0 %v2275
        %2294 = vmatpush.bf16.msra.mxu0 %v2273
        %2295 = vmatpush.bf16.msra.mxu0 %v2271
        %2296 = vmatpush.bf16.msra.mxu0 %v2269
        %2297 = vmatpush.bf16.msra.mxu0 %v2267
        %2298 = vmatpush.bf16.msra.mxu0 %v2265
        %2299 = vmatpush.bf16.msra.mxu0 %v2263
        %2300 = vmatpush.bf16.msra.mxu0 %v2261
        %2301 = vmatmul.bf16.gmra.mxu0 %v660
        %v2302 = vpop.f32.mrf.mxu0
        %v2303 = vadd.f32 0.0, %v2302
        %v2304 = vpop.f32.mrf.mxu0
        %v2305 = vadd.f32 0.0, %v2304
        %2306 = vmatmul.bf16.gmra.mxu0 %v661
        %v2307 = vpop.f32.mrf.mxu0
        %v2308 = vadd.f32 0.0, %v2307
        %v2309 = vpop.f32.mrf.mxu0
        %v2310 = vadd.f32 0.0, %v2309
        %2311 = vmatmul.bf16.gmra.mxu0 %v662
        %v2312 = vpop.f32.mrf.mxu0
        %v2313 = vadd.f32 0.0, %v2312
        %v2314 = vpop.f32.mrf.mxu0
        %v2315 = vadd.f32 0.0, %v2314
        %2316 = vmatmul.bf16.gmra.mxu0 %v663
        %v2317 = vpop.f32.mrf.mxu0
        %v2318 = vadd.f32 0.0, %v2317
        %v2319 = vpop.f32.mrf.mxu0
        %v2320 = vadd.f32 0.0, %v2319
        %2321 = vmatmul.bf16.gmra.mxu0 %v664
        %v2322 = vpop.f32.mrf.mxu0
        %v2323 = vadd.f32 0.0, %v2322
        %v2324 = vpop.f32.mrf.mxu0
        %v2325 = vadd.f32 0.0, %v2324
        %2326 = vmatmul.bf16.gmra.mxu0 %v665
        %v2327 = vpop.f32.mrf.mxu0
        %v2328 = vadd.f32 0.0, %v2327
        %v2329 = vpop.f32.mrf.mxu0
        %v2330 = vadd.f32 0.0, %v2329
        %2331 = vmatmul.bf16.gmra.mxu0 %v666
        %v2332 = vpop.f32.mrf.mxu0
        %v2333 = vadd.f32 0.0, %v2332
        %v2334 = vpop.f32.mrf.mxu0
        %v2335 = vadd.f32 0.0, %v2334
        %2336 = vmatmul.bf16.gmra.mxu0 %v667
        %v2337 = vpop.f32.mrf.mxu0
        %v2338 = vadd.f32 0.0, %v2337
        %v2339 = vpop.f32.mrf.mxu0
        %v2340 = vadd.f32 0.0, %v2339
        %2341 = vmatmul.bf16.gmra.mxu0 %v668
        %v2342 = vpop.f32.mrf.mxu0
        %v2343 = vadd.f32 0.0, %v2342
        %v2344 = vpop.f32.mrf.mxu0
        %v2345 = vadd.f32 0.0, %v2344
        %2346 = vmatmul.bf16.gmra.mxu0 %v669
        %v2347 = vpop.f32.mrf.mxu0
        %v2348 = vadd.f32 0.0, %v2347
        %v2349 = vpop.f32.mrf.mxu0
        %v2350 = vadd.f32 0.0, %v2349
        %2351 = vmatmul.bf16.gmra.mxu0 %v670
        %v2352 = vpop.f32.mrf.mxu0
        %v2353 = vadd.f32 0.0, %v2352
        %v2354 = vpop.f32.mrf.mxu0
        %v2355 = vadd.f32 0.0, %v2354
        %2356 = vmatmul.bf16.gmra.mxu0 %v671
        %v2357 = vpop.f32.mrf.mxu0
        %v2358 = vadd.f32 0.0, %v2357
        %v2359 = vpop.f32.mrf.mxu0
        %v2360 = vadd.f32 0.0, %v2359
        %2361 = vmatmul.bf16.gmra.mxu0 %v672
        %v2362 = vpop.f32.mrf.mxu0
        %v2363 = vadd.f32 0.0, %v2362
        %v2364 = vpop.f32.mrf.mxu0
        %v2365 = vadd.f32 0.0, %v2364
        %2366 = vmatmul.bf16.gmra.mxu0 %v673
        %v2367 = vpop.f32.mrf.mxu0
        %v2368 = vadd.f32 0.0, %v2367
        %v2369 = vpop.f32.mrf.mxu0
        %v2370 = vadd.f32 0.0, %v2369
        %2371 = vmatmul.bf16.gmra.mxu0 %v674
        %v2372 = vpop.f32.mrf.mxu0
        %v2373 = vadd.f32 0.0, %v2372
        %v2374 = vpop.f32.mrf.mxu0
        %v2375 = vadd.f32 0.0, %v2374
        %2376 = vmatmul.bf16.gmra.mxu0 %v675
        %v2377 = vpop.f32.mrf.mxu0
        %v2378 = vadd.f32 0.0, %v2377
        %v2379 = vpop.f32.mrf.mxu0
        %v2380 = vadd.f32 0.0, %v2379
        %2381 = vdwg.mxu0
        %2382 = vmatpush.bf16.msra.mxu0 %v2276
        %2383 = vmatpush.bf16.msra.mxu0 %v2274
        %2384 = vmatpush.bf16.msra.mxu0 %v2272
        %2385 = vmatpush.bf16.msra.mxu0 %v2270
        %2386 = vmatpush.bf16.msra.mxu0 %v2268
        %2387 = vmatpush.bf16.msra.mxu0 %v2266
        %2388 = vmatpush.bf16.msra.mxu0 %v2264
        %2389 = vmatpush.bf16.msra.mxu0 %v2262
        %2390 = vmatmul.bf16.gmra.mxu0 %v660
        %v2391 = vpop.f32.mrf.mxu0
        %v2392 = vadd.f32 0.0, %v2391
        %v2393 = vpop.f32.mrf.mxu0
        %v2394 = vadd.f32 0.0, %v2393
        %2395 = vmatmul.bf16.gmra.mxu0 %v661
        %v2396 = vpop.f32.mrf.mxu0
        %v2397 = vadd.f32 0.0, %v2396
        %v2398 = vpop.f32.mrf.mxu0
        %v2399 = vadd.f32 0.0, %v2398
        %2400 = vmatmul.bf16.gmra.mxu0 %v662
        %v2401 = vpop.f32.mrf.mxu0
        %v2402 = vadd.f32 0.0, %v2401
        %v2403 = vpop.f32.mrf.mxu0
        %v2404 = vadd.f32 0.0, %v2403
        %2405 = vmatmul.bf16.gmra.mxu0 %v663
        %v2406 = vpop.f32.mrf.mxu0
        %v2407 = vadd.f32 0.0, %v2406
        %v2408 = vpop.f32.mrf.mxu0
        %v2409 = vadd.f32 0.0, %v2408
        %2410 = vmatmul.bf16.gmra.mxu0 %v664
        %v2411 = vpop.f32.mrf.mxu0
        %v2412 = vadd.f32 0.0, %v2411
        %v2413 = vpop.f32.mrf.mxu0
        %v2414 = vadd.f32 0.0, %v2413
        %2415 = vmatmul.bf16.gmra.mxu0 %v665
        %v2416 = vpop.f32.mrf.mxu0
        %v2417 = vadd.f32 0.0, %v2416
        %v2418 = vpop.f32.mrf.mxu0
        %v2419 = vadd.f32 0.0, %v2418
        %2420 = vmatmul.bf16.gmra.mxu0 %v666
        %v2421 = vpop.f32.mrf.mxu0
        %v2422 = vadd.f32 0.0, %v2421
        %v2423 = vpop.f32.mrf.mxu0
        %v2424 = vadd.f32 0.0, %v2423
        %2425 = vmatmul.bf16.gmra.mxu0 %v667
        %v2426 = vpop.f32.mrf.mxu0
        %v2427 = vadd.f32 0.0, %v2426
        %v2428 = vpop.f32.mrf.mxu0
        %v2429 = vadd.f32 0.0, %v2428
        %2430 = vmatmul.bf16.gmra.mxu0 %v668
        %v2431 = vpop.f32.mrf.mxu0
        %v2432 = vadd.f32 0.0, %v2431
        %v2433 = vpop.f32.mrf.mxu0
        %v2434 = vadd.f32 0.0, %v2433
        %2435 = vmatmul.bf16.gmra.mxu0 %v669
        %v2436 = vpop.f32.mrf.mxu0
        %v2437 = vadd.f32 0.0, %v2436
        %v2438 = vpop.f32.mrf.mxu0
        %v2439 = vadd.f32 0.0, %v2438
        %2440 = vmatmul.bf16.gmra.mxu0 %v670
        %v2441 = vpop.f32.mrf.mxu0
        %v2442 = vadd.f32 0.0, %v2441
        %v2443 = vpop.f32.mrf.mxu0
        %v2444 = vadd.f32 0.0, %v2443
        %2445 = vmatmul.bf16.gmra.mxu0 %v671
        %v2446 = vpop.f32.mrf.mxu0
        %v2447 = vadd.f32 0.0, %v2446
        %v2448 = vpop.f32.mrf.mxu0
        %v2449 = vadd.f32 0.0, %v2448
        %2450 = vmatmul.bf16.gmra.mxu0 %v672
        %v2451 = vpop.f32.mrf.mxu0
        %v2452 = vadd.f32 0.0, %v2451
        %v2453 = vpop.f32.mrf.mxu0
        %v2454 = vadd.f32 0.0, %v2453
        %2455 = vmatmul.bf16.gmra.mxu0 %v673
        %v2456 = vpop.f32.mrf.mxu0
        %v2457 = vadd.f32 0.0, %v2456
        %v2458 = vpop.f32.mrf.mxu0
        %v2459 = vadd.f32 0.0, %v2458
        %2460 = vmatmul.bf16.gmra.mxu0 %v674
        %v2461 = vpop.f32.mrf.mxu0
        %v2462 = vadd.f32 0.0, %v2461
        %v2463 = vpop.f32.mrf.mxu0
        %v2464 = vadd.f32 0.0, %v2463
        %2465 = vmatmul.bf16.gmra.mxu0 %v675
        %v2466 = vpop.f32.mrf.mxu0
        %v2467 = vadd.f32 0.0, %v2466
        %v2468 = vpop.f32.mrf.mxu0
        %v2469 = vadd.f32 0.0, %v2468
        %2470 = vdwg.mxu0
        %v2487 = vunpack.c.l.b16 %v2180
        %v2488 = vunpack.c.h.b16 %v2180
        %v2489 = vunpack.c.l.b16 %v2181
        %v2490 = vunpack.c.h.b16 %v2181
        %v2491 = vunpack.c.l.b16 %v2182
        %v2492 = vunpack.c.h.b16 %v2182
        %v2493 = vunpack.c.l.b16 %v2183
        %v2494 = vunpack.c.h.b16 %v2183
        %v2495 = vunpack.c.l.b16 %v2184
        %v2496 = vunpack.c.h.b16 %v2184
        %v2497 = vunpack.c.l.b16 %v2185
        %v2498 = vunpack.c.h.b16 %v2185
        %v2499 = vunpack.c.l.b16 %v2186
        %v2500 = vunpack.c.h.b16 %v2186
        %v2501 = vunpack.c.l.b16 %v2187
        %v2502 = vunpack.c.h.b16 %v2187
        %v2503 = vunpack.c.l.b16 %v2188
        %v2504 = vunpack.c.h.b16 %v2188
        %v2505 = vunpack.c.l.b16 %v2189
        %v2506 = vunpack.c.h.b16 %v2189
        %v2507 = vunpack.c.l.b16 %v2190
        %v2508 = vunpack.c.h.b16 %v2190
        %v2509 = vunpack.c.l.b16 %v2191
        %v2510 = vunpack.c.h.b16 %v2191
        %v2511 = vunpack.c.l.b16 %v2192
        %v2512 = vunpack.c.h.b16 %v2192
        %v2513 = vunpack.c.l.b16 %v2193
        %v2514 = vunpack.c.h.b16 %v2193
        %v2515 = vunpack.c.l.b16 %v2194
        %v2516 = vunpack.c.h.b16 %v2194
        %v2517 = vunpack.c.l.b16 %v2195
        %v2518 = vunpack.c.h.b16 %v2195
        %v2519 = vpack.c.b16 %v2489, %v2487
        %v2520 = vpack.c.b16 %v2490, %v2488
        %v2521 = vpack.c.b16 %v2493, %v2491
        %v2522 = vpack.c.b16 %v2494, %v2492
        %v2523 = vpack.c.b16 %v2497, %v2495
        %v2524 = vpack.c.b16 %v2498, %v2496
        %v2525 = vpack.c.b16 %v2501, %v2499
        %v2526 = vpack.c.b16 %v2502, %v2500
        %v2527 = vpack.c.b16 %v2505, %v2503
        %v2528 = vpack.c.b16 %v2506, %v2504
        %v2529 = vpack.c.b16 %v2509, %v2507
        %v2530 = vpack.c.b16 %v2510, %v2508
        %v2531 = vpack.c.b16 %v2513, %v2511
        %v2532 = vpack.c.b16 %v2514, %v2512
        %v2533 = vpack.c.b16 %v2517, %v2515
        %v2534 = vpack.c.b16 %v2518, %v2516
        %2551 = vmatpush.bf16.msra.mxu0 %v2533
        %2552 = vmatpush.bf16.msra.mxu0 %v2531
        %2553 = vmatpush.bf16.msra.mxu0 %v2529
        %2554 = vmatpush.bf16.msra.mxu0 %v2527
        %2555 = vmatpush.bf16.msra.mxu0 %v2525
        %2556 = vmatpush.bf16.msra.mxu0 %v2523
        %2557 = vmatpush.bf16.msra.mxu0 %v2521
        %2558 = vmatpush.bf16.msra.mxu0 %v2519
        %2559 = vmatmul.bf16.gmra.mxu0 %v1014
        %v2560 = vpop.f32.mrf.mxu0
        %v2561 = vadd.f32 %v2303, %v2560
        %v2562 = vpop.f32.mrf.mxu0
        %v2563 = vadd.f32 %v2305, %v2562
        %2564 = vmatmul.bf16.gmra.mxu0 %v1015
        %v2565 = vpop.f32.mrf.mxu0
        %v2566 = vadd.f32 %v2308, %v2565
        %v2567 = vpop.f32.mrf.mxu0
        %v2568 = vadd.f32 %v2310, %v2567
        %2569 = vmatmul.bf16.gmra.mxu0 %v1016
        %v2570 = vpop.f32.mrf.mxu0
        %v2571 = vadd.f32 %v2313, %v2570
        %v2572 = vpop.f32.mrf.mxu0
        %v2573 = vadd.f32 %v2315, %v2572
        %2574 = vmatmul.bf16.gmra.mxu0 %v1017
        %v2575 = vpop.f32.mrf.mxu0
        %v2576 = vadd.f32 %v2318, %v2575
        %v2577 = vpop.f32.mrf.mxu0
        %v2578 = vadd.f32 %v2320, %v2577
        %2579 = vmatmul.bf16.gmra.mxu0 %v1018
        %v2580 = vpop.f32.mrf.mxu0
        %v2581 = vadd.f32 %v2323, %v2580
        %v2582 = vpop.f32.mrf.mxu0
        %v2583 = vadd.f32 %v2325, %v2582
        %2584 = vmatmul.bf16.gmra.mxu0 %v1019
        %v2585 = vpop.f32.mrf.mxu0
        %v2586 = vadd.f32 %v2328, %v2585
        %v2587 = vpop.f32.mrf.mxu0
        %v2588 = vadd.f32 %v2330, %v2587
        %2589 = vmatmul.bf16.gmra.mxu0 %v1020
        %v2590 = vpop.f32.mrf.mxu0
        %v2591 = vadd.f32 %v2333, %v2590
        %v2592 = vpop.f32.mrf.mxu0
        %v2593 = vadd.f32 %v2335, %v2592
        %2594 = vmatmul.bf16.gmra.mxu0 %v1021
        %v2595 = vpop.f32.mrf.mxu0
        %v2596 = vadd.f32 %v2338, %v2595
        %v2597 = vpop.f32.mrf.mxu0
        %v2598 = vadd.f32 %v2340, %v2597
        %2599 = vmatmul.bf16.gmra.mxu0 %v1022
        %v2600 = vpop.f32.mrf.mxu0
        %v2601 = vadd.f32 %v2343, %v2600
        %v2602 = vpop.f32.mrf.mxu0
        %v2603 = vadd.f32 %v2345, %v2602
        %2604 = vmatmul.bf16.gmra.mxu0 %v1023
        %v2605 = vpop.f32.mrf.mxu0
        %v2606 = vadd.f32 %v2348, %v2605
        %v2607 = vpop.f32.mrf.mxu0
        %v2608 = vadd.f32 %v2350, %v2607
        %2609 = vmatmul.bf16.gmra.mxu0 %v1024
        %v2610 = vpop.f32.mrf.mxu0
        %v2611 = vadd.f32 %v2353, %v2610
        %v2612 = vpop.f32.mrf.mxu0
        %v2613 = vadd.f32 %v2355, %v2612
        %2614 = vmatmul.bf16.gmra.mxu0 %v1025
        %v2615 = vpop.f32.mrf.mxu0
        %v2616 = vadd.f32 %v2358, %v2615
        %v2617 = vpop.f32.mrf.mxu0
        %v2618 = vadd.f32 %v2360, %v2617
        %2619 = vmatmul.bf16.gmra.mxu0 %v1026
        %v2620 = vpop.f32.mrf.mxu0
        %v2621 = vadd.f32 %v2363, %v2620
        %v2622 = vpop.f32.mrf.mxu0
        %v2623 = vadd.f32 %v2365, %v2622
        %2624 = vmatmul.bf16.gmra.mxu0 %v1027
        %v2625 = vpop.f32.mrf.mxu0
        %v2626 = vadd.f32 %v2368, %v2625
        %v2627 = vpop.f32.mrf.mxu0
        %v2628 = vadd.f32 %v2370, %v2627
        %2629 = vmatmul.bf16.gmra.mxu0 %v1028
        %v2630 = vpop.f32.mrf.mxu0
        %v2631 = vadd.f32 %v2373, %v2630
        %v2632 = vpop.f32.mrf.mxu0
        %v2633 = vadd.f32 %v2375, %v2632
        %2634 = vmatmul.bf16.gmra.mxu0 %v1029
        %v2635 = vpop.f32.mrf.mxu0
        %v2636 = vadd.f32 %v2378, %v2635
        %v2637 = vpop.f32.mrf.mxu0
        %v2638 = vadd.f32 %v2380, %v2637
        %2639 = vdwg.mxu0
        %2640 = vmatpush.bf16.msra.mxu0 %v2534
        %2641 = vmatpush.bf16.msra.mxu0 %v2532
        %2642 = vmatpush.bf16.msra.mxu0 %v2530
        %2643 = vmatpush.bf16.msra.mxu0 %v2528
        %2644 = vmatpush.bf16.msra.mxu0 %v2526
        %2645 = vmatpush.bf16.msra.mxu0 %v2524
        %2646 = vmatpush.bf16.msra.mxu0 %v2522
        %2647 = vmatpush.bf16.msra.mxu0 %v2520
        %2648 = vmatmul.bf16.gmra.mxu0 %v1014
        %v2649 = vpop.f32.mrf.mxu0
        %v2650 = vadd.f32 %v2392, %v2649
        %v2651 = vpop.f32.mrf.mxu0
        %v2652 = vadd.f32 %v2394, %v2651
        %2653 = vmatmul.bf16.gmra.mxu0 %v1015
        %v2654 = vpop.f32.mrf.mxu0
        %v2655 = vadd.f32 %v2397, %v2654
        %v2656 = vpop.f32.mrf.mxu0
        %v2657 = vadd.f32 %v2399, %v2656
        %2658 = vmatmul.bf16.gmra.mxu0 %v1016
        %v2659 = vpop.f32.mrf.mxu0
        %v2660 = vadd.f32 %v2402, %v2659
        %v2661 = vpop.f32.mrf.mxu0
        %v2662 = vadd.f32 %v2404, %v2661
        %2663 = vmatmul.bf16.gmra.mxu0 %v1017
        %v2664 = vpop.f32.mrf.mxu0
        %v2665 = vadd.f32 %v2407, %v2664
        %v2666 = vpop.f32.mrf.mxu0
        %v2667 = vadd.f32 %v2409, %v2666
        %2668 = vmatmul.bf16.gmra.mxu0 %v1018
        %v2669 = vpop.f32.mrf.mxu0
        %v2670 = vadd.f32 %v2412, %v2669
        %v2671 = vpop.f32.mrf.mxu0
        %v2672 = vadd.f32 %v2414, %v2671
        %2673 = vmatmul.bf16.gmra.mxu0 %v1019
        %v2674 = vpop.f32.mrf.mxu0
        %v2675 = vadd.f32 %v2417, %v2674
        %v2676 = vpop.f32.mrf.mxu0
        %v2677 = vadd.f32 %v2419, %v2676
        %2678 = vmatmul.bf16.gmra.mxu0 %v1020
        %v2679 = vpop.f32.mrf.mxu0
        %v2680 = vadd.f32 %v2422, %v2679
        %v2681 = vpop.f32.mrf.mxu0
        %v2682 = vadd.f32 %v2424, %v2681
        %2683 = vmatmul.bf16.gmra.mxu0 %v1021
        %v2684 = vpop.f32.mrf.mxu0
        %v2685 = vadd.f32 %v2427, %v2684
        %v2686 = vpop.f32.mrf.mxu0
        %v2687 = vadd.f32 %v2429, %v2686
        %2688 = vmatmul.bf16.gmra.mxu0 %v1022
        %v2689 = vpop.f32.mrf.mxu0
        %v2690 = vadd.f32 %v2432, %v2689
        %v2691 = vpop.f32.mrf.mxu0
        %v2692 = vadd.f32 %v2434, %v2691
        %2693 = vmatmul.bf16.gmra.mxu0 %v1023
        %v2694 = vpop.f32.mrf.mxu0
        %v2695 = vadd.f32 %v2437, %v2694
        %v2696 = vpop.f32.mrf.mxu0
        %v2697 = vadd.f32 %v2439, %v2696
        %2698 = vmatmul.bf16.gmra.mxu0 %v1024
        %v2699 = vpop.f32.mrf.mxu0
        %v2700 = vadd.f32 %v2442, %v2699
        %v2701 = vpop.f32.mrf.mxu0
        %v2702 = vadd.f32 %v2444, %v2701
        %2703 = vmatmul.bf16.gmra.mxu0 %v1025
        %v2704 = vpop.f32.mrf.mxu0
        %v2705 = vadd.f32 %v2447, %v2704
        %v2706 = vpop.f32.mrf.mxu0
        %v2707 = vadd.f32 %v2449, %v2706
        %2708 = vmatmul.bf16.gmra.mxu0 %v1026
        %v2709 = vpop.f32.mrf.mxu0
        %v2710 = vadd.f32 %v2452, %v2709
        %v2711 = vpop.f32.mrf.mxu0
        %v2712 = vadd.f32 %v2454, %v2711
        %2713 = vmatmul.bf16.gmra.mxu0 %v1027
        %v2714 = vpop.f32.mrf.mxu0
        %v2715 = vadd.f32 %v2457, %v2714
        %v2716 = vpop.f32.mrf.mxu0
        %v2717 = vadd.f32 %v2459, %v2716
        %2718 = vmatmul.bf16.gmra.mxu0 %v1028
        %v2719 = vpop.f32.mrf.mxu0
        %v2720 = vadd.f32 %v2462, %v2719
        %v2721 = vpop.f32.mrf.mxu0
        %v2722 = vadd.f32 %v2464, %v2721
        %2723 = vmatmul.bf16.gmra.mxu0 %v1029
        %v2724 = vpop.f32.mrf.mxu0
        %v2725 = vadd.f32 %v2467, %v2724
        %v2726 = vpop.f32.mrf.mxu0
        %v2727 = vadd.f32 %v2469, %v2726
        %2728 = vdwg.mxu0
        %v2729 = vadd.f32 %v2561, %v1305
        %v2730 = vadd.f32 %v2650, %v1306
        %v2731 = vadd.f32 %v2563, %v1305
        %v2732 = vadd.f32 %v2652, %v1306
        %v2733 = vadd.f32 %v2566, %v1305
        %v2734 = vadd.f32 %v2655, %v1306
        %v2735 = vadd.f32 %v2568, %v1305
        %v2736 = vadd.f32 %v2657, %v1306
        %v2737 = vadd.f32 %v2571, %v1305
        %v2738 = vadd.f32 %v2660, %v1306
        %v2739 = vadd.f32 %v2573, %v1305
        %v2740 = vadd.f32 %v2662, %v1306
        %v2741 = vadd.f32 %v2576, %v1305
        %v2742 = vadd.f32 %v2665, %v1306
        %v2743 = vadd.f32 %v2578, %v1305
        %v2744 = vadd.f32 %v2667, %v1306
        %v2745 = vadd.f32 %v2581, %v1305
        %v2746 = vadd.f32 %v2670, %v1306
        %v2747 = vadd.f32 %v2583, %v1305
        %v2748 = vadd.f32 %v2672, %v1306
        %v2749 = vadd.f32 %v2586, %v1305
        %v2750 = vadd.f32 %v2675, %v1306
        %v2751 = vadd.f32 %v2588, %v1305
        %v2752 = vadd.f32 %v2677, %v1306
        %v2753 = vadd.f32 %v2591, %v1305
        %v2754 = vadd.f32 %v2680, %v1306
        %v2755 = vadd.f32 %v2593, %v1305
        %v2756 = vadd.f32 %v2682, %v1306
        %v2757 = vadd.f32 %v2596, %v1305
        %v2758 = vadd.f32 %v2685, %v1306
        %v2759 = vadd.f32 %v2598, %v1305
        %v2760 = vadd.f32 %v2687, %v1306
        %v2761 = vadd.f32 %v2601, %v1305
        %v2762 = vadd.f32 %v2690, %v1306
        %v2763 = vadd.f32 %v2603, %v1305
        %v2764 = vadd.f32 %v2692, %v1306
        %v2765 = vadd.f32 %v2606, %v1305
        %v2766 = vadd.f32 %v2695, %v1306
        %v2767 = vadd.f32 %v2608, %v1305
        %v2768 = vadd.f32 %v2697, %v1306
        %v2769 = vadd.f32 %v2611, %v1305
        %v2770 = vadd.f32 %v2700, %v1306
        %v2771 = vadd.f32 %v2613, %v1305
        %v2772 = vadd.f32 %v2702, %v1306
        %v2773 = vadd.f32 %v2616, %v1305
        %v2774 = vadd.f32 %v2705, %v1306
        %v2775 = vadd.f32 %v2618, %v1305
        %v2776 = vadd.f32 %v2707, %v1306
        %v2777 = vadd.f32 %v2621, %v1305
        %v2778 = vadd.f32 %v2710, %v1306
        %v2779 = vadd.f32 %v2623, %v1305
        %v2780 = vadd.f32 %v2712, %v1306
        %v2781 = vadd.f32 %v2626, %v1305
        %v2782 = vadd.f32 %v2715, %v1306
        %v2783 = vadd.f32 %v2628, %v1305
        %v2784 = vadd.f32 %v2717, %v1306
        %v2785 = vadd.f32 %v2631, %v1305
        %v2786 = vadd.f32 %v2720, %v1306
        %v2787 = vadd.f32 %v2633, %v1305
        %v2788 = vadd.f32 %v2722, %v1306
        %v2789 = vadd.f32 %v2636, %v1305
        %v2790 = vadd.f32 %v2725, %v1306
        %v2791 = vadd.f32 %v2638, %v1305
        %v2792 = vadd.f32 %v2727, %v1306
        %v2793 = vmax.f32 %v2729, 0.0
        %v2794 = vmax.f32 %v2730, 0.0
        %v2795 = vmax.f32 %v2731, 0.0
        %v2796 = vmax.f32 %v2732, 0.0
        %v2797 = vmax.f32 %v2733, 0.0
        %v2798 = vmax.f32 %v2734, 0.0
        %v2799 = vmax.f32 %v2735, 0.0
        %v2800 = vmax.f32 %v2736, 0.0
        %v2801 = vmax.f32 %v2737, 0.0
        %v2802 = vmax.f32 %v2738, 0.0
        %v2803 = vmax.f32 %v2739, 0.0
        %v2804 = vmax.f32 %v2740, 0.0
        %v2805 = vmax.f32 %v2741, 0.0
        %v2806 = vmax.f32 %v2742, 0.0
        %v2807 = vmax.f32 %v2743, 0.0
        %v2808 = vmax.f32 %v2744, 0.0
        %v2809 = vmax.f32 %v2745, 0.0
        %v2810 = vmax.f32 %v2746, 0.0
        %v2811 = vmax.f32 %v2747, 0.0
        %v2812 = vmax.f32 %v2748, 0.0
        %v2813 = vmax.f32 %v2749, 0.0
        %v2814 = vmax.f32 %v2750, 0.0
        %v2815 = vmax.f32 %v2751, 0.0
        %v2816 = vmax.f32 %v2752, 0.0
        %v2817 = vmax.f32 %v2753, 0.0
        %v2818 = vmax.f32 %v2754, 0.0
        %v2819 = vmax.f32 %v2755, 0.0
        %v2820 = vmax.f32 %v2756, 0.0
        %v2821 = vmax.f32 %v2757, 0.0
        %v2822 = vmax.f32 %v2758, 0.0
        %v2823 = vmax.f32 %v2759, 0.0
        %v2824 = vmax.f32 %v2760, 0.0
        %v2825 = vmax.f32 %v2761, 0.0
        %v2826 = vmax.f32 %v2762, 0.0
        %v2827 = vmax.f32 %v2763, 0.0
        %v2828 = vmax.f32 %v2764, 0.0
        %v2829 = vmax.f32 %v2765, 0.0
        %v2830 = vmax.f32 %v2766, 0.0
        %v2831 = vmax.f32 %v2767, 0.0
        %v2832 = vmax.f32 %v2768, 0.0
        %v2833 = vmax.f32 %v2769, 0.0
        %v2834 = vmax.f32 %v2770, 0.0
        %v2835 = vmax.f32 %v2771, 0.0
        %v2836 = vmax.f32 %v2772, 0.0
        %v2837 = vmax.f32 %v2773, 0.0
        %v2838 = vmax.f32 %v2774, 0.0
        %v2839 = vmax.f32 %v2775, 0.0
        %v2840 = vmax.f32 %v2776, 0.0
        %v2841 = vmax.f32 %v2777, 0.0
        %v2842 = vmax.f32 %v2778, 0.0
        %v2843 = vmax.f32 %v2779, 0.0
        %v2844 = vmax.f32 %v2780, 0.0
        %v2845 = vmax.f32 %v2781, 0.0
        %v2846 = vmax.f32 %v2782, 0.0
        %v2847 = vmax.f32 %v2783, 0.0
        %v2848 = vmax.f32 %v2784, 0.0
        %v2849 = vmax.f32 %v2785, 0.0
        %v2850 = vmax.f32 %v2786, 0.0
        %v2851 = vmax.f32 %v2787, 0.0
        %v2852 = vmax.f32 %v2788, 0.0
        %v2853 = vmax.f32 %v2789, 0.0
        %v2854 = vmax.f32 %v2790, 0.0
        %v2855 = vmax.f32 %v2791, 0.0
        %v2856 = vmax.f32 %v2792, 0.0
        %v2857 = vmax.f32 %v2115, %v2793
        %v2858 = vmax.f32 %v2116, %v2794
        %v2859 = vmax.f32 %v2117, %v2795
        %v2860 = vmax.f32 %v2118, %v2796
        %v2861 = vmax.f32 %v2119, %v2797
        %v2862 = vmax.f32 %v2120, %v2798
        %v2863 = vmax.f32 %v2121, %v2799
        %v2864 = vmax.f32 %v2122, %v2800
        %v2865 = vmax.f32 %v2123, %v2801
        %v2866 = vmax.f32 %v2124, %v2802
        %v2867 = vmax.f32 %v2125, %v2803
        %v2868 = vmax.f32 %v2126, %v2804
        %v2869 = vmax.f32 %v2127, %v2805
        %v2870 = vmax.f32 %v2128, %v2806
        %v2871 = vmax.f32 %v2129, %v2807
        %v2872 = vmax.f32 %v2130, %v2808
        %v2873 = vmax.f32 %v2131, %v2809
        %v2874 = vmax.f32 %v2132, %v2810
        %v2875 = vmax.f32 %v2133, %v2811
        %v2876 = vmax.f32 %v2134, %v2812
        %v2877 = vmax.f32 %v2135, %v2813
        %v2878 = vmax.f32 %v2136, %v2814
        %v2879 = vmax.f32 %v2137, %v2815
        %v2880 = vmax.f32 %v2138, %v2816
        %v2881 = vmax.f32 %v2139, %v2817
        %v2882 = vmax.f32 %v2140, %v2818
        %v2883 = vmax.f32 %v2141, %v2819
        %v2884 = vmax.f32 %v2142, %v2820
        %v2885 = vmax.f32 %v2143, %v2821
        %v2886 = vmax.f32 %v2144, %v2822
        %v2887 = vmax.f32 %v2145, %v2823
        %v2888 = vmax.f32 %v2146, %v2824
        %v2889 = vmax.f32 %v2147, %v2825
        %v2890 = vmax.f32 %v2148, %v2826
        %v2891 = vmax.f32 %v2149, %v2827
        %v2892 = vmax.f32 %v2150, %v2828
        %v2893 = vmax.f32 %v2151, %v2829
        %v2894 = vmax.f32 %v2152, %v2830
        %v2895 = vmax.f32 %v2153, %v2831
        %v2896 = vmax.f32 %v2154, %v2832
        %v2897 = vmax.f32 %v2155, %v2833
        %v2898 = vmax.f32 %v2156, %v2834
        %v2899 = vmax.f32 %v2157, %v2835
        %v2900 = vmax.f32 %v2158, %v2836
        %v2901 = vmax.f32 %v2159, %v2837
        %v2902 = vmax.f32 %v2160, %v2838
        %v2903 = vmax.f32 %v2161, %v2839
        %v2904 = vmax.f32 %v2162, %v2840
        %v2905 = vmax.f32 %v2163, %v2841
        %v2906 = vmax.f32 %v2164, %v2842
        %v2907 = vmax.f32 %v2165, %v2843
        %v2908 = vmax.f32 %v2166, %v2844
        %v2909 = vmax.f32 %v2167, %v2845
        %v2910 = vmax.f32 %v2168, %v2846
        %v2911 = vmax.f32 %v2169, %v2847
        %v2912 = vmax.f32 %v2170, %v2848
        %v2913 = vmax.f32 %v2171, %v2849
        %v2914 = vmax.f32 %v2172, %v2850
        %v2915 = vmax.f32 %v2173, %v2851
        %v2916 = vmax.f32 %v2174, %v2852
        %v2917 = vmax.f32 %v2175, %v2853
        %v2918 = vmax.f32 %v2176, %v2854
        %v2919 = vmax.f32 %v2177, %v2855
        %v2920 = vmax.f32 %v2178, %v2856
        %s2921 = scalar_lea.vmem %s1, 768
        %v2922 = vld [vmem:[%s2921] sm:$0xff]
        %v2923 = vld [vmem:[%s2921 + $0x8] sm:$0xff]
        %v2924 = vld [vmem:[%s2921 + $0x10] sm:$0xff]
        %v2925 = vld [vmem:[%s2921 + $0x18] sm:$0xff]
        %v2926 = vld [vmem:[%s2921 + $0x20] sm:$0xff]
        %v2927 = vld [vmem:[%s2921 + $0x28] sm:$0xff]
        %v2928 = vld [vmem:[%s2921 + $0x30] sm:$0xff]
        %v2929 = vld [vmem:[%s2921 + $0x38] sm:$0xff]
        %v2930 = vld [vmem:[%s2921 + $0x40] sm:$0xff]
        %v2931 = vld [vmem:[%s2921 + $0x48] sm:$0xff]
        %v2932 = vld [vmem:[%s2921 + $0x50] sm:$0xff]
        %v2933 = vld [vmem:[%s2921 + $0x58] sm:$0xff]
        %v2934 = vld [vmem:[%s2921 + $0x60] sm:$0xff]
        %v2935 = vld [vmem:[%s2921 + $0x68] sm:$0xff]
        %v2936 = vld [vmem:[%s2921 + $0x70] sm:$0xff]
        %v2937 = vld [vmem:[%s2921 + $0x78] sm:$0xff]
        %s2938 = scalar_lea.vmem %s1, 896
        %v2939 = vld [vmem:[%s2938] sm:$0xff]
        %v2940 = vld [vmem:[%s2938 + $0x8] sm:$0xff]
        %v2941 = vld [vmem:[%s2938 + $0x10] sm:$0xff]
        %v2942 = vld [vmem:[%s2938 + $0x18] sm:$0xff]
        %v2943 = vld [vmem:[%s2938 + $0x20] sm:$0xff]
        %v2944 = vld [vmem:[%s2938 + $0x28] sm:$0xff]
        %v2945 = vld [vmem:[%s2938 + $0x30] sm:$0xff]
        %v2946 = vld [vmem:[%s2938 + $0x38] sm:$0xff]
        %v2947 = vld [vmem:[%s2938 + $0x40] sm:$0xff]
        %v2948 = vld [vmem:[%s2938 + $0x48] sm:$0xff]
        %v2949 = vld [vmem:[%s2938 + $0x50] sm:$0xff]
        %v2950 = vld [vmem:[%s2938 + $0x58] sm:$0xff]
        %v2951 = vld [vmem:[%s2938 + $0x60] sm:$0xff]
        %v2952 = vld [vmem:[%s2938 + $0x68] sm:$0xff]
        %v2953 = vld [vmem:[%s2938 + $0x70] sm:$0xff]
        %v2954 = vld [vmem:[%s2938 + $0x78] sm:$0xff]
        %v2971 = vunpack.c.l.b16 %v2939
        %v2972 = vunpack.c.h.b16 %v2939
        %v2973 = vunpack.c.l.b16 %v2940
        %v2974 = vunpack.c.h.b16 %v2940
        %v2975 = vunpack.c.l.b16 %v2941
        %v2976 = vunpack.c.h.b16 %v2941
        %v2977 = vunpack.c.l.b16 %v2942
        %v2978 = vunpack.c.h.b16 %v2942
        %v2979 = vunpack.c.l.b16 %v2943
        %v2980 = vunpack.c.h.b16 %v2943
        %v2981 = vunpack.c.l.b16 %v2944
        %v2982 = vunpack.c.h.b16 %v2944
        %v2983 = vunpack.c.l.b16 %v2945
        %v2984 = vunpack.c.h.b16 %v2945
        %v2985 = vunpack.c.l.b16 %v2946
        %v2986 = vunpack.c.h.b16 %v2946
        %v2987 = vunpack.c.l.b16 %v2947
        %v2988 = vunpack.c.h.b16 %v2947
        %v2989 = vunpack.c.l.b16 %v2948
        %v2990 = vunpack.c.h.b16 %v2948
        %v2991 = vunpack.c.l.b16 %v2949
        %v2992 = vunpack.c.h.b16 %v2949
        %v2993 = vunpack.c.l.b16 %v2950
        %v2994 = vunpack.c.h.b16 %v2950
        %v2995 = vunpack.c.l.b16 %v2951
        %v2996 = vunpack.c.h.b16 %v2951
        %v2997 = vunpack.c.l.b16 %v2952
        %v2998 = vunpack.c.h.b16 %v2952
        %v2999 = vunpack.c.l.b16 %v2953
        %v3000 = vunpack.c.h.b16 %v2953
        %v3001 = vunpack.c.l.b16 %v2954
        %v3002 = vunpack.c.h.b16 %v2954
        %v3003 = vpack.c.b16 %v2973, %v2971
        %v3004 = vpack.c.b16 %v2974, %v2972
        %v3005 = vpack.c.b16 %v2977, %v2975
        %v3006 = vpack.c.b16 %v2978, %v2976
        %v3007 = vpack.c.b16 %v2981, %v2979
        %v3008 = vpack.c.b16 %v2982, %v2980
        %v3009 = vpack.c.b16 %v2985, %v2983
        %v3010 = vpack.c.b16 %v2986, %v2984
        %v3011 = vpack.c.b16 %v2989, %v2987
        %v3012 = vpack.c.b16 %v2990, %v2988
        %v3013 = vpack.c.b16 %v2993, %v2991
        %v3014 = vpack.c.b16 %v2994, %v2992
        %v3015 = vpack.c.b16 %v2997, %v2995
        %v3016 = vpack.c.b16 %v2998, %v2996
        %v3017 = vpack.c.b16 %v3001, %v2999
        %v3018 = vpack.c.b16 %v3002, %v3000
        %3035 = vmatpush.bf16.msra.mxu0 %v3017
        %3036 = vmatpush.bf16.msra.mxu0 %v3015
        %3037 = vmatpush.bf16.msra.mxu0 %v3013
        %3038 = vmatpush.bf16.msra.mxu0 %v3011
        %3039 = vmatpush.bf16.msra.mxu0 %v3009
        %3040 = vmatpush.bf16.msra.mxu0 %v3007
        %3041 = vmatpush.bf16.msra.mxu0 %v3005
        %3042 = vmatpush.bf16.msra.mxu0 %v3003
        %3043 = vmatmul.bf16.gmra.mxu0 %v660
        %v3044 = vpop.f32.mrf.mxu0
        %v3045 = vadd.f32 0.0, %v3044
        %v3046 = vpop.f32.mrf.mxu0
        %v3047 = vadd.f32 0.0, %v3046
        %3048 = vmatmul.bf16.gmra.mxu0 %v661
        %v3049 = vpop.f32.mrf.mxu0
        %v3050 = vadd.f32 0.0, %v3049
        %v3051 = vpop.f32.mrf.mxu0
        %v3052 = vadd.f32 0.0, %v3051
        %3053 = vmatmul.bf16.gmra.mxu0 %v662
        %v3054 = vpop.f32.mrf.mxu0
        %v3055 = vadd.f32 0.0, %v3054
        %v3056 = vpop.f32.mrf.mxu0
        %v3057 = vadd.f32 0.0, %v3056
        %3058 = vmatmul.bf16.gmra.mxu0 %v663
        %v3059 = vpop.f32.mrf.mxu0
        %v3060 = vadd.f32 0.0, %v3059
        %v3061 = vpop.f32.mrf.mxu0
        %v3062 = vadd.f32 0.0, %v3061
        %3063 = vmatmul.bf16.gmra.mxu0 %v664
        %v3064 = vpop.f32.mrf.mxu0
        %v3065 = vadd.f32 0.0, %v3064
        %v3066 = vpop.f32.mrf.mxu0
        %v3067 = vadd.f32 0.0, %v3066
        %3068 = vmatmul.bf16.gmra.mxu0 %v665
        %v3069 = vpop.f32.mrf.mxu0
        %v3070 = vadd.f32 0.0, %v3069
        %v3071 = vpop.f32.mrf.mxu0
        %v3072 = vadd.f32 0.0, %v3071
        %3073 = vmatmul.bf16.gmra.mxu0 %v666
        %v3074 = vpop.f32.mrf.mxu0
        %v3075 = vadd.f32 0.0, %v3074
        %v3076 = vpop.f32.mrf.mxu0
        %v3077 = vadd.f32 0.0, %v3076
        %3078 = vmatmul.bf16.gmra.mxu0 %v667
        %v3079 = vpop.f32.mrf.mxu0
        %v3080 = vadd.f32 0.0, %v3079
        %v3081 = vpop.f32.mrf.mxu0
        %v3082 = vadd.f32 0.0, %v3081
        %3083 = vmatmul.bf16.gmra.mxu0 %v668
        %v3084 = vpop.f32.mrf.mxu0
        %v3085 = vadd.f32 0.0, %v3084
        %v3086 = vpop.f32.mrf.mxu0
        %v3087 = vadd.f32 0.0, %v3086
        %3088 = vmatmul.bf16.gmra.mxu0 %v669
        %v3089 = vpop.f32.mrf.mxu0
        %v3090 = vadd.f32 0.0, %v3089
        %v3091 = vpop.f32.mrf.mxu0
        %v3092 = vadd.f32 0.0, %v3091
        %3093 = vmatmul.bf16.gmra.mxu0 %v670
        %v3094 = vpop.f32.mrf.mxu0
        %v3095 = vadd.f32 0.0, %v3094
        %v3096 = vpop.f32.mrf.mxu0
        %v3097 = vadd.f32 0.0, %v3096
        %3098 = vmatmul.bf16.gmra.mxu0 %v671
        %v3099 = vpop.f32.mrf.mxu0
        %v3100 = vadd.f32 0.0, %v3099
        %v3101 = vpop.f32.mrf.mxu0
        %v3102 = vadd.f32 0.0, %v3101
        %3103 = vmatmul.bf16.gmra.mxu0 %v672
        %v3104 = vpop.f32.mrf.mxu0
        %v3105 = vadd.f32 0.0, %v3104
        %v3106 = vpop.f32.mrf.mxu0
        %v3107 = vadd.f32 0.0, %v3106
        %3108 = vmatmul.bf16.gmra.mxu0 %v673
        %v3109 = vpop.f32.mrf.mxu0
        %v3110 = vadd.f32 0.0, %v3109
        %v3111 = vpop.f32.mrf.mxu0
        %v3112 = vadd.f32 0.0, %v3111
        %3113 = vmatmul.bf16.gmra.mxu0 %v674
        %v3114 = vpop.f32.mrf.mxu0
        %v3115 = vadd.f32 0.0, %v3114
        %v3116 = vpop.f32.mrf.mxu0
        %v3117 = vadd.f32 0.0, %v3116
        %3118 = vmatmul.bf16.gmra.mxu0 %v675
        %v3119 = vpop.f32.mrf.mxu0
        %v3120 = vadd.f32 0.0, %v3119
        %v3121 = vpop.f32.mrf.mxu0
        %v3122 = vadd.f32 0.0, %v3121
        %3123 = vdwg.mxu0
        %3124 = vmatpush.bf16.msra.mxu0 %v3018
        %3125 = vmatpush.bf16.msra.mxu0 %v3016
        %3126 = vmatpush.bf16.msra.mxu0 %v3014
        %3127 = vmatpush.bf16.msra.mxu0 %v3012
        %3128 = vmatpush.bf16.msra.mxu0 %v3010
        %3129 = vmatpush.bf16.msra.mxu0 %v3008
        %3130 = vmatpush.bf16.msra.mxu0 %v3006
        %3131 = vmatpush.bf16.msra.mxu0 %v3004
        %3132 = vmatmul.bf16.gmra.mxu0 %v660
        %v3133 = vpop.f32.mrf.mxu0
        %v3134 = vadd.f32 0.0, %v3133
        %v3135 = vpop.f32.mrf.mxu0
        %v3136 = vadd.f32 0.0, %v3135
        %3137 = vmatmul.bf16.gmra.mxu0 %v661
        %v3138 = vpop.f32.mrf.mxu0
        %v3139 = vadd.f32 0.0, %v3138
        %v3140 = vpop.f32.mrf.mxu0
        %v3141 = vadd.f32 0.0, %v3140
        %3142 = vmatmul.bf16.gmra.mxu0 %v662
        %v3143 = vpop.f32.mrf.mxu0
        %v3144 = vadd.f32 0.0, %v3143
        %v3145 = vpop.f32.mrf.mxu0
        %v3146 = vadd.f32 0.0, %v3145
        %3147 = vmatmul.bf16.gmra.mxu0 %v663
        %v3148 = vpop.f32.mrf.mxu0
        %v3149 = vadd.f32 0.0, %v3148
        %v3150 = vpop.f32.mrf.mxu0
        %v3151 = vadd.f32 0.0, %v3150
        %3152 = vmatmul.bf16.gmra.mxu0 %v664
        %v3153 = vpop.f32.mrf.mxu0
        %v3154 = vadd.f32 0.0, %v3153
        %v3155 = vpop.f32.mrf.mxu0
        %v3156 = vadd.f32 0.0, %v3155
        %3157 = vmatmul.bf16.gmra.mxu0 %v665
        %v3158 = vpop.f32.mrf.mxu0
        %v3159 = vadd.f32 0.0, %v3158
        %v3160 = vpop.f32.mrf.mxu0
        %v3161 = vadd.f32 0.0, %v3160
        %3162 = vmatmul.bf16.gmra.mxu0 %v666
        %v3163 = vpop.f32.mrf.mxu0
        %v3164 = vadd.f32 0.0, %v3163
        %v3165 = vpop.f32.mrf.mxu0
        %v3166 = vadd.f32 0.0, %v3165
        %3167 = vmatmul.bf16.gmra.mxu0 %v667
        %v3168 = vpop.f32.mrf.mxu0
        %v3169 = vadd.f32 0.0, %v3168
        %v3170 = vpop.f32.mrf.mxu0
        %v3171 = vadd.f32 0.0, %v3170
        %3172 = vmatmul.bf16.gmra.mxu0 %v668
        %v3173 = vpop.f32.mrf.mxu0
        %v3174 = vadd.f32 0.0, %v3173
        %v3175 = vpop.f32.mrf.mxu0
        %v3176 = vadd.f32 0.0, %v3175
        %3177 = vmatmul.bf16.gmra.mxu0 %v669
        %v3178 = vpop.f32.mrf.mxu0
        %v3179 = vadd.f32 0.0, %v3178
        %v3180 = vpop.f32.mrf.mxu0
        %v3181 = vadd.f32 0.0, %v3180
        %3182 = vmatmul.bf16.gmra.mxu0 %v670
        %v3183 = vpop.f32.mrf.mxu0
        %v3184 = vadd.f32 0.0, %v3183
        %v3185 = vpop.f32.mrf.mxu0
        %v3186 = vadd.f32 0.0, %v3185
        %3187 = vmatmul.bf16.gmra.mxu0 %v671
        %v3188 = vpop.f32.mrf.mxu0
        %v3189 = vadd.f32 0.0, %v3188
        %v3190 = vpop.f32.mrf.mxu0
        %v3191 = vadd.f32 0.0, %v3190
        %3192 = vmatmul.bf16.gmra.mxu0 %v672
        %v3193 = vpop.f32.mrf.mxu0
        %v3194 = vadd.f32 0.0, %v3193
        %v3195 = vpop.f32.mrf.mxu0
        %v3196 = vadd.f32 0.0, %v3195
        %3197 = vmatmul.bf16.gmra.mxu0 %v673
        %v3198 = vpop.f32.mrf.mxu0
        %v3199 = vadd.f32 0.0, %v3198
        %v3200 = vpop.f32.mrf.mxu0
        %v3201 = vadd.f32 0.0, %v3200
        %3202 = vmatmul.bf16.gmra.mxu0 %v674
        %v3203 = vpop.f32.mrf.mxu0
        %v3204 = vadd.f32 0.0, %v3203
        %v3205 = vpop.f32.mrf.mxu0
        %v3206 = vadd.f32 0.0, %v3205
        %3207 = vmatmul.bf16.gmra.mxu0 %v675
        %v3208 = vpop.f32.mrf.mxu0
        %v3209 = vadd.f32 0.0, %v3208
        %v3210 = vpop.f32.mrf.mxu0
        %v3211 = vadd.f32 0.0, %v3210
        %3212 = vdwg.mxu0
        %v3229 = vunpack.c.l.b16 %v2922
        %v3230 = vunpack.c.h.b16 %v2922
        %v3231 = vunpack.c.l.b16 %v2923
        %v3232 = vunpack.c.h.b16 %v2923
        %v3233 = vunpack.c.l.b16 %v2924
        %v3234 = vunpack.c.h.b16 %v2924
        %v3235 = vunpack.c.l.b16 %v2925
        %v3236 = vunpack.c.h.b16 %v2925
        %v3237 = vunpack.c.l.b16 %v2926
        %v3238 = vunpack.c.h.b16 %v2926
        %v3239 = vunpack.c.l.b16 %v2927
        %v3240 = vunpack.c.h.b16 %v2927
        %v3241 = vunpack.c.l.b16 %v2928
        %v3242 = vunpack.c.h.b16 %v2928
        %v3243 = vunpack.c.l.b16 %v2929
        %v3244 = vunpack.c.h.b16 %v2929
        %v3245 = vunpack.c.l.b16 %v2930
        %v3246 = vunpack.c.h.b16 %v2930
        %v3247 = vunpack.c.l.b16 %v2931
        %v3248 = vunpack.c.h.b16 %v2931
        %v3249 = vunpack.c.l.b16 %v2932
        %v3250 = vunpack.c.h.b16 %v2932
        %v3251 = vunpack.c.l.b16 %v2933
        %v3252 = vunpack.c.h.b16 %v2933
        %v3253 = vunpack.c.l.b16 %v2934
        %v3254 = vunpack.c.h.b16 %v2934
        %v3255 = vunpack.c.l.b16 %v2935
        %v3256 = vunpack.c.h.b16 %v2935
        %v3257 = vunpack.c.l.b16 %v2936
        %v3258 = vunpack.c.h.b16 %v2936
        %v3259 = vunpack.c.l.b16 %v2937
        %v3260 = vunpack.c.h.b16 %v2937
        %v3261 = vpack.c.b16 %v3231, %v3229
        %v3262 = vpack.c.b16 %v3232, %v3230
        %v3263 = vpack.c.b16 %v3235, %v3233
        %v3264 = vpack.c.b16 %v3236, %v3234
        %v3265 = vpack.c.b16 %v3239, %v3237
        %v3266 = vpack.c.b16 %v3240, %v3238
        %v3267 = vpack.c.b16 %v3243, %v3241
        %v3268 = vpack.c.b16 %v3244, %v3242
        %v3269 = vpack.c.b16 %v3247, %v3245
        %v3270 = vpack.c.b16 %v3248, %v3246
        %v3271 = vpack.c.b16 %v3251, %v3249
        %v3272 = vpack.c.b16 %v3252, %v3250
        %v3273 = vpack.c.b16 %v3255, %v3253
        %v3274 = vpack.c.b16 %v3256, %v3254
        %v3275 = vpack.c.b16 %v3259, %v3257
        %v3276 = vpack.c.b16 %v3260, %v3258
        %3293 = vmatpush.bf16.msra.mxu0 %v3275
        %3294 = vmatpush.bf16.msra.mxu0 %v3273
        %3295 = vmatpush.bf16.msra.mxu0 %v3271
        %3296 = vmatpush.bf16.msra.mxu0 %v3269
        %3297 = vmatpush.bf16.msra.mxu0 %v3267
        %3298 = vmatpush.bf16.msra.mxu0 %v3265
        %3299 = vmatpush.bf16.msra.mxu0 %v3263
        %3300 = vmatpush.bf16.msra.mxu0 %v3261
        %3301 = vmatmul.bf16.gmra.mxu0 %v1014
        %v3302 = vpop.f32.mrf.mxu0
        %v3303 = vadd.f32 %v3045, %v3302
        %v3304 = vpop.f32.mrf.mxu0
        %v3305 = vadd.f32 %v3047, %v3304
        %3306 = vmatmul.bf16.gmra.mxu0 %v1015
        %v3307 = vpop.f32.mrf.mxu0
        %v3308 = vadd.f32 %v3050, %v3307
        %v3309 = vpop.f32.mrf.mxu0
        %v3310 = vadd.f32 %v3052, %v3309
        %3311 = vmatmul.bf16.gmra.mxu0 %v1016
        %v3312 = vpop.f32.mrf.mxu0
        %v3313 = vadd.f32 %v3055, %v3312
        %v3314 = vpop.f32.mrf.mxu0
        %v3315 = vadd.f32 %v3057, %v3314
        %3316 = vmatmul.bf16.gmra.mxu0 %v1017
        %v3317 = vpop.f32.mrf.mxu0
        %v3318 = vadd.f32 %v3060, %v3317
        %v3319 = vpop.f32.mrf.mxu0
        %v3320 = vadd.f32 %v3062, %v3319
        %3321 = vmatmul.bf16.gmra.mxu0 %v1018
        %v3322 = vpop.f32.mrf.mxu0
        %v3323 = vadd.f32 %v3065, %v3322
        %v3324 = vpop.f32.mrf.mxu0
        %v3325 = vadd.f32 %v3067, %v3324
        %3326 = vmatmul.bf16.gmra.mxu0 %v1019
        %v3327 = vpop.f32.mrf.mxu0
        %v3328 = vadd.f32 %v3070, %v3327
        %v3329 = vpop.f32.mrf.mxu0
        %v3330 = vadd.f32 %v3072, %v3329
        %3331 = vmatmul.bf16.gmra.mxu0 %v1020
        %v3332 = vpop.f32.mrf.mxu0
        %v3333 = vadd.f32 %v3075, %v3332
        %v3334 = vpop.f32.mrf.mxu0
        %v3335 = vadd.f32 %v3077, %v3334
        %3336 = vmatmul.bf16.gmra.mxu0 %v1021
        %v3337 = vpop.f32.mrf.mxu0
        %v3338 = vadd.f32 %v3080, %v3337
        %v3339 = vpop.f32.mrf.mxu0
        %v3340 = vadd.f32 %v3082, %v3339
        %3341 = vmatmul.bf16.gmra.mxu0 %v1022
        %v3342 = vpop.f32.mrf.mxu0
        %v3343 = vadd.f32 %v3085, %v3342
        %v3344 = vpop.f32.mrf.mxu0
        %v3345 = vadd.f32 %v3087, %v3344
        %3346 = vmatmul.bf16.gmra.mxu0 %v1023
        %v3347 = vpop.f32.mrf.mxu0
        %v3348 = vadd.f32 %v3090, %v3347
        %v3349 = vpop.f32.mrf.mxu0
        %v3350 = vadd.f32 %v3092, %v3349
        %3351 = vmatmul.bf16.gmra.mxu0 %v1024
        %v3352 = vpop.f32.mrf.mxu0
        %v3353 = vadd.f32 %v3095, %v3352
        %v3354 = vpop.f32.mrf.mxu0
        %v3355 = vadd.f32 %v3097, %v3354
        %3356 = vmatmul.bf16.gmra.mxu0 %v1025
        %v3357 = vpop.f32.mrf.mxu0
        %v3358 = vadd.f32 %v3100, %v3357
        %v3359 = vpop.f32.mrf.mxu0
        %v3360 = vadd.f32 %v3102, %v3359
        %3361 = vmatmul.bf16.gmra.mxu0 %v1026
        %v3362 = vpop.f32.mrf.mxu0
        %v3363 = vadd.f32 %v3105, %v3362
        %v3364 = vpop.f32.mrf.mxu0
        %v3365 = vadd.f32 %v3107, %v3364
        %3366 = vmatmul.bf16.gmra.mxu0 %v1027
        %v3367 = vpop.f32.mrf.mxu0
        %v3368 = vadd.f32 %v3110, %v3367
        %v3369 = vpop.f32.mrf.mxu0
        %v3370 = vadd.f32 %v3112, %v3369
        %3371 = vmatmul.bf16.gmra.mxu0 %v1028
        %v3372 = vpop.f32.mrf.mxu0
        %v3373 = vadd.f32 %v3115, %v3372
        %v3374 = vpop.f32.mrf.mxu0
        %v3375 = vadd.f32 %v3117, %v3374
        %3376 = vmatmul.bf16.gmra.mxu0 %v1029
        %v3377 = vpop.f32.mrf.mxu0
        %v3378 = vadd.f32 %v3120, %v3377
        %v3379 = vpop.f32.mrf.mxu0
        %v3380 = vadd.f32 %v3122, %v3379
        %3381 = vdwg.mxu0
        %3382 = vmatpush.bf16.msra.mxu0 %v3276
        %3383 = vmatpush.bf16.msra.mxu0 %v3274
        %3384 = vmatpush.bf16.msra.mxu0 %v3272
        %3385 = vmatpush.bf16.msra.mxu0 %v3270
        %3386 = vmatpush.bf16.msra.mxu0 %v3268
        %3387 = vmatpush.bf16.msra.mxu0 %v3266
        %3388 = vmatpush.bf16.msra.mxu0 %v3264
        %3389 = vmatpush.bf16.msra.mxu0 %v3262
        %3390 = vmatmul.bf16.gmra.mxu0 %v1014
        %v3391 = vpop.f32.mrf.mxu0
        %v3392 = vadd.f32 %v3134, %v3391
        %v3393 = vpop.f32.mrf.mxu0
        %v3394 = vadd.f32 %v3136, %v3393
        %3395 = vmatmul.bf16.gmra.mxu0 %v1015
        %v3396 = vpop.f32.mrf.mxu0
        %v3397 = vadd.f32 %v3139, %v3396
        %v3398 = vpop.f32.mrf.mxu0
        %v3399 = vadd.f32 %v3141, %v3398
        %3400 = vmatmul.bf16.gmra.mxu0 %v1016
        %v3401 = vpop.f32.mrf.mxu0
        %v3402 = vadd.f32 %v3144, %v3401
        %v3403 = vpop.f32.mrf.mxu0
        %v3404 = vadd.f32 %v3146, %v3403
        %3405 = vmatmul.bf16.gmra.mxu0 %v1017
        %v3406 = vpop.f32.mrf.mxu0
        %v3407 = vadd.f32 %v3149, %v3406
        %v3408 = vpop.f32.mrf.mxu0
        %v3409 = vadd.f32 %v3151, %v3408
        %3410 = vmatmul.bf16.gmra.mxu0 %v1018
        %v3411 = vpop.f32.mrf.mxu0
        %v3412 = vadd.f32 %v3154, %v3411
        %v3413 = vpop.f32.mrf.mxu0
        %v3414 = vadd.f32 %v3156, %v3413
        %3415 = vmatmul.bf16.gmra.mxu0 %v1019
        %v3416 = vpop.f32.mrf.mxu0
        %v3417 = vadd.f32 %v3159, %v3416
        %v3418 = vpop.f32.mrf.mxu0
        %v3419 = vadd.f32 %v3161, %v3418
        %3420 = vmatmul.bf16.gmra.mxu0 %v1020
        %v3421 = vpop.f32.mrf.mxu0
        %v3422 = vadd.f32 %v3164, %v3421
        %v3423 = vpop.f32.mrf.mxu0
        %v3424 = vadd.f32 %v3166, %v3423
        %3425 = vmatmul.bf16.gmra.mxu0 %v1021
        %v3426 = vpop.f32.mrf.mxu0
        %v3427 = vadd.f32 %v3169, %v3426
        %v3428 = vpop.f32.mrf.mxu0
        %v3429 = vadd.f32 %v3171, %v3428
        %3430 = vmatmul.bf16.gmra.mxu0 %v1022
        %v3431 = vpop.f32.mrf.mxu0
        %v3432 = vadd.f32 %v3174, %v3431
        %v3433 = vpop.f32.mrf.mxu0
        %v3434 = vadd.f32 %v3176, %v3433
        %3435 = vmatmul.bf16.gmra.mxu0 %v1023
        %v3436 = vpop.f32.mrf.mxu0
        %v3437 = vadd.f32 %v3179, %v3436
        %v3438 = vpop.f32.mrf.mxu0
        %v3439 = vadd.f32 %v3181, %v3438
        %3440 = vmatmul.bf16.gmra.mxu0 %v1024
        %v3441 = vpop.f32.mrf.mxu0
        %v3442 = vadd.f32 %v3184, %v3441
        %v3443 = vpop.f32.mrf.mxu0
        %v3444 = vadd.f32 %v3186, %v3443
        %3445 = vmatmul.bf16.gmra.mxu0 %v1025
        %v3446 = vpop.f32.mrf.mxu0
        %v3447 = vadd.f32 %v3189, %v3446
        %v3448 = vpop.f32.mrf.mxu0
        %v3449 = vadd.f32 %v3191, %v3448
        %3450 = vmatmul.bf16.gmra.mxu0 %v1026
        %v3451 = vpop.f32.mrf.mxu0
        %v3452 = vadd.f32 %v3194, %v3451
        %v3453 = vpop.f32.mrf.mxu0
        %v3454 = vadd.f32 %v3196, %v3453
        %3455 = vmatmul.bf16.gmra.mxu0 %v1027
        %v3456 = vpop.f32.mrf.mxu0
        %v3457 = vadd.f32 %v3199, %v3456
        %v3458 = vpop.f32.mrf.mxu0
        %v3459 = vadd.f32 %v3201, %v3458
        %3460 = vmatmul.bf16.gmra.mxu0 %v1028
        %v3461 = vpop.f32.mrf.mxu0
        %v3462 = vadd.f32 %v3204, %v3461
        %v3463 = vpop.f32.mrf.mxu0
        %v3464 = vadd.f32 %v3206, %v3463
        %3465 = vmatmul.bf16.gmra.mxu0 %v1029
        %v3466 = vpop.f32.mrf.mxu0
        %v3467 = vadd.f32 %v3209, %v3466
        %v3468 = vpop.f32.mrf.mxu0
        %v3469 = vadd.f32 %v3211, %v3468
        %3470 = vdwg.mxu0
        %v3471 = vadd.f32 %v3303, %v1305
        %v3472 = vadd.f32 %v3392, %v1306
        %v3473 = vadd.f32 %v3305, %v1305
        %v3474 = vadd.f32 %v3394, %v1306
        %v3475 = vadd.f32 %v3308, %v1305
        %v3476 = vadd.f32 %v3397, %v1306
        %v3477 = vadd.f32 %v3310, %v1305
        %v3478 = vadd.f32 %v3399, %v1306
        %v3479 = vadd.f32 %v3313, %v1305
        %v3480 = vadd.f32 %v3402, %v1306
        %v3481 = vadd.f32 %v3315, %v1305
        %v3482 = vadd.f32 %v3404, %v1306
        %v3483 = vadd.f32 %v3318, %v1305
        %v3484 = vadd.f32 %v3407, %v1306
        %v3485 = vadd.f32 %v3320, %v1305
        %v3486 = vadd.f32 %v3409, %v1306
        %v3487 = vadd.f32 %v3323, %v1305
        %v3488 = vadd.f32 %v3412, %v1306
        %v3489 = vadd.f32 %v3325, %v1305
        %v3490 = vadd.f32 %v3414, %v1306
        %v3491 = vadd.f32 %v3328, %v1305
        %v3492 = vadd.f32 %v3417, %v1306
        %v3493 = vadd.f32 %v3330, %v1305
        %v3494 = vadd.f32 %v3419, %v1306
        %v3495 = vadd.f32 %v3333, %v1305
        %v3496 = vadd.f32 %v3422, %v1306
        %v3497 = vadd.f32 %v3335, %v1305
        %v3498 = vadd.f32 %v3424, %v1306
        %v3499 = vadd.f32 %v3338, %v1305
        %v3500 = vadd.f32 %v3427, %v1306
        %v3501 = vadd.f32 %v3340, %v1305
        %v3502 = vadd.f32 %v3429, %v1306
        %v3503 = vadd.f32 %v3343, %v1305
        %v3504 = vadd.f32 %v3432, %v1306
        %v3505 = vadd.f32 %v3345, %v1305
        %v3506 = vadd.f32 %v3434, %v1306
        %v3507 = vadd.f32 %v3348, %v1305
        %v3508 = vadd.f32 %v3437, %v1306
        %v3509 = vadd.f32 %v3350, %v1305
        %v3510 = vadd.f32 %v3439, %v1306
        %v3511 = vadd.f32 %v3353, %v1305
        %v3512 = vadd.f32 %v3442, %v1306
        %v3513 = vadd.f32 %v3355, %v1305
        %v3514 = vadd.f32 %v3444, %v1306
        %v3515 = vadd.f32 %v3358, %v1305
        %v3516 = vadd.f32 %v3447, %v1306
        %v3517 = vadd.f32 %v3360, %v1305
        %v3518 = vadd.f32 %v3449, %v1306
        %v3519 = vadd.f32 %v3363, %v1305
        %v3520 = vadd.f32 %v3452, %v1306
        %v3521 = vadd.f32 %v3365, %v1305
        %v3522 = vadd.f32 %v3454, %v1306
        %v3523 = vadd.f32 %v3368, %v1305
        %v3524 = vadd.f32 %v3457, %v1306
        %v3525 = vadd.f32 %v3370, %v1305
        %v3526 = vadd.f32 %v3459, %v1306
        %v3527 = vadd.f32 %v3373, %v1305
        %v3528 = vadd.f32 %v3462, %v1306
        %v3529 = vadd.f32 %v3375, %v1305
        %v3530 = vadd.f32 %v3464, %v1306
        %v3531 = vadd.f32 %v3378, %v1305
        %v3532 = vadd.f32 %v3467, %v1306
        %v3533 = vadd.f32 %v3380, %v1305
        %v3534 = vadd.f32 %v3469, %v1306
        %v3535 = vmax.f32 %v3471, 0.0
        %v3536 = vmax.f32 %v3472, 0.0
        %v3537 = vmax.f32 %v3473, 0.0
        %v3538 = vmax.f32 %v3474, 0.0
        %v3539 = vmax.f32 %v3475, 0.0
        %v3540 = vmax.f32 %v3476, 0.0
        %v3541 = vmax.f32 %v3477, 0.0
        %v3542 = vmax.f32 %v3478, 0.0
        %v3543 = vmax.f32 %v3479, 0.0
        %v3544 = vmax.f32 %v3480, 0.0
        %v3545 = vmax.f32 %v3481, 0.0
        %v3546 = vmax.f32 %v3482, 0.0
        %v3547 = vmax.f32 %v3483, 0.0
        %v3548 = vmax.f32 %v3484, 0.0
        %v3549 = vmax.f32 %v3485, 0.0
        %v3550 = vmax.f32 %v3486, 0.0
        %v3551 = vmax.f32 %v3487, 0.0
        %v3552 = vmax.f32 %v3488, 0.0
        %v3553 = vmax.f32 %v3489, 0.0
        %v3554 = vmax.f32 %v3490, 0.0
        %v3555 = vmax.f32 %v3491, 0.0
        %v3556 = vmax.f32 %v3492, 0.0
        %v3557 = vmax.f32 %v3493, 0.0
        %v3558 = vmax.f32 %v3494, 0.0
        %v3559 = vmax.f32 %v3495, 0.0
        %v3560 = vmax.f32 %v3496, 0.0
        %v3561 = vmax.f32 %v3497, 0.0
        %v3562 = vmax.f32 %v3498, 0.0
        %v3563 = vmax.f32 %v3499, 0.0
        %v3564 = vmax.f32 %v3500, 0.0
        %v3565 = vmax.f32 %v3501, 0.0
        %v3566 = vmax.f32 %v3502, 0.0
        %v3567 = vmax.f32 %v3503, 0.0
        %v3568 = vmax.f32 %v3504, 0.0
        %v3569 = vmax.f32 %v3505, 0.0
        %v3570 = vmax.f32 %v3506, 0.0
        %v3571 = vmax.f32 %v3507, 0.0
        %v3572 = vmax.f32 %v3508, 0.0
        %v3573 = vmax.f32 %v3509, 0.0
        %v3574 = vmax.f32 %v3510, 0.0
        %v3575 = vmax.f32 %v3511, 0.0
        %v3576 = vmax.f32 %v3512, 0.0
        %v3577 = vmax.f32 %v3513, 0.0
        %v3578 = vmax.f32 %v3514, 0.0
        %v3579 = vmax.f32 %v3515, 0.0
        %v3580 = vmax.f32 %v3516, 0.0
        %v3581 = vmax.f32 %v3517, 0.0
        %v3582 = vmax.f32 %v3518, 0.0
        %v3583 = vmax.f32 %v3519, 0.0
        %v3584 = vmax.f32 %v3520, 0.0
        %v3585 = vmax.f32 %v3521, 0.0
        %v3586 = vmax.f32 %v3522, 0.0
        %v3587 = vmax.f32 %v3523, 0.0
        %v3588 = vmax.f32 %v3524, 0.0
        %v3589 = vmax.f32 %v3525, 0.0
        %v3590 = vmax.f32 %v3526, 0.0
        %v3591 = vmax.f32 %v3527, 0.0
        %v3592 = vmax.f32 %v3528, 0.0
        %v3593 = vmax.f32 %v3529, 0.0
        %v3594 = vmax.f32 %v3530, 0.0
        %v3595 = vmax.f32 %v3531, 0.0
        %v3596 = vmax.f32 %v3532, 0.0
        %v3597 = vmax.f32 %v3533, 0.0
        %v3598 = vmax.f32 %v3534, 0.0
        %v3599 = vmax.f32 %v2857, %v3535
        %v3600 = vmax.f32 %v2858, %v3536
        %v3601 = vmax.f32 %v2859, %v3537
        %v3602 = vmax.f32 %v2860, %v3538
        %v3603 = vmax.f32 %v2861, %v3539
        %v3604 = vmax.f32 %v2862, %v3540
        %v3605 = vmax.f32 %v2863, %v3541
        %v3606 = vmax.f32 %v2864, %v3542
        %v3607 = vmax.f32 %v2865, %v3543
        %v3608 = vmax.f32 %v2866, %v3544
        %v3609 = vmax.f32 %v2867, %v3545
        %v3610 = vmax.f32 %v2868, %v3546
        %v3611 = vmax.f32 %v2869, %v3547
        %v3612 = vmax.f32 %v2870, %v3548
        %v3613 = vmax.f32 %v2871, %v3549
        %v3614 = vmax.f32 %v2872, %v3550
        %v3615 = vmax.f32 %v2873, %v3551
        %v3616 = vmax.f32 %v2874, %v3552
        %v3617 = vmax.f32 %v2875, %v3553
        %v3618 = vmax.f32 %v2876, %v3554
        %v3619 = vmax.f32 %v2877, %v3555
        %v3620 = vmax.f32 %v2878, %v3556
        %v3621 = vmax.f32 %v2879, %v3557
        %v3622 = vmax.f32 %v2880, %v3558
        %v3623 = vmax.f32 %v2881, %v3559
        %v3624 = vmax.f32 %v2882, %v3560
        %v3625 = vmax.f32 %v2883, %v3561
        %v3626 = vmax.f32 %v2884, %v3562
        %v3627 = vmax.f32 %v2885, %v3563
        %v3628 = vmax.f32 %v2886, %v3564
        %v3629 = vmax.f32 %v2887, %v3565
        %v3630 = vmax.f32 %v2888, %v3566
        %v3631 = vmax.f32 %v2889, %v3567
        %v3632 = vmax.f32 %v2890, %v3568
        %v3633 = vmax.f32 %v2891, %v3569
        %v3634 = vmax.f32 %v2892, %v3570
        %v3635 = vmax.f32 %v2893, %v3571
        %v3636 = vmax.f32 %v2894, %v3572
        %v3637 = vmax.f32 %v2895, %v3573
        %v3638 = vmax.f32 %v2896, %v3574
        %v3639 = vmax.f32 %v2897, %v3575
        %v3640 = vmax.f32 %v2898, %v3576
        %v3641 = vmax.f32 %v2899, %v3577
        %v3642 = vmax.f32 %v2900, %v3578
        %v3643 = vmax.f32 %v2901, %v3579
        %v3644 = vmax.f32 %v2902, %v3580
        %v3645 = vmax.f32 %v2903, %v3581
        %v3646 = vmax.f32 %v2904, %v3582
        %v3647 = vmax.f32 %v2905, %v3583
        %v3648 = vmax.f32 %v2906, %v3584
        %v3649 = vmax.f32 %v2907, %v3585
        %v3650 = vmax.f32 %v2908, %v3586
        %v3651 = vmax.f32 %v2909, %v3587
        %v3652 = vmax.f32 %v2910, %v3588
        %v3653 = vmax.f32 %v2911, %v3589
        %v3654 = vmax.f32 %v2912, %v3590
        %v3655 = vmax.f32 %v2913, %v3591
        %v3656 = vmax.f32 %v2914, %v3592
        %v3657 = vmax.f32 %v2915, %v3593
        %v3658 = vmax.f32 %v2916, %v3594
        %v3659 = vmax.f32 %v2917, %v3595
        %v3660 = vmax.f32 %v2918, %v3596
        %v3661 = vmax.f32 %v2919, %v3597
        %v3662 = vmax.f32 %v2920, %v3598
        %v3663 = vpack.c.bf16 %v3600, %v3599
        %v3664 = vpack.c.bf16 %v3602, %v3601
        %v3665 = vpack.c.bf16 %v3604, %v3603
        %v3666 = vpack.c.bf16 %v3606, %v3605
        %v3667 = vpack.c.bf16 %v3608, %v3607
        %v3668 = vpack.c.bf16 %v3610, %v3609
        %v3669 = vpack.c.bf16 %v3612, %v3611
        %v3670 = vpack.c.bf16 %v3614, %v3613
        %v3671 = vpack.c.bf16 %v3616, %v3615
        %v3672 = vpack.c.bf16 %v3618, %v3617
        %v3673 = vpack.c.bf16 %v3620, %v3619
        %v3674 = vpack.c.bf16 %v3622, %v3621
        %v3675 = vpack.c.bf16 %v3624, %v3623
        %v3676 = vpack.c.bf16 %v3626, %v3625
        %v3677 = vpack.c.bf16 %v3628, %v3627
        %v3678 = vpack.c.bf16 %v3630, %v3629
        %v3679 = vpack.c.bf16 %v3632, %v3631
        %v3680 = vpack.c.bf16 %v3634, %v3633
        %v3681 = vpack.c.bf16 %v3636, %v3635
        %v3682 = vpack.c.bf16 %v3638, %v3637
        %v3683 = vpack.c.bf16 %v3640, %v3639
        %v3684 = vpack.c.bf16 %v3642, %v3641
        %v3685 = vpack.c.bf16 %v3644, %v3643
        %v3686 = vpack.c.bf16 %v3646, %v3645
        %v3687 = vpack.c.bf16 %v3648, %v3647
        %v3688 = vpack.c.bf16 %v3650, %v3649
        %v3689 = vpack.c.bf16 %v3652, %v3651
        %v3690 = vpack.c.bf16 %v3654, %v3653
        %v3691 = vpack.c.bf16 %v3656, %v3655
        %v3692 = vpack.c.bf16 %v3658, %v3657
        %v3693 = vpack.c.bf16 %v3660, %v3659
        %v3694 = vpack.c.bf16 %v3662, %v3661
        %3695 = vst [vmem:[%s495] sm:$0xff] %v3663
        %3696 = vst [vmem:[%s495 + $0x8] sm:$0xff] %v3664
        %3697 = vst [vmem:[%s495 + $0x10] sm:$0xff] %v3665
        %3698 = vst [vmem:[%s495 + $0x18] sm:$0xff] %v3666
        %3699 = vst [vmem:[%s495 + $0x20] sm:$0xff] %v3667
        %3700 = vst [vmem:[%s495 + $0x28] sm:$0xff] %v3668
        %3701 = vst [vmem:[%s495 + $0x30] sm:$0xff] %v3669
        %3702 = vst [vmem:[%s495 + $0x38] sm:$0xff] %v3670
        %3703 = vst [vmem:[%s495 + $0x40] sm:$0xff] %v3671
        %3704 = vst [vmem:[%s495 + $0x48] sm:$0xff] %v3672
        %3705 = vst [vmem:[%s495 + $0x50] sm:$0xff] %v3673
        %3706 = vst [vmem:[%s495 + $0x58] sm:$0xff] %v3674
        %3707 = vst [vmem:[%s495 + $0x60] sm:$0xff] %v3675
        %3708 = vst [vmem:[%s495 + $0x68] sm:$0xff] %v3676
        %3709 = vst [vmem:[%s495 + $0x70] sm:$0xff] %v3677
        %3710 = vst [vmem:[%s495 + $0x78] sm:$0xff] %v3678
        %3711 = vst [vmem:[%s495 + $0x80] sm:$0xff] %v3679
        %3712 = vst [vmem:[%s495 + $0x88] sm:$0xff] %v3680
        %3713 = vst [vmem:[%s495 + $0x90] sm:$0xff] %v3681
        %3714 = vst [vmem:[%s495 + $0x98] sm:$0xff] %v3682
        %3715 = vst [vmem:[%s495 + $0xa0] sm:$0xff] %v3683
        %3716 = vst [vmem:[%s495 + $0xa8] sm:$0xff] %v3684
        %3717 = vst [vmem:[%s495 + $0xb0] sm:$0xff] %v3685
        %3718 = vst [vmem:[%s495 + $0xb8] sm:$0xff] %v3686
        %3719 = vst [vmem:[%s495 + $0xc0] sm:$0xff] %v3687
        %3720 = vst [vmem:[%s495 + $0xc8] sm:$0xff] %v3688
        %3721 = vst [vmem:[%s495 + $0xd0] sm:$0xff] %v3689
        %3722 = vst [vmem:[%s495 + $0xd8] sm:$0xff] %v3690
        %3723 = vst [vmem:[%s495 + $0xe0] sm:$0xff] %v3691
        %3724 = vst [vmem:[%s495 + $0xe8] sm:$0xff] %v3692
        %3725 = vst [vmem:[%s495 + $0xf0] sm:$0xff] %v3693
        %3726 = vst [vmem:[%s495 + $0xf8] sm:$0xff] %v3694
        %s3727 = smul.u32 32, %s19
        %p3728 = scmp.lt.s32.totalorder %s18, 1
        %s3729 = scalar_select %p3728, %s18, 1
        %p3730 = scmp.lt.s32.totalorder %s3727, 63
        %s3731 = scalar_select %p3730, %s3727, 63
        %s3732 = smul.addr %s3731, 2
        %s3733 = smul.addr %s3729, 128
        %s3734 = sadd.s32 %s3732, %s3733
        %s3735 = smul.addr %s3734, 4
        %s3736 = scalar_lea.vmem %s3, %s3735
        // Predicated region
        $region74: #{cnn_for_audio_forward.4} parent=68 // pred_check
          %p3737 = pneg %p116
        $region75: #{cnn_for_audio_forward.4} parent=68 // pred_check_branch
          %3739 = sbr.rel (%p3737) target = $region77
        $region76: #{cnn_for_audio_forward.4} parent=68 // pred_region
          %s3740 = smul.u32 32, %s19
        $region77: #{cnn_for_audio_forward.4} parent=68 // pred_fallthru
          _
      $region69: #{cnn_for_audio_forward.4} parent=5 // pred_fallthru
        _
      %p3741 = scmp.le.s32.totalorder 2, %s9
      // Predicated region
      $region78: #{cnn_for_audio_forward.4} parent=5 // pred_check
        %p3742 = pneg %p3741
      $region79: #{cnn_for_audio_forward.4} parent=5 // pred_check_branch
        %3744 = sbr.rel (%p3742) target = $region81
      $region80: #{cnn_for_audio_forward.4} parent=5 // pred_region
        %s3745 = ssub.s32 %s9, 2
        // Predicated region
        $region82: #{cnn_for_audio_forward.4} parent=80 // pred_check
          %p3746 = pneg %p122
        $region83: #{cnn_for_audio_forward.4} parent=80 // pred_check_branch
          %3748 = sbr.rel (%p3746) target = $region85
        $region84: #{cnn_for_audio_forward.4} parent=80 // pred_region
          %s3749 = smul.u32 32, %s21
          %p3750 = scmp.lt.s32.totalorder %s20, 1
          %s3751 = scalar_select %p3750, %s20, 1
          %p3752 = scmp.lt.s32.totalorder %s3749, 63
          %s3753 = scalar_select %p3752, %s3749, 63
          %s3754 = smul.addr %s3753, 2
          %s3755 = smul.addr %s3751, 128
          %s3756 = sadd.s32 %s3754, %s3755
          %s3757 = smul.addr %s3756, 4
          %s3758 = scalar_lea.vmem %s3, %s3757
        $region85: #{cnn_for_audio_forward.4} parent=80 // pred_fallthru
          _
      $region81: #{cnn_for_audio_forward.4} parent=5 // pred_fallthru
        _
    $region6: #{cnn_for_audio_forward.4} parent=1 // loop_footer
      %s13 = sadd.s32 1, %s9
    $region7: #{cnn_for_audio_forward.4} parent=1 // loop_footer_branch
      %8 = sbr.rel target = $region3
    $region8: #{cnn_for_audio_forward.4} parent=1 // loop_exit
      _

// kernel: cnn_for_audio_forward.5
$region0: #{cnn_for_audio_forward.5}
  #allocation0 [shape = 'u32[]', space=smem, size = 0x4, offset = 0x4, fixed_abs, tag = 'smem constant byte address 0x4 - core index']
  #allocation1 [shape = 'u32[72,128]{1,0:T(1,128)}', space=vmem, size = 0x9000, scoped, tag = 'internal scratch']
  %s0 = inlined_call_operand.vmem [shape: bf16[2,1,256,512], index: 0, kind: input, shape index: {}]
  %s1 = inlined_call_operand.vmem [shape: bf16[4,512,32], index: 1, kind: input, shape index: {}]
  %s2 = inlined_call_operand.vmem [shape: f32[1,32], index: 2, kind: input, shape index: {}]
  %s3 = inlined_call_operand.vmem [shape: bf16[2,256,32], index: 3, kind: output, shape index: {}]
  %s4 = sld [smem:[#allocation0]]
  $region45: #{cnn_for_audio_forward.5} parent=0
    _
  %s6 = ssub.s32 1, %s4
  %s7 = scalar_select 0, %s6, %s4
  loop: start=0, step=1, limit=4
  $region2: #{cnn_for_audio_forward.5} parent=0 // loop_pre_header
    _
  $region3: #{cnn_for_audio_forward.5} parent=0 // loop_header
    %s9 = sphi 0, %s13
    %p10 = scmp.ge.s32.totalorder %s9, 4
    %s16 = sphi 0, %s28
    %s17 = sphi 0, %s24
    %s18 = sphi 0, %s16
    %s19 = sphi 0, %s17
    %s20 = sphi 0, %s18
    %s21 = sphi 0, %s19
    %s33 = sphi 0, %s35
    %s36 = sphi 0, %s33
    %s37 = sphi 0, %s36
    %s53 = sphi 0, %s37
    %s57 = sphi 0, %s57
    %s59 = sphi 0, %s57
    %s60 = sphi 0, %s59
    %s74 = sphi 0, %s60
    %s78 = sphi 0, %s78
    %s80 = sphi 0, %s78
    %s81 = sphi 0, %s80
    %s95 = sphi 0, %s81
    %s103 = sphi 0, %s105
    %s106 = sphi 0, %s103
    %s107 = sphi 0, %s106
    %s123 = sphi 0, %s107
  $region4: #{cnn_for_audio_forward.5} parent=0 // loop_header_branch
    %12 = sbr.rel (%p10) target = $region8
  $region5: #{cnn_for_audio_forward.5} parent=0 // loop_body
    %s14 = ssub.s32 %s9, 1
    %s15 = ssub.s32 %s9, 2
    %s22 = sadd.s32 1, %s17
    %p23 = scmp.ge.s32.totalorder %s22, 1
    %s24 = scalar_select %p23, 0, %s22
    %s25 = sadd.s32 1, %s16
    %s26 = scalar_select %p23, %s25, %s16
    %p27 = scmp.ge.s32.totalorder %s26, 2
    %s28 = scalar_select %p27, 0, %s26
    %s29 = ssub.s32 %s16, %s28
    %s30 = ssub.s32 %s17, %s24
    %s31 = sor.u32 %s29, %s30
    %p32 = scmp.eq.s32.totalorder %s31, 0
    %s34 = sadd.s32 %s33, 1
    %s35 = scalar_select %p32, %s33, %s34
    %p38 = pneg %p32
    %p39 = scmp.eq.s32.totalorder %s9, 1
    %p40 = por %p38, %p39
    %p41 = scmp.ne.s32.totalorder %s33, %s36
    %p42 = scmp.eq.s32.totalorder %s9, 0
    %p43 = por %p41, %p42
    %p44 = scmp.ne.s32.totalorder %s33, %s36
    %p45 = scmp.eq.s32.totalorder %s14, 1
    %p46 = por %p44, %p45
    %p47 = scmp.ne.s32.totalorder %s36, %s37
    %p48 = scmp.eq.s32.totalorder %s14, 0
    %p49 = por %p47, %p48
    %p50 = scmp.ne.s32.totalorder %s36, %s37
    %p51 = scmp.eq.s32.totalorder %s15, 1
    %p52 = por %p50, %p51
    %p54 = scmp.ne.s32.totalorder %s37, %s53
    %p55 = scmp.eq.s32.totalorder %s15, 0
    %p56 = por %p54, %p55
    %s58 = sadd.s32 %s57, 1
    %p61 = scmp.eq.s32.totalorder %s9, 1
    %p62 = scmp.ne.s32.totalorder %s57, %s59
    %p63 = scmp.eq.s32.totalorder %s9, 0
    %p64 = por %p62, %p63
    %p65 = scmp.ne.s32.totalorder %s57, %s59
    %p66 = scmp.eq.s32.totalorder %s14, 1
    %p67 = por %p65, %p66
    %p68 = scmp.ne.s32.totalorder %s59, %s60
    %p69 = scmp.eq.s32.totalorder %s14, 0
    %p70 = por %p68, %p69
    %p71 = scmp.ne.s32.totalorder %s59, %s60
    %p72 = scmp.eq.s32.totalorder %s15, 1
    %p73 = por %p71, %p72
    %p75 = scmp.ne.s32.totalorder %s60, %s74
    %p76 = scmp.eq.s32.totalorder %s15, 0
    %p77 = por %p75, %p76
    %s79 = sadd.s32 %s78, 1
    %p82 = scmp.eq.s32.totalorder %s9, 1
    %p83 = scmp.ne.s32.totalorder %s78, %s80
    %p84 = scmp.eq.s32.totalorder %s9, 0
    %p85 = por %p83, %p84
    %p86 = scmp.ne.s32.totalorder %s78, %s80
    %p87 = scmp.eq.s32.totalorder %s14, 1
    %p88 = por %p86, %p87
    %p89 = scmp.ne.s32.totalorder %s80, %s81
    %p90 = scmp.eq.s32.totalorder %s14, 0
    %p91 = por %p89, %p90
    %p92 = scmp.ne.s32.totalorder %s80, %s81
    %p93 = scmp.eq.s32.totalorder %s15, 1
    %p94 = por %p92, %p93
    %p96 = scmp.ne.s32.totalorder %s81, %s95
    %p97 = scmp.eq.s32.totalorder %s15, 0
    %p98 = por %p96, %p97
    %s99 = ssub.s32 %s16, %s28
    %s100 = ssub.s32 %s17, %s24
    %s101 = sor.u32 %s99, %s100
    %p102 = scmp.eq.s32.totalorder %s101, 0
    %s104 = sadd.s32 %s103, 1
    %s105 = scalar_select %p102, %s103, %s104
    %p108 = pneg %p102
    %p109 = scmp.eq.s32.totalorder %s9, 1
    %p110 = por %p108, %p109
    %p111 = scmp.ne.s32.totalorder %s103, %s106
    %p112 = scmp.eq.s32.totalorder %s9, 0
    %p113 = por %p111, %p112
    %p114 = scmp.ne.s32.totalorder %s103, %s106
    %p115 = scmp.eq.s32.totalorder %s14, 1
    %p116 = por %p114, %p115
    %p117 = scmp.ne.s32.totalorder %s106, %s107
    %p118 = scmp.eq.s32.totalorder %s14, 0
    %p119 = por %p117, %p118
    %p120 = scmp.ne.s32.totalorder %s106, %s107
    %p121 = scmp.eq.s32.totalorder %s15, 1
    %p122 = por %p120, %p121
    %p124 = scmp.ne.s32.totalorder %s107, %s123
    %p125 = scmp.eq.s32.totalorder %s15, 0
    %p126 = por %p124, %p125
    %p127 = scmp.le.s32.totalorder 1, %s9
    %p128 = scmp.lt.s32.totalorder %s9, 3
    %p129 = pnand %p127, %p128
    %p130 = pneg %p129
    // Predicated region
    $region9: #{cnn_for_audio_forward.5} parent=5 // pred_check
      _
    $region10: #{cnn_for_audio_forward.5} parent=5 // pred_check_branch
      %132 = sbr.rel (%p129) target = $region12
    $region11: #{cnn_for_audio_forward.5} parent=5 // pred_region
      %s133 = ssub.s32 %s9, 1
      // Predicated region
      $region13: #{cnn_for_audio_forward.5} parent=11 // pred_check
        %p134 = pneg %p70
      $region14: #{cnn_for_audio_forward.5} parent=11 // pred_check_branch
        %136 = sbr.rel (%p134) target = $region16
      $region15: #{cnn_for_audio_forward.5} parent=11 // pred_region
        _
      $region16: #{cnn_for_audio_forward.5} parent=11 // pred_fallthru
        _
      // Predicated region
      $region17: #{cnn_for_audio_forward.5} parent=11 // pred_check
        %p137 = pneg %p91
      $region18: #{cnn_for_audio_forward.5} parent=11 // pred_check_branch
        %139 = sbr.rel (%p137) target = $region20
      $region19: #{cnn_for_audio_forward.5} parent=11 // pred_region
        _
      $region20: #{cnn_for_audio_forward.5} parent=11 // pred_fallthru
        _
    $region12: #{cnn_for_audio_forward.5} parent=5 // pred_fallthru
      _
    %p140 = scmp.lt.s32.totalorder %s9, 2
    // Predicated region
    $region21: #{cnn_for_audio_forward.5} parent=5 // pred_check
      %p141 = pneg %p140
    $region22: #{cnn_for_audio_forward.5} parent=5 // pred_check_branch
      %143 = sbr.rel (%p141) target = $region24
    $region23: #{cnn_for_audio_forward.5} parent=5 // pred_region
      // Predicated region
      $region25: #{cnn_for_audio_forward.5} parent=23 // pred_check
        %p144 = pneg %p43
      $region26: #{cnn_for_audio_forward.5} parent=23 // pred_check_branch
        %146 = sbr.rel (%p144) target = $region28
      $region27: #{cnn_for_audio_forward.5} parent=23 // pred_region
        %s147 = smul.u32 32, %s17
        %p148 = scmp.lt.s32.totalorder %s16, 1
        %s149 = scalar_select %p148, %s16, 1
        %p150 = scmp.lt.s32.totalorder %s147, 31
        %s151 = scalar_select %p150, %s147, 31
        %s152 = smul.addr %s151, 4
        %s153 = smul.addr %s149, 128
        %s154 = sadd.s32 %s152, %s153
        %s155 = smul.addr %s154, 4
        %s156 = scalar_lea.vmem %s0, %s155
        %s157 = smul.u32 32, %s17
      $region28: #{cnn_for_audio_forward.5} parent=23 // pred_fallthru
        _
    $region24: #{cnn_for_audio_forward.5} parent=5 // pred_fallthru
      _
    %p158 = scmp.le.s32.totalorder 1, %s9
    %p159 = scmp.lt.s32.totalorder %s9, 3
    %p160 = pnand %p158, %p159
    %p161 = pneg %p160
    // Predicated region
    $region29: #{cnn_for_audio_forward.5} parent=5 // pred_check
      _
    $region30: #{cnn_for_audio_forward.5} parent=5 // pred_check_branch
      %163 = sbr.rel (%p160) target = $region32
    $region31: #{cnn_for_audio_forward.5} parent=5 // pred_region
      %s164 = ssub.s32 %s9, 1
      %s165 = smul.u32 32, %s19
      %p166 = scmp.lt.s32.totalorder %s18, 1
      %s167 = scalar_select %p166, %s18, 1
      %p168 = scmp.lt.s32.totalorder %s165, 31
      %s169 = scalar_select %p168, %s165, 31
      %s170 = smul.addr %s169, 4
      %s171 = smul.addr %s167, 128
      %s172 = sadd.s32 %s170, %s171
      %s173 = smul.addr %s172, 4
      %s174 = scalar_lea.vmem %s0, %s173
      %p175 = pneg %p49
      %p176 = pneg %p46
      %p177 = pneg %p70
      %p178 = pneg %p67
      %p179 = pneg %p91
      %p180 = pneg %p88
      %p181 = pneg %p119
      %p182 = pneg %p116
      %s183 = smul.u32 32, %s19
      %p184 = scmp.lt.s32.totalorder %s18, 1
      %s185 = scalar_select %p184, %s18, 1
      %p186 = scmp.lt.s32.totalorder %s183, 31
      %s187 = scalar_select %p186, %s183, 31
      %s188 = smul.addr %s185, 32
      %s189 = sadd.s32 %s187, %s188
      %s190 = smul.addr %s189, 4
      %s191 = scalar_lea.vmem %s3, %s190
      %s192 = smul.u32 32, %s19
      %p193 = scmp.lt.s32.totalorder %s18, 1
      %s194 = scalar_select %p193, %s18, 1
      %p195 = scmp.lt.s32.totalorder %s192, 31
      %s196 = scalar_select %p195, %s192, 31
      %s197 = smul.addr %s196, 4
      %s198 = smul.addr %s194, 128
      %s199 = sadd.s32 %s197, %s198
      %s200 = smul.addr %s199, 4
      %s201 = scalar_lea.vmem %s0, %s200
      %s202 = smul.u32 32, %s19
      %s203 = smul.u32 32, %s19
      %p204 = scmp.lt.s32.totalorder %s18, 1
      %s205 = scalar_select %p204, %s18, 1
      %p206 = scmp.lt.s32.totalorder %s203, 31
      %s207 = scalar_select %p206, %s203, 31
      %s208 = smul.addr %s205, 32
      %s209 = sadd.s32 %s207, %s208
      %s210 = smul.addr %s209, 4
      %s211 = scalar_lea.vmem %s3, %s210
      %s212 = smul.u32 32, %s19
      %v213 = vld [vmem:[%s2] sm:$0x1]
      %v214 = vld [vmem:[%s201] sm:$0xff]
      %v215 = vld [vmem:[%s201 + $0x8] sm:$0xff]
      %v216 = vld [vmem:[%s201 + $0x10] sm:$0xff]
      %v217 = vld [vmem:[%s201 + $0x18] sm:$0xff]
      %v218 = vld [vmem:[%s201 + $0x20] sm:$0xff]
      %v219 = vld [vmem:[%s201 + $0x28] sm:$0xff]
      %v220 = vld [vmem:[%s201 + $0x30] sm:$0xff]
      %v221 = vld [vmem:[%s201 + $0x38] sm:$0xff]
      %v222 = vld [vmem:[%s201 + $0x40] sm:$0xff]
      %v223 = vld [vmem:[%s201 + $0x48] sm:$0xff]
      %v224 = vld [vmem:[%s201 + $0x50] sm:$0xff]
      %v225 = vld [vmem:[%s201 + $0x58] sm:$0xff]
      %v226 = vld [vmem:[%s201 + $0x60] sm:$0xff]
      %v227 = vld [vmem:[%s201 + $0x68] sm:$0xff]
      %v228 = vld [vmem:[%s201 + $0x70] sm:$0xff]
      %v229 = vld [vmem:[%s201 + $0x78] sm:$0xff]
      %v230 = vld [vmem:[%s201 + $0x80] sm:$0xff]
      %v231 = vld [vmem:[%s201 + $0x88] sm:$0xff]
      %v232 = vld [vmem:[%s201 + $0x90] sm:$0xff]
      %v233 = vld [vmem:[%s201 + $0x98] sm:$0xff]
      %v234 = vld [vmem:[%s201 + $0xa0] sm:$0xff]
      %v235 = vld [vmem:[%s201 + $0xa8] sm:$0xff]
      %v236 = vld [vmem:[%s201 + $0xb0] sm:$0xff]
      %v237 = vld [vmem:[%s201 + $0xb8] sm:$0xff]
      %v238 = vld [vmem:[%s201 + $0xc0] sm:$0xff]
      %v239 = vld [vmem:[%s201 + $0xc8] sm:$0xff]
      %v240 = vld [vmem:[%s201 + $0xd0] sm:$0xff]
      %v241 = vld [vmem:[%s201 + $0xd8] sm:$0xff]
      %v242 = vld [vmem:[%s201 + $0xe0] sm:$0xff]
      %v243 = vld [vmem:[%s201 + $0xe8] sm:$0xff]
      %v244 = vld [vmem:[%s201 + $0xf0] sm:$0xff]
      %v245 = vld [vmem:[%s201 + $0xf8] sm:$0xff]
      %v246 = vld [vmem:[%s201 + $0x100] sm:$0xff]
      %v247 = vld [vmem:[%s201 + $0x108] sm:$0xff]
      %v248 = vld [vmem:[%s201 + $0x110] sm:$0xff]
      %v249 = vld [vmem:[%s201 + $0x118] sm:$0xff]
      %v250 = vld [vmem:[%s201 + $0x120] sm:$0xff]
      %v251 = vld [vmem:[%s201 + $0x128] sm:$0xff]
      %v252 = vld [vmem:[%s201 + $0x130] sm:$0xff]
      %v253 = vld [vmem:[%s201 + $0x138] sm:$0xff]
      %v254 = vld [vmem:[%s201 + $0x140] sm:$0xff]
      %v255 = vld [vmem:[%s201 + $0x148] sm:$0xff]
      %v256 = vld [vmem:[%s201 + $0x150] sm:$0xff]
      %v257 = vld [vmem:[%s201 + $0x158] sm:$0xff]
      %v258 = vld [vmem:[%s201 + $0x160] sm:$0xff]
      %v259 = vld [vmem:[%s201 + $0x168] sm:$0xff]
      %v260 = vld [vmem:[%s201 + $0x170] sm:$0xff]
      %v261 = vld [vmem:[%s201 + $0x178] sm:$0xff]
      %v262 = vld [vmem:[%s201 + $0x180] sm:$0xff]
      %v263 = vld [vmem:[%s201 + $0x188] sm:$0xff]
      %v264 = vld [vmem:[%s201 + $0x190] sm:$0xff]
      %v265 = vld [vmem:[%s201 + $0x198] sm:$0xff]
      %v266 = vld [vmem:[%s201 + $0x1a0] sm:$0xff]
      %v267 = vld [vmem:[%s201 + $0x1a8] sm:$0xff]
      %v268 = vld [vmem:[%s201 + $0x1b0] sm:$0xff]
      %v269 = vld [vmem:[%s201 + $0x1b8] sm:$0xff]
      %v270 = vld [vmem:[%s201 + $0x1c0] sm:$0xff]
      %v271 = vld [vmem:[%s201 + $0x1c8] sm:$0xff]
      %v272 = vld [vmem:[%s201 + $0x1d0] sm:$0xff]
      %v273 = vld [vmem:[%s201 + $0x1d8] sm:$0xff]
      %v274 = vld [vmem:[%s201 + $0x1e0] sm:$0xff]
      %v275 = vld [vmem:[%s201 + $0x1e8] sm:$0xff]
      %v276 = vld [vmem:[%s201 + $0x1f0] sm:$0xff]
      %v277 = vld [vmem:[%s201 + $0x1f8] sm:$0xff]
      %v278 = vld [vmem:[%s1] sm:$0xf]
      %v279 = vld [vmem:[%s1 + $0x4] sm:$0xf]
      %v280 = vld [vmem:[%s1 + $0x8] sm:$0xf]
      %v281 = vld [vmem:[%s1 + $0xc] sm:$0xf]
      %v282 = vld [vmem:[%s1 + $0x10] sm:$0xf]
      %v283 = vld [vmem:[%s1 + $0x14] sm:$0xf]
      %v284 = vld [vmem:[%s1 + $0x18] sm:$0xf]
      %v285 = vld [vmem:[%s1 + $0x1c] sm:$0xf]
      %v286 = vld [vmem:[%s1 + $0x20] sm:$0xf]
      %v287 = vld [vmem:[%s1 + $0x24] sm:$0xf]
      %v288 = vld [vmem:[%s1 + $0x28] sm:$0xf]
      %v289 = vld [vmem:[%s1 + $0x2c] sm:$0xf]
      %v290 = vld [vmem:[%s1 + $0x30] sm:$0xf]
      %v291 = vld [vmem:[%s1 + $0x34] sm:$0xf]
      %v292 = vld [vmem:[%s1 + $0x38] sm:$0xf]
      %v293 = vld [vmem:[%s1 + $0x3c] sm:$0xf]
      %v294 = vld [vmem:[%s1 + $0x40] sm:$0xf]
      %v295 = vld [vmem:[%s1 + $0x44] sm:$0xf]
      %v296 = vld [vmem:[%s1 + $0x48] sm:$0xf]
      %v297 = vld [vmem:[%s1 + $0x4c] sm:$0xf]
      %v298 = vld [vmem:[%s1 + $0x50] sm:$0xf]
      %v299 = vld [vmem:[%s1 + $0x54] sm:$0xf]
      %v300 = vld [vmem:[%s1 + $0x58] sm:$0xf]
      %v301 = vld [vmem:[%s1 + $0x5c] sm:$0xf]
      %v302 = vld [vmem:[%s1 + $0x60] sm:$0xf]
      %v303 = vld [vmem:[%s1 + $0x64] sm:$0xf]
      %v304 = vld [vmem:[%s1 + $0x68] sm:$0xf]
      %v305 = vld [vmem:[%s1 + $0x6c] sm:$0xf]
      %v306 = vld [vmem:[%s1 + $0x70] sm:$0xf]
      %v307 = vld [vmem:[%s1 + $0x74] sm:$0xf]
      %v308 = vld [vmem:[%s1 + $0x78] sm:$0xf]
      %v309 = vld [vmem:[%s1 + $0x7c] sm:$0xf]
      %v310 = vld [vmem:[%s1 + $0x80] sm:$0xf]
      %v311 = vld [vmem:[%s1 + $0x84] sm:$0xf]
      %v312 = vld [vmem:[%s1 + $0x88] sm:$0xf]
      %v313 = vld [vmem:[%s1 + $0x8c] sm:$0xf]
      %v314 = vld [vmem:[%s1 + $0x90] sm:$0xf]
      %v315 = vld [vmem:[%s1 + $0x94] sm:$0xf]
      %v316 = vld [vmem:[%s1 + $0x98] sm:$0xf]
      %v317 = vld [vmem:[%s1 + $0x9c] sm:$0xf]
      %v318 = vld [vmem:[%s1 + $0xa0] sm:$0xf]
      %v319 = vld [vmem:[%s1 + $0xa4] sm:$0xf]
      %v320 = vld [vmem:[%s1 + $0xa8] sm:$0xf]
      %v321 = vld [vmem:[%s1 + $0xac] sm:$0xf]
      %v322 = vld [vmem:[%s1 + $0xb0] sm:$0xf]
      %v323 = vld [vmem:[%s1 + $0xb4] sm:$0xf]
      %v324 = vld [vmem:[%s1 + $0xb8] sm:$0xf]
      %v325 = vld [vmem:[%s1 + $0xbc] sm:$0xf]
      %v326 = vld [vmem:[%s1 + $0xc0] sm:$0xf]
      %v327 = vld [vmem:[%s1 + $0xc4] sm:$0xf]
      %v328 = vld [vmem:[%s1 + $0xc8] sm:$0xf]
      %v329 = vld [vmem:[%s1 + $0xcc] sm:$0xf]
      %v330 = vld [vmem:[%s1 + $0xd0] sm:$0xf]
      %v331 = vld [vmem:[%s1 + $0xd4] sm:$0xf]
      %v332 = vld [vmem:[%s1 + $0xd8] sm:$0xf]
      %v333 = vld [vmem:[%s1 + $0xdc] sm:$0xf]
      %v334 = vld [vmem:[%s1 + $0xe0] sm:$0xf]
      %v335 = vld [vmem:[%s1 + $0xe4] sm:$0xf]
      %v336 = vld [vmem:[%s1 + $0xe8] sm:$0xf]
      %v337 = vld [vmem:[%s1 + $0xec] sm:$0xf]
      %v338 = vld [vmem:[%s1 + $0xf0] sm:$0xf]
      %v339 = vld [vmem:[%s1 + $0xf4] sm:$0xf]
      %v340 = vld [vmem:[%s1 + $0xf8] sm:$0xf]
      %v341 = vld [vmem:[%s1 + $0xfc] sm:$0xf]
      %v343 = vperm.slane %v213, 0
      %v409 = vunpack.c.l.b16 %v214
      %v410 = vunpack.c.h.b16 %v214
      %v411 = vunpack.c.l.b16 %v215
      %v412 = vunpack.c.h.b16 %v215
      %v413 = vunpack.c.l.b16 %v216
      %v414 = vunpack.c.h.b16 %v216
      %v415 = vunpack.c.l.b16 %v217
      %v416 = vunpack.c.h.b16 %v217
      %v417 = vunpack.c.l.b16 %v218
      %v418 = vunpack.c.h.b16 %v218
      %v419 = vunpack.c.l.b16 %v219
      %v420 = vunpack.c.h.b16 %v219
      %v421 = vunpack.c.l.b16 %v220
      %v422 = vunpack.c.h.b16 %v220
      %v423 = vunpack.c.l.b16 %v221
      %v424 = vunpack.c.h.b16 %v221
      %v425 = vunpack.c.l.b16 %v222
      %v426 = vunpack.c.h.b16 %v222
      %v427 = vunpack.c.l.b16 %v223
      %v428 = vunpack.c.h.b16 %v223
      %v429 = vunpack.c.l.b16 %v224
      %v430 = vunpack.c.h.b16 %v224
      %v431 = vunpack.c.l.b16 %v225
      %v432 = vunpack.c.h.b16 %v225
      %v433 = vunpack.c.l.b16 %v226
      %v434 = vunpack.c.h.b16 %v226
      %v435 = vunpack.c.l.b16 %v227
      %v436 = vunpack.c.h.b16 %v227
      %v437 = vunpack.c.l.b16 %v228
      %v438 = vunpack.c.h.b16 %v228
      %v439 = vunpack.c.l.b16 %v229
      %v440 = vunpack.c.h.b16 %v229
      %v441 = vunpack.c.l.b16 %v230
      %v442 = vunpack.c.h.b16 %v230
      %v443 = vunpack.c.l.b16 %v231
      %v444 = vunpack.c.h.b16 %v231
      %v445 = vunpack.c.l.b16 %v232
      %v446 = vunpack.c.h.b16 %v232
      %v447 = vunpack.c.l.b16 %v233
      %v448 = vunpack.c.h.b16 %v233
      %v449 = vunpack.c.l.b16 %v234
      %v450 = vunpack.c.h.b16 %v234
      %v451 = vunpack.c.l.b16 %v235
      %v452 = vunpack.c.h.b16 %v235
      %v453 = vunpack.c.l.b16 %v236
      %v454 = vunpack.c.h.b16 %v236
      %v455 = vunpack.c.l.b16 %v237
      %v456 = vunpack.c.h.b16 %v237
      %v457 = vunpack.c.l.b16 %v238
      %v458 = vunpack.c.h.b16 %v238
      %v459 = vunpack.c.l.b16 %v239
      %v460 = vunpack.c.h.b16 %v239
      %v461 = vunpack.c.l.b16 %v240
      %v462 = vunpack.c.h.b16 %v240
      %v463 = vunpack.c.l.b16 %v241
      %v464 = vunpack.c.h.b16 %v241
      %v465 = vunpack.c.l.b16 %v242
      %v466 = vunpack.c.h.b16 %v242
      %v467 = vunpack.c.l.b16 %v243
      %v468 = vunpack.c.h.b16 %v243
      %v469 = vunpack.c.l.b16 %v244
      %v470 = vunpack.c.h.b16 %v244
      %v471 = vunpack.c.l.b16 %v245
      %v472 = vunpack.c.h.b16 %v245
      %v473 = vunpack.c.l.b16 %v246
      %v474 = vunpack.c.h.b16 %v246
      %v475 = vunpack.c.l.b16 %v247
      %v476 = vunpack.c.h.b16 %v247
      %v477 = vunpack.c.l.b16 %v248
      %v478 = vunpack.c.h.b16 %v248
      %v479 = vunpack.c.l.b16 %v249
      %v480 = vunpack.c.h.b16 %v249
      %v481 = vunpack.c.l.b16 %v250
      %v482 = vunpack.c.h.b16 %v250
      %v483 = vunpack.c.l.b16 %v251
      %v484 = vunpack.c.h.b16 %v251
      %v485 = vunpack.c.l.b16 %v252
      %v486 = vunpack.c.h.b16 %v252
      %v487 = vunpack.c.l.b16 %v253
      %v488 = vunpack.c.h.b16 %v253
      %v489 = vunpack.c.l.b16 %v254
      %v490 = vunpack.c.h.b16 %v254
      %v491 = vunpack.c.l.b16 %v255
      %v492 = vunpack.c.h.b16 %v255
      %v493 = vunpack.c.l.b16 %v256
      %v494 = vunpack.c.h.b16 %v256
      %v495 = vunpack.c.l.b16 %v257
      %v496 = vunpack.c.h.b16 %v257
      %v497 = vunpack.c.l.b16 %v258
      %v498 = vunpack.c.h.b16 %v258
      %v499 = vunpack.c.l.b16 %v259
      %v500 = vunpack.c.h.b16 %v259
      %v501 = vunpack.c.l.b16 %v260
      %v502 = vunpack.c.h.b16 %v260
      %v503 = vunpack.c.l.b16 %v261
      %v504 = vunpack.c.h.b16 %v261
      %v505 = vunpack.c.l.b16 %v262
      %v506 = vunpack.c.h.b16 %v262
      %v507 = vunpack.c.l.b16 %v263
      %v508 = vunpack.c.h.b16 %v263
      %v509 = vunpack.c.l.b16 %v264
      %v510 = vunpack.c.h.b16 %v264
      %v511 = vunpack.c.l.b16 %v265
      %v512 = vunpack.c.h.b16 %v265
      %v513 = vunpack.c.l.b16 %v266
      %v514 = vunpack.c.h.b16 %v266
      %v515 = vunpack.c.l.b16 %v267
      %v516 = vunpack.c.h.b16 %v267
      %v517 = vunpack.c.l.b16 %v268
      %v518 = vunpack.c.h.b16 %v268
      %v519 = vunpack.c.l.b16 %v269
      %v520 = vunpack.c.h.b16 %v269
      %v521 = vunpack.c.l.b16 %v270
      %v522 = vunpack.c.h.b16 %v270
      %v523 = vunpack.c.l.b16 %v271
      %v524 = vunpack.c.h.b16 %v271
      %v525 = vunpack.c.l.b16 %v272
      %v526 = vunpack.c.h.b16 %v272
      %v527 = vunpack.c.l.b16 %v273
      %v528 = vunpack.c.h.b16 %v273
      %v529 = vunpack.c.l.b16 %v274
      %v530 = vunpack.c.h.b16 %v274
      %v531 = vunpack.c.l.b16 %v275
      %v532 = vunpack.c.h.b16 %v275
      %v533 = vunpack.c.l.b16 %v276
      %v534 = vunpack.c.h.b16 %v276
      %v535 = vunpack.c.l.b16 %v277
      %v536 = vunpack.c.h.b16 %v277
      %v537 = vpack.c.b16 %v413, %v409
      %v538 = vpack.c.b16 %v414, %v410
      %v539 = vpack.c.b16 %v415, %v411
      %v540 = vpack.c.b16 %v416, %v412
      %v541 = vpack.c.b16 %v421, %v417
      %v542 = vpack.c.b16 %v422, %v418
      %v543 = vpack.c.b16 %v423, %v419
      %v544 = vpack.c.b16 %v424, %v420
      %v545 = vpack.c.b16 %v429, %v425
      %v546 = vpack.c.b16 %v430, %v426
      %v547 = vpack.c.b16 %v431, %v427
      %v548 = vpack.c.b16 %v432, %v428
      %v549 = vpack.c.b16 %v437, %v433
      %v550 = vpack.c.b16 %v438, %v434
      %v551 = vpack.c.b16 %v439, %v435
      %v552 = vpack.c.b16 %v440, %v436
      %v553 = vpack.c.b16 %v445, %v441
      %v554 = vpack.c.b16 %v446, %v442
      %v555 = vpack.c.b16 %v447, %v443
      %v556 = vpack.c.b16 %v448, %v444
      %v557 = vpack.c.b16 %v453, %v449
      %v558 = vpack.c.b16 %v454, %v450
      %v559 = vpack.c.b16 %v455, %v451
      %v560 = vpack.c.b16 %v456, %v452
      %v561 = vpack.c.b16 %v461, %v457
      %v562 = vpack.c.b16 %v462, %v458
      %v563 = vpack.c.b16 %v463, %v459
      %v564 = vpack.c.b16 %v464, %v460
      %v565 = vpack.c.b16 %v469, %v465
      %v566 = vpack.c.b16 %v470, %v466
      %v567 = vpack.c.b16 %v471, %v467
      %v568 = vpack.c.b16 %v472, %v468
      %v569 = vpack.c.b16 %v477, %v473
      %v570 = vpack.c.b16 %v478, %v474
      %v571 = vpack.c.b16 %v479, %v475
      %v572 = vpack.c.b16 %v480, %v476
      %v573 = vpack.c.b16 %v485, %v481
      %v574 = vpack.c.b16 %v486, %v482
      %v575 = vpack.c.b16 %v487, %v483
      %v576 = vpack.c.b16 %v488, %v484
      %v577 = vpack.c.b16 %v493, %v489
      %v578 = vpack.c.b16 %v494, %v490
      %v579 = vpack.c.b16 %v495, %v491
      %v580 = vpack.c.b16 %v496, %v492
      %v581 = vpack.c.b16 %v501, %v497
      %v582 = vpack.c.b16 %v502, %v498
      %v583 = vpack.c.b16 %v503, %v499
      %v584 = vpack.c.b16 %v504, %v500
      %v585 = vpack.c.b16 %v509, %v505
      %v586 = vpack.c.b16 %v510, %v506
      %v587 = vpack.c.b16 %v511, %v507
      %v588 = vpack.c.b16 %v512, %v508
      %v589 = vpack.c.b16 %v517, %v513
      %v590 = vpack.c.b16 %v518, %v514
      %v591 = vpack.c.b16 %v519, %v515
      %v592 = vpack.c.b16 %v520, %v516
      %v593 = vpack.c.b16 %v525, %v521
      %v594 = vpack.c.b16 %v526, %v522
      %v595 = vpack.c.b16 %v527, %v523
      %v596 = vpack.c.b16 %v528, %v524
      %v597 = vpack.c.b16 %v533, %v529
      %v598 = vpack.c.b16 %v534, %v530
      %v599 = vpack.c.b16 %v535, %v531
      %v600 = vpack.c.b16 %v536, %v532
      %v729 = vunpack.c.l.b16 %v278
      %v730 = vunpack.c.l.b16 %v279
      %v731 = vunpack.c.l.b16 %v280
      %v732 = vunpack.c.l.b16 %v281
      %v733 = vunpack.c.l.b16 %v282
      %v734 = vunpack.c.l.b16 %v283
      %v735 = vunpack.c.l.b16 %v284
      %v736 = vunpack.c.l.b16 %v285
      %v737 = vunpack.c.l.b16 %v286
      %v738 = vunpack.c.l.b16 %v287
      %v739 = vunpack.c.l.b16 %v288
      %v740 = vunpack.c.l.b16 %v289
      %v741 = vunpack.c.l.b16 %v290
      %v742 = vunpack.c.l.b16 %v291
      %v743 = vunpack.c.l.b16 %v292
      %v744 = vunpack.c.l.b16 %v293
      %v745 = vunpack.c.l.b16 %v294
      %v746 = vunpack.c.l.b16 %v295
      %v747 = vunpack.c.l.b16 %v296
      %v748 = vunpack.c.l.b16 %v297
      %v749 = vunpack.c.l.b16 %v298
      %v750 = vunpack.c.l.b16 %v299
      %v751 = vunpack.c.l.b16 %v300
      %v752 = vunpack.c.l.b16 %v301
      %v753 = vunpack.c.l.b16 %v302
      %v754 = vunpack.c.l.b16 %v303
      %v755 = vunpack.c.l.b16 %v304
      %v756 = vunpack.c.l.b16 %v305
      %v757 = vunpack.c.l.b16 %v306
      %v758 = vunpack.c.l.b16 %v307
      %v759 = vunpack.c.l.b16 %v308
      %v760 = vunpack.c.l.b16 %v309
      %v761 = vunpack.c.l.b16 %v310
      %v762 = vunpack.c.l.b16 %v311
      %v763 = vunpack.c.l.b16 %v312
      %v764 = vunpack.c.l.b16 %v313
      %v765 = vunpack.c.l.b16 %v314
      %v766 = vunpack.c.l.b16 %v315
      %v767 = vunpack.c.l.b16 %v316
      %v768 = vunpack.c.l.b16 %v317
      %v769 = vunpack.c.l.b16 %v318
      %v770 = vunpack.c.l.b16 %v319
      %v771 = vunpack.c.l.b16 %v320
      %v772 = vunpack.c.l.b16 %v321
      %v773 = vunpack.c.l.b16 %v322
      %v774 = vunpack.c.l.b16 %v323
      %v775 = vunpack.c.l.b16 %v324
      %v776 = vunpack.c.l.b16 %v325
      %v777 = vunpack.c.l.b16 %v326
      %v778 = vunpack.c.l.b16 %v327
      %v779 = vunpack.c.l.b16 %v328
      %v780 = vunpack.c.l.b16 %v329
      %v781 = vunpack.c.l.b16 %v330
      %v782 = vunpack.c.l.b16 %v331
      %v783 = vunpack.c.l.b16 %v332
      %v784 = vunpack.c.l.b16 %v333
      %v785 = vunpack.c.l.b16 %v334
      %v786 = vunpack.c.l.b16 %v335
      %v787 = vunpack.c.l.b16 %v336
      %v788 = vunpack.c.l.b16 %v337
      %v789 = vunpack.c.l.b16 %v338
      %v790 = vunpack.c.l.b16 %v339
      %v791 = vunpack.c.l.b16 %v340
      %v792 = vunpack.c.l.b16 %v341
      %v793 = vpack.c.b16 %v730, %v729
      %v794 = vpack.c.b16 %v732, %v731
      %v795 = vpack.c.b16 %v734, %v733
      %v796 = vpack.c.b16 %v736, %v735
      %v797 = vpack.c.b16 %v738, %v737
      %v798 = vpack.c.b16 %v740, %v739
      %v799 = vpack.c.b16 %v742, %v741
      %v800 = vpack.c.b16 %v744, %v743
      %v801 = vpack.c.b16 %v746, %v745
      %v802 = vpack.c.b16 %v748, %v747
      %v803 = vpack.c.b16 %v750, %v749
      %v804 = vpack.c.b16 %v752, %v751
      %v805 = vpack.c.b16 %v754, %v753
      %v806 = vpack.c.b16 %v756, %v755
      %v807 = vpack.c.b16 %v758, %v757
      %v808 = vpack.c.b16 %v760, %v759
      %v809 = vpack.c.b16 %v762, %v761
      %v810 = vpack.c.b16 %v764, %v763
      %v811 = vpack.c.b16 %v766, %v765
      %v812 = vpack.c.b16 %v768, %v767
      %v813 = vpack.c.b16 %v770, %v769
      %v814 = vpack.c.b16 %v772, %v771
      %v815 = vpack.c.b16 %v774, %v773
      %v816 = vpack.c.b16 %v776, %v775
      %v817 = vpack.c.b16 %v778, %v777
      %v818 = vpack.c.b16 %v780, %v779
      %v819 = vpack.c.b16 %v782, %v781
      %v820 = vpack.c.b16 %v784, %v783
      %v821 = vpack.c.b16 %v786, %v785
      %v822 = vpack.c.b16 %v788, %v787
      %v823 = vpack.c.b16 %v790, %v789
      %v824 = vpack.c.b16 %v792, %v791
      %857 = vmatpush.bf16.msra.mxu0 %v800
      %858 = vmatpush.bf16.msra.mxu0 %v799
      %859 = vmatpush.bf16.msra.mxu0 %v798
      %860 = vmatpush.bf16.msra.mxu0 %v797
      %861 = vmatpush.bf16.msra.mxu0 %v796
      %862 = vmatpush.bf16.msra.mxu0 %v795
      %863 = vmatpush.bf16.msra.mxu0 %v794
      %864 = vmatpush.bf16.msra.mxu0 %v793
      %865 = vmatmul.bf16.gmra.mxu0 %v537
      %v866 = vpop.f32.mrf.mxu0
      %v867 = vadd.f32 %v343, %v866
      %v868 = vpop.f32.mrf.mxu0
      %v869 = vadd.f32 %v343, %v868
      %870 = vmatmul.bf16.gmra.mxu0 %v541
      %v871 = vpop.f32.mrf.mxu0
      %v872 = vadd.f32 %v343, %v871
      %v873 = vpop.f32.mrf.mxu0
      %v874 = vadd.f32 %v343, %v873
      %875 = vmatmul.bf16.gmra.mxu0 %v545
      %v876 = vpop.f32.mrf.mxu0
      %v877 = vadd.f32 %v343, %v876
      %v878 = vpop.f32.mrf.mxu0
      %v879 = vadd.f32 %v343, %v878
      %880 = vmatmul.bf16.gmra.mxu0 %v549
      %v881 = vpop.f32.mrf.mxu0
      %v882 = vadd.f32 %v343, %v881
      %v883 = vpop.f32.mrf.mxu0
      %v884 = vadd.f32 %v343, %v883
      %885 = vmatmul.bf16.gmra.mxu0 %v553
      %v886 = vpop.f32.mrf.mxu0
      %v887 = vadd.f32 %v343, %v886
      %v888 = vpop.f32.mrf.mxu0
      %v889 = vadd.f32 %v343, %v888
      %890 = vmatmul.bf16.gmra.mxu0 %v557
      %v891 = vpop.f32.mrf.mxu0
      %v892 = vadd.f32 %v343, %v891
      %v893 = vpop.f32.mrf.mxu0
      %v894 = vadd.f32 %v343, %v893
      %895 = vmatmul.bf16.gmra.mxu0 %v561
      %v896 = vpop.f32.mrf.mxu0
      %v897 = vadd.f32 %v343, %v896
      %v898 = vpop.f32.mrf.mxu0
      %v899 = vadd.f32 %v343, %v898
      %900 = vmatmul.bf16.gmra.mxu0 %v565
      %v901 = vpop.f32.mrf.mxu0
      %v902 = vadd.f32 %v343, %v901
      %v903 = vpop.f32.mrf.mxu0
      %v904 = vadd.f32 %v343, %v903
      %905 = vmatmul.bf16.gmra.mxu0 %v569
      %v906 = vpop.f32.mrf.mxu0
      %v907 = vadd.f32 %v343, %v906
      %v908 = vpop.f32.mrf.mxu0
      %v909 = vadd.f32 %v343, %v908
      %910 = vmatmul.bf16.gmra.mxu0 %v573
      %v911 = vpop.f32.mrf.mxu0
      %v912 = vadd.f32 %v343, %v911
      %v913 = vpop.f32.mrf.mxu0
      %v914 = vadd.f32 %v343, %v913
      %915 = vmatmul.bf16.gmra.mxu0 %v577
      %v916 = vpop.f32.mrf.mxu0
      %v917 = vadd.f32 %v343, %v916
      %v918 = vpop.f32.mrf.mxu0
      %v919 = vadd.f32 %v343, %v918
      %920 = vmatmul.bf16.gmra.mxu0 %v581
      %v921 = vpop.f32.mrf.mxu0
      %v922 = vadd.f32 %v343, %v921
      %v923 = vpop.f32.mrf.mxu0
      %v924 = vadd.f32 %v343, %v923
      %925 = vmatmul.bf16.gmra.mxu0 %v585
      %v926 = vpop.f32.mrf.mxu0
      %v927 = vadd.f32 %v343, %v926
      %v928 = vpop.f32.mrf.mxu0
      %v929 = vadd.f32 %v343, %v928
      %930 = vmatmul.bf16.gmra.mxu0 %v589
      %v931 = vpop.f32.mrf.mxu0
      %v932 = vadd.f32 %v343, %v931
      %v933 = vpop.f32.mrf.mxu0
      %v934 = vadd.f32 %v343, %v933
      %935 = vmatmul.bf16.gmra.mxu0 %v593
      %v936 = vpop.f32.mrf.mxu0
      %v937 = vadd.f32 %v343, %v936
      %v938 = vpop.f32.mrf.mxu0
      %v939 = vadd.f32 %v343, %v938
      %940 = vmatmul.bf16.gmra.mxu0 %v597
      %v941 = vpop.f32.mrf.mxu0
      %v942 = vadd.f32 %v343, %v941
      %v943 = vpop.f32.mrf.mxu0
      %v944 = vadd.f32 %v343, %v943
      %945 = vdwg.mxu0
      %946 = vmatpush.bf16.msra.mxu0 %v808
      %947 = vmatpush.bf16.msra.mxu0 %v807
      %948 = vmatpush.bf16.msra.mxu0 %v806
      %949 = vmatpush.bf16.msra.mxu0 %v805
      %950 = vmatpush.bf16.msra.mxu0 %v804
      %951 = vmatpush.bf16.msra.mxu0 %v803
      %952 = vmatpush.bf16.msra.mxu0 %v802
      %953 = vmatpush.bf16.msra.mxu0 %v801
      %954 = vmatmul.bf16.gmra.mxu0 %v538
      %v955 = vpop.f32.mrf.mxu0
      %v956 = vadd.f32 %v867, %v955
      %v957 = vpop.f32.mrf.mxu0
      %v958 = vadd.f32 %v869, %v957
      %959 = vmatmul.bf16.gmra.mxu0 %v542
      %v960 = vpop.f32.mrf.mxu0
      %v961 = vadd.f32 %v872, %v960
      %v962 = vpop.f32.mrf.mxu0
      %v963 = vadd.f32 %v874, %v962
      %964 = vmatmul.bf16.gmra.mxu0 %v546
      %v965 = vpop.f32.mrf.mxu0
      %v966 = vadd.f32 %v877, %v965
      %v967 = vpop.f32.mrf.mxu0
      %v968 = vadd.f32 %v879, %v967
      %969 = vmatmul.bf16.gmra.mxu0 %v550
      %v970 = vpop.f32.mrf.mxu0
      %v971 = vadd.f32 %v882, %v970
      %v972 = vpop.f32.mrf.mxu0
      %v973 = vadd.f32 %v884, %v972
      %974 = vmatmul.bf16.gmra.mxu0 %v554
      %v975 = vpop.f32.mrf.mxu0
      %v976 = vadd.f32 %v887, %v975
      %v977 = vpop.f32.mrf.mxu0
      %v978 = vadd.f32 %v889, %v977
      %979 = vmatmul.bf16.gmra.mxu0 %v558
      %v980 = vpop.f32.mrf.mxu0
      %v981 = vadd.f32 %v892, %v980
      %v982 = vpop.f32.mrf.mxu0
      %v983 = vadd.f32 %v894, %v982
      %984 = vmatmul.bf16.gmra.mxu0 %v562
      %v985 = vpop.f32.mrf.mxu0
      %v986 = vadd.f32 %v897, %v985
      %v987 = vpop.f32.mrf.mxu0
      %v988 = vadd.f32 %v899, %v987
      %989 = vmatmul.bf16.gmra.mxu0 %v566
      %v990 = vpop.f32.mrf.mxu0
      %v991 = vadd.f32 %v902, %v990
      %v992 = vpop.f32.mrf.mxu0
      %v993 = vadd.f32 %v904, %v992
      %994 = vmatmul.bf16.gmra.mxu0 %v570
      %v995 = vpop.f32.mrf.mxu0
      %v996 = vadd.f32 %v907, %v995
      %v997 = vpop.f32.mrf.mxu0
      %v998 = vadd.f32 %v909, %v997
      %999 = vmatmul.bf16.gmra.mxu0 %v574
      %v1000 = vpop.f32.mrf.mxu0
      %v1001 = vadd.f32 %v912, %v1000
      %v1002 = vpop.f32.mrf.mxu0
      %v1003 = vadd.f32 %v914, %v1002
      %1004 = vmatmul.bf16.gmra.mxu0 %v578
      %v1005 = vpop.f32.mrf.mxu0
      %v1006 = vadd.f32 %v917, %v1005
      %v1007 = vpop.f32.mrf.mxu0
      %v1008 = vadd.f32 %v919, %v1007
      %1009 = vmatmul.bf16.gmra.mxu0 %v582
      %v1010 = vpop.f32.mrf.mxu0
      %v1011 = vadd.f32 %v922, %v1010
      %v1012 = vpop.f32.mrf.mxu0
      %v1013 = vadd.f32 %v924, %v1012
      %1014 = vmatmul.bf16.gmra.mxu0 %v586
      %v1015 = vpop.f32.mrf.mxu0
      %v1016 = vadd.f32 %v927, %v1015
      %v1017 = vpop.f32.mrf.mxu0
      %v1018 = vadd.f32 %v929, %v1017
      %1019 = vmatmul.bf16.gmra.mxu0 %v590
      %v1020 = vpop.f32.mrf.mxu0
      %v1021 = vadd.f32 %v932, %v1020
      %v1022 = vpop.f32.mrf.mxu0
      %v1023 = vadd.f32 %v934, %v1022
      %1024 = vmatmul.bf16.gmra.mxu0 %v594
      %v1025 = vpop.f32.mrf.mxu0
      %v1026 = vadd.f32 %v937, %v1025
      %v1027 = vpop.f32.mrf.mxu0
      %v1028 = vadd.f32 %v939, %v1027
      %1029 = vmatmul.bf16.gmra.mxu0 %v598
      %v1030 = vpop.f32.mrf.mxu0
      %v1031 = vadd.f32 %v942, %v1030
      %v1032 = vpop.f32.mrf.mxu0
      %v1033 = vadd.f32 %v944, %v1032
      %1034 = vdwg.mxu0
      %1035 = vmatpush.bf16.msra.mxu0 %v816
      %1036 = vmatpush.bf16.msra.mxu0 %v815
      %1037 = vmatpush.bf16.msra.mxu0 %v814
      %1038 = vmatpush.bf16.msra.mxu0 %v813
      %1039 = vmatpush.bf16.msra.mxu0 %v812
      %1040 = vmatpush.bf16.msra.mxu0 %v811
      %1041 = vmatpush.bf16.msra.mxu0 %v810
      %1042 = vmatpush.bf16.msra.mxu0 %v809
      %1043 = vmatmul.bf16.gmra.mxu0 %v539
      %v1044 = vpop.f32.mrf.mxu0
      %v1045 = vadd.f32 %v956, %v1044
      %v1046 = vpop.f32.mrf.mxu0
      %v1047 = vadd.f32 %v958, %v1046
      %1048 = vmatmul.bf16.gmra.mxu0 %v543
      %v1049 = vpop.f32.mrf.mxu0
      %v1050 = vadd.f32 %v961, %v1049
      %v1051 = vpop.f32.mrf.mxu0
      %v1052 = vadd.f32 %v963, %v1051
      %1053 = vmatmul.bf16.gmra.mxu0 %v547
      %v1054 = vpop.f32.mrf.mxu0
      %v1055 = vadd.f32 %v966, %v1054
      %v1056 = vpop.f32.mrf.mxu0
      %v1057 = vadd.f32 %v968, %v1056
      %1058 = vmatmul.bf16.gmra.mxu0 %v551
      %v1059 = vpop.f32.mrf.mxu0
      %v1060 = vadd.f32 %v971, %v1059
      %v1061 = vpop.f32.mrf.mxu0
      %v1062 = vadd.f32 %v973, %v1061
      %1063 = vmatmul.bf16.gmra.mxu0 %v555
      %v1064 = vpop.f32.mrf.mxu0
      %v1065 = vadd.f32 %v976, %v1064
      %v1066 = vpop.f32.mrf.mxu0
      %v1067 = vadd.f32 %v978, %v1066
      %1068 = vmatmul.bf16.gmra.mxu0 %v559
      %v1069 = vpop.f32.mrf.mxu0
      %v1070 = vadd.f32 %v981, %v1069
      %v1071 = vpop.f32.mrf.mxu0
      %v1072 = vadd.f32 %v983, %v1071
      %1073 = vmatmul.bf16.gmra.mxu0 %v563
      %v1074 = vpop.f32.mrf.mxu0
      %v1075 = vadd.f32 %v986, %v1074
      %v1076 = vpop.f32.mrf.mxu0
      %v1077 = vadd.f32 %v988, %v1076
      %1078 = vmatmul.bf16.gmra.mxu0 %v567
      %v1079 = vpop.f32.mrf.mxu0
      %v1080 = vadd.f32 %v991, %v1079
      %v1081 = vpop.f32.mrf.mxu0
      %v1082 = vadd.f32 %v993, %v1081
      %1083 = vmatmul.bf16.gmra.mxu0 %v571
      %v1084 = vpop.f32.mrf.mxu0
      %v1085 = vadd.f32 %v996, %v1084
      %v1086 = vpop.f32.mrf.mxu0
      %v1087 = vadd.f32 %v998, %v1086
      %1088 = vmatmul.bf16.gmra.mxu0 %v575
      %v1089 = vpop.f32.mrf.mxu0
      %v1090 = vadd.f32 %v1001, %v1089
      %v1091 = vpop.f32.mrf.mxu0
      %v1092 = vadd.f32 %v1003, %v1091
      %1093 = vmatmul.bf16.gmra.mxu0 %v579
      %v1094 = vpop.f32.mrf.mxu0
      %v1095 = vadd.f32 %v1006, %v1094
      %v1096 = vpop.f32.mrf.mxu0
      %v1097 = vadd.f32 %v1008, %v1096
      %1098 = vmatmul.bf16.gmra.mxu0 %v583
      %v1099 = vpop.f32.mrf.mxu0
      %v1100 = vadd.f32 %v1011, %v1099
      %v1101 = vpop.f32.mrf.mxu0
      %v1102 = vadd.f32 %v1013, %v1101
      %1103 = vmatmul.bf16.gmra.mxu0 %v587
      %v1104 = vpop.f32.mrf.mxu0
      %v1105 = vadd.f32 %v1016, %v1104
      %v1106 = vpop.f32.mrf.mxu0
      %v1107 = vadd.f32 %v1018, %v1106
      %1108 = vmatmul.bf16.gmra.mxu0 %v591
      %v1109 = vpop.f32.mrf.mxu0
      %v1110 = vadd.f32 %v1021, %v1109
      %v1111 = vpop.f32.mrf.mxu0
      %v1112 = vadd.f32 %v1023, %v1111
      %1113 = vmatmul.bf16.gmra.mxu0 %v595
      %v1114 = vpop.f32.mrf.mxu0
      %v1115 = vadd.f32 %v1026, %v1114
      %v1116 = vpop.f32.mrf.mxu0
      %v1117 = vadd.f32 %v1028, %v1116
      %1118 = vmatmul.bf16.gmra.mxu0 %v599
      %v1119 = vpop.f32.mrf.mxu0
      %v1120 = vadd.f32 %v1031, %v1119
      %v1121 = vpop.f32.mrf.mxu0
      %v1122 = vadd.f32 %v1033, %v1121
      %1123 = vdwg.mxu0
      %1124 = vmatpush.bf16.msra.mxu0 %v824
      %1125 = vmatpush.bf16.msra.mxu0 %v823
      %1126 = vmatpush.bf16.msra.mxu0 %v822
      %1127 = vmatpush.bf16.msra.mxu0 %v821
      %1128 = vmatpush.bf16.msra.mxu0 %v820
      %1129 = vmatpush.bf16.msra.mxu0 %v819
      %1130 = vmatpush.bf16.msra.mxu0 %v818
      %1131 = vmatpush.bf16.msra.mxu0 %v817
      %1132 = vmatmul.bf16.gmra.mxu0 %v540
      %v1133 = vpop.f32.mrf.mxu0
      %v1134 = vadd.f32 %v1045, %v1133
      %v1135 = vpop.f32.mrf.mxu0
      %v1136 = vadd.f32 %v1047, %v1135
      %1137 = vmatmul.bf16.gmra.mxu0 %v544
      %v1138 = vpop.f32.mrf.mxu0
      %v1139 = vadd.f32 %v1050, %v1138
      %v1140 = vpop.f32.mrf.mxu0
      %v1141 = vadd.f32 %v1052, %v1140
      %1142 = vmatmul.bf16.gmra.mxu0 %v548
      %v1143 = vpop.f32.mrf.mxu0
      %v1144 = vadd.f32 %v1055, %v1143
      %v1145 = vpop.f32.mrf.mxu0
      %v1146 = vadd.f32 %v1057, %v1145
      %1147 = vmatmul.bf16.gmra.mxu0 %v552
      %v1148 = vpop.f32.mrf.mxu0
      %v1149 = vadd.f32 %v1060, %v1148
      %v1150 = vpop.f32.mrf.mxu0
      %v1151 = vadd.f32 %v1062, %v1150
      %1152 = vmatmul.bf16.gmra.mxu0 %v556
      %v1153 = vpop.f32.mrf.mxu0
      %v1154 = vadd.f32 %v1065, %v1153
      %v1155 = vpop.f32.mrf.mxu0
      %v1156 = vadd.f32 %v1067, %v1155
      %1157 = vmatmul.bf16.gmra.mxu0 %v560
      %v1158 = vpop.f32.mrf.mxu0
      %v1159 = vadd.f32 %v1070, %v1158
      %v1160 = vpop.f32.mrf.mxu0
      %v1161 = vadd.f32 %v1072, %v1160
      %1162 = vmatmul.bf16.gmra.mxu0 %v564
      %v1163 = vpop.f32.mrf.mxu0
      %v1164 = vadd.f32 %v1075, %v1163
      %v1165 = vpop.f32.mrf.mxu0
      %v1166 = vadd.f32 %v1077, %v1165
      %1167 = vmatmul.bf16.gmra.mxu0 %v568
      %v1168 = vpop.f32.mrf.mxu0
      %v1169 = vadd.f32 %v1080, %v1168
      %v1170 = vpop.f32.mrf.mxu0
      %v1171 = vadd.f32 %v1082, %v1170
      %1172 = vmatmul.bf16.gmra.mxu0 %v572
      %v1173 = vpop.f32.mrf.mxu0
      %v1174 = vadd.f32 %v1085, %v1173
      %v1175 = vpop.f32.mrf.mxu0
      %v1176 = vadd.f32 %v1087, %v1175
      %1177 = vmatmul.bf16.gmra.mxu0 %v576
      %v1178 = vpop.f32.mrf.mxu0
      %v1179 = vadd.f32 %v1090, %v1178
      %v1180 = vpop.f32.mrf.mxu0
      %v1181 = vadd.f32 %v1092, %v1180
      %1182 = vmatmul.bf16.gmra.mxu0 %v580
      %v1183 = vpop.f32.mrf.mxu0
      %v1184 = vadd.f32 %v1095, %v1183
      %v1185 = vpop.f32.mrf.mxu0
      %v1186 = vadd.f32 %v1097, %v1185
      %1187 = vmatmul.bf16.gmra.mxu0 %v584
      %v1188 = vpop.f32.mrf.mxu0
      %v1189 = vadd.f32 %v1100, %v1188
      %v1190 = vpop.f32.mrf.mxu0
      %v1191 = vadd.f32 %v1102, %v1190
      %1192 = vmatmul.bf16.gmra.mxu0 %v588
      %v1193 = vpop.f32.mrf.mxu0
      %v1194 = vadd.f32 %v1105, %v1193
      %v1195 = vpop.f32.mrf.mxu0
      %v1196 = vadd.f32 %v1107, %v1195
      %1197 = vmatmul.bf16.gmra.mxu0 %v592
      %v1198 = vpop.f32.mrf.mxu0
      %v1199 = vadd.f32 %v1110, %v1198
      %v1200 = vpop.f32.mrf.mxu0
      %v1201 = vadd.f32 %v1112, %v1200
      %1202 = vmatmul.bf16.gmra.mxu0 %v596
      %v1203 = vpop.f32.mrf.mxu0
      %v1204 = vadd.f32 %v1115, %v1203
      %v1205 = vpop.f32.mrf.mxu0
      %v1206 = vadd.f32 %v1117, %v1205
      %1207 = vmatmul.bf16.gmra.mxu0 %v600
      %v1208 = vpop.f32.mrf.mxu0
      %v1209 = vadd.f32 %v1120, %v1208
      %v1210 = vpop.f32.mrf.mxu0
      %v1211 = vadd.f32 %v1122, %v1210
      %1212 = vdwg.mxu0
      %v1213 = vmax.f32 %v1134, 0.0
      %v1214 = vmax.f32 %v1136, 0.0
      %v1215 = vmax.f32 %v1139, 0.0
      %v1216 = vmax.f32 %v1141, 0.0
      %v1217 = vmax.f32 %v1144, 0.0
      %v1218 = vmax.f32 %v1146, 0.0
      %v1219 = vmax.f32 %v1149, 0.0
      %v1220 = vmax.f32 %v1151, 0.0
      %v1221 = vmax.f32 %v1154, 0.0
      %v1222 = vmax.f32 %v1156, 0.0
      %v1223 = vmax.f32 %v1159, 0.0
      %v1224 = vmax.f32 %v1161, 0.0
      %v1225 = vmax.f32 %v1164, 0.0
      %v1226 = vmax.f32 %v1166, 0.0
      %v1227 = vmax.f32 %v1169, 0.0
      %v1228 = vmax.f32 %v1171, 0.0
      %v1229 = vmax.f32 %v1174, 0.0
      %v1230 = vmax.f32 %v1176, 0.0
      %v1231 = vmax.f32 %v1179, 0.0
      %v1232 = vmax.f32 %v1181, 0.0
      %v1233 = vmax.f32 %v1184, 0.0
      %v1234 = vmax.f32 %v1186, 0.0
      %v1235 = vmax.f32 %v1189, 0.0
      %v1236 = vmax.f32 %v1191, 0.0
      %v1237 = vmax.f32 %v1194, 0.0
      %v1238 = vmax.f32 %v1196, 0.0
      %v1239 = vmax.f32 %v1199, 0.0
      %v1240 = vmax.f32 %v1201, 0.0
      %v1241 = vmax.f32 %v1204, 0.0
      %v1242 = vmax.f32 %v1206, 0.0
      %v1243 = vmax.f32 %v1209, 0.0
      %v1244 = vmax.f32 %v1211, 0.0
      %s1245 = scalar_lea.vmem %s1, 256
      %v1246 = vld [vmem:[%s1245] sm:$0xf]
      %v1247 = vld [vmem:[%s1245 + $0x4] sm:$0xf]
      %v1248 = vld [vmem:[%s1245 + $0x8] sm:$0xf]
      %v1249 = vld [vmem:[%s1245 + $0xc] sm:$0xf]
      %v1250 = vld [vmem:[%s1245 + $0x10] sm:$0xf]
      %v1251 = vld [vmem:[%s1245 + $0x14] sm:$0xf]
      %v1252 = vld [vmem:[%s1245 + $0x18] sm:$0xf]
      %v1253 = vld [vmem:[%s1245 + $0x1c] sm:$0xf]
      %v1254 = vld [vmem:[%s1245 + $0x20] sm:$0xf]
      %v1255 = vld [vmem:[%s1245 + $0x24] sm:$0xf]
      %v1256 = vld [vmem:[%s1245 + $0x28] sm:$0xf]
      %v1257 = vld [vmem:[%s1245 + $0x2c] sm:$0xf]
      %v1258 = vld [vmem:[%s1245 + $0x30] sm:$0xf]
      %v1259 = vld [vmem:[%s1245 + $0x34] sm:$0xf]
      %v1260 = vld [vmem:[%s1245 + $0x38] sm:$0xf]
      %v1261 = vld [vmem:[%s1245 + $0x3c] sm:$0xf]
      %v1262 = vld [vmem:[%s1245 + $0x40] sm:$0xf]
      %v1263 = vld [vmem:[%s1245 + $0x44] sm:$0xf]
      %v1264 = vld [vmem:[%s1245 + $0x48] sm:$0xf]
      %v1265 = vld [vmem:[%s1245 + $0x4c] sm:$0xf]
      %v1266 = vld [vmem:[%s1245 + $0x50] sm:$0xf]
      %v1267 = vld [vmem:[%s1245 + $0x54] sm:$0xf]
      %v1268 = vld [vmem:[%s1245 + $0x58] sm:$0xf]
      %v1269 = vld [vmem:[%s1245 + $0x5c] sm:$0xf]
      %v1270 = vld [vmem:[%s1245 + $0x60] sm:$0xf]
      %v1271 = vld [vmem:[%s1245 + $0x64] sm:$0xf]
      %v1272 = vld [vmem:[%s1245 + $0x68] sm:$0xf]
      %v1273 = vld [vmem:[%s1245 + $0x6c] sm:$0xf]
      %v1274 = vld [vmem:[%s1245 + $0x70] sm:$0xf]
      %v1275 = vld [vmem:[%s1245 + $0x74] sm:$0xf]
      %v1276 = vld [vmem:[%s1245 + $0x78] sm:$0xf]
      %v1277 = vld [vmem:[%s1245 + $0x7c] sm:$0xf]
      %v1278 = vld [vmem:[%s1245 + $0x80] sm:$0xf]
      %v1279 = vld [vmem:[%s1245 + $0x84] sm:$0xf]
      %v1280 = vld [vmem:[%s1245 + $0x88] sm:$0xf]
      %v1281 = vld [vmem:[%s1245 + $0x8c] sm:$0xf]
      %v1282 = vld [vmem:[%s1245 + $0x90] sm:$0xf]
      %v1283 = vld [vmem:[%s1245 + $0x94] sm:$0xf]
      %v1284 = vld [vmem:[%s1245 + $0x98] sm:$0xf]
      %v1285 = vld [vmem:[%s1245 + $0x9c] sm:$0xf]
      %v1286 = vld [vmem:[%s1245 + $0xa0] sm:$0xf]
      %v1287 = vld [vmem:[%s1245 + $0xa4] sm:$0xf]
      %v1288 = vld [vmem:[%s1245 + $0xa8] sm:$0xf]
      %v1289 = vld [vmem:[%s1245 + $0xac] sm:$0xf]
      %v1290 = vld [vmem:[%s1245 + $0xb0] sm:$0xf]
      %v1291 = vld [vmem:[%s1245 + $0xb4] sm:$0xf]
      %v1292 = vld [vmem:[%s1245 + $0xb8] sm:$0xf]
      %v1293 = vld [vmem:[%s1245 + $0xbc] sm:$0xf]
      %v1294 = vld [vmem:[%s1245 + $0xc0] sm:$0xf]
      %v1295 = vld [vmem:[%s1245 + $0xc4] sm:$0xf]
      %v1296 = vld [vmem:[%s1245 + $0xc8] sm:$0xf]
      %v1297 = vld [vmem:[%s1245 + $0xcc] sm:$0xf]
      %v1298 = vld [vmem:[%s1245 + $0xd0] sm:$0xf]
      %v1299 = vld [vmem:[%s1245 + $0xd4] sm:$0xf]
      %v1300 = vld [vmem:[%s1245 + $0xd8] sm:$0xf]
      %v1301 = vld [vmem:[%s1245 + $0xdc] sm:$0xf]
      %v1302 = vld [vmem:[%s1245 + $0xe0] sm:$0xf]
      %v1303 = vld [vmem:[%s1245 + $0xe4] sm:$0xf]
      %v1304 = vld [vmem:[%s1245 + $0xe8] sm:$0xf]
      %v1305 = vld [vmem:[%s1245 + $0xec] sm:$0xf]
      %v1306 = vld [vmem:[%s1245 + $0xf0] sm:$0xf]
      %v1307 = vld [vmem:[%s1245 + $0xf4] sm:$0xf]
      %v1308 = vld [vmem:[%s1245 + $0xf8] sm:$0xf]
      %v1309 = vld [vmem:[%s1245 + $0xfc] sm:$0xf]
      %v1374 = vunpack.c.l.b16 %v1246
      %v1375 = vunpack.c.l.b16 %v1247
      %v1376 = vunpack.c.l.b16 %v1248
      %v1377 = vunpack.c.l.b16 %v1249
      %v1378 = vunpack.c.l.b16 %v1250
      %v1379 = vunpack.c.l.b16 %v1251
      %v1380 = vunpack.c.l.b16 %v1252
      %v1381 = vunpack.c.l.b16 %v1253
      %v1382 = vunpack.c.l.b16 %v1254
      %v1383 = vunpack.c.l.b16 %v1255
      %v1384 = vunpack.c.l.b16 %v1256
      %v1385 = vunpack.c.l.b16 %v1257
      %v1386 = vunpack.c.l.b16 %v1258
      %v1387 = vunpack.c.l.b16 %v1259
      %v1388 = vunpack.c.l.b16 %v1260
      %v1389 = vunpack.c.l.b16 %v1261
      %v1390 = vunpack.c.l.b16 %v1262
      %v1391 = vunpack.c.l.b16 %v1263
      %v1392 = vunpack.c.l.b16 %v1264
      %v1393 = vunpack.c.l.b16 %v1265
      %v1394 = vunpack.c.l.b16 %v1266
      %v1395 = vunpack.c.l.b16 %v1267
      %v1396 = vunpack.c.l.b16 %v1268
      %v1397 = vunpack.c.l.b16 %v1269
      %v1398 = vunpack.c.l.b16 %v1270
      %v1399 = vunpack.c.l.b16 %v1271
      %v1400 = vunpack.c.l.b16 %v1272
      %v1401 = vunpack.c.l.b16 %v1273
      %v1402 = vunpack.c.l.b16 %v1274
      %v1403 = vunpack.c.l.b16 %v1275
      %v1404 = vunpack.c.l.b16 %v1276
      %v1405 = vunpack.c.l.b16 %v1277
      %v1406 = vunpack.c.l.b16 %v1278
      %v1407 = vunpack.c.l.b16 %v1279
      %v1408 = vunpack.c.l.b16 %v1280
      %v1409 = vunpack.c.l.b16 %v1281
      %v1410 = vunpack.c.l.b16 %v1282
      %v1411 = vunpack.c.l.b16 %v1283
      %v1412 = vunpack.c.l.b16 %v1284
      %v1413 = vunpack.c.l.b16 %v1285
      %v1414 = vunpack.c.l.b16 %v1286
      %v1415 = vunpack.c.l.b16 %v1287
      %v1416 = vunpack.c.l.b16 %v1288
      %v1417 = vunpack.c.l.b16 %v1289
      %v1418 = vunpack.c.l.b16 %v1290
      %v1419 = vunpack.c.l.b16 %v1291
      %v1420 = vunpack.c.l.b16 %v1292
      %v1421 = vunpack.c.l.b16 %v1293
      %v1422 = vunpack.c.l.b16 %v1294
      %v1423 = vunpack.c.l.b16 %v1295
      %v1424 = vunpack.c.l.b16 %v1296
      %v1425 = vunpack.c.l.b16 %v1297
      %v1426 = vunpack.c.l.b16 %v1298
      %v1427 = vunpack.c.l.b16 %v1299
      %v1428 = vunpack.c.l.b16 %v1300
      %v1429 = vunpack.c.l.b16 %v1301
      %v1430 = vunpack.c.l.b16 %v1302
      %v1431 = vunpack.c.l.b16 %v1303
      %v1432 = vunpack.c.l.b16 %v1304
      %v1433 = vunpack.c.l.b16 %v1305
      %v1434 = vunpack.c.l.b16 %v1306
      %v1435 = vunpack.c.l.b16 %v1307
      %v1436 = vunpack.c.l.b16 %v1308
      %v1437 = vunpack.c.l.b16 %v1309
      %v1438 = vpack.c.b16 %v1375, %v1374
      %v1439 = vpack.c.b16 %v1377, %v1376
      %v1440 = vpack.c.b16 %v1379, %v1378
      %v1441 = vpack.c.b16 %v1381, %v1380
      %v1442 = vpack.c.b16 %v1383, %v1382
      %v1443 = vpack.c.b16 %v1385, %v1384
      %v1444 = vpack.c.b16 %v1387, %v1386
      %v1445 = vpack.c.b16 %v1389, %v1388
      %v1446 = vpack.c.b16 %v1391, %v1390
      %v1447 = vpack.c.b16 %v1393, %v1392
      %v1448 = vpack.c.b16 %v1395, %v1394
      %v1449 = vpack.c.b16 %v1397, %v1396
      %v1450 = vpack.c.b16 %v1399, %v1398
      %v1451 = vpack.c.b16 %v1401, %v1400
      %v1452 = vpack.c.b16 %v1403, %v1402
      %v1453 = vpack.c.b16 %v1405, %v1404
      %v1454 = vpack.c.b16 %v1407, %v1406
      %v1455 = vpack.c.b16 %v1409, %v1408
      %v1456 = vpack.c.b16 %v1411, %v1410
      %v1457 = vpack.c.b16 %v1413, %v1412
      %v1458 = vpack.c.b16 %v1415, %v1414
      %v1459 = vpack.c.b16 %v1417, %v1416
      %v1460 = vpack.c.b16 %v1419, %v1418
      %v1461 = vpack.c.b16 %v1421, %v1420
      %v1462 = vpack.c.b16 %v1423, %v1422
      %v1463 = vpack.c.b16 %v1425, %v1424
      %v1464 = vpack.c.b16 %v1427, %v1426
      %v1465 = vpack.c.b16 %v1429, %v1428
      %v1466 = vpack.c.b16 %v1431, %v1430
      %v1467 = vpack.c.b16 %v1433, %v1432
      %v1468 = vpack.c.b16 %v1435, %v1434
      %v1469 = vpack.c.b16 %v1437, %v1436
      %1502 = vmatpush.bf16.msra.mxu0 %v1445
      %1503 = vmatpush.bf16.msra.mxu0 %v1444
      %1504 = vmatpush.bf16.msra.mxu0 %v1443
      %1505 = vmatpush.bf16.msra.mxu0 %v1442
      %1506 = vmatpush.bf16.msra.mxu0 %v1441
      %1507 = vmatpush.bf16.msra.mxu0 %v1440
      %1508 = vmatpush.bf16.msra.mxu0 %v1439
      %1509 = vmatpush.bf16.msra.mxu0 %v1438
      %1510 = vmatmul.bf16.gmra.mxu0 %v537
      %v1511 = vpop.f32.mrf.mxu0
      %v1512 = vadd.f32 %v343, %v1511
      %v1513 = vpop.f32.mrf.mxu0
      %v1514 = vadd.f32 %v343, %v1513
      %1515 = vmatmul.bf16.gmra.mxu0 %v541
      %v1516 = vpop.f32.mrf.mxu0
      %v1517 = vadd.f32 %v343, %v1516
      %v1518 = vpop.f32.mrf.mxu0
      %v1519 = vadd.f32 %v343, %v1518
      %1520 = vmatmul.bf16.gmra.mxu0 %v545
      %v1521 = vpop.f32.mrf.mxu0
      %v1522 = vadd.f32 %v343, %v1521
      %v1523 = vpop.f32.mrf.mxu0
      %v1524 = vadd.f32 %v343, %v1523
      %1525 = vmatmul.bf16.gmra.mxu0 %v549
      %v1526 = vpop.f32.mrf.mxu0
      %v1527 = vadd.f32 %v343, %v1526
      %v1528 = vpop.f32.mrf.mxu0
      %v1529 = vadd.f32 %v343, %v1528
      %1530 = vmatmul.bf16.gmra.mxu0 %v553
      %v1531 = vpop.f32.mrf.mxu0
      %v1532 = vadd.f32 %v343, %v1531
      %v1533 = vpop.f32.mrf.mxu0
      %v1534 = vadd.f32 %v343, %v1533
      %1535 = vmatmul.bf16.gmra.mxu0 %v557
      %v1536 = vpop.f32.mrf.mxu0
      %v1537 = vadd.f32 %v343, %v1536
      %v1538 = vpop.f32.mrf.mxu0
      %v1539 = vadd.f32 %v343, %v1538
      %1540 = vmatmul.bf16.gmra.mxu0 %v561
      %v1541 = vpop.f32.mrf.mxu0
      %v1542 = vadd.f32 %v343, %v1541
      %v1543 = vpop.f32.mrf.mxu0
      %v1544 = vadd.f32 %v343, %v1543
      %1545 = vmatmul.bf16.gmra.mxu0 %v565
      %v1546 = vpop.f32.mrf.mxu0
      %v1547 = vadd.f32 %v343, %v1546
      %v1548 = vpop.f32.mrf.mxu0
      %v1549 = vadd.f32 %v343, %v1548
      %1550 = vmatmul.bf16.gmra.mxu0 %v569
      %v1551 = vpop.f32.mrf.mxu0
      %v1552 = vadd.f32 %v343, %v1551
      %v1553 = vpop.f32.mrf.mxu0
      %v1554 = vadd.f32 %v343, %v1553
      %1555 = vmatmul.bf16.gmra.mxu0 %v573
      %v1556 = vpop.f32.mrf.mxu0
      %v1557 = vadd.f32 %v343, %v1556
      %v1558 = vpop.f32.mrf.mxu0
      %v1559 = vadd.f32 %v343, %v1558
      %1560 = vmatmul.bf16.gmra.mxu0 %v577
      %v1561 = vpop.f32.mrf.mxu0
      %v1562 = vadd.f32 %v343, %v1561
      %v1563 = vpop.f32.mrf.mxu0
      %v1564 = vadd.f32 %v343, %v1563
      %1565 = vmatmul.bf16.gmra.mxu0 %v581
      %v1566 = vpop.f32.mrf.mxu0
      %v1567 = vadd.f32 %v343, %v1566
      %v1568 = vpop.f32.mrf.mxu0
      %v1569 = vadd.f32 %v343, %v1568
      %1570 = vmatmul.bf16.gmra.mxu0 %v585
      %v1571 = vpop.f32.mrf.mxu0
      %v1572 = vadd.f32 %v343, %v1571
      %v1573 = vpop.f32.mrf.mxu0
      %v1574 = vadd.f32 %v343, %v1573
      %1575 = vmatmul.bf16.gmra.mxu0 %v589
      %v1576 = vpop.f32.mrf.mxu0
      %v1577 = vadd.f32 %v343, %v1576
      %v1578 = vpop.f32.mrf.mxu0
      %v1579 = vadd.f32 %v343, %v1578
      %1580 = vmatmul.bf16.gmra.mxu0 %v593
      %v1581 = vpop.f32.mrf.mxu0
      %v1582 = vadd.f32 %v343, %v1581
      %v1583 = vpop.f32.mrf.mxu0
      %v1584 = vadd.f32 %v343, %v1583
      %1585 = vmatmul.bf16.gmra.mxu0 %v597
      %v1586 = vpop.f32.mrf.mxu0
      %v1587 = vadd.f32 %v343, %v1586
      %v1588 = vpop.f32.mrf.mxu0
      %v1589 = vadd.f32 %v343, %v1588
      %1590 = vdwg.mxu0
      %1591 = vmatpush.bf16.msra.mxu0 %v1453
      %1592 = vmatpush.bf16.msra.mxu0 %v1452
      %1593 = vmatpush.bf16.msra.mxu0 %v1451
      %1594 = vmatpush.bf16.msra.mxu0 %v1450
      %1595 = vmatpush.bf16.msra.mxu0 %v1449
      %1596 = vmatpush.bf16.msra.mxu0 %v1448
      %1597 = vmatpush.bf16.msra.mxu0 %v1447
      %1598 = vmatpush.bf16.msra.mxu0 %v1446
      %1599 = vmatmul.bf16.gmra.mxu0 %v538
      %v1600 = vpop.f32.mrf.mxu0
      %v1601 = vadd.f32 %v1512, %v1600
      %v1602 = vpop.f32.mrf.mxu0
      %v1603 = vadd.f32 %v1514, %v1602
      %1604 = vmatmul.bf16.gmra.mxu0 %v542
      %v1605 = vpop.f32.mrf.mxu0
      %v1606 = vadd.f32 %v1517, %v1605
      %v1607 = vpop.f32.mrf.mxu0
      %v1608 = vadd.f32 %v1519, %v1607
      %1609 = vmatmul.bf16.gmra.mxu0 %v546
      %v1610 = vpop.f32.mrf.mxu0
      %v1611 = vadd.f32 %v1522, %v1610
      %v1612 = vpop.f32.mrf.mxu0
      %v1613 = vadd.f32 %v1524, %v1612
      %1614 = vmatmul.bf16.gmra.mxu0 %v550
      %v1615 = vpop.f32.mrf.mxu0
      %v1616 = vadd.f32 %v1527, %v1615
      %v1617 = vpop.f32.mrf.mxu0
      %v1618 = vadd.f32 %v1529, %v1617
      %1619 = vmatmul.bf16.gmra.mxu0 %v554
      %v1620 = vpop.f32.mrf.mxu0
      %v1621 = vadd.f32 %v1532, %v1620
      %v1622 = vpop.f32.mrf.mxu0
      %v1623 = vadd.f32 %v1534, %v1622
      %1624 = vmatmul.bf16.gmra.mxu0 %v558
      %v1625 = vpop.f32.mrf.mxu0
      %v1626 = vadd.f32 %v1537, %v1625
      %v1627 = vpop.f32.mrf.mxu0
      %v1628 = vadd.f32 %v1539, %v1627
      %1629 = vmatmul.bf16.gmra.mxu0 %v562
      %v1630 = vpop.f32.mrf.mxu0
      %v1631 = vadd.f32 %v1542, %v1630
      %v1632 = vpop.f32.mrf.mxu0
      %v1633 = vadd.f32 %v1544, %v1632
      %1634 = vmatmul.bf16.gmra.mxu0 %v566
      %v1635 = vpop.f32.mrf.mxu0
      %v1636 = vadd.f32 %v1547, %v1635
      %v1637 = vpop.f32.mrf.mxu0
      %v1638 = vadd.f32 %v1549, %v1637
      %1639 = vmatmul.bf16.gmra.mxu0 %v570
      %v1640 = vpop.f32.mrf.mxu0
      %v1641 = vadd.f32 %v1552, %v1640
      %v1642 = vpop.f32.mrf.mxu0
      %v1643 = vadd.f32 %v1554, %v1642
      %1644 = vmatmul.bf16.gmra.mxu0 %v574
      %v1645 = vpop.f32.mrf.mxu0
      %v1646 = vadd.f32 %v1557, %v1645
      %v1647 = vpop.f32.mrf.mxu0
      %v1648 = vadd.f32 %v1559, %v1647
      %1649 = vmatmul.bf16.gmra.mxu0 %v578
      %v1650 = vpop.f32.mrf.mxu0
      %v1651 = vadd.f32 %v1562, %v1650
      %v1652 = vpop.f32.mrf.mxu0
      %v1653 = vadd.f32 %v1564, %v1652
      %1654 = vmatmul.bf16.gmra.mxu0 %v582
      %v1655 = vpop.f32.mrf.mxu0
      %v1656 = vadd.f32 %v1567, %v1655
      %v1657 = vpop.f32.mrf.mxu0
      %v1658 = vadd.f32 %v1569, %v1657
      %1659 = vmatmul.bf16.gmra.mxu0 %v586
      %v1660 = vpop.f32.mrf.mxu0
      %v1661 = vadd.f32 %v1572, %v1660
      %v1662 = vpop.f32.mrf.mxu0
      %v1663 = vadd.f32 %v1574, %v1662
      %1664 = vmatmul.bf16.gmra.mxu0 %v590
      %v1665 = vpop.f32.mrf.mxu0
      %v1666 = vadd.f32 %v1577, %v1665
      %v1667 = vpop.f32.mrf.mxu0
      %v1668 = vadd.f32 %v1579, %v1667
      %1669 = vmatmul.bf16.gmra.mxu0 %v594
      %v1670 = vpop.f32.mrf.mxu0
      %v1671 = vadd.f32 %v1582, %v1670
      %v1672 = vpop.f32.mrf.mxu0
      %v1673 = vadd.f32 %v1584, %v1672
      %1674 = vmatmul.bf16.gmra.mxu0 %v598
      %v1675 = vpop.f32.mrf.mxu0
      %v1676 = vadd.f32 %v1587, %v1675
      %v1677 = vpop.f32.mrf.mxu0
      %v1678 = vadd.f32 %v1589, %v1677
      %1679 = vdwg.mxu0
      %1680 = vmatpush.bf16.msra.mxu0 %v1461
      %1681 = vmatpush.bf16.msra.mxu0 %v1460
      %1682 = vmatpush.bf16.msra.mxu0 %v1459
      %1683 = vmatpush.bf16.msra.mxu0 %v1458
      %1684 = vmatpush.bf16.msra.mxu0 %v1457
      %1685 = vmatpush.bf16.msra.mxu0 %v1456
      %1686 = vmatpush.bf16.msra.mxu0 %v1455
      %1687 = vmatpush.bf16.msra.mxu0 %v1454
      %1688 = vmatmul.bf16.gmra.mxu0 %v539
      %v1689 = vpop.f32.mrf.mxu0
      %v1690 = vadd.f32 %v1601, %v1689
      %v1691 = vpop.f32.mrf.mxu0
      %v1692 = vadd.f32 %v1603, %v1691
      %1693 = vmatmul.bf16.gmra.mxu0 %v543
      %v1694 = vpop.f32.mrf.mxu0
      %v1695 = vadd.f32 %v1606, %v1694
      %v1696 = vpop.f32.mrf.mxu0
      %v1697 = vadd.f32 %v1608, %v1696
      %1698 = vmatmul.bf16.gmra.mxu0 %v547
      %v1699 = vpop.f32.mrf.mxu0
      %v1700 = vadd.f32 %v1611, %v1699
      %v1701 = vpop.f32.mrf.mxu0
      %v1702 = vadd.f32 %v1613, %v1701
      %1703 = vmatmul.bf16.gmra.mxu0 %v551
      %v1704 = vpop.f32.mrf.mxu0
      %v1705 = vadd.f32 %v1616, %v1704
      %v1706 = vpop.f32.mrf.mxu0
      %v1707 = vadd.f32 %v1618, %v1706
      %1708 = vmatmul.bf16.gmra.mxu0 %v555
      %v1709 = vpop.f32.mrf.mxu0
      %v1710 = vadd.f32 %v1621, %v1709
      %v1711 = vpop.f32.mrf.mxu0
      %v1712 = vadd.f32 %v1623, %v1711
      %1713 = vmatmul.bf16.gmra.mxu0 %v559
      %v1714 = vpop.f32.mrf.mxu0
      %v1715 = vadd.f32 %v1626, %v1714
      %v1716 = vpop.f32.mrf.mxu0
      %v1717 = vadd.f32 %v1628, %v1716
      %1718 = vmatmul.bf16.gmra.mxu0 %v563
      %v1719 = vpop.f32.mrf.mxu0
      %v1720 = vadd.f32 %v1631, %v1719
      %v1721 = vpop.f32.mrf.mxu0
      %v1722 = vadd.f32 %v1633, %v1721
      %1723 = vmatmul.bf16.gmra.mxu0 %v567
      %v1724 = vpop.f32.mrf.mxu0
      %v1725 = vadd.f32 %v1636, %v1724
      %v1726 = vpop.f32.mrf.mxu0
      %v1727 = vadd.f32 %v1638, %v1726
      %1728 = vmatmul.bf16.gmra.mxu0 %v571
      %v1729 = vpop.f32.mrf.mxu0
      %v1730 = vadd.f32 %v1641, %v1729
      %v1731 = vpop.f32.mrf.mxu0
      %v1732 = vadd.f32 %v1643, %v1731
      %1733 = vmatmul.bf16.gmra.mxu0 %v575
      %v1734 = vpop.f32.mrf.mxu0
      %v1735 = vadd.f32 %v1646, %v1734
      %v1736 = vpop.f32.mrf.mxu0
      %v1737 = vadd.f32 %v1648, %v1736
      %1738 = vmatmul.bf16.gmra.mxu0 %v579
      %v1739 = vpop.f32.mrf.mxu0
      %v1740 = vadd.f32 %v1651, %v1739
      %v1741 = vpop.f32.mrf.mxu0
      %v1742 = vadd.f32 %v1653, %v1741
      %1743 = vmatmul.bf16.gmra.mxu0 %v583
      %v1744 = vpop.f32.mrf.mxu0
      %v1745 = vadd.f32 %v1656, %v1744
      %v1746 = vpop.f32.mrf.mxu0
      %v1747 = vadd.f32 %v1658, %v1746
      %1748 = vmatmul.bf16.gmra.mxu0 %v587
      %v1749 = vpop.f32.mrf.mxu0
      %v1750 = vadd.f32 %v1661, %v1749
      %v1751 = vpop.f32.mrf.mxu0
      %v1752 = vadd.f32 %v1663, %v1751
      %1753 = vmatmul.bf16.gmra.mxu0 %v591
      %v1754 = vpop.f32.mrf.mxu0
      %v1755 = vadd.f32 %v1666, %v1754
      %v1756 = vpop.f32.mrf.mxu0
      %v1757 = vadd.f32 %v1668, %v1756
      %1758 = vmatmul.bf16.gmra.mxu0 %v595
      %v1759 = vpop.f32.mrf.mxu0
      %v1760 = vadd.f32 %v1671, %v1759
      %v1761 = vpop.f32.mrf.mxu0
      %v1762 = vadd.f32 %v1673, %v1761
      %1763 = vmatmul.bf16.gmra.mxu0 %v599
      %v1764 = vpop.f32.mrf.mxu0
      %v1765 = vadd.f32 %v1676, %v1764
      %v1766 = vpop.f32.mrf.mxu0
      %v1767 = vadd.f32 %v1678, %v1766
      %1768 = vdwg.mxu0
      %1769 = vmatpush.bf16.msra.mxu0 %v1469
      %1770 = vmatpush.bf16.msra.mxu0 %v1468
      %1771 = vmatpush.bf16.msra.mxu0 %v1467
      %1772 = vmatpush.bf16.msra.mxu0 %v1466
      %1773 = vmatpush.bf16.msra.mxu0 %v1465
      %1774 = vmatpush.bf16.msra.mxu0 %v1464
      %1775 = vmatpush.bf16.msra.mxu0 %v1463
      %1776 = vmatpush.bf16.msra.mxu0 %v1462
      %1777 = vmatmul.bf16.gmra.mxu0 %v540
      %v1778 = vpop.f32.mrf.mxu0
      %v1779 = vadd.f32 %v1690, %v1778
      %v1780 = vpop.f32.mrf.mxu0
      %v1781 = vadd.f32 %v1692, %v1780
      %1782 = vmatmul.bf16.gmra.mxu0 %v544
      %v1783 = vpop.f32.mrf.mxu0
      %v1784 = vadd.f32 %v1695, %v1783
      %v1785 = vpop.f32.mrf.mxu0
      %v1786 = vadd.f32 %v1697, %v1785
      %1787 = vmatmul.bf16.gmra.mxu0 %v548
      %v1788 = vpop.f32.mrf.mxu0
      %v1789 = vadd.f32 %v1700, %v1788
      %v1790 = vpop.f32.mrf.mxu0
      %v1791 = vadd.f32 %v1702, %v1790
      %1792 = vmatmul.bf16.gmra.mxu0 %v552
      %v1793 = vpop.f32.mrf.mxu0
      %v1794 = vadd.f32 %v1705, %v1793
      %v1795 = vpop.f32.mrf.mxu0
      %v1796 = vadd.f32 %v1707, %v1795
      %1797 = vmatmul.bf16.gmra.mxu0 %v556
      %v1798 = vpop.f32.mrf.mxu0
      %v1799 = vadd.f32 %v1710, %v1798
      %v1800 = vpop.f32.mrf.mxu0
      %v1801 = vadd.f32 %v1712, %v1800
      %1802 = vmatmul.bf16.gmra.mxu0 %v560
      %v1803 = vpop.f32.mrf.mxu0
      %v1804 = vadd.f32 %v1715, %v1803
      %v1805 = vpop.f32.mrf.mxu0
      %v1806 = vadd.f32 %v1717, %v1805
      %1807 = vmatmul.bf16.gmra.mxu0 %v564
      %v1808 = vpop.f32.mrf.mxu0
      %v1809 = vadd.f32 %v1720, %v1808
      %v1810 = vpop.f32.mrf.mxu0
      %v1811 = vadd.f32 %v1722, %v1810
      %1812 = vmatmul.bf16.gmra.mxu0 %v568
      %v1813 = vpop.f32.mrf.mxu0
      %v1814 = vadd.f32 %v1725, %v1813
      %v1815 = vpop.f32.mrf.mxu0
      %v1816 = vadd.f32 %v1727, %v1815
      %1817 = vmatmul.bf16.gmra.mxu0 %v572
      %v1818 = vpop.f32.mrf.mxu0
      %v1819 = vadd.f32 %v1730, %v1818
      %v1820 = vpop.f32.mrf.mxu0
      %v1821 = vadd.f32 %v1732, %v1820
      %1822 = vmatmul.bf16.gmra.mxu0 %v576
      %v1823 = vpop.f32.mrf.mxu0
      %v1824 = vadd.f32 %v1735, %v1823
      %v1825 = vpop.f32.mrf.mxu0
      %v1826 = vadd.f32 %v1737, %v1825
      %1827 = vmatmul.bf16.gmra.mxu0 %v580
      %v1828 = vpop.f32.mrf.mxu0
      %v1829 = vadd.f32 %v1740, %v1828
      %v1830 = vpop.f32.mrf.mxu0
      %v1831 = vadd.f32 %v1742, %v1830
      %1832 = vmatmul.bf16.gmra.mxu0 %v584
      %v1833 = vpop.f32.mrf.mxu0
      %v1834 = vadd.f32 %v1745, %v1833
      %v1835 = vpop.f32.mrf.mxu0
      %v1836 = vadd.f32 %v1747, %v1835
      %1837 = vmatmul.bf16.gmra.mxu0 %v588
      %v1838 = vpop.f32.mrf.mxu0
      %v1839 = vadd.f32 %v1750, %v1838
      %v1840 = vpop.f32.mrf.mxu0
      %v1841 = vadd.f32 %v1752, %v1840
      %1842 = vmatmul.bf16.gmra.mxu0 %v592
      %v1843 = vpop.f32.mrf.mxu0
      %v1844 = vadd.f32 %v1755, %v1843
      %v1845 = vpop.f32.mrf.mxu0
      %v1846 = vadd.f32 %v1757, %v1845
      %1847 = vmatmul.bf16.gmra.mxu0 %v596
      %v1848 = vpop.f32.mrf.mxu0
      %v1849 = vadd.f32 %v1760, %v1848
      %v1850 = vpop.f32.mrf.mxu0
      %v1851 = vadd.f32 %v1762, %v1850
      %1852 = vmatmul.bf16.gmra.mxu0 %v600
      %v1853 = vpop.f32.mrf.mxu0
      %v1854 = vadd.f32 %v1765, %v1853
      %v1855 = vpop.f32.mrf.mxu0
      %v1856 = vadd.f32 %v1767, %v1855
      %1857 = vdwg.mxu0
      %v1858 = vmax.f32 %v1779, 0.0
      %v1859 = vmax.f32 %v1781, 0.0
      %v1860 = vmax.f32 %v1784, 0.0
      %v1861 = vmax.f32 %v1786, 0.0
      %v1862 = vmax.f32 %v1789, 0.0
      %v1863 = vmax.f32 %v1791, 0.0
      %v1864 = vmax.f32 %v1794, 0.0
      %v1865 = vmax.f32 %v1796, 0.0
      %v1866 = vmax.f32 %v1799, 0.0
      %v1867 = vmax.f32 %v1801, 0.0
      %v1868 = vmax.f32 %v1804, 0.0
      %v1869 = vmax.f32 %v1806, 0.0
      %v1870 = vmax.f32 %v1809, 0.0
      %v1871 = vmax.f32 %v1811, 0.0
      %v1872 = vmax.f32 %v1814, 0.0
      %v1873 = vmax.f32 %v1816, 0.0
      %v1874 = vmax.f32 %v1819, 0.0
      %v1875 = vmax.f32 %v1821, 0.0
      %v1876 = vmax.f32 %v1824, 0.0
      %v1877 = vmax.f32 %v1826, 0.0
      %v1878 = vmax.f32 %v1829, 0.0
      %v1879 = vmax.f32 %v1831, 0.0
      %v1880 = vmax.f32 %v1834, 0.0
      %v1881 = vmax.f32 %v1836, 0.0
      %v1882 = vmax.f32 %v1839, 0.0
      %v1883 = vmax.f32 %v1841, 0.0
      %v1884 = vmax.f32 %v1844, 0.0
      %v1885 = vmax.f32 %v1846, 0.0
      %v1886 = vmax.f32 %v1849, 0.0
      %v1887 = vmax.f32 %v1851, 0.0
      %v1888 = vmax.f32 %v1854, 0.0
      %v1889 = vmax.f32 %v1856, 0.0
      %v1890 = vmax.f32 %v1213, %v1858
      %v1891 = vmax.f32 %v1214, %v1859
      %v1892 = vmax.f32 %v1215, %v1860
      %v1893 = vmax.f32 %v1216, %v1861
      %v1894 = vmax.f32 %v1217, %v1862
      %v1895 = vmax.f32 %v1218, %v1863
      %v1896 = vmax.f32 %v1219, %v1864
      %v1897 = vmax.f32 %v1220, %v1865
      %v1898 = vmax.f32 %v1221, %v1866
      %v1899 = vmax.f32 %v1222, %v1867
      %v1900 = vmax.f32 %v1223, %v1868
      %v1901 = vmax.f32 %v1224, %v1869
      %v1902 = vmax.f32 %v1225, %v1870
      %v1903 = vmax.f32 %v1226, %v1871
      %v1904 = vmax.f32 %v1227, %v1872
      %v1905 = vmax.f32 %v1228, %v1873
      %v1906 = vmax.f32 %v1229, %v1874
      %v1907 = vmax.f32 %v1230, %v1875
      %v1908 = vmax.f32 %v1231, %v1876
      %v1909 = vmax.f32 %v1232, %v1877
      %v1910 = vmax.f32 %v1233, %v1878
      %v1911 = vmax.f32 %v1234, %v1879
      %v1912 = vmax.f32 %v1235, %v1880
      %v1913 = vmax.f32 %v1236, %v1881
      %v1914 = vmax.f32 %v1237, %v1882
      %v1915 = vmax.f32 %v1238, %v1883
      %v1916 = vmax.f32 %v1239, %v1884
      %v1917 = vmax.f32 %v1240, %v1885
      %v1918 = vmax.f32 %v1241, %v1886
      %v1919 = vmax.f32 %v1242, %v1887
      %v1920 = vmax.f32 %v1243, %v1888
      %v1921 = vmax.f32 %v1244, %v1889
      %s1922 = scalar_lea.vmem %s1, 512
      %v1923 = vld [vmem:[%s1922] sm:$0xf]
      %v1924 = vld [vmem:[%s1922 + $0x4] sm:$0xf]
      %v1925 = vld [vmem:[%s1922 + $0x8] sm:$0xf]
      %v1926 = vld [vmem:[%s1922 + $0xc] sm:$0xf]
      %v1927 = vld [vmem:[%s1922 + $0x10] sm:$0xf]
      %v1928 = vld [vmem:[%s1922 + $0x14] sm:$0xf]
      %v1929 = vld [vmem:[%s1922 + $0x18] sm:$0xf]
      %v1930 = vld [vmem:[%s1922 + $0x1c] sm:$0xf]
      %v1931 = vld [vmem:[%s1922 + $0x20] sm:$0xf]
      %v1932 = vld [vmem:[%s1922 + $0x24] sm:$0xf]
      %v1933 = vld [vmem:[%s1922 + $0x28] sm:$0xf]
      %v1934 = vld [vmem:[%s1922 + $0x2c] sm:$0xf]
      %v1935 = vld [vmem:[%s1922 + $0x30] sm:$0xf]
      %v1936 = vld [vmem:[%s1922 + $0x34] sm:$0xf]
      %v1937 = vld [vmem:[%s1922 + $0x38] sm:$0xf]
      %v1938 = vld [vmem:[%s1922 + $0x3c] sm:$0xf]
      %v1939 = vld [vmem:[%s1922 + $0x40] sm:$0xf]
      %v1940 = vld [vmem:[%s1922 + $0x44] sm:$0xf]
      %v1941 = vld [vmem:[%s1922 + $0x48] sm:$0xf]
      %v1942 = vld [vmem:[%s1922 + $0x4c] sm:$0xf]
      %v1943 = vld [vmem:[%s1922 + $0x50] sm:$0xf]
      %v1944 = vld [vmem:[%s1922 + $0x54] sm:$0xf]
      %v1945 = vld [vmem:[%s1922 + $0x58] sm:$0xf]
      %v1946 = vld [vmem:[%s1922 + $0x5c] sm:$0xf]
      %v1947 = vld [vmem:[%s1922 + $0x60] sm:$0xf]
      %v1948 = vld [vmem:[%s1922 + $0x64] sm:$0xf]
      %v1949 = vld [vmem:[%s1922 + $0x68] sm:$0xf]
      %v1950 = vld [vmem:[%s1922 + $0x6c] sm:$0xf]
      %v1951 = vld [vmem:[%s1922 + $0x70] sm:$0xf]
      %v1952 = vld [vmem:[%s1922 + $0x74] sm:$0xf]
      %v1953 = vld [vmem:[%s1922 + $0x78] sm:$0xf]
      %v1954 = vld [vmem:[%s1922 + $0x7c] sm:$0xf]
      %v1955 = vld [vmem:[%s1922 + $0x80] sm:$0xf]
      %v1956 = vld [vmem:[%s1922 + $0x84] sm:$0xf]
      %v1957 = vld [vmem:[%s1922 + $0x88] sm:$0xf]
      %v1958 = vld [vmem:[%s1922 + $0x8c] sm:$0xf]
      %v1959 = vld [vmem:[%s1922 + $0x90] sm:$0xf]
      %v1960 = vld [vmem:[%s1922 + $0x94] sm:$0xf]
      %v1961 = vld [vmem:[%s1922 + $0x98] sm:$0xf]
      %v1962 = vld [vmem:[%s1922 + $0x9c] sm:$0xf]
      %v1963 = vld [vmem:[%s1922 + $0xa0] sm:$0xf]
      %v1964 = vld [vmem:[%s1922 + $0xa4] sm:$0xf]
      %v1965 = vld [vmem:[%s1922 + $0xa8] sm:$0xf]
      %v1966 = vld [vmem:[%s1922 + $0xac] sm:$0xf]
      %v1967 = vld [vmem:[%s1922 + $0xb0] sm:$0xf]
      %v1968 = vld [vmem:[%s1922 + $0xb4] sm:$0xf]
      %v1969 = vld [vmem:[%s1922 + $0xb8] sm:$0xf]
      %v1970 = vld [vmem:[%s1922 + $0xbc] sm:$0xf]
      %v1971 = vld [vmem:[%s1922 + $0xc0] sm:$0xf]
      %v1972 = vld [vmem:[%s1922 + $0xc4] sm:$0xf]
      %v1973 = vld [vmem:[%s1922 + $0xc8] sm:$0xf]
      %v1974 = vld [vmem:[%s1922 + $0xcc] sm:$0xf]
      %v1975 = vld [vmem:[%s1922 + $0xd0] sm:$0xf]
      %v1976 = vld [vmem:[%s1922 + $0xd4] sm:$0xf]
      %v1977 = vld [vmem:[%s1922 + $0xd8] sm:$0xf]
      %v1978 = vld [vmem:[%s1922 + $0xdc] sm:$0xf]
      %v1979 = vld [vmem:[%s1922 + $0xe0] sm:$0xf]
      %v1980 = vld [vmem:[%s1922 + $0xe4] sm:$0xf]
      %v1981 = vld [vmem:[%s1922 + $0xe8] sm:$0xf]
      %v1982 = vld [vmem:[%s1922 + $0xec] sm:$0xf]
      %v1983 = vld [vmem:[%s1922 + $0xf0] sm:$0xf]
      %v1984 = vld [vmem:[%s1922 + $0xf4] sm:$0xf]
      %v1985 = vld [vmem:[%s1922 + $0xf8] sm:$0xf]
      %v1986 = vld [vmem:[%s1922 + $0xfc] sm:$0xf]
      %v2051 = vunpack.c.l.b16 %v1923
      %v2052 = vunpack.c.l.b16 %v1924
      %v2053 = vunpack.c.l.b16 %v1925
      %v2054 = vunpack.c.l.b16 %v1926
      %v2055 = vunpack.c.l.b16 %v1927
      %v2056 = vunpack.c.l.b16 %v1928
      %v2057 = vunpack.c.l.b16 %v1929
      %v2058 = vunpack.c.l.b16 %v1930
      %v2059 = vunpack.c.l.b16 %v1931
      %v2060 = vunpack.c.l.b16 %v1932
      %v2061 = vunpack.c.l.b16 %v1933
      %v2062 = vunpack.c.l.b16 %v1934
      %v2063 = vunpack.c.l.b16 %v1935
      %v2064 = vunpack.c.l.b16 %v1936
      %v2065 = vunpack.c.l.b16 %v1937
      %v2066 = vunpack.c.l.b16 %v1938
      %v2067 = vunpack.c.l.b16 %v1939
      %v2068 = vunpack.c.l.b16 %v1940
      %v2069 = vunpack.c.l.b16 %v1941
      %v2070 = vunpack.c.l.b16 %v1942
      %v2071 = vunpack.c.l.b16 %v1943
      %v2072 = vunpack.c.l.b16 %v1944
      %v2073 = vunpack.c.l.b16 %v1945
      %v2074 = vunpack.c.l.b16 %v1946
      %v2075 = vunpack.c.l.b16 %v1947
      %v2076 = vunpack.c.l.b16 %v1948
      %v2077 = vunpack.c.l.b16 %v1949
      %v2078 = vunpack.c.l.b16 %v1950
      %v2079 = vunpack.c.l.b16 %v1951
      %v2080 = vunpack.c.l.b16 %v1952
      %v2081 = vunpack.c.l.b16 %v1953
      %v2082 = vunpack.c.l.b16 %v1954
      %v2083 = vunpack.c.l.b16 %v1955
      %v2084 = vunpack.c.l.b16 %v1956
      %v2085 = vunpack.c.l.b16 %v1957
      %v2086 = vunpack.c.l.b16 %v1958
      %v2087 = vunpack.c.l.b16 %v1959
      %v2088 = vunpack.c.l.b16 %v1960
      %v2089 = vunpack.c.l.b16 %v1961
      %v2090 = vunpack.c.l.b16 %v1962
      %v2091 = vunpack.c.l.b16 %v1963
      %v2092 = vunpack.c.l.b16 %v1964
      %v2093 = vunpack.c.l.b16 %v1965
      %v2094 = vunpack.c.l.b16 %v1966
      %v2095 = vunpack.c.l.b16 %v1967
      %v2096 = vunpack.c.l.b16 %v1968
      %v2097 = vunpack.c.l.b16 %v1969
      %v2098 = vunpack.c.l.b16 %v1970
      %v2099 = vunpack.c.l.b16 %v1971
      %v2100 = vunpack.c.l.b16 %v1972
      %v2101 = vunpack.c.l.b16 %v1973
      %v2102 = vunpack.c.l.b16 %v1974
      %v2103 = vunpack.c.l.b16 %v1975
      %v2104 = vunpack.c.l.b16 %v1976
      %v2105 = vunpack.c.l.b16 %v1977
      %v2106 = vunpack.c.l.b16 %v1978
      %v2107 = vunpack.c.l.b16 %v1979
      %v2108 = vunpack.c.l.b16 %v1980
      %v2109 = vunpack.c.l.b16 %v1981
      %v2110 = vunpack.c.l.b16 %v1982
      %v2111 = vunpack.c.l.b16 %v1983
      %v2112 = vunpack.c.l.b16 %v1984
      %v2113 = vunpack.c.l.b16 %v1985
      %v2114 = vunpack.c.l.b16 %v1986
      %v2115 = vpack.c.b16 %v2052, %v2051
      %v2116 = vpack.c.b16 %v2054, %v2053
      %v2117 = vpack.c.b16 %v2056, %v2055
      %v2118 = vpack.c.b16 %v2058, %v2057
      %v2119 = vpack.c.b16 %v2060, %v2059
      %v2120 = vpack.c.b16 %v2062, %v2061
      %v2121 = vpack.c.b16 %v2064, %v2063
      %v2122 = vpack.c.b16 %v2066, %v2065
      %v2123 = vpack.c.b16 %v2068, %v2067
      %v2124 = vpack.c.b16 %v2070, %v2069
      %v2125 = vpack.c.b16 %v2072, %v2071
      %v2126 = vpack.c.b16 %v2074, %v2073
      %v2127 = vpack.c.b16 %v2076, %v2075
      %v2128 = vpack.c.b16 %v2078, %v2077
      %v2129 = vpack.c.b16 %v2080, %v2079
      %v2130 = vpack.c.b16 %v2082, %v2081
      %v2131 = vpack.c.b16 %v2084, %v2083
      %v2132 = vpack.c.b16 %v2086, %v2085
      %v2133 = vpack.c.b16 %v2088, %v2087
      %v2134 = vpack.c.b16 %v2090, %v2089
      %v2135 = vpack.c.b16 %v2092, %v2091
      %v2136 = vpack.c.b16 %v2094, %v2093
      %v2137 = vpack.c.b16 %v2096, %v2095
      %v2138 = vpack.c.b16 %v2098, %v2097
      %v2139 = vpack.c.b16 %v2100, %v2099
      %v2140 = vpack.c.b16 %v2102, %v2101
      %v2141 = vpack.c.b16 %v2104, %v2103
      %v2142 = vpack.c.b16 %v2106, %v2105
      %v2143 = vpack.c.b16 %v2108, %v2107
      %v2144 = vpack.c.b16 %v2110, %v2109
      %v2145 = vpack.c.b16 %v2112, %v2111
      %v2146 = vpack.c.b16 %v2114, %v2113
      %2179 = vmatpush.bf16.msra.mxu0 %v2122
      %2180 = vmatpush.bf16.msra.mxu0 %v2121
      %2181 = vmatpush.bf16.msra.mxu0 %v2120
      %2182 = vmatpush.bf16.msra.mxu0 %v2119
      %2183 = vmatpush.bf16.msra.mxu0 %v2118
      %2184 = vmatpush.bf16.msra.mxu0 %v2117
      %2185 = vmatpush.bf16.msra.mxu0 %v2116
      %2186 = vmatpush.bf16.msra.mxu0 %v2115
      %2187 = vmatmul.bf16.gmra.mxu0 %v537
      %v2188 = vpop.f32.mrf.mxu0
      %v2189 = vadd.f32 %v343, %v2188
      %v2190 = vpop.f32.mrf.mxu0
      %v2191 = vadd.f32 %v343, %v2190
      %2192 = vmatmul.bf16.gmra.mxu0 %v541
      %v2193 = vpop.f32.mrf.mxu0
      %v2194 = vadd.f32 %v343, %v2193
      %v2195 = vpop.f32.mrf.mxu0
      %v2196 = vadd.f32 %v343, %v2195
      %2197 = vmatmul.bf16.gmra.mxu0 %v545
      %v2198 = vpop.f32.mrf.mxu0
      %v2199 = vadd.f32 %v343, %v2198
      %v2200 = vpop.f32.mrf.mxu0
      %v2201 = vadd.f32 %v343, %v2200
      %2202 = vmatmul.bf16.gmra.mxu0 %v549
      %v2203 = vpop.f32.mrf.mxu0
      %v2204 = vadd.f32 %v343, %v2203
      %v2205 = vpop.f32.mrf.mxu0
      %v2206 = vadd.f32 %v343, %v2205
      %2207 = vmatmul.bf16.gmra.mxu0 %v553
      %v2208 = vpop.f32.mrf.mxu0
      %v2209 = vadd.f32 %v343, %v2208
      %v2210 = vpop.f32.mrf.mxu0
      %v2211 = vadd.f32 %v343, %v2210
      %2212 = vmatmul.bf16.gmra.mxu0 %v557
      %v2213 = vpop.f32.mrf.mxu0
      %v2214 = vadd.f32 %v343, %v2213
      %v2215 = vpop.f32.mrf.mxu0
      %v2216 = vadd.f32 %v343, %v2215
      %2217 = vmatmul.bf16.gmra.mxu0 %v561
      %v2218 = vpop.f32.mrf.mxu0
      %v2219 = vadd.f32 %v343, %v2218
      %v2220 = vpop.f32.mrf.mxu0
      %v2221 = vadd.f32 %v343, %v2220
      %2222 = vmatmul.bf16.gmra.mxu0 %v565
      %v2223 = vpop.f32.mrf.mxu0
      %v2224 = vadd.f32 %v343, %v2223
      %v2225 = vpop.f32.mrf.mxu0
      %v2226 = vadd.f32 %v343, %v2225
      %2227 = vmatmul.bf16.gmra.mxu0 %v569
      %v2228 = vpop.f32.mrf.mxu0
      %v2229 = vadd.f32 %v343, %v2228
      %v2230 = vpop.f32.mrf.mxu0
      %v2231 = vadd.f32 %v343, %v2230
      %2232 = vmatmul.bf16.gmra.mxu0 %v573
      %v2233 = vpop.f32.mrf.mxu0
      %v2234 = vadd.f32 %v343, %v2233
      %v2235 = vpop.f32.mrf.mxu0
      %v2236 = vadd.f32 %v343, %v2235
      %2237 = vmatmul.bf16.gmra.mxu0 %v577
      %v2238 = vpop.f32.mrf.mxu0
      %v2239 = vadd.f32 %v343, %v2238
      %v2240 = vpop.f32.mrf.mxu0
      %v2241 = vadd.f32 %v343, %v2240
      %2242 = vmatmul.bf16.gmra.mxu0 %v581
      %v2243 = vpop.f32.mrf.mxu0
      %v2244 = vadd.f32 %v343, %v2243
      %v2245 = vpop.f32.mrf.mxu0
      %v2246 = vadd.f32 %v343, %v2245
      %2247 = vmatmul.bf16.gmra.mxu0 %v585
      %v2248 = vpop.f32.mrf.mxu0
      %v2249 = vadd.f32 %v343, %v2248
      %v2250 = vpop.f32.mrf.mxu0
      %v2251 = vadd.f32 %v343, %v2250
      %2252 = vmatmul.bf16.gmra.mxu0 %v589
      %v2253 = vpop.f32.mrf.mxu0
      %v2254 = vadd.f32 %v343, %v2253
      %v2255 = vpop.f32.mrf.mxu0
      %v2256 = vadd.f32 %v343, %v2255
      %2257 = vmatmul.bf16.gmra.mxu0 %v593
      %v2258 = vpop.f32.mrf.mxu0
      %v2259 = vadd.f32 %v343, %v2258
      %v2260 = vpop.f32.mrf.mxu0
      %v2261 = vadd.f32 %v343, %v2260
      %2262 = vmatmul.bf16.gmra.mxu0 %v597
      %v2263 = vpop.f32.mrf.mxu0
      %v2264 = vadd.f32 %v343, %v2263
      %v2265 = vpop.f32.mrf.mxu0
      %v2266 = vadd.f32 %v343, %v2265
      %2267 = vdwg.mxu0
      %2268 = vmatpush.bf16.msra.mxu0 %v2130
      %2269 = vmatpush.bf16.msra.mxu0 %v2129
      %2270 = vmatpush.bf16.msra.mxu0 %v2128
      %2271 = vmatpush.bf16.msra.mxu0 %v2127
      %2272 = vmatpush.bf16.msra.mxu0 %v2126
      %2273 = vmatpush.bf16.msra.mxu0 %v2125
      %2274 = vmatpush.bf16.msra.mxu0 %v2124
      %2275 = vmatpush.bf16.msra.mxu0 %v2123
      %2276 = vmatmul.bf16.gmra.mxu0 %v538
      %v2277 = vpop.f32.mrf.mxu0
      %v2278 = vadd.f32 %v2189, %v2277
      %v2279 = vpop.f32.mrf.mxu0
      %v2280 = vadd.f32 %v2191, %v2279
      %2281 = vmatmul.bf16.gmra.mxu0 %v542
      %v2282 = vpop.f32.mrf.mxu0
      %v2283 = vadd.f32 %v2194, %v2282
      %v2284 = vpop.f32.mrf.mxu0
      %v2285 = vadd.f32 %v2196, %v2284
      %2286 = vmatmul.bf16.gmra.mxu0 %v546
      %v2287 = vpop.f32.mrf.mxu0
      %v2288 = vadd.f32 %v2199, %v2287
      %v2289 = vpop.f32.mrf.mxu0
      %v2290 = vadd.f32 %v2201, %v2289
      %2291 = vmatmul.bf16.gmra.mxu0 %v550
      %v2292 = vpop.f32.mrf.mxu0
      %v2293 = vadd.f32 %v2204, %v2292
      %v2294 = vpop.f32.mrf.mxu0
      %v2295 = vadd.f32 %v2206, %v2294
      %2296 = vmatmul.bf16.gmra.mxu0 %v554
      %v2297 = vpop.f32.mrf.mxu0
      %v2298 = vadd.f32 %v2209, %v2297
      %v2299 = vpop.f32.mrf.mxu0
      %v2300 = vadd.f32 %v2211, %v2299
      %2301 = vmatmul.bf16.gmra.mxu0 %v558
      %v2302 = vpop.f32.mrf.mxu0
      %v2303 = vadd.f32 %v2214, %v2302
      %v2304 = vpop.f32.mrf.mxu0
      %v2305 = vadd.f32 %v2216, %v2304
      %2306 = vmatmul.bf16.gmra.mxu0 %v562
      %v2307 = vpop.f32.mrf.mxu0
      %v2308 = vadd.f32 %v2219, %v2307
      %v2309 = vpop.f32.mrf.mxu0
      %v2310 = vadd.f32 %v2221, %v2309
      %2311 = vmatmul.bf16.gmra.mxu0 %v566
      %v2312 = vpop.f32.mrf.mxu0
      %v2313 = vadd.f32 %v2224, %v2312
      %v2314 = vpop.f32.mrf.mxu0
      %v2315 = vadd.f32 %v2226, %v2314
      %2316 = vmatmul.bf16.gmra.mxu0 %v570
      %v2317 = vpop.f32.mrf.mxu0
      %v2318 = vadd.f32 %v2229, %v2317
      %v2319 = vpop.f32.mrf.mxu0
      %v2320 = vadd.f32 %v2231, %v2319
      %2321 = vmatmul.bf16.gmra.mxu0 %v574
      %v2322 = vpop.f32.mrf.mxu0
      %v2323 = vadd.f32 %v2234, %v2322
      %v2324 = vpop.f32.mrf.mxu0
      %v2325 = vadd.f32 %v2236, %v2324
      %2326 = vmatmul.bf16.gmra.mxu0 %v578
      %v2327 = vpop.f32.mrf.mxu0
      %v2328 = vadd.f32 %v2239, %v2327
      %v2329 = vpop.f32.mrf.mxu0
      %v2330 = vadd.f32 %v2241, %v2329
      %2331 = vmatmul.bf16.gmra.mxu0 %v582
      %v2332 = vpop.f32.mrf.mxu0
      %v2333 = vadd.f32 %v2244, %v2332
      %v2334 = vpop.f32.mrf.mxu0
      %v2335 = vadd.f32 %v2246, %v2334
      %2336 = vmatmul.bf16.gmra.mxu0 %v586
      %v2337 = vpop.f32.mrf.mxu0
      %v2338 = vadd.f32 %v2249, %v2337
      %v2339 = vpop.f32.mrf.mxu0
      %v2340 = vadd.f32 %v2251, %v2339
      %2341 = vmatmul.bf16.gmra.mxu0 %v590
      %v2342 = vpop.f32.mrf.mxu0
      %v2343 = vadd.f32 %v2254, %v2342
      %v2344 = vpop.f32.mrf.mxu0
      %v2345 = vadd.f32 %v2256, %v2344
      %2346 = vmatmul.bf16.gmra.mxu0 %v594
      %v2347 = vpop.f32.mrf.mxu0
      %v2348 = vadd.f32 %v2259, %v2347
      %v2349 = vpop.f32.mrf.mxu0
      %v2350 = vadd.f32 %v2261, %v2349
      %2351 = vmatmul.bf16.gmra.mxu0 %v598
      %v2352 = vpop.f32.mrf.mxu0
      %v2353 = vadd.f32 %v2264, %v2352
      %v2354 = vpop.f32.mrf.mxu0
      %v2355 = vadd.f32 %v2266, %v2354
      %2356 = vdwg.mxu0
      %2357 = vmatpush.bf16.msra.mxu0 %v2138
      %2358 = vmatpush.bf16.msra.mxu0 %v2137
      %2359 = vmatpush.bf16.msra.mxu0 %v2136
      %2360 = vmatpush.bf16.msra.mxu0 %v2135
      %2361 = vmatpush.bf16.msra.mxu0 %v2134
      %2362 = vmatpush.bf16.msra.mxu0 %v2133
      %2363 = vmatpush.bf16.msra.mxu0 %v2132
      %2364 = vmatpush.bf16.msra.mxu0 %v2131
      %2365 = vmatmul.bf16.gmra.mxu0 %v539
      %v2366 = vpop.f32.mrf.mxu0
      %v2367 = vadd.f32 %v2278, %v2366
      %v2368 = vpop.f32.mrf.mxu0
      %v2369 = vadd.f32 %v2280, %v2368
      %2370 = vmatmul.bf16.gmra.mxu0 %v543
      %v2371 = vpop.f32.mrf.mxu0
      %v2372 = vadd.f32 %v2283, %v2371
      %v2373 = vpop.f32.mrf.mxu0
      %v2374 = vadd.f32 %v2285, %v2373
      %2375 = vmatmul.bf16.gmra.mxu0 %v547
      %v2376 = vpop.f32.mrf.mxu0
      %v2377 = vadd.f32 %v2288, %v2376
      %v2378 = vpop.f32.mrf.mxu0
      %v2379 = vadd.f32 %v2290, %v2378
      %2380 = vmatmul.bf16.gmra.mxu0 %v551
      %v2381 = vpop.f32.mrf.mxu0
      %v2382 = vadd.f32 %v2293, %v2381
      %v2383 = vpop.f32.mrf.mxu0
      %v2384 = vadd.f32 %v2295, %v2383
      %2385 = vmatmul.bf16.gmra.mxu0 %v555
      %v2386 = vpop.f32.mrf.mxu0
      %v2387 = vadd.f32 %v2298, %v2386
      %v2388 = vpop.f32.mrf.mxu0
      %v2389 = vadd.f32 %v2300, %v2388
      %2390 = vmatmul.bf16.gmra.mxu0 %v559
      %v2391 = vpop.f32.mrf.mxu0
      %v2392 = vadd.f32 %v2303, %v2391
      %v2393 = vpop.f32.mrf.mxu0
      %v2394 = vadd.f32 %v2305, %v2393
      %2395 = vmatmul.bf16.gmra.mxu0 %v563
      %v2396 = vpop.f32.mrf.mxu0
      %v2397 = vadd.f32 %v2308, %v2396
      %v2398 = vpop.f32.mrf.mxu0
      %v2399 = vadd.f32 %v2310, %v2398
      %2400 = vmatmul.bf16.gmra.mxu0 %v567
      %v2401 = vpop.f32.mrf.mxu0
      %v2402 = vadd.f32 %v2313, %v2401
      %v2403 = vpop.f32.mrf.mxu0
      %v2404 = vadd.f32 %v2315, %v2403
      %2405 = vmatmul.bf16.gmra.mxu0 %v571
      %v2406 = vpop.f32.mrf.mxu0
      %v2407 = vadd.f32 %v2318, %v2406
      %v2408 = vpop.f32.mrf.mxu0
      %v2409 = vadd.f32 %v2320, %v2408
      %2410 = vmatmul.bf16.gmra.mxu0 %v575
      %v2411 = vpop.f32.mrf.mxu0
      %v2412 = vadd.f32 %v2323, %v2411
      %v2413 = vpop.f32.mrf.mxu0
      %v2414 = vadd.f32 %v2325, %v2413
      %2415 = vmatmul.bf16.gmra.mxu0 %v579
      %v2416 = vpop.f32.mrf.mxu0
      %v2417 = vadd.f32 %v2328, %v2416
      %v2418 = vpop.f32.mrf.mxu0
      %v2419 = vadd.f32 %v2330, %v2418
      %2420 = vmatmul.bf16.gmra.mxu0 %v583
      %v2421 = vpop.f32.mrf.mxu0
      %v2422 = vadd.f32 %v2333, %v2421
      %v2423 = vpop.f32.mrf.mxu0
      %v2424 = vadd.f32 %v2335, %v2423
      %2425 = vmatmul.bf16.gmra.mxu0 %v587
      %v2426 = vpop.f32.mrf.mxu0
      %v2427 = vadd.f32 %v2338, %v2426
      %v2428 = vpop.f32.mrf.mxu0
      %v2429 = vadd.f32 %v2340, %v2428
      %2430 = vmatmul.bf16.gmra.mxu0 %v591
      %v2431 = vpop.f32.mrf.mxu0
      %v2432 = vadd.f32 %v2343, %v2431
      %v2433 = vpop.f32.mrf.mxu0
      %v2434 = vadd.f32 %v2345, %v2433
      %2435 = vmatmul.bf16.gmra.mxu0 %v595
      %v2436 = vpop.f32.mrf.mxu0
      %v2437 = vadd.f32 %v2348, %v2436
      %v2438 = vpop.f32.mrf.mxu0
      %v2439 = vadd.f32 %v2350, %v2438
      %2440 = vmatmul.bf16.gmra.mxu0 %v599
      %v2441 = vpop.f32.mrf.mxu0
      %v2442 = vadd.f32 %v2353, %v2441
      %v2443 = vpop.f32.mrf.mxu0
      %v2444 = vadd.f32 %v2355, %v2443
      %2445 = vdwg.mxu0
      %2446 = vmatpush.bf16.msra.mxu0 %v2146
      %2447 = vmatpush.bf16.msra.mxu0 %v2145
      %2448 = vmatpush.bf16.msra.mxu0 %v2144
      %2449 = vmatpush.bf16.msra.mxu0 %v2143
      %2450 = vmatpush.bf16.msra.mxu0 %v2142
      %2451 = vmatpush.bf16.msra.mxu0 %v2141
      %2452 = vmatpush.bf16.msra.mxu0 %v2140
      %2453 = vmatpush.bf16.msra.mxu0 %v2139
      %2454 = vmatmul.bf16.gmra.mxu0 %v540
      %v2455 = vpop.f32.mrf.mxu0
      %v2456 = vadd.f32 %v2367, %v2455
      %v2457 = vpop.f32.mrf.mxu0
      %v2458 = vadd.f32 %v2369, %v2457
      %2459 = vmatmul.bf16.gmra.mxu0 %v544
      %v2460 = vpop.f32.mrf.mxu0
      %v2461 = vadd.f32 %v2372, %v2460
      %v2462 = vpop.f32.mrf.mxu0
      %v2463 = vadd.f32 %v2374, %v2462
      %2464 = vmatmul.bf16.gmra.mxu0 %v548
      %v2465 = vpop.f32.mrf.mxu0
      %v2466 = vadd.f32 %v2377, %v2465
      %v2467 = vpop.f32.mrf.mxu0
      %v2468 = vadd.f32 %v2379, %v2467
      %2469 = vmatmul.bf16.gmra.mxu0 %v552
      %v2470 = vpop.f32.mrf.mxu0
      %v2471 = vadd.f32 %v2382, %v2470
      %v2472 = vpop.f32.mrf.mxu0
      %v2473 = vadd.f32 %v2384, %v2472
      %2474 = vmatmul.bf16.gmra.mxu0 %v556
      %v2475 = vpop.f32.mrf.mxu0
      %v2476 = vadd.f32 %v2387, %v2475
      %v2477 = vpop.f32.mrf.mxu0
      %v2478 = vadd.f32 %v2389, %v2477
      %2479 = vmatmul.bf16.gmra.mxu0 %v560
      %v2480 = vpop.f32.mrf.mxu0
      %v2481 = vadd.f32 %v2392, %v2480
      %v2482 = vpop.f32.mrf.mxu0
      %v2483 = vadd.f32 %v2394, %v2482
      %2484 = vmatmul.bf16.gmra.mxu0 %v564
      %v2485 = vpop.f32.mrf.mxu0
      %v2486 = vadd.f32 %v2397, %v2485
      %v2487 = vpop.f32.mrf.mxu0
      %v2488 = vadd.f32 %v2399, %v2487
      %2489 = vmatmul.bf16.gmra.mxu0 %v568
      %v2490 = vpop.f32.mrf.mxu0
      %v2491 = vadd.f32 %v2402, %v2490
      %v2492 = vpop.f32.mrf.mxu0
      %v2493 = vadd.f32 %v2404, %v2492
      %2494 = vmatmul.bf16.gmra.mxu0 %v572
      %v2495 = vpop.f32.mrf.mxu0
      %v2496 = vadd.f32 %v2407, %v2495
      %v2497 = vpop.f32.mrf.mxu0
      %v2498 = vadd.f32 %v2409, %v2497
      %2499 = vmatmul.bf16.gmra.mxu0 %v576
      %v2500 = vpop.f32.mrf.mxu0
      %v2501 = vadd.f32 %v2412, %v2500
      %v2502 = vpop.f32.mrf.mxu0
      %v2503 = vadd.f32 %v2414, %v2502
      %2504 = vmatmul.bf16.gmra.mxu0 %v580
      %v2505 = vpop.f32.mrf.mxu0
      %v2506 = vadd.f32 %v2417, %v2505
      %v2507 = vpop.f32.mrf.mxu0
      %v2508 = vadd.f32 %v2419, %v2507
      %2509 = vmatmul.bf16.gmra.mxu0 %v584
      %v2510 = vpop.f32.mrf.mxu0
      %v2511 = vadd.f32 %v2422, %v2510
      %v2512 = vpop.f32.mrf.mxu0
      %v2513 = vadd.f32 %v2424, %v2512
      %2514 = vmatmul.bf16.gmra.mxu0 %v588
      %v2515 = vpop.f32.mrf.mxu0
      %v2516 = vadd.f32 %v2427, %v2515
      %v2517 = vpop.f32.mrf.mxu0
      %v2518 = vadd.f32 %v2429, %v2517
      %2519 = vmatmul.bf16.gmra.mxu0 %v592
      %v2520 = vpop.f32.mrf.mxu0
      %v2521 = vadd.f32 %v2432, %v2520
      %v2522 = vpop.f32.mrf.mxu0
      %v2523 = vadd.f32 %v2434, %v2522
      %2524 = vmatmul.bf16.gmra.mxu0 %v596
      %v2525 = vpop.f32.mrf.mxu0
      %v2526 = vadd.f32 %v2437, %v2525
      %v2527 = vpop.f32.mrf.mxu0
      %v2528 = vadd.f32 %v2439, %v2527
      %2529 = vmatmul.bf16.gmra.mxu0 %v600
      %v2530 = vpop.f32.mrf.mxu0
      %v2531 = vadd.f32 %v2442, %v2530
      %v2532 = vpop.f32.mrf.mxu0
      %v2533 = vadd.f32 %v2444, %v2532
      %2534 = vdwg.mxu0
      %v2535 = vmax.f32 %v2456, 0.0
      %v2536 = vmax.f32 %v2458, 0.0
      %v2537 = vmax.f32 %v2461, 0.0
      %v2538 = vmax.f32 %v2463, 0.0
      %v2539 = vmax.f32 %v2466, 0.0
      %v2540 = vmax.f32 %v2468, 0.0
      %v2541 = vmax.f32 %v2471, 0.0
      %v2542 = vmax.f32 %v2473, 0.0
      %v2543 = vmax.f32 %v2476, 0.0
      %v2544 = vmax.f32 %v2478, 0.0
      %v2545 = vmax.f32 %v2481, 0.0
      %v2546 = vmax.f32 %v2483, 0.0
      %v2547 = vmax.f32 %v2486, 0.0
      %v2548 = vmax.f32 %v2488, 0.0
      %v2549 = vmax.f32 %v2491, 0.0
      %v2550 = vmax.f32 %v2493, 0.0
      %v2551 = vmax.f32 %v2496, 0.0
      %v2552 = vmax.f32 %v2498, 0.0
      %v2553 = vmax.f32 %v2501, 0.0
      %v2554 = vmax.f32 %v2503, 0.0
      %v2555 = vmax.f32 %v2506, 0.0
      %v2556 = vmax.f32 %v2508, 0.0
      %v2557 = vmax.f32 %v2511, 0.0
      %v2558 = vmax.f32 %v2513, 0.0
      %v2559 = vmax.f32 %v2516, 0.0
      %v2560 = vmax.f32 %v2518, 0.0
      %v2561 = vmax.f32 %v2521, 0.0
      %v2562 = vmax.f32 %v2523, 0.0
      %v2563 = vmax.f32 %v2526, 0.0
      %v2564 = vmax.f32 %v2528, 0.0
      %v2565 = vmax.f32 %v2531, 0.0
      %v2566 = vmax.f32 %v2533, 0.0
      %v2567 = vmax.f32 %v1890, %v2535
      %v2568 = vmax.f32 %v1891, %v2536
      %v2569 = vmax.f32 %v1892, %v2537
      %v2570 = vmax.f32 %v1893, %v2538
      %v2571 = vmax.f32 %v1894, %v2539
      %v2572 = vmax.f32 %v1895, %v2540
      %v2573 = vmax.f32 %v1896, %v2541
      %v2574 = vmax.f32 %v1897, %v2542
      %v2575 = vmax.f32 %v1898, %v2543
      %v2576 = vmax.f32 %v1899, %v2544
      %v2577 = vmax.f32 %v1900, %v2545
      %v2578 = vmax.f32 %v1901, %v2546
      %v2579 = vmax.f32 %v1902, %v2547
      %v2580 = vmax.f32 %v1903, %v2548
      %v2581 = vmax.f32 %v1904, %v2549
      %v2582 = vmax.f32 %v1905, %v2550
      %v2583 = vmax.f32 %v1906, %v2551
      %v2584 = vmax.f32 %v1907, %v2552
      %v2585 = vmax.f32 %v1908, %v2553
      %v2586 = vmax.f32 %v1909, %v2554
      %v2587 = vmax.f32 %v1910, %v2555
      %v2588 = vmax.f32 %v1911, %v2556
      %v2589 = vmax.f32 %v1912, %v2557
      %v2590 = vmax.f32 %v1913, %v2558
      %v2591 = vmax.f32 %v1914, %v2559
      %v2592 = vmax.f32 %v1915, %v2560
      %v2593 = vmax.f32 %v1916, %v2561
      %v2594 = vmax.f32 %v1917, %v2562
      %v2595 = vmax.f32 %v1918, %v2563
      %v2596 = vmax.f32 %v1919, %v2564
      %v2597 = vmax.f32 %v1920, %v2565
      %v2598 = vmax.f32 %v1921, %v2566
      %s2599 = scalar_lea.vmem %s1, 768
      %v2600 = vld [vmem:[%s2599] sm:$0xf]
      %v2601 = vld [vmem:[%s2599 + $0x4] sm:$0xf]
      %v2602 = vld [vmem:[%s2599 + $0x8] sm:$0xf]
      %v2603 = vld [vmem:[%s2599 + $0xc] sm:$0xf]
      %v2604 = vld [vmem:[%s2599 + $0x10] sm:$0xf]
      %v2605 = vld [vmem:[%s2599 + $0x14] sm:$0xf]
      %v2606 = vld [vmem:[%s2599 + $0x18] sm:$0xf]
      %v2607 = vld [vmem:[%s2599 + $0x1c] sm:$0xf]
      %v2608 = vld [vmem:[%s2599 + $0x20] sm:$0xf]
      %v2609 = vld [vmem:[%s2599 + $0x24] sm:$0xf]
      %v2610 = vld [vmem:[%s2599 + $0x28] sm:$0xf]
      %v2611 = vld [vmem:[%s2599 + $0x2c] sm:$0xf]
      %v2612 = vld [vmem:[%s2599 + $0x30] sm:$0xf]
      %v2613 = vld [vmem:[%s2599 + $0x34] sm:$0xf]
      %v2614 = vld [vmem:[%s2599 + $0x38] sm:$0xf]
      %v2615 = vld [vmem:[%s2599 + $0x3c] sm:$0xf]
      %v2616 = vld [vmem:[%s2599 + $0x40] sm:$0xf]
      %v2617 = vld [vmem:[%s2599 + $0x44] sm:$0xf]
      %v2618 = vld [vmem:[%s2599 + $0x48] sm:$0xf]
      %v2619 = vld [vmem:[%s2599 + $0x4c] sm:$0xf]
      %v2620 = vld [vmem:[%s2599 + $0x50] sm:$0xf]
      %v2621 = vld [vmem:[%s2599 + $0x54] sm:$0xf]
      %v2622 = vld [vmem:[%s2599 + $0x58] sm:$0xf]
      %v2623 = vld [vmem:[%s2599 + $0x5c] sm:$0xf]
      %v2624 = vld [vmem:[%s2599 + $0x60] sm:$0xf]
      %v2625 = vld [vmem:[%s2599 + $0x64] sm:$0xf]
      %v2626 = vld [vmem:[%s2599 + $0x68] sm:$0xf]
      %v2627 = vld [vmem:[%s2599 + $0x6c] sm:$0xf]
      %v2628 = vld [vmem:[%s2599 + $0x70] sm:$0xf]
      %v2629 = vld [vmem:[%s2599 + $0x74] sm:$0xf]
      %v2630 = vld [vmem:[%s2599 + $0x78] sm:$0xf]
      %v2631 = vld [vmem:[%s2599 + $0x7c] sm:$0xf]
      %v2632 = vld [vmem:[%s2599 + $0x80] sm:$0xf]
      %v2633 = vld [vmem:[%s2599 + $0x84] sm:$0xf]
      %v2634 = vld [vmem:[%s2599 + $0x88] sm:$0xf]
      %v2635 = vld [vmem:[%s2599 + $0x8c] sm:$0xf]
      %v2636 = vld [vmem:[%s2599 + $0x90] sm:$0xf]
      %v2637 = vld [vmem:[%s2599 + $0x94] sm:$0xf]
      %v2638 = vld [vmem:[%s2599 + $0x98] sm:$0xf]
      %v2639 = vld [vmem:[%s2599 + $0x9c] sm:$0xf]
      %v2640 = vld [vmem:[%s2599 + $0xa0] sm:$0xf]
      %v2641 = vld [vmem:[%s2599 + $0xa4] sm:$0xf]
      %v2642 = vld [vmem:[%s2599 + $0xa8] sm:$0xf]
      %v2643 = vld [vmem:[%s2599 + $0xac] sm:$0xf]
      %v2644 = vld [vmem:[%s2599 + $0xb0] sm:$0xf]
      %v2645 = vld [vmem:[%s2599 + $0xb4] sm:$0xf]
      %v2646 = vld [vmem:[%s2599 + $0xb8] sm:$0xf]
      %v2647 = vld [vmem:[%s2599 + $0xbc] sm:$0xf]
      %v2648 = vld [vmem:[%s2599 + $0xc0] sm:$0xf]
      %v2649 = vld [vmem:[%s2599 + $0xc4] sm:$0xf]
      %v2650 = vld [vmem:[%s2599 + $0xc8] sm:$0xf]
      %v2651 = vld [vmem:[%s2599 + $0xcc] sm:$0xf]
      %v2652 = vld [vmem:[%s2599 + $0xd0] sm:$0xf]
      %v2653 = vld [vmem:[%s2599 + $0xd4] sm:$0xf]
      %v2654 = vld [vmem:[%s2599 + $0xd8] sm:$0xf]
      %v2655 = vld [vmem:[%s2599 + $0xdc] sm:$0xf]
      %v2656 = vld [vmem:[%s2599 + $0xe0] sm:$0xf]
      %v2657 = vld [vmem:[%s2599 + $0xe4] sm:$0xf]
      %v2658 = vld [vmem:[%s2599 + $0xe8] sm:$0xf]
      %v2659 = vld [vmem:[%s2599 + $0xec] sm:$0xf]
      %v2660 = vld [vmem:[%s2599 + $0xf0] sm:$0xf]
      %v2661 = vld [vmem:[%s2599 + $0xf4] sm:$0xf]
      %v2662 = vld [vmem:[%s2599 + $0xf8] sm:$0xf]
      %v2663 = vld [vmem:[%s2599 + $0xfc] sm:$0xf]
      %v2728 = vunpack.c.l.b16 %v2600
      %v2729 = vunpack.c.l.b16 %v2601
      %v2730 = vunpack.c.l.b16 %v2602
      %v2731 = vunpack.c.l.b16 %v2603
      %v2732 = vunpack.c.l.b16 %v2604
      %v2733 = vunpack.c.l.b16 %v2605
      %v2734 = vunpack.c.l.b16 %v2606
      %v2735 = vunpack.c.l.b16 %v2607
      %v2736 = vunpack.c.l.b16 %v2608
      %v2737 = vunpack.c.l.b16 %v2609
      %v2738 = vunpack.c.l.b16 %v2610
      %v2739 = vunpack.c.l.b16 %v2611
      %v2740 = vunpack.c.l.b16 %v2612
      %v2741 = vunpack.c.l.b16 %v2613
      %v2742 = vunpack.c.l.b16 %v2614
      %v2743 = vunpack.c.l.b16 %v2615
      %v2744 = vunpack.c.l.b16 %v2616
      %v2745 = vunpack.c.l.b16 %v2617
      %v2746 = vunpack.c.l.b16 %v2618
      %v2747 = vunpack.c.l.b16 %v2619
      %v2748 = vunpack.c.l.b16 %v2620
      %v2749 = vunpack.c.l.b16 %v2621
      %v2750 = vunpack.c.l.b16 %v2622
      %v2751 = vunpack.c.l.b16 %v2623
      %v2752 = vunpack.c.l.b16 %v2624
      %v2753 = vunpack.c.l.b16 %v2625
      %v2754 = vunpack.c.l.b16 %v2626
      %v2755 = vunpack.c.l.b16 %v2627
      %v2756 = vunpack.c.l.b16 %v2628
      %v2757 = vunpack.c.l.b16 %v2629
      %v2758 = vunpack.c.l.b16 %v2630
      %v2759 = vunpack.c.l.b16 %v2631
      %v2760 = vunpack.c.l.b16 %v2632
      %v2761 = vunpack.c.l.b16 %v2633
      %v2762 = vunpack.c.l.b16 %v2634
      %v2763 = vunpack.c.l.b16 %v2635
      %v2764 = vunpack.c.l.b16 %v2636
      %v2765 = vunpack.c.l.b16 %v2637
      %v2766 = vunpack.c.l.b16 %v2638
      %v2767 = vunpack.c.l.b16 %v2639
      %v2768 = vunpack.c.l.b16 %v2640
      %v2769 = vunpack.c.l.b16 %v2641
      %v2770 = vunpack.c.l.b16 %v2642
      %v2771 = vunpack.c.l.b16 %v2643
      %v2772 = vunpack.c.l.b16 %v2644
      %v2773 = vunpack.c.l.b16 %v2645
      %v2774 = vunpack.c.l.b16 %v2646
      %v2775 = vunpack.c.l.b16 %v2647
      %v2776 = vunpack.c.l.b16 %v2648
      %v2777 = vunpack.c.l.b16 %v2649
      %v2778 = vunpack.c.l.b16 %v2650
      %v2779 = vunpack.c.l.b16 %v2651
      %v2780 = vunpack.c.l.b16 %v2652
      %v2781 = vunpack.c.l.b16 %v2653
      %v2782 = vunpack.c.l.b16 %v2654
      %v2783 = vunpack.c.l.b16 %v2655
      %v2784 = vunpack.c.l.b16 %v2656
      %v2785 = vunpack.c.l.b16 %v2657
      %v2786 = vunpack.c.l.b16 %v2658
      %v2787 = vunpack.c.l.b16 %v2659
      %v2788 = vunpack.c.l.b16 %v2660
      %v2789 = vunpack.c.l.b16 %v2661
      %v2790 = vunpack.c.l.b16 %v2662
      %v2791 = vunpack.c.l.b16 %v2663
      %v2792 = vpack.c.b16 %v2729, %v2728
      %v2793 = vpack.c.b16 %v2731, %v2730
      %v2794 = vpack.c.b16 %v2733, %v2732
      %v2795 = vpack.c.b16 %v2735, %v2734
      %v2796 = vpack.c.b16 %v2737, %v2736
      %v2797 = vpack.c.b16 %v2739, %v2738
      %v2798 = vpack.c.b16 %v2741, %v2740
      %v2799 = vpack.c.b16 %v2743, %v2742
      %v2800 = vpack.c.b16 %v2745, %v2744
      %v2801 = vpack.c.b16 %v2747, %v2746
      %v2802 = vpack.c.b16 %v2749, %v2748
      %v2803 = vpack.c.b16 %v2751, %v2750
      %v2804 = vpack.c.b16 %v2753, %v2752
      %v2805 = vpack.c.b16 %v2755, %v2754
      %v2806 = vpack.c.b16 %v2757, %v2756
      %v2807 = vpack.c.b16 %v2759, %v2758
      %v2808 = vpack.c.b16 %v2761, %v2760
      %v2809 = vpack.c.b16 %v2763, %v2762
      %v2810 = vpack.c.b16 %v2765, %v2764
      %v2811 = vpack.c.b16 %v2767, %v2766
      %v2812 = vpack.c.b16 %v2769, %v2768
      %v2813 = vpack.c.b16 %v2771, %v2770
      %v2814 = vpack.c.b16 %v2773, %v2772
      %v2815 = vpack.c.b16 %v2775, %v2774
      %v2816 = vpack.c.b16 %v2777, %v2776
      %v2817 = vpack.c.b16 %v2779, %v2778
      %v2818 = vpack.c.b16 %v2781, %v2780
      %v2819 = vpack.c.b16 %v2783, %v2782
      %v2820 = vpack.c.b16 %v2785, %v2784
      %v2821 = vpack.c.b16 %v2787, %v2786
      %v2822 = vpack.c.b16 %v2789, %v2788
      %v2823 = vpack.c.b16 %v2791, %v2790
      %2856 = vmatpush.bf16.msra.mxu0 %v2799
      %2857 = vmatpush.bf16.msra.mxu0 %v2798
      %2858 = vmatpush.bf16.msra.mxu0 %v2797
      %2859 = vmatpush.bf16.msra.mxu0 %v2796
      %2860 = vmatpush.bf16.msra.mxu0 %v2795
      %2861 = vmatpush.bf16.msra.mxu0 %v2794
      %2862 = vmatpush.bf16.msra.mxu0 %v2793
      %2863 = vmatpush.bf16.msra.mxu0 %v2792
      %2864 = vmatmul.bf16.gmra.mxu0 %v537
      %v2865 = vpop.f32.mrf.mxu0
      %v2866 = vadd.f32 %v343, %v2865
      %v2867 = vpop.f32.mrf.mxu0
      %v2868 = vadd.f32 %v343, %v2867
      %2869 = vmatmul.bf16.gmra.mxu0 %v541
      %v2870 = vpop.f32.mrf.mxu0
      %v2871 = vadd.f32 %v343, %v2870
      %v2872 = vpop.f32.mrf.mxu0
      %v2873 = vadd.f32 %v343, %v2872
      %2874 = vmatmul.bf16.gmra.mxu0 %v545
      %v2875 = vpop.f32.mrf.mxu0
      %v2876 = vadd.f32 %v343, %v2875
      %v2877 = vpop.f32.mrf.mxu0
      %v2878 = vadd.f32 %v343, %v2877
      %2879 = vmatmul.bf16.gmra.mxu0 %v549
      %v2880 = vpop.f32.mrf.mxu0
      %v2881 = vadd.f32 %v343, %v2880
      %v2882 = vpop.f32.mrf.mxu0
      %v2883 = vadd.f32 %v343, %v2882
      %2884 = vmatmul.bf16.gmra.mxu0 %v553
      %v2885 = vpop.f32.mrf.mxu0
      %v2886 = vadd.f32 %v343, %v2885
      %v2887 = vpop.f32.mrf.mxu0
      %v2888 = vadd.f32 %v343, %v2887
      %2889 = vmatmul.bf16.gmra.mxu0 %v557
      %v2890 = vpop.f32.mrf.mxu0
      %v2891 = vadd.f32 %v343, %v2890
      %v2892 = vpop.f32.mrf.mxu0
      %v2893 = vadd.f32 %v343, %v2892
      %2894 = vmatmul.bf16.gmra.mxu0 %v561
      %v2895 = vpop.f32.mrf.mxu0
      %v2896 = vadd.f32 %v343, %v2895
      %v2897 = vpop.f32.mrf.mxu0
      %v2898 = vadd.f32 %v343, %v2897
      %2899 = vmatmul.bf16.gmra.mxu0 %v565
      %v2900 = vpop.f32.mrf.mxu0
      %v2901 = vadd.f32 %v343, %v2900
      %v2902 = vpop.f32.mrf.mxu0
      %v2903 = vadd.f32 %v343, %v2902
      %2904 = vmatmul.bf16.gmra.mxu0 %v569
      %v2905 = vpop.f32.mrf.mxu0
      %v2906 = vadd.f32 %v343, %v2905
      %v2907 = vpop.f32.mrf.mxu0
      %v2908 = vadd.f32 %v343, %v2907
      %2909 = vmatmul.bf16.gmra.mxu0 %v573
      %v2910 = vpop.f32.mrf.mxu0
      %v2911 = vadd.f32 %v343, %v2910
      %v2912 = vpop.f32.mrf.mxu0
      %v2913 = vadd.f32 %v343, %v2912
      %2914 = vmatmul.bf16.gmra.mxu0 %v577
      %v2915 = vpop.f32.mrf.mxu0
      %v2916 = vadd.f32 %v343, %v2915
      %v2917 = vpop.f32.mrf.mxu0
      %v2918 = vadd.f32 %v343, %v2917
      %2919 = vmatmul.bf16.gmra.mxu0 %v581
      %v2920 = vpop.f32.mrf.mxu0
      %v2921 = vadd.f32 %v343, %v2920
      %v2922 = vpop.f32.mrf.mxu0
      %v2923 = vadd.f32 %v343, %v2922
      %2924 = vmatmul.bf16.gmra.mxu0 %v585
      %v2925 = vpop.f32.mrf.mxu0
      %v2926 = vadd.f32 %v343, %v2925
      %v2927 = vpop.f32.mrf.mxu0
      %v2928 = vadd.f32 %v343, %v2927
      %2929 = vmatmul.bf16.gmra.mxu0 %v589
      %v2930 = vpop.f32.mrf.mxu0
      %v2931 = vadd.f32 %v343, %v2930
      %v2932 = vpop.f32.mrf.mxu0
      %v2933 = vadd.f32 %v343, %v2932
      %2934 = vmatmul.bf16.gmra.mxu0 %v593
      %v2935 = vpop.f32.mrf.mxu0
      %v2936 = vadd.f32 %v343, %v2935
      %v2937 = vpop.f32.mrf.mxu0
      %v2938 = vadd.f32 %v343, %v2937
      %2939 = vmatmul.bf16.gmra.mxu0 %v597
      %v2940 = vpop.f32.mrf.mxu0
      %v2941 = vadd.f32 %v343, %v2940
      %v2942 = vpop.f32.mrf.mxu0
      %v2943 = vadd.f32 %v343, %v2942
      %2944 = vdwg.mxu0
      %2945 = vmatpush.bf16.msra.mxu0 %v2807
      %2946 = vmatpush.bf16.msra.mxu0 %v2806
      %2947 = vmatpush.bf16.msra.mxu0 %v2805
      %2948 = vmatpush.bf16.msra.mxu0 %v2804
      %2949 = vmatpush.bf16.msra.mxu0 %v2803
      %2950 = vmatpush.bf16.msra.mxu0 %v2802
      %2951 = vmatpush.bf16.msra.mxu0 %v2801
      %2952 = vmatpush.bf16.msra.mxu0 %v2800
      %2953 = vmatmul.bf16.gmra.mxu0 %v538
      %v2954 = vpop.f32.mrf.mxu0
      %v2955 = vadd.f32 %v2866, %v2954
      %v2956 = vpop.f32.mrf.mxu0
      %v2957 = vadd.f32 %v2868, %v2956
      %2958 = vmatmul.bf16.gmra.mxu0 %v542
      %v2959 = vpop.f32.mrf.mxu0
      %v2960 = vadd.f32 %v2871, %v2959
      %v2961 = vpop.f32.mrf.mxu0
      %v2962 = vadd.f32 %v2873, %v2961
      %2963 = vmatmul.bf16.gmra.mxu0 %v546
      %v2964 = vpop.f32.mrf.mxu0
      %v2965 = vadd.f32 %v2876, %v2964
      %v2966 = vpop.f32.mrf.mxu0
      %v2967 = vadd.f32 %v2878, %v2966
      %2968 = vmatmul.bf16.gmra.mxu0 %v550
      %v2969 = vpop.f32.mrf.mxu0
      %v2970 = vadd.f32 %v2881, %v2969
      %v2971 = vpop.f32.mrf.mxu0
      %v2972 = vadd.f32 %v2883, %v2971
      %2973 = vmatmul.bf16.gmra.mxu0 %v554
      %v2974 = vpop.f32.mrf.mxu0
      %v2975 = vadd.f32 %v2886, %v2974
      %v2976 = vpop.f32.mrf.mxu0
      %v2977 = vadd.f32 %v2888, %v2976
      %2978 = vmatmul.bf16.gmra.mxu0 %v558
      %v2979 = vpop.f32.mrf.mxu0
      %v2980 = vadd.f32 %v2891, %v2979
      %v2981 = vpop.f32.mrf.mxu0
      %v2982 = vadd.f32 %v2893, %v2981
      %2983 = vmatmul.bf16.gmra.mxu0 %v562
      %v2984 = vpop.f32.mrf.mxu0
      %v2985 = vadd.f32 %v2896, %v2984
      %v2986 = vpop.f32.mrf.mxu0
      %v2987 = vadd.f32 %v2898, %v2986
      %2988 = vmatmul.bf16.gmra.mxu0 %v566
      %v2989 = vpop.f32.mrf.mxu0
      %v2990 = vadd.f32 %v2901, %v2989
      %v2991 = vpop.f32.mrf.mxu0
      %v2992 = vadd.f32 %v2903, %v2991
      %2993 = vmatmul.bf16.gmra.mxu0 %v570
      %v2994 = vpop.f32.mrf.mxu0
      %v2995 = vadd.f32 %v2906, %v2994
      %v2996 = vpop.f32.mrf.mxu0
      %v2997 = vadd.f32 %v2908, %v2996
      %2998 = vmatmul.bf16.gmra.mxu0 %v574
      %v2999 = vpop.f32.mrf.mxu0
      %v3000 = vadd.f32 %v2911, %v2999
      %v3001 = vpop.f32.mrf.mxu0
      %v3002 = vadd.f32 %v2913, %v3001
      %3003 = vmatmul.bf16.gmra.mxu0 %v578
      %v3004 = vpop.f32.mrf.mxu0
      %v3005 = vadd.f32 %v2916, %v3004
      %v3006 = vpop.f32.mrf.mxu0
      %v3007 = vadd.f32 %v2918, %v3006
      %3008 = vmatmul.bf16.gmra.mxu0 %v582
      %v3009 = vpop.f32.mrf.mxu0
      %v3010 = vadd.f32 %v2921, %v3009
      %v3011 = vpop.f32.mrf.mxu0
      %v3012 = vadd.f32 %v2923, %v3011
      %3013 = vmatmul.bf16.gmra.mxu0 %v586
      %v3014 = vpop.f32.mrf.mxu0
      %v3015 = vadd.f32 %v2926, %v3014
      %v3016 = vpop.f32.mrf.mxu0
      %v3017 = vadd.f32 %v2928, %v3016
      %3018 = vmatmul.bf16.gmra.mxu0 %v590
      %v3019 = vpop.f32.mrf.mxu0
      %v3020 = vadd.f32 %v2931, %v3019
      %v3021 = vpop.f32.mrf.mxu0
      %v3022 = vadd.f32 %v2933, %v3021
      %3023 = vmatmul.bf16.gmra.mxu0 %v594
      %v3024 = vpop.f32.mrf.mxu0
      %v3025 = vadd.f32 %v2936, %v3024
      %v3026 = vpop.f32.mrf.mxu0
      %v3027 = vadd.f32 %v2938, %v3026
      %3028 = vmatmul.bf16.gmra.mxu0 %v598
      %v3029 = vpop.f32.mrf.mxu0
      %v3030 = vadd.f32 %v2941, %v3029
      %v3031 = vpop.f32.mrf.mxu0
      %v3032 = vadd.f32 %v2943, %v3031
      %3033 = vdwg.mxu0
      %3034 = vmatpush.bf16.msra.mxu0 %v2815
      %3035 = vmatpush.bf16.msra.mxu0 %v2814
      %3036 = vmatpush.bf16.msra.mxu0 %v2813
      %3037 = vmatpush.bf16.msra.mxu0 %v2812
      %3038 = vmatpush.bf16.msra.mxu0 %v2811
      %3039 = vmatpush.bf16.msra.mxu0 %v2810
      %3040 = vmatpush.bf16.msra.mxu0 %v2809
      %3041 = vmatpush.bf16.msra.mxu0 %v2808
      %3042 = vmatmul.bf16.gmra.mxu0 %v539
      %v3043 = vpop.f32.mrf.mxu0
      %v3044 = vadd.f32 %v2955, %v3043
      %v3045 = vpop.f32.mrf.mxu0
      %v3046 = vadd.f32 %v2957, %v3045
      %3047 = vmatmul.bf16.gmra.mxu0 %v543
      %v3048 = vpop.f32.mrf.mxu0
      %v3049 = vadd.f32 %v2960, %v3048
      %v3050 = vpop.f32.mrf.mxu0
      %v3051 = vadd.f32 %v2962, %v3050
      %3052 = vmatmul.bf16.gmra.mxu0 %v547
      %v3053 = vpop.f32.mrf.mxu0
      %v3054 = vadd.f32 %v2965, %v3053
      %v3055 = vpop.f32.mrf.mxu0
      %v3056 = vadd.f32 %v2967, %v3055
      %3057 = vmatmul.bf16.gmra.mxu0 %v551
      %v3058 = vpop.f32.mrf.mxu0
      %v3059 = vadd.f32 %v2970, %v3058
      %v3060 = vpop.f32.mrf.mxu0
      %v3061 = vadd.f32 %v2972, %v3060
      %3062 = vmatmul.bf16.gmra.mxu0 %v555
      %v3063 = vpop.f32.mrf.mxu0
      %v3064 = vadd.f32 %v2975, %v3063
      %v3065 = vpop.f32.mrf.mxu0
      %v3066 = vadd.f32 %v2977, %v3065
      %3067 = vmatmul.bf16.gmra.mxu0 %v559
      %v3068 = vpop.f32.mrf.mxu0
      %v3069 = vadd.f32 %v2980, %v3068
      %v3070 = vpop.f32.mrf.mxu0
      %v3071 = vadd.f32 %v2982, %v3070
      %3072 = vmatmul.bf16.gmra.mxu0 %v563
      %v3073 = vpop.f32.mrf.mxu0
      %v3074 = vadd.f32 %v2985, %v3073
      %v3075 = vpop.f32.mrf.mxu0
      %v3076 = vadd.f32 %v2987, %v3075
      %3077 = vmatmul.bf16.gmra.mxu0 %v567
      %v3078 = vpop.f32.mrf.mxu0
      %v3079 = vadd.f32 %v2990, %v3078
      %v3080 = vpop.f32.mrf.mxu0
      %v3081 = vadd.f32 %v2992, %v3080
      %3082 = vmatmul.bf16.gmra.mxu0 %v571
      %v3083 = vpop.f32.mrf.mxu0
      %v3084 = vadd.f32 %v2995, %v3083
      %v3085 = vpop.f32.mrf.mxu0
      %v3086 = vadd.f32 %v2997, %v3085
      %3087 = vmatmul.bf16.gmra.mxu0 %v575
      %v3088 = vpop.f32.mrf.mxu0
      %v3089 = vadd.f32 %v3000, %v3088
      %v3090 = vpop.f32.mrf.mxu0
      %v3091 = vadd.f32 %v3002, %v3090
      %3092 = vmatmul.bf16.gmra.mxu0 %v579
      %v3093 = vpop.f32.mrf.mxu0
      %v3094 = vadd.f32 %v3005, %v3093
      %v3095 = vpop.f32.mrf.mxu0
      %v3096 = vadd.f32 %v3007, %v3095
      %3097 = vmatmul.bf16.gmra.mxu0 %v583
      %v3098 = vpop.f32.mrf.mxu0
      %v3099 = vadd.f32 %v3010, %v3098
      %v3100 = vpop.f32.mrf.mxu0
      %v3101 = vadd.f32 %v3012, %v3100
      %3102 = vmatmul.bf16.gmra.mxu0 %v587
      %v3103 = vpop.f32.mrf.mxu0
      %v3104 = vadd.f32 %v3015, %v3103
      %v3105 = vpop.f32.mrf.mxu0
      %v3106 = vadd.f32 %v3017, %v3105
      %3107 = vmatmul.bf16.gmra.mxu0 %v591
      %v3108 = vpop.f32.mrf.mxu0
      %v3109 = vadd.f32 %v3020, %v3108
      %v3110 = vpop.f32.mrf.mxu0
      %v3111 = vadd.f32 %v3022, %v3110
      %3112 = vmatmul.bf16.gmra.mxu0 %v595
      %v3113 = vpop.f32.mrf.mxu0
      %v3114 = vadd.f32 %v3025, %v3113
      %v3115 = vpop.f32.mrf.mxu0
      %v3116 = vadd.f32 %v3027, %v3115
      %3117 = vmatmul.bf16.gmra.mxu0 %v599
      %v3118 = vpop.f32.mrf.mxu0
      %v3119 = vadd.f32 %v3030, %v3118
      %v3120 = vpop.f32.mrf.mxu0
      %v3121 = vadd.f32 %v3032, %v3120
      %3122 = vdwg.mxu0
      %3123 = vmatpush.bf16.msra.mxu0 %v2823
      %3124 = vmatpush.bf16.msra.mxu0 %v2822
      %3125 = vmatpush.bf16.msra.mxu0 %v2821
      %3126 = vmatpush.bf16.msra.mxu0 %v2820
      %3127 = vmatpush.bf16.msra.mxu0 %v2819
      %3128 = vmatpush.bf16.msra.mxu0 %v2818
      %3129 = vmatpush.bf16.msra.mxu0 %v2817
      %3130 = vmatpush.bf16.msra.mxu0 %v2816
      %3131 = vmatmul.bf16.gmra.mxu0 %v540
      %v3132 = vpop.f32.mrf.mxu0
      %v3133 = vadd.f32 %v3044, %v3132
      %v3134 = vpop.f32.mrf.mxu0
      %v3135 = vadd.f32 %v3046, %v3134
      %3136 = vmatmul.bf16.gmra.mxu0 %v544
      %v3137 = vpop.f32.mrf.mxu0
      %v3138 = vadd.f32 %v3049, %v3137
      %v3139 = vpop.f32.mrf.mxu0
      %v3140 = vadd.f32 %v3051, %v3139
      %3141 = vmatmul.bf16.gmra.mxu0 %v548
      %v3142 = vpop.f32.mrf.mxu0
      %v3143 = vadd.f32 %v3054, %v3142
      %v3144 = vpop.f32.mrf.mxu0
      %v3145 = vadd.f32 %v3056, %v3144
      %3146 = vmatmul.bf16.gmra.mxu0 %v552
      %v3147 = vpop.f32.mrf.mxu0
      %v3148 = vadd.f32 %v3059, %v3147
      %v3149 = vpop.f32.mrf.mxu0
      %v3150 = vadd.f32 %v3061, %v3149
      %3151 = vmatmul.bf16.gmra.mxu0 %v556
      %v3152 = vpop.f32.mrf.mxu0
      %v3153 = vadd.f32 %v3064, %v3152
      %v3154 = vpop.f32.mrf.mxu0
      %v3155 = vadd.f32 %v3066, %v3154
      %3156 = vmatmul.bf16.gmra.mxu0 %v560
      %v3157 = vpop.f32.mrf.mxu0
      %v3158 = vadd.f32 %v3069, %v3157
      %v3159 = vpop.f32.mrf.mxu0
      %v3160 = vadd.f32 %v3071, %v3159
      %3161 = vmatmul.bf16.gmra.mxu0 %v564
      %v3162 = vpop.f32.mrf.mxu0
      %v3163 = vadd.f32 %v3074, %v3162
      %v3164 = vpop.f32.mrf.mxu0
      %v3165 = vadd.f32 %v3076, %v3164
      %3166 = vmatmul.bf16.gmra.mxu0 %v568
      %v3167 = vpop.f32.mrf.mxu0
      %v3168 = vadd.f32 %v3079, %v3167
      %v3169 = vpop.f32.mrf.mxu0
      %v3170 = vadd.f32 %v3081, %v3169
      %3171 = vmatmul.bf16.gmra.mxu0 %v572
      %v3172 = vpop.f32.mrf.mxu0
      %v3173 = vadd.f32 %v3084, %v3172
      %v3174 = vpop.f32.mrf.mxu0
      %v3175 = vadd.f32 %v3086, %v3174
      %3176 = vmatmul.bf16.gmra.mxu0 %v576
      %v3177 = vpop.f32.mrf.mxu0
      %v3178 = vadd.f32 %v3089, %v3177
      %v3179 = vpop.f32.mrf.mxu0
      %v3180 = vadd.f32 %v3091, %v3179
      %3181 = vmatmul.bf16.gmra.mxu0 %v580
      %v3182 = vpop.f32.mrf.mxu0
      %v3183 = vadd.f32 %v3094, %v3182
      %v3184 = vpop.f32.mrf.mxu0
      %v3185 = vadd.f32 %v3096, %v3184
      %3186 = vmatmul.bf16.gmra.mxu0 %v584
      %v3187 = vpop.f32.mrf.mxu0
      %v3188 = vadd.f32 %v3099, %v3187
      %v3189 = vpop.f32.mrf.mxu0
      %v3190 = vadd.f32 %v3101, %v3189
      %3191 = vmatmul.bf16.gmra.mxu0 %v588
      %v3192 = vpop.f32.mrf.mxu0
      %v3193 = vadd.f32 %v3104, %v3192
      %v3194 = vpop.f32.mrf.mxu0
      %v3195 = vadd.f32 %v3106, %v3194
      %3196 = vmatmul.bf16.gmra.mxu0 %v592
      %v3197 = vpop.f32.mrf.mxu0
      %v3198 = vadd.f32 %v3109, %v3197
      %v3199 = vpop.f32.mrf.mxu0
      %v3200 = vadd.f32 %v3111, %v3199
      %3201 = vmatmul.bf16.gmra.mxu0 %v596
      %v3202 = vpop.f32.mrf.mxu0
      %v3203 = vadd.f32 %v3114, %v3202
      %v3204 = vpop.f32.mrf.mxu0
      %v3205 = vadd.f32 %v3116, %v3204
      %3206 = vmatmul.bf16.gmra.mxu0 %v600
      %v3207 = vpop.f32.mrf.mxu0
      %v3208 = vadd.f32 %v3119, %v3207
      %v3209 = vpop.f32.mrf.mxu0
      %v3210 = vadd.f32 %v3121, %v3209
      %3211 = vdwg.mxu0
      %v3212 = vmax.f32 %v3133, 0.0
      %v3213 = vmax.f32 %v3135, 0.0
      %v3214 = vmax.f32 %v3138, 0.0
      %v3215 = vmax.f32 %v3140, 0.0
      %v3216 = vmax.f32 %v3143, 0.0
      %v3217 = vmax.f32 %v3145, 0.0
      %v3218 = vmax.f32 %v3148, 0.0
      %v3219 = vmax.f32 %v3150, 0.0
      %v3220 = vmax.f32 %v3153, 0.0
      %v3221 = vmax.f32 %v3155, 0.0
      %v3222 = vmax.f32 %v3158, 0.0
      %v3223 = vmax.f32 %v3160, 0.0
      %v3224 = vmax.f32 %v3163, 0.0
      %v3225 = vmax.f32 %v3165, 0.0
      %v3226 = vmax.f32 %v3168, 0.0
      %v3227 = vmax.f32 %v3170, 0.0
      %v3228 = vmax.f32 %v3173, 0.0
      %v3229 = vmax.f32 %v3175, 0.0
      %v3230 = vmax.f32 %v3178, 0.0
      %v3231 = vmax.f32 %v3180, 0.0
      %v3232 = vmax.f32 %v3183, 0.0
      %v3233 = vmax.f32 %v3185, 0.0
      %v3234 = vmax.f32 %v3188, 0.0
      %v3235 = vmax.f32 %v3190, 0.0
      %v3236 = vmax.f32 %v3193, 0.0
      %v3237 = vmax.f32 %v3195, 0.0
      %v3238 = vmax.f32 %v3198, 0.0
      %v3239 = vmax.f32 %v3200, 0.0
      %v3240 = vmax.f32 %v3203, 0.0
      %v3241 = vmax.f32 %v3205, 0.0
      %v3242 = vmax.f32 %v3208, 0.0
      %v3243 = vmax.f32 %v3210, 0.0
      %v3244 = vmax.f32 %v2567, %v3212
      %v3245 = vmax.f32 %v2568, %v3213
      %v3246 = vmax.f32 %v2569, %v3214
      %v3247 = vmax.f32 %v2570, %v3215
      %v3248 = vmax.f32 %v2571, %v3216
      %v3249 = vmax.f32 %v2572, %v3217
      %v3250 = vmax.f32 %v2573, %v3218
      %v3251 = vmax.f32 %v2574, %v3219
      %v3252 = vmax.f32 %v2575, %v3220
      %v3253 = vmax.f32 %v2576, %v3221
      %v3254 = vmax.f32 %v2577, %v3222
      %v3255 = vmax.f32 %v2578, %v3223
      %v3256 = vmax.f32 %v2579, %v3224
      %v3257 = vmax.f32 %v2580, %v3225
      %v3258 = vmax.f32 %v2581, %v3226
      %v3259 = vmax.f32 %v2582, %v3227
      %v3260 = vmax.f32 %v2583, %v3228
      %v3261 = vmax.f32 %v2584, %v3229
      %v3262 = vmax.f32 %v2585, %v3230
      %v3263 = vmax.f32 %v2586, %v3231
      %v3264 = vmax.f32 %v2587, %v3232
      %v3265 = vmax.f32 %v2588, %v3233
      %v3266 = vmax.f32 %v2589, %v3234
      %v3267 = vmax.f32 %v2590, %v3235
      %v3268 = vmax.f32 %v2591, %v3236
      %v3269 = vmax.f32 %v2592, %v3237
      %v3270 = vmax.f32 %v2593, %v3238
      %v3271 = vmax.f32 %v2594, %v3239
      %v3272 = vmax.f32 %v2595, %v3240
      %v3273 = vmax.f32 %v2596, %v3241
      %v3274 = vmax.f32 %v2597, %v3242
      %v3275 = vmax.f32 %v2598, %v3243
      %v3276 = vpack.c.bf16 %v3244, %v3244
      %v3277 = vpack.c.bf16 %v3245, %v3245
      %v3278 = vpack.c.bf16 %v3246, %v3246
      %v3279 = vpack.c.bf16 %v3247, %v3247
      %v3280 = vpack.c.bf16 %v3248, %v3248
      %v3281 = vpack.c.bf16 %v3249, %v3249
      %v3282 = vpack.c.bf16 %v3250, %v3250
      %v3283 = vpack.c.bf16 %v3251, %v3251
      %v3284 = vpack.c.bf16 %v3252, %v3252
      %v3285 = vpack.c.bf16 %v3253, %v3253
      %v3286 = vpack.c.bf16 %v3254, %v3254
      %v3287 = vpack.c.bf16 %v3255, %v3255
      %v3288 = vpack.c.bf16 %v3256, %v3256
      %v3289 = vpack.c.bf16 %v3257, %v3257
      %v3290 = vpack.c.bf16 %v3258, %v3258
      %v3291 = vpack.c.bf16 %v3259, %v3259
      %v3292 = vpack.c.bf16 %v3260, %v3260
      %v3293 = vpack.c.bf16 %v3261, %v3261
      %v3294 = vpack.c.bf16 %v3262, %v3262
      %v3295 = vpack.c.bf16 %v3263, %v3263
      %v3296 = vpack.c.bf16 %v3264, %v3264
      %v3297 = vpack.c.bf16 %v3265, %v3265
      %v3298 = vpack.c.bf16 %v3266, %v3266
      %v3299 = vpack.c.bf16 %v3267, %v3267
      %v3300 = vpack.c.bf16 %v3268, %v3268
      %v3301 = vpack.c.bf16 %v3269, %v3269
      %v3302 = vpack.c.bf16 %v3270, %v3270
      %v3303 = vpack.c.bf16 %v3271, %v3271
      %v3304 = vpack.c.bf16 %v3272, %v3272
      %v3305 = vpack.c.bf16 %v3273, %v3273
      %v3306 = vpack.c.bf16 %v3274, %v3274
      %v3307 = vpack.c.bf16 %v3275, %v3275
      %vm3308 = vcmask 257024
      %3309 = vst.msk [vmem:[%s211] sm:$0xf] %vm3308, %v3276
      %3310 = vst.msk [vmem:[%s211 + $0x4] sm:$0xf] %vm3308, %v3277
      %3311 = vst.msk [vmem:[%s211 + $0x8] sm:$0xf] %vm3308, %v3278
      %3312 = vst.msk [vmem:[%s211 + $0xc] sm:$0xf] %vm3308, %v3279
      %3313 = vst.msk [vmem:[%s211 + $0x10] sm:$0xf] %vm3308, %v3280
      %3314 = vst.msk [vmem:[%s211 + $0x14] sm:$0xf] %vm3308, %v3281
      %3315 = vst.msk [vmem:[%s211 + $0x18] sm:$0xf] %vm3308, %v3282
      %3316 = vst.msk [vmem:[%s211 + $0x1c] sm:$0xf] %vm3308, %v3283
      %3317 = vst.msk [vmem:[%s211 + $0x20] sm:$0xf] %vm3308, %v3284
      %3318 = vst.msk [vmem:[%s211 + $0x24] sm:$0xf] %vm3308, %v3285
      %3319 = vst.msk [vmem:[%s211 + $0x28] sm:$0xf] %vm3308, %v3286
      %3320 = vst.msk [vmem:[%s211 + $0x2c] sm:$0xf] %vm3308, %v3287
      %3321 = vst.msk [vmem:[%s211 + $0x30] sm:$0xf] %vm3308, %v3288
      %3322 = vst.msk [vmem:[%s211 + $0x34] sm:$0xf] %vm3308, %v3289
      %3323 = vst.msk [vmem:[%s211 + $0x38] sm:$0xf] %vm3308, %v3290
      %3324 = vst.msk [vmem:[%s211 + $0x3c] sm:$0xf] %vm3308, %v3291
      %3325 = vst.msk [vmem:[%s211 + $0x40] sm:$0xf] %vm3308, %v3292
      %3326 = vst.msk [vmem:[%s211 + $0x44] sm:$0xf] %vm3308, %v3293
      %3327 = vst.msk [vmem:[%s211 + $0x48] sm:$0xf] %vm3308, %v3294
      %3328 = vst.msk [vmem:[%s211 + $0x4c] sm:$0xf] %vm3308, %v3295
      %3329 = vst.msk [vmem:[%s211 + $0x50] sm:$0xf] %vm3308, %v3296
      %3330 = vst.msk [vmem:[%s211 + $0x54] sm:$0xf] %vm3308, %v3297
      %3331 = vst.msk [vmem:[%s211 + $0x58] sm:$0xf] %vm3308, %v3298
      %3332 = vst.msk [vmem:[%s211 + $0x5c] sm:$0xf] %vm3308, %v3299
      %3333 = vst.msk [vmem:[%s211 + $0x60] sm:$0xf] %vm3308, %v3300
      %3334 = vst.msk [vmem:[%s211 + $0x64] sm:$0xf] %vm3308, %v3301
      %3335 = vst.msk [vmem:[%s211 + $0x68] sm:$0xf] %vm3308, %v3302
      %3336 = vst.msk [vmem:[%s211 + $0x6c] sm:$0xf] %vm3308, %v3303
      %3337 = vst.msk [vmem:[%s211 + $0x70] sm:$0xf] %vm3308, %v3304
      %3338 = vst.msk [vmem:[%s211 + $0x74] sm:$0xf] %vm3308, %v3305
      %3339 = vst.msk [vmem:[%s211 + $0x78] sm:$0xf] %vm3308, %v3306
      %3340 = vst.msk [vmem:[%s211 + $0x7c] sm:$0xf] %vm3308, %v3307
      %s3341 = smul.u32 32, %s19
      %p3342 = scmp.lt.s32.totalorder %s18, 1
      %s3343 = scalar_select %p3342, %s18, 1
      %p3344 = scmp.lt.s32.totalorder %s3341, 31
      %s3345 = scalar_select %p3344, %s3341, 31
      %s3346 = smul.addr %s3343, 32
      %s3347 = sadd.s32 %s3345, %s3346
      %s3348 = smul.addr %s3347, 4
      %s3349 = scalar_lea.vmem %s3, %s3348
      // Predicated region
      $region33: #{cnn_for_audio_forward.5} parent=31 // pred_check
        %p3350 = pneg %p116
      $region34: #{cnn_for_audio_forward.5} parent=31 // pred_check_branch
        %3352 = sbr.rel (%p3350) target = $region36
      $region35: #{cnn_for_audio_forward.5} parent=31 // pred_region
        %s3353 = smul.u32 32, %s19
      $region36: #{cnn_for_audio_forward.5} parent=31 // pred_fallthru
        _
    $region32: #{cnn_for_audio_forward.5} parent=5 // pred_fallthru
      _
    %p3354 = scmp.le.s32.totalorder 2, %s9
    // Predicated region
    $region37: #{cnn_for_audio_forward.5} parent=5 // pred_check
      %p3355 = pneg %p3354
    $region38: #{cnn_for_audio_forward.5} parent=5 // pred_check_branch
      %3357 = sbr.rel (%p3355) target = $region40
    $region39: #{cnn_for_audio_forward.5} parent=5 // pred_region
      %s3358 = ssub.s32 %s9, 2
      // Predicated region
      $region41: #{cnn_for_audio_forward.5} parent=39 // pred_check
        %p3359 = pneg %p122
      $region42: #{cnn_for_audio_forward.5} parent=39 // pred_check_branch
        %3361 = sbr.rel (%p3359) target = $region44
      $region43: #{cnn_for_audio_forward.5} parent=39 // pred_region
        %s3362 = smul.u32 32, %s21
        %p3363 = scmp.lt.s32.totalorder %s20, 1
        %s3364 = scalar_select %p3363, %s20, 1
        %p3365 = scmp.lt.s32.totalorder %s3362, 31
        %s3366 = scalar_select %p3365, %s3362, 31
        %s3367 = smul.addr %s3364, 32
        %s3368 = sadd.s32 %s3366, %s3367
        %s3369 = smul.addr %s3368, 4
        %s3370 = scalar_lea.vmem %s3, %s3369
      $region44: #{cnn_for_audio_forward.5} parent=39 // pred_fallthru
        _
    $region40: #{cnn_for_audio_forward.5} parent=5 // pred_fallthru
      _
  $region6: #{cnn_for_audio_forward.5} parent=0 // loop_footer
    %s13 = sadd.s32 1, %s9
  $region7: #{cnn_for_audio_forward.5} parent=0 // loop_footer_branch
    %8 = sbr.rel target = $region3
  $region8: #{cnn_for_audio_forward.5} parent=0 // loop_exit
    _

// kernel: cnn_for_audio_forward.6
$region0: #{cnn_for_audio_forward.6}
  #allocation0 [shape = 'u32[]', space=smem, size = 0x4, offset = 0x4, fixed_abs, tag = 'smem constant byte address 0x4 - core index']
  #allocation1 [shape = 'u32[72,128]{1,0:T(1,128)}', space=vmem, size = 0x9000, scoped, tag = 'internal scratch']
  %s0 = inlined_call_operand.vmem [shape: bf16[2,1,16,512], index: 0, kind: input, shape index: {}]
  %s1 = inlined_call_operand.vmem [shape: bf16[4,512,64], index: 1, kind: input, shape index: {}]
  %s2 = inlined_call_operand.vmem [shape: f32[1,64], index: 2, kind: input, shape index: {}]
  %s3 = inlined_call_operand.vmem [shape: bf16[2,16,64], index: 3, kind: output, shape index: {}]
  %s4 = sld [smem:[#allocation0]]
  $region45: #{cnn_for_audio_forward.6} parent=0
    _
  %s6 = ssub.s32 1, %s4
  %s7 = scalar_select 0, %s6, %s4
  loop: start=0, step=1, limit=4
  $region2: #{cnn_for_audio_forward.6} parent=0 // loop_pre_header
    _
  $region3: #{cnn_for_audio_forward.6} parent=0 // loop_header
    %s9 = sphi 0, %s13
    %p10 = scmp.ge.s32.totalorder %s9, 4
    %s16 = sphi 0, %s28
    %s17 = sphi 0, %s24
    %s18 = sphi 0, %s16
    %s19 = sphi 0, %s17
    %s20 = sphi 0, %s18
    %s21 = sphi 0, %s19
    %s33 = sphi 0, %s35
    %s36 = sphi 0, %s33
    %s37 = sphi 0, %s36
    %s53 = sphi 0, %s37
    %s57 = sphi 0, %s57
    %s59 = sphi 0, %s57
    %s60 = sphi 0, %s59
    %s74 = sphi 0, %s60
    %s78 = sphi 0, %s78
    %s80 = sphi 0, %s78
    %s81 = sphi 0, %s80
    %s95 = sphi 0, %s81
    %s103 = sphi 0, %s105
    %s106 = sphi 0, %s103
    %s107 = sphi 0, %s106
    %s123 = sphi 0, %s107
  $region4: #{cnn_for_audio_forward.6} parent=0 // loop_header_branch
    %12 = sbr.rel (%p10) target = $region8
  $region5: #{cnn_for_audio_forward.6} parent=0 // loop_body
    %s14 = ssub.s32 %s9, 1
    %s15 = ssub.s32 %s9, 2
    %s22 = sadd.s32 1, %s17
    %p23 = scmp.ge.s32.totalorder %s22, 1
    %s24 = scalar_select %p23, 0, %s22
    %s25 = sadd.s32 1, %s16
    %s26 = scalar_select %p23, %s25, %s16
    %p27 = scmp.ge.s32.totalorder %s26, 2
    %s28 = scalar_select %p27, 0, %s26
    %s29 = ssub.s32 %s16, %s28
    %s30 = ssub.s32 %s17, %s24
    %s31 = sor.u32 %s29, %s30
    %p32 = scmp.eq.s32.totalorder %s31, 0
    %s34 = sadd.s32 %s33, 1
    %s35 = scalar_select %p32, %s33, %s34
    %p38 = pneg %p32
    %p39 = scmp.eq.s32.totalorder %s9, 1
    %p40 = por %p38, %p39
    %p41 = scmp.ne.s32.totalorder %s33, %s36
    %p42 = scmp.eq.s32.totalorder %s9, 0
    %p43 = por %p41, %p42
    %p44 = scmp.ne.s32.totalorder %s33, %s36
    %p45 = scmp.eq.s32.totalorder %s14, 1
    %p46 = por %p44, %p45
    %p47 = scmp.ne.s32.totalorder %s36, %s37
    %p48 = scmp.eq.s32.totalorder %s14, 0
    %p49 = por %p47, %p48
    %p50 = scmp.ne.s32.totalorder %s36, %s37
    %p51 = scmp.eq.s32.totalorder %s15, 1
    %p52 = por %p50, %p51
    %p54 = scmp.ne.s32.totalorder %s37, %s53
    %p55 = scmp.eq.s32.totalorder %s15, 0
    %p56 = por %p54, %p55
    %s58 = sadd.s32 %s57, 1
    %p61 = scmp.eq.s32.totalorder %s9, 1
    %p62 = scmp.ne.s32.totalorder %s57, %s59
    %p63 = scmp.eq.s32.totalorder %s9, 0
    %p64 = por %p62, %p63
    %p65 = scmp.ne.s32.totalorder %s57, %s59
    %p66 = scmp.eq.s32.totalorder %s14, 1
    %p67 = por %p65, %p66
    %p68 = scmp.ne.s32.totalorder %s59, %s60
    %p69 = scmp.eq.s32.totalorder %s14, 0
    %p70 = por %p68, %p69
    %p71 = scmp.ne.s32.totalorder %s59, %s60
    %p72 = scmp.eq.s32.totalorder %s15, 1
    %p73 = por %p71, %p72
    %p75 = scmp.ne.s32.totalorder %s60, %s74
    %p76 = scmp.eq.s32.totalorder %s15, 0
    %p77 = por %p75, %p76
    %s79 = sadd.s32 %s78, 1
    %p82 = scmp.eq.s32.totalorder %s9, 1
    %p83 = scmp.ne.s32.totalorder %s78, %s80
    %p84 = scmp.eq.s32.totalorder %s9, 0
    %p85 = por %p83, %p84
    %p86 = scmp.ne.s32.totalorder %s78, %s80
    %p87 = scmp.eq.s32.totalorder %s14, 1
    %p88 = por %p86, %p87
    %p89 = scmp.ne.s32.totalorder %s80, %s81
    %p90 = scmp.eq.s32.totalorder %s14, 0
    %p91 = por %p89, %p90
    %p92 = scmp.ne.s32.totalorder %s80, %s81
    %p93 = scmp.eq.s32.totalorder %s15, 1
    %p94 = por %p92, %p93
    %p96 = scmp.ne.s32.totalorder %s81, %s95
    %p97 = scmp.eq.s32.totalorder %s15, 0
    %p98 = por %p96, %p97
    %s99 = ssub.s32 %s16, %s28
    %s100 = ssub.s32 %s17, %s24
    %s101 = sor.u32 %s99, %s100
    %p102 = scmp.eq.s32.totalorder %s101, 0
    %s104 = sadd.s32 %s103, 1
    %s105 = scalar_select %p102, %s103, %s104
    %p108 = pneg %p102
    %p109 = scmp.eq.s32.totalorder %s9, 1
    %p110 = por %p108, %p109
    %p111 = scmp.ne.s32.totalorder %s103, %s106
    %p112 = scmp.eq.s32.totalorder %s9, 0
    %p113 = por %p111, %p112
    %p114 = scmp.ne.s32.totalorder %s103, %s106
    %p115 = scmp.eq.s32.totalorder %s14, 1
    %p116 = por %p114, %p115
    %p117 = scmp.ne.s32.totalorder %s106, %s107
    %p118 = scmp.eq.s32.totalorder %s14, 0
    %p119 = por %p117, %p118
    %p120 = scmp.ne.s32.totalorder %s106, %s107
    %p121 = scmp.eq.s32.totalorder %s15, 1
    %p122 = por %p120, %p121
    %p124 = scmp.ne.s32.totalorder %s107, %s123
    %p125 = scmp.eq.s32.totalorder %s15, 0
    %p126 = por %p124, %p125
    %p127 = scmp.le.s32.totalorder 1, %s9
    %p128 = scmp.lt.s32.totalorder %s9, 3
    %p129 = pnand %p127, %p128
    %p130 = pneg %p129
    // Predicated region
    $region9: #{cnn_for_audio_forward.6} parent=5 // pred_check
      _
    $region10: #{cnn_for_audio_forward.6} parent=5 // pred_check_branch
      %132 = sbr.rel (%p129) target = $region12
    $region11: #{cnn_for_audio_forward.6} parent=5 // pred_region
      %s133 = ssub.s32 %s9, 1
      // Predicated region
      $region13: #{cnn_for_audio_forward.6} parent=11 // pred_check
        %p134 = pneg %p70
      $region14: #{cnn_for_audio_forward.6} parent=11 // pred_check_branch
        %136 = sbr.rel (%p134) target = $region16
      $region15: #{cnn_for_audio_forward.6} parent=11 // pred_region
        _
      $region16: #{cnn_for_audio_forward.6} parent=11 // pred_fallthru
        _
      // Predicated region
      $region17: #{cnn_for_audio_forward.6} parent=11 // pred_check
        %p137 = pneg %p91
      $region18: #{cnn_for_audio_forward.6} parent=11 // pred_check_branch
        %139 = sbr.rel (%p137) target = $region20
      $region19: #{cnn_for_audio_forward.6} parent=11 // pred_region
        _
      $region20: #{cnn_for_audio_forward.6} parent=11 // pred_fallthru
        _
    $region12: #{cnn_for_audio_forward.6} parent=5 // pred_fallthru
      _
    %p140 = scmp.lt.s32.totalorder %s9, 2
    // Predicated region
    $region21: #{cnn_for_audio_forward.6} parent=5 // pred_check
      %p141 = pneg %p140
    $region22: #{cnn_for_audio_forward.6} parent=5 // pred_check_branch
      %143 = sbr.rel (%p141) target = $region24
    $region23: #{cnn_for_audio_forward.6} parent=5 // pred_region
      // Predicated region
      $region25: #{cnn_for_audio_forward.6} parent=23 // pred_check
        %p144 = pneg %p43
      $region26: #{cnn_for_audio_forward.6} parent=23 // pred_check_branch
        %146 = sbr.rel (%p144) target = $region28
      $region27: #{cnn_for_audio_forward.6} parent=23 // pred_region
        %s147 = smul.u32 2, %s17
        %p148 = scmp.lt.s32.totalorder %s16, 1
        %s149 = scalar_select %p148, %s16, 1
        %p150 = scmp.lt.s32.totalorder %s147, 1
        %s151 = scalar_select %p150, %s147, 1
        %s152 = smul.addr %s151, 4
        %s153 = smul.addr %s149, 8
        %s154 = sadd.s32 %s152, %s153
        %s155 = smul.addr %s154, 4
        %s156 = scalar_lea.vmem %s0, %s155
        %s157 = smul.u32 2, %s17
      $region28: #{cnn_for_audio_forward.6} parent=23 // pred_fallthru
        _
    $region24: #{cnn_for_audio_forward.6} parent=5 // pred_fallthru
      _
    %p158 = scmp.le.s32.totalorder 1, %s9
    %p159 = scmp.lt.s32.totalorder %s9, 3
    %p160 = pnand %p158, %p159
    %p161 = pneg %p160
    // Predicated region
    $region29: #{cnn_for_audio_forward.6} parent=5 // pred_check
      _
    $region30: #{cnn_for_audio_forward.6} parent=5 // pred_check_branch
      %163 = sbr.rel (%p160) target = $region32
    $region31: #{cnn_for_audio_forward.6} parent=5 // pred_region
      %s164 = ssub.s32 %s9, 1
      %s165 = smul.u32 2, %s19
      %p166 = scmp.lt.s32.totalorder %s18, 1
      %s167 = scalar_select %p166, %s18, 1
      %p168 = scmp.lt.s32.totalorder %s165, 1
      %s169 = scalar_select %p168, %s165, 1
      %s170 = smul.addr %s169, 4
      %s171 = smul.addr %s167, 8
      %s172 = sadd.s32 %s170, %s171
      %s173 = smul.addr %s172, 4
      %s174 = scalar_lea.vmem %s0, %s173
      %p175 = pneg %p49
      %p176 = pneg %p46
      %p177 = pneg %p70
      %p178 = pneg %p67
      %p179 = pneg %p91
      %p180 = pneg %p88
      %p181 = pneg %p119
      %p182 = pneg %p116
      %s183 = smul.u32 2, %s19
      %p184 = scmp.lt.s32.totalorder %s18, 1
      %s185 = scalar_select %p184, %s18, 1
      %p186 = scmp.lt.s32.totalorder %s183, 1
      %s187 = scalar_select %p186, %s183, 1
      %s188 = smul.addr %s185, 2
      %s189 = sadd.s32 %s187, %s188
      %s190 = smul.addr %s189, 4
      %s191 = scalar_lea.vmem %s3, %s190
      %s192 = smul.u32 2, %s19
      %p193 = scmp.lt.s32.totalorder %s18, 1
      %s194 = scalar_select %p193, %s18, 1
      %p195 = scmp.lt.s32.totalorder %s192, 1
      %s196 = scalar_select %p195, %s192, 1
      %s197 = smul.addr %s196, 4
      %s198 = smul.addr %s194, 8
      %s199 = sadd.s32 %s197, %s198
      %s200 = smul.addr %s199, 4
      %s201 = scalar_lea.vmem %s0, %s200
      %s202 = smul.u32 2, %s19
      %s203 = smul.u32 2, %s19
      %p204 = scmp.lt.s32.totalorder %s18, 1
      %s205 = scalar_select %p204, %s18, 1
      %p206 = scmp.lt.s32.totalorder %s203, 1
      %s207 = scalar_select %p206, %s203, 1
      %s208 = smul.addr %s205, 2
      %s209 = sadd.s32 %s207, %s208
      %s210 = smul.addr %s209, 4
      %s211 = scalar_lea.vmem %s3, %s210
      %s212 = smul.u32 2, %s19
      %v213 = vld [vmem:[%s2] sm:$0x1]
      %v214 = vld [vmem:[%s201] sm:$0xff]
      %v215 = vld [vmem:[%s201 + $0x8] sm:$0xff]
      %v216 = vld [vmem:[%s201 + $0x10] sm:$0xff]
      %v217 = vld [vmem:[%s201 + $0x18] sm:$0xff]
      %v218 = vld [vmem:[%s1] sm:$0xf]
      %v219 = vld [vmem:[%s1 + $0x4] sm:$0xf]
      %v220 = vld [vmem:[%s1 + $0x8] sm:$0xf]
      %v221 = vld [vmem:[%s1 + $0xc] sm:$0xf]
      %v222 = vld [vmem:[%s1 + $0x10] sm:$0xf]
      %v223 = vld [vmem:[%s1 + $0x14] sm:$0xf]
      %v224 = vld [vmem:[%s1 + $0x18] sm:$0xf]
      %v225 = vld [vmem:[%s1 + $0x1c] sm:$0xf]
      %v226 = vld [vmem:[%s1 + $0x20] sm:$0xf]
      %v227 = vld [vmem:[%s1 + $0x24] sm:$0xf]
      %v228 = vld [vmem:[%s1 + $0x28] sm:$0xf]
      %v229 = vld [vmem:[%s1 + $0x2c] sm:$0xf]
      %v230 = vld [vmem:[%s1 + $0x30] sm:$0xf]
      %v231 = vld [vmem:[%s1 + $0x34] sm:$0xf]
      %v232 = vld [vmem:[%s1 + $0x38] sm:$0xf]
      %v233 = vld [vmem:[%s1 + $0x3c] sm:$0xf]
      %v234 = vld [vmem:[%s1 + $0x40] sm:$0xf]
      %v235 = vld [vmem:[%s1 + $0x44] sm:$0xf]
      %v236 = vld [vmem:[%s1 + $0x48] sm:$0xf]
      %v237 = vld [vmem:[%s1 + $0x4c] sm:$0xf]
      %v238 = vld [vmem:[%s1 + $0x50] sm:$0xf]
      %v239 = vld [vmem:[%s1 + $0x54] sm:$0xf]
      %v240 = vld [vmem:[%s1 + $0x58] sm:$0xf]
      %v241 = vld [vmem:[%s1 + $0x5c] sm:$0xf]
      %v242 = vld [vmem:[%s1 + $0x60] sm:$0xf]
      %v243 = vld [vmem:[%s1 + $0x64] sm:$0xf]
      %v244 = vld [vmem:[%s1 + $0x68] sm:$0xf]
      %v245 = vld [vmem:[%s1 + $0x6c] sm:$0xf]
      %v246 = vld [vmem:[%s1 + $0x70] sm:$0xf]
      %v247 = vld [vmem:[%s1 + $0x74] sm:$0xf]
      %v248 = vld [vmem:[%s1 + $0x78] sm:$0xf]
      %v249 = vld [vmem:[%s1 + $0x7c] sm:$0xf]
      %v250 = vld [vmem:[%s1 + $0x80] sm:$0xf]
      %v251 = vld [vmem:[%s1 + $0x84] sm:$0xf]
      %v252 = vld [vmem:[%s1 + $0x88] sm:$0xf]
      %v253 = vld [vmem:[%s1 + $0x8c] sm:$0xf]
      %v254 = vld [vmem:[%s1 + $0x90] sm:$0xf]
      %v255 = vld [vmem:[%s1 + $0x94] sm:$0xf]
      %v256 = vld [vmem:[%s1 + $0x98] sm:$0xf]
      %v257 = vld [vmem:[%s1 + $0x9c] sm:$0xf]
      %v258 = vld [vmem:[%s1 + $0xa0] sm:$0xf]
      %v259 = vld [vmem:[%s1 + $0xa4] sm:$0xf]
      %v260 = vld [vmem:[%s1 + $0xa8] sm:$0xf]
      %v261 = vld [vmem:[%s1 + $0xac] sm:$0xf]
      %v262 = vld [vmem:[%s1 + $0xb0] sm:$0xf]
      %v263 = vld [vmem:[%s1 + $0xb4] sm:$0xf]
      %v264 = vld [vmem:[%s1 + $0xb8] sm:$0xf]
      %v265 = vld [vmem:[%s1 + $0xbc] sm:$0xf]
      %v266 = vld [vmem:[%s1 + $0xc0] sm:$0xf]
      %v267 = vld [vmem:[%s1 + $0xc4] sm:$0xf]
      %v268 = vld [vmem:[%s1 + $0xc8] sm:$0xf]
      %v269 = vld [vmem:[%s1 + $0xcc] sm:$0xf]
      %v270 = vld [vmem:[%s1 + $0xd0] sm:$0xf]
      %v271 = vld [vmem:[%s1 + $0xd4] sm:$0xf]
      %v272 = vld [vmem:[%s1 + $0xd8] sm:$0xf]
      %v273 = vld [vmem:[%s1 + $0xdc] sm:$0xf]
      %v274 = vld [vmem:[%s1 + $0xe0] sm:$0xf]
      %v275 = vld [vmem:[%s1 + $0xe4] sm:$0xf]
      %v276 = vld [vmem:[%s1 + $0xe8] sm:$0xf]
      %v277 = vld [vmem:[%s1 + $0xec] sm:$0xf]
      %v278 = vld [vmem:[%s1 + $0xf0] sm:$0xf]
      %v279 = vld [vmem:[%s1 + $0xf4] sm:$0xf]
      %v280 = vld [vmem:[%s1 + $0xf8] sm:$0xf]
      %v281 = vld [vmem:[%s1 + $0xfc] sm:$0xf]
      %v283 = vperm.slane %v213, 0
      %v289 = vunpack.c.l.b16 %v214
      %v290 = vunpack.c.h.b16 %v214
      %v291 = vunpack.c.l.b16 %v215
      %v292 = vunpack.c.h.b16 %v215
      %v293 = vunpack.c.l.b16 %v216
      %v294 = vunpack.c.h.b16 %v216
      %v295 = vunpack.c.l.b16 %v217
      %v296 = vunpack.c.h.b16 %v217
      %v297 = vpack.c.b16 %v293, %v289
      %v298 = vpack.c.b16 %v294, %v290
      %v299 = vpack.c.b16 %v295, %v291
      %v300 = vpack.c.b16 %v296, %v292
      %v369 = vunpack.c.l.b16 %v218
      %v370 = vunpack.c.l.b16 %v219
      %v371 = vunpack.c.l.b16 %v220
      %v372 = vunpack.c.l.b16 %v221
      %v373 = vunpack.c.l.b16 %v222
      %v374 = vunpack.c.l.b16 %v223
      %v375 = vunpack.c.l.b16 %v224
      %v376 = vunpack.c.l.b16 %v225
      %v377 = vunpack.c.l.b16 %v226
      %v378 = vunpack.c.l.b16 %v227
      %v379 = vunpack.c.l.b16 %v228
      %v380 = vunpack.c.l.b16 %v229
      %v381 = vunpack.c.l.b16 %v230
      %v382 = vunpack.c.l.b16 %v231
      %v383 = vunpack.c.l.b16 %v232
      %v384 = vunpack.c.l.b16 %v233
      %v385 = vunpack.c.l.b16 %v234
      %v386 = vunpack.c.l.b16 %v235
      %v387 = vunpack.c.l.b16 %v236
      %v388 = vunpack.c.l.b16 %v237
      %v389 = vunpack.c.l.b16 %v238
      %v390 = vunpack.c.l.b16 %v239
      %v391 = vunpack.c.l.b16 %v240
      %v392 = vunpack.c.l.b16 %v241
      %v393 = vunpack.c.l.b16 %v242
      %v394 = vunpack.c.l.b16 %v243
      %v395 = vunpack.c.l.b16 %v244
      %v396 = vunpack.c.l.b16 %v245
      %v397 = vunpack.c.l.b16 %v246
      %v398 = vunpack.c.l.b16 %v247
      %v399 = vunpack.c.l.b16 %v248
      %v400 = vunpack.c.l.b16 %v249
      %v401 = vunpack.c.l.b16 %v250
      %v402 = vunpack.c.l.b16 %v251
      %v403 = vunpack.c.l.b16 %v252
      %v404 = vunpack.c.l.b16 %v253
      %v405 = vunpack.c.l.b16 %v254
      %v406 = vunpack.c.l.b16 %v255
      %v407 = vunpack.c.l.b16 %v256
      %v408 = vunpack.c.l.b16 %v257
      %v409 = vunpack.c.l.b16 %v258
      %v410 = vunpack.c.l.b16 %v259
      %v411 = vunpack.c.l.b16 %v260
      %v412 = vunpack.c.l.b16 %v261
      %v413 = vunpack.c.l.b16 %v262
      %v414 = vunpack.c.l.b16 %v263
      %v415 = vunpack.c.l.b16 %v264
      %v416 = vunpack.c.l.b16 %v265
      %v417 = vunpack.c.l.b16 %v266
      %v418 = vunpack.c.l.b16 %v267
      %v419 = vunpack.c.l.b16 %v268
      %v420 = vunpack.c.l.b16 %v269
      %v421 = vunpack.c.l.b16 %v270
      %v422 = vunpack.c.l.b16 %v271
      %v423 = vunpack.c.l.b16 %v272
      %v424 = vunpack.c.l.b16 %v273
      %v425 = vunpack.c.l.b16 %v274
      %v426 = vunpack.c.l.b16 %v275
      %v427 = vunpack.c.l.b16 %v276
      %v428 = vunpack.c.l.b16 %v277
      %v429 = vunpack.c.l.b16 %v278
      %v430 = vunpack.c.l.b16 %v279
      %v431 = vunpack.c.l.b16 %v280
      %v432 = vunpack.c.l.b16 %v281
      %v433 = vpack.c.b16 %v370, %v369
      %v434 = vpack.c.b16 %v372, %v371
      %v435 = vpack.c.b16 %v374, %v373
      %v436 = vpack.c.b16 %v376, %v375
      %v437 = vpack.c.b16 %v378, %v377
      %v438 = vpack.c.b16 %v380, %v379
      %v439 = vpack.c.b16 %v382, %v381
      %v440 = vpack.c.b16 %v384, %v383
      %v441 = vpack.c.b16 %v386, %v385
      %v442 = vpack.c.b16 %v388, %v387
      %v443 = vpack.c.b16 %v390, %v389
      %v444 = vpack.c.b16 %v392, %v391
      %v445 = vpack.c.b16 %v394, %v393
      %v446 = vpack.c.b16 %v396, %v395
      %v447 = vpack.c.b16 %v398, %v397
      %v448 = vpack.c.b16 %v400, %v399
      %v449 = vpack.c.b16 %v402, %v401
      %v450 = vpack.c.b16 %v404, %v403
      %v451 = vpack.c.b16 %v406, %v405
      %v452 = vpack.c.b16 %v408, %v407
      %v453 = vpack.c.b16 %v410, %v409
      %v454 = vpack.c.b16 %v412, %v411
      %v455 = vpack.c.b16 %v414, %v413
      %v456 = vpack.c.b16 %v416, %v415
      %v457 = vpack.c.b16 %v418, %v417
      %v458 = vpack.c.b16 %v420, %v419
      %v459 = vpack.c.b16 %v422, %v421
      %v460 = vpack.c.b16 %v424, %v423
      %v461 = vpack.c.b16 %v426, %v425
      %v462 = vpack.c.b16 %v428, %v427
      %v463 = vpack.c.b16 %v430, %v429
      %v464 = vpack.c.b16 %v432, %v431
      %497 = vmatpush.bf16.msra.mxu0 %v440
      %498 = vmatpush.bf16.msra.mxu0 %v439
      %499 = vmatpush.bf16.msra.mxu0 %v438
      %500 = vmatpush.bf16.msra.mxu0 %v437
      %501 = vmatpush.bf16.msra.mxu0 %v436
      %502 = vmatpush.bf16.msra.mxu0 %v435
      %503 = vmatpush.bf16.msra.mxu0 %v434
      %504 = vmatpush.bf16.msra.mxu0 %v433
      %505 = vmatmul.bf16.gmra.mxu0 %v297
      %v506 = vpop.f32.mrf.mxu0
      %v507 = vadd.f32 %v283, %v506
      %v508 = vpop.f32.mrf.mxu0
      %v509 = vadd.f32 %v283, %v508
      %510 = vdwg.mxu0
      %511 = vmatpush.bf16.msra.mxu0 %v448
      %512 = vmatpush.bf16.msra.mxu0 %v447
      %513 = vmatpush.bf16.msra.mxu0 %v446
      %514 = vmatpush.bf16.msra.mxu0 %v445
      %515 = vmatpush.bf16.msra.mxu0 %v444
      %516 = vmatpush.bf16.msra.mxu0 %v443
      %517 = vmatpush.bf16.msra.mxu0 %v442
      %518 = vmatpush.bf16.msra.mxu0 %v441
      %519 = vmatmul.bf16.gmra.mxu0 %v298
      %v520 = vpop.f32.mrf.mxu0
      %v521 = vadd.f32 %v507, %v520
      %v522 = vpop.f32.mrf.mxu0
      %v523 = vadd.f32 %v509, %v522
      %524 = vdwg.mxu0
      %525 = vmatpush.bf16.msra.mxu0 %v456
      %526 = vmatpush.bf16.msra.mxu0 %v455
      %527 = vmatpush.bf16.msra.mxu0 %v454
      %528 = vmatpush.bf16.msra.mxu0 %v453
      %529 = vmatpush.bf16.msra.mxu0 %v452
      %530 = vmatpush.bf16.msra.mxu0 %v451
      %531 = vmatpush.bf16.msra.mxu0 %v450
      %532 = vmatpush.bf16.msra.mxu0 %v449
      %533 = vmatmul.bf16.gmra.mxu0 %v299
      %v534 = vpop.f32.mrf.mxu0
      %v535 = vadd.f32 %v521, %v534
      %v536 = vpop.f32.mrf.mxu0
      %v537 = vadd.f32 %v523, %v536
      %538 = vdwg.mxu0
      %539 = vmatpush.bf16.msra.mxu0 %v464
      %540 = vmatpush.bf16.msra.mxu0 %v463
      %541 = vmatpush.bf16.msra.mxu0 %v462
      %542 = vmatpush.bf16.msra.mxu0 %v461
      %543 = vmatpush.bf16.msra.mxu0 %v460
      %544 = vmatpush.bf16.msra.mxu0 %v459
      %545 = vmatpush.bf16.msra.mxu0 %v458
      %546 = vmatpush.bf16.msra.mxu0 %v457
      %547 = vmatmul.bf16.gmra.mxu0 %v300
      %v548 = vpop.f32.mrf.mxu0
      %v549 = vadd.f32 %v535, %v548
      %v550 = vpop.f32.mrf.mxu0
      %v551 = vadd.f32 %v537, %v550
      %552 = vdwg.mxu0
      %v553 = vmax.f32 %v549, 0.0
      %v554 = vmax.f32 %v551, 0.0
      %s555 = scalar_lea.vmem %s1, 256
      %v556 = vld [vmem:[%s555] sm:$0xf]
      %v557 = vld [vmem:[%s555 + $0x4] sm:$0xf]
      %v558 = vld [vmem:[%s555 + $0x8] sm:$0xf]
      %v559 = vld [vmem:[%s555 + $0xc] sm:$0xf]
      %v560 = vld [vmem:[%s555 + $0x10] sm:$0xf]
      %v561 = vld [vmem:[%s555 + $0x14] sm:$0xf]
      %v562 = vld [vmem:[%s555 + $0x18] sm:$0xf]
      %v563 = vld [vmem:[%s555 + $0x1c] sm:$0xf]
      %v564 = vld [vmem:[%s555 + $0x20] sm:$0xf]
      %v565 = vld [vmem:[%s555 + $0x24] sm:$0xf]
      %v566 = vld [vmem:[%s555 + $0x28] sm:$0xf]
      %v567 = vld [vmem:[%s555 + $0x2c] sm:$0xf]
      %v568 = vld [vmem:[%s555 + $0x30] sm:$0xf]
      %v569 = vld [vmem:[%s555 + $0x34] sm:$0xf]
      %v570 = vld [vmem:[%s555 + $0x38] sm:$0xf]
      %v571 = vld [vmem:[%s555 + $0x3c] sm:$0xf]
      %v572 = vld [vmem:[%s555 + $0x40] sm:$0xf]
      %v573 = vld [vmem:[%s555 + $0x44] sm:$0xf]
      %v574 = vld [vmem:[%s555 + $0x48] sm:$0xf]
      %v575 = vld [vmem:[%s555 + $0x4c] sm:$0xf]
      %v576 = vld [vmem:[%s555 + $0x50] sm:$0xf]
      %v577 = vld [vmem:[%s555 + $0x54] sm:$0xf]
      %v578 = vld [vmem:[%s555 + $0x58] sm:$0xf]
      %v579 = vld [vmem:[%s555 + $0x5c] sm:$0xf]
      %v580 = vld [vmem:[%s555 + $0x60] sm:$0xf]
      %v581 = vld [vmem:[%s555 + $0x64] sm:$0xf]
      %v582 = vld [vmem:[%s555 + $0x68] sm:$0xf]
      %v583 = vld [vmem:[%s555 + $0x6c] sm:$0xf]
      %v584 = vld [vmem:[%s555 + $0x70] sm:$0xf]
      %v585 = vld [vmem:[%s555 + $0x74] sm:$0xf]
      %v586 = vld [vmem:[%s555 + $0x78] sm:$0xf]
      %v587 = vld [vmem:[%s555 + $0x7c] sm:$0xf]
      %v588 = vld [vmem:[%s555 + $0x80] sm:$0xf]
      %v589 = vld [vmem:[%s555 + $0x84] sm:$0xf]
      %v590 = vld [vmem:[%s555 + $0x88] sm:$0xf]
      %v591 = vld [vmem:[%s555 + $0x8c] sm:$0xf]
      %v592 = vld [vmem:[%s555 + $0x90] sm:$0xf]
      %v593 = vld [vmem:[%s555 + $0x94] sm:$0xf]
      %v594 = vld [vmem:[%s555 + $0x98] sm:$0xf]
      %v595 = vld [vmem:[%s555 + $0x9c] sm:$0xf]
      %v596 = vld [vmem:[%s555 + $0xa0] sm:$0xf]
      %v597 = vld [vmem:[%s555 + $0xa4] sm:$0xf]
      %v598 = vld [vmem:[%s555 + $0xa8] sm:$0xf]
      %v599 = vld [vmem:[%s555 + $0xac] sm:$0xf]
      %v600 = vld [vmem:[%s555 + $0xb0] sm:$0xf]
      %v601 = vld [vmem:[%s555 + $0xb4] sm:$0xf]
      %v602 = vld [vmem:[%s555 + $0xb8] sm:$0xf]
      %v603 = vld [vmem:[%s555 + $0xbc] sm:$0xf]
      %v604 = vld [vmem:[%s555 + $0xc0] sm:$0xf]
      %v605 = vld [vmem:[%s555 + $0xc4] sm:$0xf]
      %v606 = vld [vmem:[%s555 + $0xc8] sm:$0xf]
      %v607 = vld [vmem:[%s555 + $0xcc] sm:$0xf]
      %v608 = vld [vmem:[%s555 + $0xd0] sm:$0xf]
      %v609 = vld [vmem:[%s555 + $0xd4] sm:$0xf]
      %v610 = vld [vmem:[%s555 + $0xd8] sm:$0xf]
      %v611 = vld [vmem:[%s555 + $0xdc] sm:$0xf]
      %v612 = vld [vmem:[%s555 + $0xe0] sm:$0xf]
      %v613 = vld [vmem:[%s555 + $0xe4] sm:$0xf]
      %v614 = vld [vmem:[%s555 + $0xe8] sm:$0xf]
      %v615 = vld [vmem:[%s555 + $0xec] sm:$0xf]
      %v616 = vld [vmem:[%s555 + $0xf0] sm:$0xf]
      %v617 = vld [vmem:[%s555 + $0xf4] sm:$0xf]
      %v618 = vld [vmem:[%s555 + $0xf8] sm:$0xf]
      %v619 = vld [vmem:[%s555 + $0xfc] sm:$0xf]
      %v684 = vunpack.c.l.b16 %v556
      %v685 = vunpack.c.l.b16 %v557
      %v686 = vunpack.c.l.b16 %v558
      %v687 = vunpack.c.l.b16 %v559
      %v688 = vunpack.c.l.b16 %v560
      %v689 = vunpack.c.l.b16 %v561
      %v690 = vunpack.c.l.b16 %v562
      %v691 = vunpack.c.l.b16 %v563
      %v692 = vunpack.c.l.b16 %v564
      %v693 = vunpack.c.l.b16 %v565
      %v694 = vunpack.c.l.b16 %v566
      %v695 = vunpack.c.l.b16 %v567
      %v696 = vunpack.c.l.b16 %v568
      %v697 = vunpack.c.l.b16 %v569
      %v698 = vunpack.c.l.b16 %v570
      %v699 = vunpack.c.l.b16 %v571
      %v700 = vunpack.c.l.b16 %v572
      %v701 = vunpack.c.l.b16 %v573
      %v702 = vunpack.c.l.b16 %v574
      %v703 = vunpack.c.l.b16 %v575
      %v704 = vunpack.c.l.b16 %v576
      %v705 = vunpack.c.l.b16 %v577
      %v706 = vunpack.c.l.b16 %v578
      %v707 = vunpack.c.l.b16 %v579
      %v708 = vunpack.c.l.b16 %v580
      %v709 = vunpack.c.l.b16 %v581
      %v710 = vunpack.c.l.b16 %v582
      %v711 = vunpack.c.l.b16 %v583
      %v712 = vunpack.c.l.b16 %v584
      %v713 = vunpack.c.l.b16 %v585
      %v714 = vunpack.c.l.b16 %v586
      %v715 = vunpack.c.l.b16 %v587
      %v716 = vunpack.c.l.b16 %v588
      %v717 = vunpack.c.l.b16 %v589
      %v718 = vunpack.c.l.b16 %v590
      %v719 = vunpack.c.l.b16 %v591
      %v720 = vunpack.c.l.b16 %v592
      %v721 = vunpack.c.l.b16 %v593
      %v722 = vunpack.c.l.b16 %v594
      %v723 = vunpack.c.l.b16 %v595
      %v724 = vunpack.c.l.b16 %v596
      %v725 = vunpack.c.l.b16 %v597
      %v726 = vunpack.c.l.b16 %v598
      %v727 = vunpack.c.l.b16 %v599
      %v728 = vunpack.c.l.b16 %v600
      %v729 = vunpack.c.l.b16 %v601
      %v730 = vunpack.c.l.b16 %v602
      %v731 = vunpack.c.l.b16 %v603
      %v732 = vunpack.c.l.b16 %v604
      %v733 = vunpack.c.l.b16 %v605
      %v734 = vunpack.c.l.b16 %v606
      %v735 = vunpack.c.l.b16 %v607
      %v736 = vunpack.c.l.b16 %v608
      %v737 = vunpack.c.l.b16 %v609
      %v738 = vunpack.c.l.b16 %v610
      %v739 = vunpack.c.l.b16 %v611
      %v740 = vunpack.c.l.b16 %v612
      %v741 = vunpack.c.l.b16 %v613
      %v742 = vunpack.c.l.b16 %v614
      %v743 = vunpack.c.l.b16 %v615
      %v744 = vunpack.c.l.b16 %v616
      %v745 = vunpack.c.l.b16 %v617
      %v746 = vunpack.c.l.b16 %v618
      %v747 = vunpack.c.l.b16 %v619
      %v748 = vpack.c.b16 %v685, %v684
      %v749 = vpack.c.b16 %v687, %v686
      %v750 = vpack.c.b16 %v689, %v688
      %v751 = vpack.c.b16 %v691, %v690
      %v752 = vpack.c.b16 %v693, %v692
      %v753 = vpack.c.b16 %v695, %v694
      %v754 = vpack.c.b16 %v697, %v696
      %v755 = vpack.c.b16 %v699, %v698
      %v756 = vpack.c.b16 %v701, %v700
      %v757 = vpack.c.b16 %v703, %v702
      %v758 = vpack.c.b16 %v705, %v704
      %v759 = vpack.c.b16 %v707, %v706
      %v760 = vpack.c.b16 %v709, %v708
      %v761 = vpack.c.b16 %v711, %v710
      %v762 = vpack.c.b16 %v713, %v712
      %v763 = vpack.c.b16 %v715, %v714
      %v764 = vpack.c.b16 %v717, %v716
      %v765 = vpack.c.b16 %v719, %v718
      %v766 = vpack.c.b16 %v721, %v720
      %v767 = vpack.c.b16 %v723, %v722
      %v768 = vpack.c.b16 %v725, %v724
      %v769 = vpack.c.b16 %v727, %v726
      %v770 = vpack.c.b16 %v729, %v728
      %v771 = vpack.c.b16 %v731, %v730
      %v772 = vpack.c.b16 %v733, %v732
      %v773 = vpack.c.b16 %v735, %v734
      %v774 = vpack.c.b16 %v737, %v736
      %v775 = vpack.c.b16 %v739, %v738
      %v776 = vpack.c.b16 %v741, %v740
      %v777 = vpack.c.b16 %v743, %v742
      %v778 = vpack.c.b16 %v745, %v744
      %v779 = vpack.c.b16 %v747, %v746
      %812 = vmatpush.bf16.msra.mxu0 %v755
      %813 = vmatpush.bf16.msra.mxu0 %v754
      %814 = vmatpush.bf16.msra.mxu0 %v753
      %815 = vmatpush.bf16.msra.mxu0 %v752
      %816 = vmatpush.bf16.msra.mxu0 %v751
      %817 = vmatpush.bf16.msra.mxu0 %v750
      %818 = vmatpush.bf16.msra.mxu0 %v749
      %819 = vmatpush.bf16.msra.mxu0 %v748
      %820 = vmatmul.bf16.gmra.mxu0 %v297
      %v821 = vpop.f32.mrf.mxu0
      %v822 = vadd.f32 %v283, %v821
      %v823 = vpop.f32.mrf.mxu0
      %v824 = vadd.f32 %v283, %v823
      %825 = vdwg.mxu0
      %826 = vmatpush.bf16.msra.mxu0 %v763
      %827 = vmatpush.bf16.msra.mxu0 %v762
      %828 = vmatpush.bf16.msra.mxu0 %v761
      %829 = vmatpush.bf16.msra.mxu0 %v760
      %830 = vmatpush.bf16.msra.mxu0 %v759
      %831 = vmatpush.bf16.msra.mxu0 %v758
      %832 = vmatpush.bf16.msra.mxu0 %v757
      %833 = vmatpush.bf16.msra.mxu0 %v756
      %834 = vmatmul.bf16.gmra.mxu0 %v298
      %v835 = vpop.f32.mrf.mxu0
      %v836 = vadd.f32 %v822, %v835
      %v837 = vpop.f32.mrf.mxu0
      %v838 = vadd.f32 %v824, %v837
      %839 = vdwg.mxu0
      %840 = vmatpush.bf16.msra.mxu0 %v771
      %841 = vmatpush.bf16.msra.mxu0 %v770
      %842 = vmatpush.bf16.msra.mxu0 %v769
      %843 = vmatpush.bf16.msra.mxu0 %v768
      %844 = vmatpush.bf16.msra.mxu0 %v767
      %845 = vmatpush.bf16.msra.mxu0 %v766
      %846 = vmatpush.bf16.msra.mxu0 %v765
      %847 = vmatpush.bf16.msra.mxu0 %v764
      %848 = vmatmul.bf16.gmra.mxu0 %v299
      %v849 = vpop.f32.mrf.mxu0
      %v850 = vadd.f32 %v836, %v849
      %v851 = vpop.f32.mrf.mxu0
      %v852 = vadd.f32 %v838, %v851
      %853 = vdwg.mxu0
      %854 = vmatpush.bf16.msra.mxu0 %v779
      %855 = vmatpush.bf16.msra.mxu0 %v778
      %856 = vmatpush.bf16.msra.mxu0 %v777
      %857 = vmatpush.bf16.msra.mxu0 %v776
      %858 = vmatpush.bf16.msra.mxu0 %v775
      %859 = vmatpush.bf16.msra.mxu0 %v774
      %860 = vmatpush.bf16.msra.mxu0 %v773
      %861 = vmatpush.bf16.msra.mxu0 %v772
      %862 = vmatmul.bf16.gmra.mxu0 %v300
      %v863 = vpop.f32.mrf.mxu0
      %v864 = vadd.f32 %v850, %v863
      %v865 = vpop.f32.mrf.mxu0
      %v866 = vadd.f32 %v852, %v865
      %867 = vdwg.mxu0
      %v868 = vmax.f32 %v864, 0.0
      %v869 = vmax.f32 %v866, 0.0
      %v870 = vmax.f32 %v553, %v868
      %v871 = vmax.f32 %v554, %v869
      %s872 = scalar_lea.vmem %s1, 512
      %v873 = vld [vmem:[%s872] sm:$0xf]
      %v874 = vld [vmem:[%s872 + $0x4] sm:$0xf]
      %v875 = vld [vmem:[%s872 + $0x8] sm:$0xf]
      %v876 = vld [vmem:[%s872 + $0xc] sm:$0xf]
      %v877 = vld [vmem:[%s872 + $0x10] sm:$0xf]
      %v878 = vld [vmem:[%s872 + $0x14] sm:$0xf]
      %v879 = vld [vmem:[%s872 + $0x18] sm:$0xf]
      %v880 = vld [vmem:[%s872 + $0x1c] sm:$0xf]
      %v881 = vld [vmem:[%s872 + $0x20] sm:$0xf]
      %v882 = vld [vmem:[%s872 + $0x24] sm:$0xf]
      %v883 = vld [vmem:[%s872 + $0x28] sm:$0xf]
      %v884 = vld [vmem:[%s872 + $0x2c] sm:$0xf]
      %v885 = vld [vmem:[%s872 + $0x30] sm:$0xf]
      %v886 = vld [vmem:[%s872 + $0x34] sm:$0xf]
      %v887 = vld [vmem:[%s872 + $0x38] sm:$0xf]
      %v888 = vld [vmem:[%s872 + $0x3c] sm:$0xf]
      %v889 = vld [vmem:[%s872 + $0x40] sm:$0xf]
      %v890 = vld [vmem:[%s872 + $0x44] sm:$0xf]
      %v891 = vld [vmem:[%s872 + $0x48] sm:$0xf]
      %v892 = vld [vmem:[%s872 + $0x4c] sm:$0xf]
      %v893 = vld [vmem:[%s872 + $0x50] sm:$0xf]
      %v894 = vld [vmem:[%s872 + $0x54] sm:$0xf]
      %v895 = vld [vmem:[%s872 + $0x58] sm:$0xf]
      %v896 = vld [vmem:[%s872 + $0x5c] sm:$0xf]
      %v897 = vld [vmem:[%s872 + $0x60] sm:$0xf]
      %v898 = vld [vmem:[%s872 + $0x64] sm:$0xf]
      %v899 = vld [vmem:[%s872 + $0x68] sm:$0xf]
      %v900 = vld [vmem:[%s872 + $0x6c] sm:$0xf]
      %v901 = vld [vmem:[%s872 + $0x70] sm:$0xf]
      %v902 = vld [vmem:[%s872 + $0x74] sm:$0xf]
      %v903 = vld [vmem:[%s872 + $0x78] sm:$0xf]
      %v904 = vld [vmem:[%s872 + $0x7c] sm:$0xf]
      %v905 = vld [vmem:[%s872 + $0x80] sm:$0xf]
      %v906 = vld [vmem:[%s872 + $0x84] sm:$0xf]
      %v907 = vld [vmem:[%s872 + $0x88] sm:$0xf]
      %v908 = vld [vmem:[%s872 + $0x8c] sm:$0xf]
      %v909 = vld [vmem:[%s872 + $0x90] sm:$0xf]
      %v910 = vld [vmem:[%s872 + $0x94] sm:$0xf]
      %v911 = vld [vmem:[%s872 + $0x98] sm:$0xf]
      %v912 = vld [vmem:[%s872 + $0x9c] sm:$0xf]
      %v913 = vld [vmem:[%s872 + $0xa0] sm:$0xf]
      %v914 = vld [vmem:[%s872 + $0xa4] sm:$0xf]
      %v915 = vld [vmem:[%s872 + $0xa8] sm:$0xf]
      %v916 = vld [vmem:[%s872 + $0xac] sm:$0xf]
      %v917 = vld [vmem:[%s872 + $0xb0] sm:$0xf]
      %v918 = vld [vmem:[%s872 + $0xb4] sm:$0xf]
      %v919 = vld [vmem:[%s872 + $0xb8] sm:$0xf]
      %v920 = vld [vmem:[%s872 + $0xbc] sm:$0xf]
      %v921 = vld [vmem:[%s872 + $0xc0] sm:$0xf]
      %v922 = vld [vmem:[%s872 + $0xc4] sm:$0xf]
      %v923 = vld [vmem:[%s872 + $0xc8] sm:$0xf]
      %v924 = vld [vmem:[%s872 + $0xcc] sm:$0xf]
      %v925 = vld [vmem:[%s872 + $0xd0] sm:$0xf]
      %v926 = vld [vmem:[%s872 + $0xd4] sm:$0xf]
      %v927 = vld [vmem:[%s872 + $0xd8] sm:$0xf]
      %v928 = vld [vmem:[%s872 + $0xdc] sm:$0xf]
      %v929 = vld [vmem:[%s872 + $0xe0] sm:$0xf]
      %v930 = vld [vmem:[%s872 + $0xe4] sm:$0xf]
      %v931 = vld [vmem:[%s872 + $0xe8] sm:$0xf]
      %v932 = vld [vmem:[%s872 + $0xec] sm:$0xf]
      %v933 = vld [vmem:[%s872 + $0xf0] sm:$0xf]
      %v934 = vld [vmem:[%s872 + $0xf4] sm:$0xf]
      %v935 = vld [vmem:[%s872 + $0xf8] sm:$0xf]
      %v936 = vld [vmem:[%s872 + $0xfc] sm:$0xf]
      %v1001 = vunpack.c.l.b16 %v873
      %v1002 = vunpack.c.l.b16 %v874
      %v1003 = vunpack.c.l.b16 %v875
      %v1004 = vunpack.c.l.b16 %v876
      %v1005 = vunpack.c.l.b16 %v877
      %v1006 = vunpack.c.l.b16 %v878
      %v1007 = vunpack.c.l.b16 %v879
      %v1008 = vunpack.c.l.b16 %v880
      %v1009 = vunpack.c.l.b16 %v881
      %v1010 = vunpack.c.l.b16 %v882
      %v1011 = vunpack.c.l.b16 %v883
      %v1012 = vunpack.c.l.b16 %v884
      %v1013 = vunpack.c.l.b16 %v885
      %v1014 = vunpack.c.l.b16 %v886
      %v1015 = vunpack.c.l.b16 %v887
      %v1016 = vunpack.c.l.b16 %v888
      %v1017 = vunpack.c.l.b16 %v889
      %v1018 = vunpack.c.l.b16 %v890
      %v1019 = vunpack.c.l.b16 %v891
      %v1020 = vunpack.c.l.b16 %v892
      %v1021 = vunpack.c.l.b16 %v893
      %v1022 = vunpack.c.l.b16 %v894
      %v1023 = vunpack.c.l.b16 %v895
      %v1024 = vunpack.c.l.b16 %v896
      %v1025 = vunpack.c.l.b16 %v897
      %v1026 = vunpack.c.l.b16 %v898
      %v1027 = vunpack.c.l.b16 %v899
      %v1028 = vunpack.c.l.b16 %v900
      %v1029 = vunpack.c.l.b16 %v901
      %v1030 = vunpack.c.l.b16 %v902
      %v1031 = vunpack.c.l.b16 %v903
      %v1032 = vunpack.c.l.b16 %v904
      %v1033 = vunpack.c.l.b16 %v905
      %v1034 = vunpack.c.l.b16 %v906
      %v1035 = vunpack.c.l.b16 %v907
      %v1036 = vunpack.c.l.b16 %v908
      %v1037 = vunpack.c.l.b16 %v909
      %v1038 = vunpack.c.l.b16 %v910
      %v1039 = vunpack.c.l.b16 %v911
      %v1040 = vunpack.c.l.b16 %v912
      %v1041 = vunpack.c.l.b16 %v913
      %v1042 = vunpack.c.l.b16 %v914
      %v1043 = vunpack.c.l.b16 %v915
      %v1044 = vunpack.c.l.b16 %v916
      %v1045 = vunpack.c.l.b16 %v917
      %v1046 = vunpack.c.l.b16 %v918
      %v1047 = vunpack.c.l.b16 %v919
      %v1048 = vunpack.c.l.b16 %v920
      %v1049 = vunpack.c.l.b16 %v921
      %v1050 = vunpack.c.l.b16 %v922
      %v1051 = vunpack.c.l.b16 %v923
      %v1052 = vunpack.c.l.b16 %v924
      %v1053 = vunpack.c.l.b16 %v925
      %v1054 = vunpack.c.l.b16 %v926
      %v1055 = vunpack.c.l.b16 %v927
      %v1056 = vunpack.c.l.b16 %v928
      %v1057 = vunpack.c.l.b16 %v929
      %v1058 = vunpack.c.l.b16 %v930
      %v1059 = vunpack.c.l.b16 %v931
      %v1060 = vunpack.c.l.b16 %v932
      %v1061 = vunpack.c.l.b16 %v933
      %v1062 = vunpack.c.l.b16 %v934
      %v1063 = vunpack.c.l.b16 %v935
      %v1064 = vunpack.c.l.b16 %v936
      %v1065 = vpack.c.b16 %v1002, %v1001
      %v1066 = vpack.c.b16 %v1004, %v1003
      %v1067 = vpack.c.b16 %v1006, %v1005
      %v1068 = vpack.c.b16 %v1008, %v1007
      %v1069 = vpack.c.b16 %v1010, %v1009
      %v1070 = vpack.c.b16 %v1012, %v1011
      %v1071 = vpack.c.b16 %v1014, %v1013
      %v1072 = vpack.c.b16 %v1016, %v1015
      %v1073 = vpack.c.b16 %v1018, %v1017
      %v1074 = vpack.c.b16 %v1020, %v1019
      %v1075 = vpack.c.b16 %v1022, %v1021
      %v1076 = vpack.c.b16 %v1024, %v1023
      %v1077 = vpack.c.b16 %v1026, %v1025
      %v1078 = vpack.c.b16 %v1028, %v1027
      %v1079 = vpack.c.b16 %v1030, %v1029
      %v1080 = vpack.c.b16 %v1032, %v1031
      %v1081 = vpack.c.b16 %v1034, %v1033
      %v1082 = vpack.c.b16 %v1036, %v1035
      %v1083 = vpack.c.b16 %v1038, %v1037
      %v1084 = vpack.c.b16 %v1040, %v1039
      %v1085 = vpack.c.b16 %v1042, %v1041
      %v1086 = vpack.c.b16 %v1044, %v1043
      %v1087 = vpack.c.b16 %v1046, %v1045
      %v1088 = vpack.c.b16 %v1048, %v1047
      %v1089 = vpack.c.b16 %v1050, %v1049
      %v1090 = vpack.c.b16 %v1052, %v1051
      %v1091 = vpack.c.b16 %v1054, %v1053
      %v1092 = vpack.c.b16 %v1056, %v1055
      %v1093 = vpack.c.b16 %v1058, %v1057
      %v1094 = vpack.c.b16 %v1060, %v1059
      %v1095 = vpack.c.b16 %v1062, %v1061
      %v1096 = vpack.c.b16 %v1064, %v1063
      %1129 = vmatpush.bf16.msra.mxu0 %v1072
      %1130 = vmatpush.bf16.msra.mxu0 %v1071
      %1131 = vmatpush.bf16.msra.mxu0 %v1070
      %1132 = vmatpush.bf16.msra.mxu0 %v1069
      %1133 = vmatpush.bf16.msra.mxu0 %v1068
      %1134 = vmatpush.bf16.msra.mxu0 %v1067
      %1135 = vmatpush.bf16.msra.mxu0 %v1066
      %1136 = vmatpush.bf16.msra.mxu0 %v1065
      %1137 = vmatmul.bf16.gmra.mxu0 %v297
      %v1138 = vpop.f32.mrf.mxu0
      %v1139 = vadd.f32 %v283, %v1138
      %v1140 = vpop.f32.mrf.mxu0
      %v1141 = vadd.f32 %v283, %v1140
      %1142 = vdwg.mxu0
      %1143 = vmatpush.bf16.msra.mxu0 %v1080
      %1144 = vmatpush.bf16.msra.mxu0 %v1079
      %1145 = vmatpush.bf16.msra.mxu0 %v1078
      %1146 = vmatpush.bf16.msra.mxu0 %v1077
      %1147 = vmatpush.bf16.msra.mxu0 %v1076
      %1148 = vmatpush.bf16.msra.mxu0 %v1075
      %1149 = vmatpush.bf16.msra.mxu0 %v1074
      %1150 = vmatpush.bf16.msra.mxu0 %v1073
      %1151 = vmatmul.bf16.gmra.mxu0 %v298
      %v1152 = vpop.f32.mrf.mxu0
      %v1153 = vadd.f32 %v1139, %v1152
      %v1154 = vpop.f32.mrf.mxu0
      %v1155 = vadd.f32 %v1141, %v1154
      %1156 = vdwg.mxu0
      %1157 = vmatpush.bf16.msra.mxu0 %v1088
      %1158 = vmatpush.bf16.msra.mxu0 %v1087
      %1159 = vmatpush.bf16.msra.mxu0 %v1086
      %1160 = vmatpush.bf16.msra.mxu0 %v1085
      %1161 = vmatpush.bf16.msra.mxu0 %v1084
      %1162 = vmatpush.bf16.msra.mxu0 %v1083
      %1163 = vmatpush.bf16.msra.mxu0 %v1082
      %1164 = vmatpush.bf16.msra.mxu0 %v1081
      %1165 = vmatmul.bf16.gmra.mxu0 %v299
      %v1166 = vpop.f32.mrf.mxu0
      %v1167 = vadd.f32 %v1153, %v1166
      %v1168 = vpop.f32.mrf.mxu0
      %v1169 = vadd.f32 %v1155, %v1168
      %1170 = vdwg.mxu0
      %1171 = vmatpush.bf16.msra.mxu0 %v1096
      %1172 = vmatpush.bf16.msra.mxu0 %v1095
      %1173 = vmatpush.bf16.msra.mxu0 %v1094
      %1174 = vmatpush.bf16.msra.mxu0 %v1093
      %1175 = vmatpush.bf16.msra.mxu0 %v1092
      %1176 = vmatpush.bf16.msra.mxu0 %v1091
      %1177 = vmatpush.bf16.msra.mxu0 %v1090
      %1178 = vmatpush.bf16.msra.mxu0 %v1089
      %1179 = vmatmul.bf16.gmra.mxu0 %v300
      %v1180 = vpop.f32.mrf.mxu0
      %v1181 = vadd.f32 %v1167, %v1180
      %v1182 = vpop.f32.mrf.mxu0
      %v1183 = vadd.f32 %v1169, %v1182
      %1184 = vdwg.mxu0
      %v1185 = vmax.f32 %v1181, 0.0
      %v1186 = vmax.f32 %v1183, 0.0
      %v1187 = vmax.f32 %v870, %v1185
      %v1188 = vmax.f32 %v871, %v1186
      %s1189 = scalar_lea.vmem %s1, 768
      %v1190 = vld [vmem:[%s1189] sm:$0xf]
      %v1191 = vld [vmem:[%s1189 + $0x4] sm:$0xf]
      %v1192 = vld [vmem:[%s1189 + $0x8] sm:$0xf]
      %v1193 = vld [vmem:[%s1189 + $0xc] sm:$0xf]
      %v1194 = vld [vmem:[%s1189 + $0x10] sm:$0xf]
      %v1195 = vld [vmem:[%s1189 + $0x14] sm:$0xf]
      %v1196 = vld [vmem:[%s1189 + $0x18] sm:$0xf]
      %v1197 = vld [vmem:[%s1189 + $0x1c] sm:$0xf]
      %v1198 = vld [vmem:[%s1189 + $0x20] sm:$0xf]
      %v1199 = vld [vmem:[%s1189 + $0x24] sm:$0xf]
      %v1200 = vld [vmem:[%s1189 + $0x28] sm:$0xf]
      %v1201 = vld [vmem:[%s1189 + $0x2c] sm:$0xf]
      %v1202 = vld [vmem:[%s1189 + $0x30] sm:$0xf]
      %v1203 = vld [vmem:[%s1189 + $0x34] sm:$0xf]
      %v1204 = vld [vmem:[%s1189 + $0x38] sm:$0xf]
      %v1205 = vld [vmem:[%s1189 + $0x3c] sm:$0xf]
      %v1206 = vld [vmem:[%s1189 + $0x40] sm:$0xf]
      %v1207 = vld [vmem:[%s1189 + $0x44] sm:$0xf]
      %v1208 = vld [vmem:[%s1189 + $0x48] sm:$0xf]
      %v1209 = vld [vmem:[%s1189 + $0x4c] sm:$0xf]
      %v1210 = vld [vmem:[%s1189 + $0x50] sm:$0xf]
      %v1211 = vld [vmem:[%s1189 + $0x54] sm:$0xf]
      %v1212 = vld [vmem:[%s1189 + $0x58] sm:$0xf]
      %v1213 = vld [vmem:[%s1189 + $0x5c] sm:$0xf]
      %v1214 = vld [vmem:[%s1189 + $0x60] sm:$0xf]
      %v1215 = vld [vmem:[%s1189 + $0x64] sm:$0xf]
      %v1216 = vld [vmem:[%s1189 + $0x68] sm:$0xf]
      %v1217 = vld [vmem:[%s1189 + $0x6c] sm:$0xf]
      %v1218 = vld [vmem:[%s1189 + $0x70] sm:$0xf]
      %v1219 = vld [vmem:[%s1189 + $0x74] sm:$0xf]
      %v1220 = vld [vmem:[%s1189 + $0x78] sm:$0xf]
      %v1221 = vld [vmem:[%s1189 + $0x7c] sm:$0xf]
      %v1222 = vld [vmem:[%s1189 + $0x80] sm:$0xf]
      %v1223 = vld [vmem:[%s1189 + $0x84] sm:$0xf]
      %v1224 = vld [vmem:[%s1189 + $0x88] sm:$0xf]
      %v1225 = vld [vmem:[%s1189 + $0x8c] sm:$0xf]
      %v1226 = vld [vmem:[%s1189 + $0x90] sm:$0xf]
      %v1227 = vld [vmem:[%s1189 + $0x94] sm:$0xf]
      %v1228 = vld [vmem:[%s1189 + $0x98] sm:$0xf]
      %v1229 = vld [vmem:[%s1189 + $0x9c] sm:$0xf]
      %v1230 = vld [vmem:[%s1189 + $0xa0] sm:$0xf]
      %v1231 = vld [vmem:[%s1189 + $0xa4] sm:$0xf]
      %v1232 = vld [vmem:[%s1189 + $0xa8] sm:$0xf]
      %v1233 = vld [vmem:[%s1189 + $0xac] sm:$0xf]
      %v1234 = vld [vmem:[%s1189 + $0xb0] sm:$0xf]
      %v1235 = vld [vmem:[%s1189 + $0xb4] sm:$0xf]
      %v1236 = vld [vmem:[%s1189 + $0xb8] sm:$0xf]
      %v1237 = vld [vmem:[%s1189 + $0xbc] sm:$0xf]
      %v1238 = vld [vmem:[%s1189 + $0xc0] sm:$0xf]
      %v1239 = vld [vmem:[%s1189 + $0xc4] sm:$0xf]
      %v1240 = vld [vmem:[%s1189 + $0xc8] sm:$0xf]
      %v1241 = vld [vmem:[%s1189 + $0xcc] sm:$0xf]
      %v1242 = vld [vmem:[%s1189 + $0xd0] sm:$0xf]
      %v1243 = vld [vmem:[%s1189 + $0xd4] sm:$0xf]
      %v1244 = vld [vmem:[%s1189 + $0xd8] sm:$0xf]
      %v1245 = vld [vmem:[%s1189 + $0xdc] sm:$0xf]
      %v1246 = vld [vmem:[%s1189 + $0xe0] sm:$0xf]
      %v1247 = vld [vmem:[%s1189 + $0xe4] sm:$0xf]
      %v1248 = vld [vmem:[%s1189 + $0xe8] sm:$0xf]
      %v1249 = vld [vmem:[%s1189 + $0xec] sm:$0xf]
      %v1250 = vld [vmem:[%s1189 + $0xf0] sm:$0xf]
      %v1251 = vld [vmem:[%s1189 + $0xf4] sm:$0xf]
      %v1252 = vld [vmem:[%s1189 + $0xf8] sm:$0xf]
      %v1253 = vld [vmem:[%s1189 + $0xfc] sm:$0xf]
      %v1318 = vunpack.c.l.b16 %v1190
      %v1319 = vunpack.c.l.b16 %v1191
      %v1320 = vunpack.c.l.b16 %v1192
      %v1321 = vunpack.c.l.b16 %v1193
      %v1322 = vunpack.c.l.b16 %v1194
      %v1323 = vunpack.c.l.b16 %v1195
      %v1324 = vunpack.c.l.b16 %v1196
      %v1325 = vunpack.c.l.b16 %v1197
      %v1326 = vunpack.c.l.b16 %v1198
      %v1327 = vunpack.c.l.b16 %v1199
      %v1328 = vunpack.c.l.b16 %v1200
      %v1329 = vunpack.c.l.b16 %v1201
      %v1330 = vunpack.c.l.b16 %v1202
      %v1331 = vunpack.c.l.b16 %v1203
      %v1332 = vunpack.c.l.b16 %v1204
      %v1333 = vunpack.c.l.b16 %v1205
      %v1334 = vunpack.c.l.b16 %v1206
      %v1335 = vunpack.c.l.b16 %v1207
      %v1336 = vunpack.c.l.b16 %v1208
      %v1337 = vunpack.c.l.b16 %v1209
      %v1338 = vunpack.c.l.b16 %v1210
      %v1339 = vunpack.c.l.b16 %v1211
      %v1340 = vunpack.c.l.b16 %v1212
      %v1341 = vunpack.c.l.b16 %v1213
      %v1342 = vunpack.c.l.b16 %v1214
      %v1343 = vunpack.c.l.b16 %v1215
      %v1344 = vunpack.c.l.b16 %v1216
      %v1345 = vunpack.c.l.b16 %v1217
      %v1346 = vunpack.c.l.b16 %v1218
      %v1347 = vunpack.c.l.b16 %v1219
      %v1348 = vunpack.c.l.b16 %v1220
      %v1349 = vunpack.c.l.b16 %v1221
      %v1350 = vunpack.c.l.b16 %v1222
      %v1351 = vunpack.c.l.b16 %v1223
      %v1352 = vunpack.c.l.b16 %v1224
      %v1353 = vunpack.c.l.b16 %v1225
      %v1354 = vunpack.c.l.b16 %v1226
      %v1355 = vunpack.c.l.b16 %v1227
      %v1356 = vunpack.c.l.b16 %v1228
      %v1357 = vunpack.c.l.b16 %v1229
      %v1358 = vunpack.c.l.b16 %v1230
      %v1359 = vunpack.c.l.b16 %v1231
      %v1360 = vunpack.c.l.b16 %v1232
      %v1361 = vunpack.c.l.b16 %v1233
      %v1362 = vunpack.c.l.b16 %v1234
      %v1363 = vunpack.c.l.b16 %v1235
      %v1364 = vunpack.c.l.b16 %v1236
      %v1365 = vunpack.c.l.b16 %v1237
      %v1366 = vunpack.c.l.b16 %v1238
      %v1367 = vunpack.c.l.b16 %v1239
      %v1368 = vunpack.c.l.b16 %v1240
      %v1369 = vunpack.c.l.b16 %v1241
      %v1370 = vunpack.c.l.b16 %v1242
      %v1371 = vunpack.c.l.b16 %v1243
      %v1372 = vunpack.c.l.b16 %v1244
      %v1373 = vunpack.c.l.b16 %v1245
      %v1374 = vunpack.c.l.b16 %v1246
      %v1375 = vunpack.c.l.b16 %v1247
      %v1376 = vunpack.c.l.b16 %v1248
      %v1377 = vunpack.c.l.b16 %v1249
      %v1378 = vunpack.c.l.b16 %v1250
      %v1379 = vunpack.c.l.b16 %v1251
      %v1380 = vunpack.c.l.b16 %v1252
      %v1381 = vunpack.c.l.b16 %v1253
      %v1382 = vpack.c.b16 %v1319, %v1318
      %v1383 = vpack.c.b16 %v1321, %v1320
      %v1384 = vpack.c.b16 %v1323, %v1322
      %v1385 = vpack.c.b16 %v1325, %v1324
      %v1386 = vpack.c.b16 %v1327, %v1326
      %v1387 = vpack.c.b16 %v1329, %v1328
      %v1388 = vpack.c.b16 %v1331, %v1330
      %v1389 = vpack.c.b16 %v1333, %v1332
      %v1390 = vpack.c.b16 %v1335, %v1334
      %v1391 = vpack.c.b16 %v1337, %v1336
      %v1392 = vpack.c.b16 %v1339, %v1338
      %v1393 = vpack.c.b16 %v1341, %v1340
      %v1394 = vpack.c.b16 %v1343, %v1342
      %v1395 = vpack.c.b16 %v1345, %v1344
      %v1396 = vpack.c.b16 %v1347, %v1346
      %v1397 = vpack.c.b16 %v1349, %v1348
      %v1398 = vpack.c.b16 %v1351, %v1350
      %v1399 = vpack.c.b16 %v1353, %v1352
      %v1400 = vpack.c.b16 %v1355, %v1354
      %v1401 = vpack.c.b16 %v1357, %v1356
      %v1402 = vpack.c.b16 %v1359, %v1358
      %v1403 = vpack.c.b16 %v1361, %v1360
      %v1404 = vpack.c.b16 %v1363, %v1362
      %v1405 = vpack.c.b16 %v1365, %v1364
      %v1406 = vpack.c.b16 %v1367, %v1366
      %v1407 = vpack.c.b16 %v1369, %v1368
      %v1408 = vpack.c.b16 %v1371, %v1370
      %v1409 = vpack.c.b16 %v1373, %v1372
      %v1410 = vpack.c.b16 %v1375, %v1374
      %v1411 = vpack.c.b16 %v1377, %v1376
      %v1412 = vpack.c.b16 %v1379, %v1378
      %v1413 = vpack.c.b16 %v1381, %v1380
      %1446 = vmatpush.bf16.msra.mxu0 %v1389
      %1447 = vmatpush.bf16.msra.mxu0 %v1388
      %1448 = vmatpush.bf16.msra.mxu0 %v1387
      %1449 = vmatpush.bf16.msra.mxu0 %v1386
      %1450 = vmatpush.bf16.msra.mxu0 %v1385
      %1451 = vmatpush.bf16.msra.mxu0 %v1384
      %1452 = vmatpush.bf16.msra.mxu0 %v1383
      %1453 = vmatpush.bf16.msra.mxu0 %v1382
      %1454 = vmatmul.bf16.gmra.mxu0 %v297
      %v1455 = vpop.f32.mrf.mxu0
      %v1456 = vadd.f32 %v283, %v1455
      %v1457 = vpop.f32.mrf.mxu0
      %v1458 = vadd.f32 %v283, %v1457
      %1459 = vdwg.mxu0
      %1460 = vmatpush.bf16.msra.mxu0 %v1397
      %1461 = vmatpush.bf16.msra.mxu0 %v1396
      %1462 = vmatpush.bf16.msra.mxu0 %v1395
      %1463 = vmatpush.bf16.msra.mxu0 %v1394
      %1464 = vmatpush.bf16.msra.mxu0 %v1393
      %1465 = vmatpush.bf16.msra.mxu0 %v1392
      %1466 = vmatpush.bf16.msra.mxu0 %v1391
      %1467 = vmatpush.bf16.msra.mxu0 %v1390
      %1468 = vmatmul.bf16.gmra.mxu0 %v298
      %v1469 = vpop.f32.mrf.mxu0
      %v1470 = vadd.f32 %v1456, %v1469
      %v1471 = vpop.f32.mrf.mxu0
      %v1472 = vadd.f32 %v1458, %v1471
      %1473 = vdwg.mxu0
      %1474 = vmatpush.bf16.msra.mxu0 %v1405
      %1475 = vmatpush.bf16.msra.mxu0 %v1404
      %1476 = vmatpush.bf16.msra.mxu0 %v1403
      %1477 = vmatpush.bf16.msra.mxu0 %v1402
      %1478 = vmatpush.bf16.msra.mxu0 %v1401
      %1479 = vmatpush.bf16.msra.mxu0 %v1400
      %1480 = vmatpush.bf16.msra.mxu0 %v1399
      %1481 = vmatpush.bf16.msra.mxu0 %v1398
      %1482 = vmatmul.bf16.gmra.mxu0 %v299
      %v1483 = vpop.f32.mrf.mxu0
      %v1484 = vadd.f32 %v1470, %v1483
      %v1485 = vpop.f32.mrf.mxu0
      %v1486 = vadd.f32 %v1472, %v1485
      %1487 = vdwg.mxu0
      %1488 = vmatpush.bf16.msra.mxu0 %v1413
      %1489 = vmatpush.bf16.msra.mxu0 %v1412
      %1490 = vmatpush.bf16.msra.mxu0 %v1411
      %1491 = vmatpush.bf16.msra.mxu0 %v1410
      %1492 = vmatpush.bf16.msra.mxu0 %v1409
      %1493 = vmatpush.bf16.msra.mxu0 %v1408
      %1494 = vmatpush.bf16.msra.mxu0 %v1407
      %1495 = vmatpush.bf16.msra.mxu0 %v1406
      %1496 = vmatmul.bf16.gmra.mxu0 %v300
      %v1497 = vpop.f32.mrf.mxu0
      %v1498 = vadd.f32 %v1484, %v1497
      %v1499 = vpop.f32.mrf.mxu0
      %v1500 = vadd.f32 %v1486, %v1499
      %1501 = vdwg.mxu0
      %v1502 = vmax.f32 %v1498, 0.0
      %v1503 = vmax.f32 %v1500, 0.0
      %v1504 = vmax.f32 %v1187, %v1502
      %v1505 = vmax.f32 %v1188, %v1503
      %v1506 = vpack.c.bf16 %v1504, %v1504
      %v1507 = vpack.c.bf16 %v1505, %v1505
      %vm1508 = vcmask 519168
      %1509 = vst.msk [vmem:[%s211] sm:$0xf] %vm1508, %v1506
      %1510 = vst.msk [vmem:[%s211 + $0x4] sm:$0xf] %vm1508, %v1507
      %s1511 = smul.u32 2, %s19
      %p1512 = scmp.lt.s32.totalorder %s18, 1
      %s1513 = scalar_select %p1512, %s18, 1
      %p1514 = scmp.lt.s32.totalorder %s1511, 1
      %s1515 = scalar_select %p1514, %s1511, 1
      %s1516 = smul.addr %s1513, 2
      %s1517 = sadd.s32 %s1515, %s1516
      %s1518 = smul.addr %s1517, 4
      %s1519 = scalar_lea.vmem %s3, %s1518
      // Predicated region
      $region33: #{cnn_for_audio_forward.6} parent=31 // pred_check
        %p1520 = pneg %p116
      $region34: #{cnn_for_audio_forward.6} parent=31 // pred_check_branch
        %1522 = sbr.rel (%p1520) target = $region36
      $region35: #{cnn_for_audio_forward.6} parent=31 // pred_region
        %s1523 = smul.u32 2, %s19
      $region36: #{cnn_for_audio_forward.6} parent=31 // pred_fallthru
        _
    $region32: #{cnn_for_audio_forward.6} parent=5 // pred_fallthru
      _
    %p1524 = scmp.le.s32.totalorder 2, %s9
    // Predicated region
    $region37: #{cnn_for_audio_forward.6} parent=5 // pred_check
      %p1525 = pneg %p1524
    $region38: #{cnn_for_audio_forward.6} parent=5 // pred_check_branch
      %1527 = sbr.rel (%p1525) target = $region40
    $region39: #{cnn_for_audio_forward.6} parent=5 // pred_region
      %s1528 = ssub.s32 %s9, 2
      // Predicated region
      $region41: #{cnn_for_audio_forward.6} parent=39 // pred_check
        %p1529 = pneg %p122
      $region42: #{cnn_for_audio_forward.6} parent=39 // pred_check_branch
        %1531 = sbr.rel (%p1529) target = $region44
      $region43: #{cnn_for_audio_forward.6} parent=39 // pred_region
        %s1532 = smul.u32 2, %s21
        %p1533 = scmp.lt.s32.totalorder %s20, 1
        %s1534 = scalar_select %p1533, %s20, 1
        %p1535 = scmp.lt.s32.totalorder %s1532, 1
        %s1536 = scalar_select %p1535, %s1532, 1
        %s1537 = smul.addr %s1534, 2
        %s1538 = sadd.s32 %s1536, %s1537
        %s1539 = smul.addr %s1538, 4
        %s1540 = scalar_lea.vmem %s3, %s1539
      $region44: #{cnn_for_audio_forward.6} parent=39 // pred_fallthru
        _
    $region40: #{cnn_for_audio_forward.6} parent=5 // pred_fallthru
      _
  $region6: #{cnn_for_audio_forward.6} parent=0 // loop_footer
    %s13 = sadd.s32 1, %s9
  $region7: #{cnn_for_audio_forward.6} parent=0 // loop_footer_branch
    %8 = sbr.rel target = $region3
  $region8: #{cnn_for_audio_forward.6} parent=0 // loop_exit
    _

// kernel: cnn_for_audio_forward.7
$region0: #{cnn_for_audio_forward.7}
  #allocation0 [shape = 'u32[]', space=smem, size = 0x4, offset = 0x4, fixed_abs, tag = 'smem constant byte address 0x4 - core index']
  #allocation1 [shape = 'u32[72,128]{1,0:T(1,128)}', space=vmem, size = 0x9000, scoped, tag = 'internal scratch']
  %s0 = inlined_call_operand.vmem [shape: bf16[2,1,8,1024], index: 0, kind: input, shape index: {}]
  %s1 = inlined_call_operand.vmem [shape: bf16[4,1024,64], index: 1, kind: input, shape index: {}]
  %s2 = inlined_call_operand.vmem [shape: f32[1,64], index: 2, kind: input, shape index: {}]
  %s3 = inlined_call_operand.vmem [shape: bf16[64,35], index: 3, kind: input, shape index: {}]
  %s4 = inlined_call_operand.vmem [shape: f32[1,35], index: 4, kind: input, shape index: {}]
  %s5 = inlined_call_operand.vmem [shape: f32[2,8,35], index: 5, kind: output, shape index: {}]
  %s6 = sld [smem:[#allocation0]]
  $region53: #{cnn_for_audio_forward.7} parent=0
    _
  %s8 = ssub.s32 1, %s6
  %s9 = scalar_select 0, %s8, %s6
  loop: start=0, step=1, limit=4
  $region2: #{cnn_for_audio_forward.7} parent=0 // loop_pre_header
    _
  $region3: #{cnn_for_audio_forward.7} parent=0 // loop_header
    %s11 = sphi 0, %s15
    %p12 = scmp.ge.s32.totalorder %s11, 4
    %s18 = sphi 0, %s30
    %s19 = sphi 0, %s26
    %s20 = sphi 0, %s18
    %s21 = sphi 0, %s19
    %s22 = sphi 0, %s20
    %s23 = sphi 0, %s21
    %s35 = sphi 0, %s37
    %s38 = sphi 0, %s35
    %s39 = sphi 0, %s38
    %s55 = sphi 0, %s39
    %s59 = sphi 0, %s59
    %s61 = sphi 0, %s59
    %s62 = sphi 0, %s61
    %s76 = sphi 0, %s62
    %s80 = sphi 0, %s80
    %s82 = sphi 0, %s80
    %s83 = sphi 0, %s82
    %s97 = sphi 0, %s83
    %s101 = sphi 0, %s101
    %s103 = sphi 0, %s101
    %s104 = sphi 0, %s103
    %s118 = sphi 0, %s104
    %s122 = sphi 0, %s122
    %s124 = sphi 0, %s122
    %s125 = sphi 0, %s124
    %s139 = sphi 0, %s125
    %s147 = sphi 0, %s149
    %s150 = sphi 0, %s147
    %s151 = sphi 0, %s150
    %s167 = sphi 0, %s151
  $region4: #{cnn_for_audio_forward.7} parent=0 // loop_header_branch
    %14 = sbr.rel (%p12) target = $region8
  $region5: #{cnn_for_audio_forward.7} parent=0 // loop_body
    %s16 = ssub.s32 %s11, 1
    %s17 = ssub.s32 %s11, 2
    %s24 = sadd.s32 1, %s19
    %p25 = scmp.ge.s32.totalorder %s24, 1
    %s26 = scalar_select %p25, 0, %s24
    %s27 = sadd.s32 1, %s18
    %s28 = scalar_select %p25, %s27, %s18
    %p29 = scmp.ge.s32.totalorder %s28, 2
    %s30 = scalar_select %p29, 0, %s28
    %s31 = ssub.s32 %s18, %s30
    %s32 = ssub.s32 %s19, %s26
    %s33 = sor.u32 %s31, %s32
    %p34 = scmp.eq.s32.totalorder %s33, 0
    %s36 = sadd.s32 %s35, 1
    %s37 = scalar_select %p34, %s35, %s36
    %p40 = pneg %p34
    %p41 = scmp.eq.s32.totalorder %s11, 1
    %p42 = por %p40, %p41
    %p43 = scmp.ne.s32.totalorder %s35, %s38
    %p44 = scmp.eq.s32.totalorder %s11, 0
    %p45 = por %p43, %p44
    %p46 = scmp.ne.s32.totalorder %s35, %s38
    %p47 = scmp.eq.s32.totalorder %s16, 1
    %p48 = por %p46, %p47
    %p49 = scmp.ne.s32.totalorder %s38, %s39
    %p50 = scmp.eq.s32.totalorder %s16, 0
    %p51 = por %p49, %p50
    %p52 = scmp.ne.s32.totalorder %s38, %s39
    %p53 = scmp.eq.s32.totalorder %s17, 1
    %p54 = por %p52, %p53
    %p56 = scmp.ne.s32.totalorder %s39, %s55
    %p57 = scmp.eq.s32.totalorder %s17, 0
    %p58 = por %p56, %p57
    %s60 = sadd.s32 %s59, 1
    %p63 = scmp.eq.s32.totalorder %s11, 1
    %p64 = scmp.ne.s32.totalorder %s59, %s61
    %p65 = scmp.eq.s32.totalorder %s11, 0
    %p66 = por %p64, %p65
    %p67 = scmp.ne.s32.totalorder %s59, %s61
    %p68 = scmp.eq.s32.totalorder %s16, 1
    %p69 = por %p67, %p68
    %p70 = scmp.ne.s32.totalorder %s61, %s62
    %p71 = scmp.eq.s32.totalorder %s16, 0
    %p72 = por %p70, %p71
    %p73 = scmp.ne.s32.totalorder %s61, %s62
    %p74 = scmp.eq.s32.totalorder %s17, 1
    %p75 = por %p73, %p74
    %p77 = scmp.ne.s32.totalorder %s62, %s76
    %p78 = scmp.eq.s32.totalorder %s17, 0
    %p79 = por %p77, %p78
    %s81 = sadd.s32 %s80, 1
    %p84 = scmp.eq.s32.totalorder %s11, 1
    %p85 = scmp.ne.s32.totalorder %s80, %s82
    %p86 = scmp.eq.s32.totalorder %s11, 0
    %p87 = por %p85, %p86
    %p88 = scmp.ne.s32.totalorder %s80, %s82
    %p89 = scmp.eq.s32.totalorder %s16, 1
    %p90 = por %p88, %p89
    %p91 = scmp.ne.s32.totalorder %s82, %s83
    %p92 = scmp.eq.s32.totalorder %s16, 0
    %p93 = por %p91, %p92
    %p94 = scmp.ne.s32.totalorder %s82, %s83
    %p95 = scmp.eq.s32.totalorder %s17, 1
    %p96 = por %p94, %p95
    %p98 = scmp.ne.s32.totalorder %s83, %s97
    %p99 = scmp.eq.s32.totalorder %s17, 0
    %p100 = por %p98, %p99
    %s102 = sadd.s32 %s101, 1
    %p105 = scmp.eq.s32.totalorder %s11, 1
    %p106 = scmp.ne.s32.totalorder %s101, %s103
    %p107 = scmp.eq.s32.totalorder %s11, 0
    %p108 = por %p106, %p107
    %p109 = scmp.ne.s32.totalorder %s101, %s103
    %p110 = scmp.eq.s32.totalorder %s16, 1
    %p111 = por %p109, %p110
    %p112 = scmp.ne.s32.totalorder %s103, %s104
    %p113 = scmp.eq.s32.totalorder %s16, 0
    %p114 = por %p112, %p113
    %p115 = scmp.ne.s32.totalorder %s103, %s104
    %p116 = scmp.eq.s32.totalorder %s17, 1
    %p117 = por %p115, %p116
    %p119 = scmp.ne.s32.totalorder %s104, %s118
    %p120 = scmp.eq.s32.totalorder %s17, 0
    %p121 = por %p119, %p120
    %s123 = sadd.s32 %s122, 1
    %p126 = scmp.eq.s32.totalorder %s11, 1
    %p127 = scmp.ne.s32.totalorder %s122, %s124
    %p128 = scmp.eq.s32.totalorder %s11, 0
    %p129 = por %p127, %p128
    %p130 = scmp.ne.s32.totalorder %s122, %s124
    %p131 = scmp.eq.s32.totalorder %s16, 1
    %p132 = por %p130, %p131
    %p133 = scmp.ne.s32.totalorder %s124, %s125
    %p134 = scmp.eq.s32.totalorder %s16, 0
    %p135 = por %p133, %p134
    %p136 = scmp.ne.s32.totalorder %s124, %s125
    %p137 = scmp.eq.s32.totalorder %s17, 1
    %p138 = por %p136, %p137
    %p140 = scmp.ne.s32.totalorder %s125, %s139
    %p141 = scmp.eq.s32.totalorder %s17, 0
    %p142 = por %p140, %p141
    %s143 = ssub.s32 %s18, %s30
    %s144 = ssub.s32 %s19, %s26
    %s145 = sor.u32 %s143, %s144
    %p146 = scmp.eq.s32.totalorder %s145, 0
    %s148 = sadd.s32 %s147, 1
    %s149 = scalar_select %p146, %s147, %s148
    %p152 = pneg %p146
    %p153 = scmp.eq.s32.totalorder %s11, 1
    %p154 = por %p152, %p153
    %p155 = scmp.ne.s32.totalorder %s147, %s150
    %p156 = scmp.eq.s32.totalorder %s11, 0
    %p157 = por %p155, %p156
    %p158 = scmp.ne.s32.totalorder %s147, %s150
    %p159 = scmp.eq.s32.totalorder %s16, 1
    %p160 = por %p158, %p159
    %p161 = scmp.ne.s32.totalorder %s150, %s151
    %p162 = scmp.eq.s32.totalorder %s16, 0
    %p163 = por %p161, %p162
    %p164 = scmp.ne.s32.totalorder %s150, %s151
    %p165 = scmp.eq.s32.totalorder %s17, 1
    %p166 = por %p164, %p165
    %p168 = scmp.ne.s32.totalorder %s151, %s167
    %p169 = scmp.eq.s32.totalorder %s17, 0
    %p170 = por %p168, %p169
    %p171 = scmp.le.s32.totalorder 1, %s11
    %p172 = scmp.lt.s32.totalorder %s11, 3
    %p173 = pnand %p171, %p172
    %p174 = pneg %p173
    // Predicated region
    $region9: #{cnn_for_audio_forward.7} parent=5 // pred_check
      _
    $region10: #{cnn_for_audio_forward.7} parent=5 // pred_check_branch
      %176 = sbr.rel (%p173) target = $region12
    $region11: #{cnn_for_audio_forward.7} parent=5 // pred_region
      %s177 = ssub.s32 %s11, 1
      // Predicated region
      $region13: #{cnn_for_audio_forward.7} parent=11 // pred_check
        %p178 = pneg %p72
      $region14: #{cnn_for_audio_forward.7} parent=11 // pred_check_branch
        %180 = sbr.rel (%p178) target = $region16
      $region15: #{cnn_for_audio_forward.7} parent=11 // pred_region
        _
      $region16: #{cnn_for_audio_forward.7} parent=11 // pred_fallthru
        _
      // Predicated region
      $region17: #{cnn_for_audio_forward.7} parent=11 // pred_check
        %p181 = pneg %p93
      $region18: #{cnn_for_audio_forward.7} parent=11 // pred_check_branch
        %183 = sbr.rel (%p181) target = $region20
      $region19: #{cnn_for_audio_forward.7} parent=11 // pred_region
        _
      $region20: #{cnn_for_audio_forward.7} parent=11 // pred_fallthru
        _
      // Predicated region
      $region21: #{cnn_for_audio_forward.7} parent=11 // pred_check
        %p184 = pneg %p114
      $region22: #{cnn_for_audio_forward.7} parent=11 // pred_check_branch
        %186 = sbr.rel (%p184) target = $region24
      $region23: #{cnn_for_audio_forward.7} parent=11 // pred_region
        _
      $region24: #{cnn_for_audio_forward.7} parent=11 // pred_fallthru
        _
      // Predicated region
      $region25: #{cnn_for_audio_forward.7} parent=11 // pred_check
        %p187 = pneg %p135
      $region26: #{cnn_for_audio_forward.7} parent=11 // pred_check_branch
        %189 = sbr.rel (%p187) target = $region28
      $region27: #{cnn_for_audio_forward.7} parent=11 // pred_region
        _
      $region28: #{cnn_for_audio_forward.7} parent=11 // pred_fallthru
        _
    $region12: #{cnn_for_audio_forward.7} parent=5 // pred_fallthru
      _
    %p190 = scmp.lt.s32.totalorder %s11, 2
    // Predicated region
    $region29: #{cnn_for_audio_forward.7} parent=5 // pred_check
      %p191 = pneg %p190
    $region30: #{cnn_for_audio_forward.7} parent=5 // pred_check_branch
      %193 = sbr.rel (%p191) target = $region32
    $region31: #{cnn_for_audio_forward.7} parent=5 // pred_region
      // Predicated region
      $region33: #{cnn_for_audio_forward.7} parent=31 // pred_check
        %p194 = pneg %p45
      $region34: #{cnn_for_audio_forward.7} parent=31 // pred_check_branch
        %196 = sbr.rel (%p194) target = $region36
      $region35: #{cnn_for_audio_forward.7} parent=31 // pred_region
        %p197 = scmp.lt.s32.totalorder %s18, 1
        %s198 = scalar_select %p197, %s18, 1
        %p199 = scmp.lt.s32.totalorder %s19, 0
        %s200 = scalar_select %p199, %s19, 0
        %s201 = smul.addr %s200, 8
        %s202 = smul.addr %s198, 8
        %s203 = sadd.s32 %s201, %s202
        %s204 = smul.addr %s203, 4
        %s205 = scalar_lea.vmem %s0, %s204
      $region36: #{cnn_for_audio_forward.7} parent=31 // pred_fallthru
        _
    $region32: #{cnn_for_audio_forward.7} parent=5 // pred_fallthru
      _
    %p206 = scmp.le.s32.totalorder 1, %s11
    %p207 = scmp.lt.s32.totalorder %s11, 3
    %p208 = pnand %p206, %p207
    %p209 = pneg %p208
    // Predicated region
    $region37: #{cnn_for_audio_forward.7} parent=5 // pred_check
      _
    $region38: #{cnn_for_audio_forward.7} parent=5 // pred_check_branch
      %211 = sbr.rel (%p208) target = $region40
    $region39: #{cnn_for_audio_forward.7} parent=5 // pred_region
      %s212 = ssub.s32 %s11, 1
      %p213 = scmp.lt.s32.totalorder %s20, 1
      %s214 = scalar_select %p213, %s20, 1
      %p215 = scmp.lt.s32.totalorder %s21, 0
      %s216 = scalar_select %p215, %s21, 0
      %s217 = smul.addr %s216, 8
      %s218 = smul.addr %s214, 8
      %s219 = sadd.s32 %s217, %s218
      %s220 = smul.addr %s219, 4
      %s221 = scalar_lea.vmem %s0, %s220
      %p222 = pneg %p51
      %p223 = pneg %p48
      %p224 = pneg %p72
      %p225 = pneg %p69
      %p226 = pneg %p93
      %p227 = pneg %p90
      %p228 = pneg %p114
      %p229 = pneg %p111
      %p230 = pneg %p135
      %p231 = pneg %p132
      %p232 = pneg %p163
      %p233 = pneg %p160
      %p234 = scmp.lt.s32.totalorder %s20, 1
      %s235 = scalar_select %p234, %s20, 1
      %p236 = scmp.lt.s32.totalorder %s21, 0
      %s237 = scalar_select %p236, %s21, 0
      %s238 = sadd.s32 %s237, %s235
      %s239 = smul.addr %s238, 8
      %s240 = scalar_lea.vmem %s5, %s239
      %p241 = scmp.lt.s32.totalorder %s20, 1
      %s242 = scalar_select %p241, %s20, 1
      %p243 = scmp.lt.s32.totalorder %s21, 0
      %s244 = scalar_select %p243, %s21, 0
      %s245 = smul.addr %s244, 8
      %s246 = smul.addr %s242, 8
      %s247 = sadd.s32 %s245, %s246
      %s248 = smul.addr %s247, 4
      %s249 = scalar_lea.vmem %s0, %s248
      %p250 = scmp.lt.s32.totalorder %s20, 1
      %s251 = scalar_select %p250, %s20, 1
      %p252 = scmp.lt.s32.totalorder %s21, 0
      %s253 = scalar_select %p252, %s21, 0
      %s254 = sadd.s32 %s253, %s251
      %s255 = smul.addr %s254, 8
      %s256 = scalar_lea.vmem %s5, %s255
      %v258 = vld [vmem:[%s2] sm:$0x1]
      %v259 = vld [vmem:[%s249] sm:$0xff]
      %v260 = vld [vmem:[%s249 + $0x8] sm:$0xff]
      %v261 = vld [vmem:[%s249 + $0x10] sm:$0xff]
      %v262 = vld [vmem:[%s249 + $0x18] sm:$0xff]
      %v263 = vld [vmem:[%s1] sm:$0xf]
      %v264 = vld [vmem:[%s1 + $0x4] sm:$0xf]
      %v265 = vld [vmem:[%s1 + $0x8] sm:$0xf]
      %v266 = vld [vmem:[%s1 + $0xc] sm:$0xf]
      %v267 = vld [vmem:[%s1 + $0x10] sm:$0xf]
      %v268 = vld [vmem:[%s1 + $0x14] sm:$0xf]
      %v269 = vld [vmem:[%s1 + $0x18] sm:$0xf]
      %v270 = vld [vmem:[%s1 + $0x1c] sm:$0xf]
      %v271 = vld [vmem:[%s1 + $0x20] sm:$0xf]
      %v272 = vld [vmem:[%s1 + $0x24] sm:$0xf]
      %v273 = vld [vmem:[%s1 + $0x28] sm:$0xf]
      %v274 = vld [vmem:[%s1 + $0x2c] sm:$0xf]
      %v275 = vld [vmem:[%s1 + $0x30] sm:$0xf]
      %v276 = vld [vmem:[%s1 + $0x34] sm:$0xf]
      %v277 = vld [vmem:[%s1 + $0x38] sm:$0xf]
      %v278 = vld [vmem:[%s1 + $0x3c] sm:$0xf]
      %v279 = vld [vmem:[%s1 + $0x40] sm:$0xf]
      %v280 = vld [vmem:[%s1 + $0x44] sm:$0xf]
      %v281 = vld [vmem:[%s1 + $0x48] sm:$0xf]
      %v282 = vld [vmem:[%s1 + $0x4c] sm:$0xf]
      %v283 = vld [vmem:[%s1 + $0x50] sm:$0xf]
      %v284 = vld [vmem:[%s1 + $0x54] sm:$0xf]
      %v285 = vld [vmem:[%s1 + $0x58] sm:$0xf]
      %v286 = vld [vmem:[%s1 + $0x5c] sm:$0xf]
      %v287 = vld [vmem:[%s1 + $0x60] sm:$0xf]
      %v288 = vld [vmem:[%s1 + $0x64] sm:$0xf]
      %v289 = vld [vmem:[%s1 + $0x68] sm:$0xf]
      %v290 = vld [vmem:[%s1 + $0x6c] sm:$0xf]
      %v291 = vld [vmem:[%s1 + $0x70] sm:$0xf]
      %v292 = vld [vmem:[%s1 + $0x74] sm:$0xf]
      %v293 = vld [vmem:[%s1 + $0x78] sm:$0xf]
      %v294 = vld [vmem:[%s1 + $0x7c] sm:$0xf]
      %v295 = vld [vmem:[%s1 + $0x80] sm:$0xf]
      %v296 = vld [vmem:[%s1 + $0x84] sm:$0xf]
      %v297 = vld [vmem:[%s1 + $0x88] sm:$0xf]
      %v298 = vld [vmem:[%s1 + $0x8c] sm:$0xf]
      %v299 = vld [vmem:[%s1 + $0x90] sm:$0xf]
      %v300 = vld [vmem:[%s1 + $0x94] sm:$0xf]
      %v301 = vld [vmem:[%s1 + $0x98] sm:$0xf]
      %v302 = vld [vmem:[%s1 + $0x9c] sm:$0xf]
      %v303 = vld [vmem:[%s1 + $0xa0] sm:$0xf]
      %v304 = vld [vmem:[%s1 + $0xa4] sm:$0xf]
      %v305 = vld [vmem:[%s1 + $0xa8] sm:$0xf]
      %v306 = vld [vmem:[%s1 + $0xac] sm:$0xf]
      %v307 = vld [vmem:[%s1 + $0xb0] sm:$0xf]
      %v308 = vld [vmem:[%s1 + $0xb4] sm:$0xf]
      %v309 = vld [vmem:[%s1 + $0xb8] sm:$0xf]
      %v310 = vld [vmem:[%s1 + $0xbc] sm:$0xf]
      %v311 = vld [vmem:[%s1 + $0xc0] sm:$0xf]
      %v312 = vld [vmem:[%s1 + $0xc4] sm:$0xf]
      %v313 = vld [vmem:[%s1 + $0xc8] sm:$0xf]
      %v314 = vld [vmem:[%s1 + $0xcc] sm:$0xf]
      %v315 = vld [vmem:[%s1 + $0xd0] sm:$0xf]
      %v316 = vld [vmem:[%s1 + $0xd4] sm:$0xf]
      %v317 = vld [vmem:[%s1 + $0xd8] sm:$0xf]
      %v318 = vld [vmem:[%s1 + $0xdc] sm:$0xf]
      %v319 = vld [vmem:[%s1 + $0xe0] sm:$0xf]
      %v320 = vld [vmem:[%s1 + $0xe4] sm:$0xf]
      %v321 = vld [vmem:[%s1 + $0xe8] sm:$0xf]
      %v322 = vld [vmem:[%s1 + $0xec] sm:$0xf]
      %v323 = vld [vmem:[%s1 + $0xf0] sm:$0xf]
      %v324 = vld [vmem:[%s1 + $0xf4] sm:$0xf]
      %v325 = vld [vmem:[%s1 + $0xf8] sm:$0xf]
      %v326 = vld [vmem:[%s1 + $0xfc] sm:$0xf]
      %v327 = vld [vmem:[%s1 + $0x100] sm:$0xf]
      %v328 = vld [vmem:[%s1 + $0x104] sm:$0xf]
      %v329 = vld [vmem:[%s1 + $0x108] sm:$0xf]
      %v330 = vld [vmem:[%s1 + $0x10c] sm:$0xf]
      %v331 = vld [vmem:[%s1 + $0x110] sm:$0xf]
      %v332 = vld [vmem:[%s1 + $0x114] sm:$0xf]
      %v333 = vld [vmem:[%s1 + $0x118] sm:$0xf]
      %v334 = vld [vmem:[%s1 + $0x11c] sm:$0xf]
      %v335 = vld [vmem:[%s1 + $0x120] sm:$0xf]
      %v336 = vld [vmem:[%s1 + $0x124] sm:$0xf]
      %v337 = vld [vmem:[%s1 + $0x128] sm:$0xf]
      %v338 = vld [vmem:[%s1 + $0x12c] sm:$0xf]
      %v339 = vld [vmem:[%s1 + $0x130] sm:$0xf]
      %v340 = vld [vmem:[%s1 + $0x134] sm:$0xf]
      %v341 = vld [vmem:[%s1 + $0x138] sm:$0xf]
      %v342 = vld [vmem:[%s1 + $0x13c] sm:$0xf]
      %v343 = vld [vmem:[%s1 + $0x140] sm:$0xf]
      %v344 = vld [vmem:[%s1 + $0x144] sm:$0xf]
      %v345 = vld [vmem:[%s1 + $0x148] sm:$0xf]
      %v346 = vld [vmem:[%s1 + $0x14c] sm:$0xf]
      %v347 = vld [vmem:[%s1 + $0x150] sm:$0xf]
      %v348 = vld [vmem:[%s1 + $0x154] sm:$0xf]
      %v349 = vld [vmem:[%s1 + $0x158] sm:$0xf]
      %v350 = vld [vmem:[%s1 + $0x15c] sm:$0xf]
      %v351 = vld [vmem:[%s1 + $0x160] sm:$0xf]
      %v352 = vld [vmem:[%s1 + $0x164] sm:$0xf]
      %v353 = vld [vmem:[%s1 + $0x168] sm:$0xf]
      %v354 = vld [vmem:[%s1 + $0x16c] sm:$0xf]
      %v355 = vld [vmem:[%s1 + $0x170] sm:$0xf]
      %v356 = vld [vmem:[%s1 + $0x174] sm:$0xf]
      %v357 = vld [vmem:[%s1 + $0x178] sm:$0xf]
      %v358 = vld [vmem:[%s1 + $0x17c] sm:$0xf]
      %v359 = vld [vmem:[%s1 + $0x180] sm:$0xf]
      %v360 = vld [vmem:[%s1 + $0x184] sm:$0xf]
      %v361 = vld [vmem:[%s1 + $0x188] sm:$0xf]
      %v362 = vld [vmem:[%s1 + $0x18c] sm:$0xf]
      %v363 = vld [vmem:[%s1 + $0x190] sm:$0xf]
      %v364 = vld [vmem:[%s1 + $0x194] sm:$0xf]
      %v365 = vld [vmem:[%s1 + $0x198] sm:$0xf]
      %v366 = vld [vmem:[%s1 + $0x19c] sm:$0xf]
      %v367 = vld [vmem:[%s1 + $0x1a0] sm:$0xf]
      %v368 = vld [vmem:[%s1 + $0x1a4] sm:$0xf]
      %v369 = vld [vmem:[%s1 + $0x1a8] sm:$0xf]
      %v370 = vld [vmem:[%s1 + $0x1ac] sm:$0xf]
      %v371 = vld [vmem:[%s1 + $0x1b0] sm:$0xf]
      %v372 = vld [vmem:[%s1 + $0x1b4] sm:$0xf]
      %v373 = vld [vmem:[%s1 + $0x1b8] sm:$0xf]
      %v374 = vld [vmem:[%s1 + $0x1bc] sm:$0xf]
      %v375 = vld [vmem:[%s1 + $0x1c0] sm:$0xf]
      %v376 = vld [vmem:[%s1 + $0x1c4] sm:$0xf]
      %v377 = vld [vmem:[%s1 + $0x1c8] sm:$0xf]
      %v378 = vld [vmem:[%s1 + $0x1cc] sm:$0xf]
      %v379 = vld [vmem:[%s1 + $0x1d0] sm:$0xf]
      %v380 = vld [vmem:[%s1 + $0x1d4] sm:$0xf]
      %v381 = vld [vmem:[%s1 + $0x1d8] sm:$0xf]
      %v382 = vld [vmem:[%s1 + $0x1dc] sm:$0xf]
      %v383 = vld [vmem:[%s1 + $0x1e0] sm:$0xf]
      %v384 = vld [vmem:[%s1 + $0x1e4] sm:$0xf]
      %v385 = vld [vmem:[%s1 + $0x1e8] sm:$0xf]
      %v386 = vld [vmem:[%s1 + $0x1ec] sm:$0xf]
      %v387 = vld [vmem:[%s1 + $0x1f0] sm:$0xf]
      %v388 = vld [vmem:[%s1 + $0x1f4] sm:$0xf]
      %v389 = vld [vmem:[%s1 + $0x1f8] sm:$0xf]
      %v390 = vld [vmem:[%s1 + $0x1fc] sm:$0xf]
      %v392 = vperm.slane %v258, 0
      %v398 = vunpack.c.l.b16 %v259
      %v399 = vunpack.c.h.b16 %v259
      %v400 = vunpack.c.l.b16 %v260
      %v401 = vunpack.c.h.b16 %v260
      %v402 = vunpack.c.l.b16 %v261
      %v403 = vunpack.c.h.b16 %v261
      %v404 = vunpack.c.l.b16 %v262
      %v405 = vunpack.c.h.b16 %v262
      %v406 = vpack.c.b16 %v398, %v398
      %v407 = vpack.c.b16 %v399, %v399
      %v408 = vpack.c.b16 %v400, %v400
      %v409 = vpack.c.b16 %v401, %v401
      %v410 = vpack.c.b16 %v402, %v402
      %v411 = vpack.c.b16 %v403, %v403
      %v412 = vpack.c.b16 %v404, %v404
      %v413 = vpack.c.b16 %v405, %v405
      %v550 = vunpack.c.l.b16 %v263
      %v551 = vunpack.c.l.b16 %v264
      %v552 = vunpack.c.l.b16 %v265
      %v553 = vunpack.c.l.b16 %v266
      %v554 = vunpack.c.l.b16 %v267
      %v555 = vunpack.c.l.b16 %v268
      %v556 = vunpack.c.l.b16 %v269
      %v557 = vunpack.c.l.b16 %v270
      %v558 = vunpack.c.l.b16 %v271
      %v559 = vunpack.c.l.b16 %v272
      %v560 = vunpack.c.l.b16 %v273
      %v561 = vunpack.c.l.b16 %v274
      %v562 = vunpack.c.l.b16 %v275
      %v563 = vunpack.c.l.b16 %v276
      %v564 = vunpack.c.l.b16 %v277
      %v565 = vunpack.c.l.b16 %v278
      %v566 = vunpack.c.l.b16 %v279
      %v567 = vunpack.c.l.b16 %v280
      %v568 = vunpack.c.l.b16 %v281
      %v569 = vunpack.c.l.b16 %v282
      %v570 = vunpack.c.l.b16 %v283
      %v571 = vunpack.c.l.b16 %v284
      %v572 = vunpack.c.l.b16 %v285
      %v573 = vunpack.c.l.b16 %v286
      %v574 = vunpack.c.l.b16 %v287
      %v575 = vunpack.c.l.b16 %v288
      %v576 = vunpack.c.l.b16 %v289
      %v577 = vunpack.c.l.b16 %v290
      %v578 = vunpack.c.l.b16 %v291
      %v579 = vunpack.c.l.b16 %v292
      %v580 = vunpack.c.l.b16 %v293
      %v581 = vunpack.c.l.b16 %v294
      %v582 = vunpack.c.l.b16 %v295
      %v583 = vunpack.c.l.b16 %v296
      %v584 = vunpack.c.l.b16 %v297
      %v585 = vunpack.c.l.b16 %v298
      %v586 = vunpack.c.l.b16 %v299
      %v587 = vunpack.c.l.b16 %v300
      %v588 = vunpack.c.l.b16 %v301
      %v589 = vunpack.c.l.b16 %v302
      %v590 = vunpack.c.l.b16 %v303
      %v591 = vunpack.c.l.b16 %v304
      %v592 = vunpack.c.l.b16 %v305
      %v593 = vunpack.c.l.b16 %v306
      %v594 = vunpack.c.l.b16 %v307
      %v595 = vunpack.c.l.b16 %v308
      %v596 = vunpack.c.l.b16 %v309
      %v597 = vunpack.c.l.b16 %v310
      %v598 = vunpack.c.l.b16 %v311
      %v599 = vunpack.c.l.b16 %v312
      %v600 = vunpack.c.l.b16 %v313
      %v601 = vunpack.c.l.b16 %v314
      %v602 = vunpack.c.l.b16 %v315
      %v603 = vunpack.c.l.b16 %v316
      %v604 = vunpack.c.l.b16 %v317
      %v605 = vunpack.c.l.b16 %v318
      %v606 = vunpack.c.l.b16 %v319
      %v607 = vunpack.c.l.b16 %v320
      %v608 = vunpack.c.l.b16 %v321
      %v609 = vunpack.c.l.b16 %v322
      %v610 = vunpack.c.l.b16 %v323
      %v611 = vunpack.c.l.b16 %v324
      %v612 = vunpack.c.l.b16 %v325
      %v613 = vunpack.c.l.b16 %v326
      %v614 = vunpack.c.l.b16 %v327
      %v615 = vunpack.c.l.b16 %v328
      %v616 = vunpack.c.l.b16 %v329
      %v617 = vunpack.c.l.b16 %v330
      %v618 = vunpack.c.l.b16 %v331
      %v619 = vunpack.c.l.b16 %v332
      %v620 = vunpack.c.l.b16 %v333
      %v621 = vunpack.c.l.b16 %v334
      %v622 = vunpack.c.l.b16 %v335
      %v623 = vunpack.c.l.b16 %v336
      %v624 = vunpack.c.l.b16 %v337
      %v625 = vunpack.c.l.b16 %v338
      %v626 = vunpack.c.l.b16 %v339
      %v627 = vunpack.c.l.b16 %v340
      %v628 = vunpack.c.l.b16 %v341
      %v629 = vunpack.c.l.b16 %v342
      %v630 = vunpack.c.l.b16 %v343
      %v631 = vunpack.c.l.b16 %v344
      %v632 = vunpack.c.l.b16 %v345
      %v633 = vunpack.c.l.b16 %v346
      %v634 = vunpack.c.l.b16 %v347
      %v635 = vunpack.c.l.b16 %v348
      %v636 = vunpack.c.l.b16 %v349
      %v637 = vunpack.c.l.b16 %v350
      %v638 = vunpack.c.l.b16 %v351
      %v639 = vunpack.c.l.b16 %v352
      %v640 = vunpack.c.l.b16 %v353
      %v641 = vunpack.c.l.b16 %v354
      %v642 = vunpack.c.l.b16 %v355
      %v643 = vunpack.c.l.b16 %v356
      %v644 = vunpack.c.l.b16 %v357
      %v645 = vunpack.c.l.b16 %v358
      %v646 = vunpack.c.l.b16 %v359
      %v647 = vunpack.c.l.b16 %v360
      %v648 = vunpack.c.l.b16 %v361
      %v649 = vunpack.c.l.b16 %v362
      %v650 = vunpack.c.l.b16 %v363
      %v651 = vunpack.c.l.b16 %v364
      %v652 = vunpack.c.l.b16 %v365
      %v653 = vunpack.c.l.b16 %v366
      %v654 = vunpack.c.l.b16 %v367
      %v655 = vunpack.c.l.b16 %v368
      %v656 = vunpack.c.l.b16 %v369
      %v657 = vunpack.c.l.b16 %v370
      %v658 = vunpack.c.l.b16 %v371
      %v659 = vunpack.c.l.b16 %v372
      %v660 = vunpack.c.l.b16 %v373
      %v661 = vunpack.c.l.b16 %v374
      %v662 = vunpack.c.l.b16 %v375
      %v663 = vunpack.c.l.b16 %v376
      %v664 = vunpack.c.l.b16 %v377
      %v665 = vunpack.c.l.b16 %v378
      %v666 = vunpack.c.l.b16 %v379
      %v667 = vunpack.c.l.b16 %v380
      %v668 = vunpack.c.l.b16 %v381
      %v669 = vunpack.c.l.b16 %v382
      %v670 = vunpack.c.l.b16 %v383
      %v671 = vunpack.c.l.b16 %v384
      %v672 = vunpack.c.l.b16 %v385
      %v673 = vunpack.c.l.b16 %v386
      %v674 = vunpack.c.l.b16 %v387
      %v675 = vunpack.c.l.b16 %v388
      %v676 = vunpack.c.l.b16 %v389
      %v677 = vunpack.c.l.b16 %v390
      %v678 = vpack.c.b16 %v551, %v550
      %v679 = vpack.c.b16 %v553, %v552
      %v680 = vpack.c.b16 %v555, %v554
      %v681 = vpack.c.b16 %v557, %v556
      %v682 = vpack.c.b16 %v559, %v558
      %v683 = vpack.c.b16 %v561, %v560
      %v684 = vpack.c.b16 %v563, %v562
      %v685 = vpack.c.b16 %v565, %v564
      %v686 = vpack.c.b16 %v567, %v566
      %v687 = vpack.c.b16 %v569, %v568
      %v688 = vpack.c.b16 %v571, %v570
      %v689 = vpack.c.b16 %v573, %v572
      %v690 = vpack.c.b16 %v575, %v574
      %v691 = vpack.c.b16 %v577, %v576
      %v692 = vpack.c.b16 %v579, %v578
      %v693 = vpack.c.b16 %v581, %v580
      %v694 = vpack.c.b16 %v583, %v582
      %v695 = vpack.c.b16 %v585, %v584
      %v696 = vpack.c.b16 %v587, %v586
      %v697 = vpack.c.b16 %v589, %v588
      %v698 = vpack.c.b16 %v591, %v590
      %v699 = vpack.c.b16 %v593, %v592
      %v700 = vpack.c.b16 %v595, %v594
      %v701 = vpack.c.b16 %v597, %v596
      %v702 = vpack.c.b16 %v599, %v598
      %v703 = vpack.c.b16 %v601, %v600
      %v704 = vpack.c.b16 %v603, %v602
      %v705 = vpack.c.b16 %v605, %v604
      %v706 = vpack.c.b16 %v607, %v606
      %v707 = vpack.c.b16 %v609, %v608
      %v708 = vpack.c.b16 %v611, %v610
      %v709 = vpack.c.b16 %v613, %v612
      %v710 = vpack.c.b16 %v615, %v614
      %v711 = vpack.c.b16 %v617, %v616
      %v712 = vpack.c.b16 %v619, %v618
      %v713 = vpack.c.b16 %v621, %v620
      %v714 = vpack.c.b16 %v623, %v622
      %v715 = vpack.c.b16 %v625, %v624
      %v716 = vpack.c.b16 %v627, %v626
      %v717 = vpack.c.b16 %v629, %v628
      %v718 = vpack.c.b16 %v631, %v630
      %v719 = vpack.c.b16 %v633, %v632
      %v720 = vpack.c.b16 %v635, %v634
      %v721 = vpack.c.b16 %v637, %v636
      %v722 = vpack.c.b16 %v639, %v638
      %v723 = vpack.c.b16 %v641, %v640
      %v724 = vpack.c.b16 %v643, %v642
      %v725 = vpack.c.b16 %v645, %v644
      %v726 = vpack.c.b16 %v647, %v646
      %v727 = vpack.c.b16 %v649, %v648
      %v728 = vpack.c.b16 %v651, %v650
      %v729 = vpack.c.b16 %v653, %v652
      %v730 = vpack.c.b16 %v655, %v654
      %v731 = vpack.c.b16 %v657, %v656
      %v732 = vpack.c.b16 %v659, %v658
      %v733 = vpack.c.b16 %v661, %v660
      %v734 = vpack.c.b16 %v663, %v662
      %v735 = vpack.c.b16 %v665, %v664
      %v736 = vpack.c.b16 %v667, %v666
      %v737 = vpack.c.b16 %v669, %v668
      %v738 = vpack.c.b16 %v671, %v670
      %v739 = vpack.c.b16 %v673, %v672
      %v740 = vpack.c.b16 %v675, %v674
      %v741 = vpack.c.b16 %v677, %v676
      %806 = vmatpush.bf16.msra.mxu0 %v685
      %807 = vmatpush.bf16.msra.mxu0 %v684
      %808 = vmatpush.bf16.msra.mxu0 %v683
      %809 = vmatpush.bf16.msra.mxu0 %v682
      %810 = vmatpush.bf16.msra.mxu0 %v681
      %811 = vmatpush.bf16.msra.mxu0 %v680
      %812 = vmatpush.bf16.msra.mxu0 %v679
      %813 = vmatpush.bf16.msra.mxu0 %v678
      %814 = vmatmul.bf16.gmra.mxu0 %v406
      %v815 = vpop.f32.mrf.mxu0
      %v816 = vadd.f32 %v392, %v815
      %v817 = vpop.f32.mrf.mxu0
      %818 = vdwg.mxu0
      %819 = vmatpush.bf16.msra.mxu0 %v693
      %820 = vmatpush.bf16.msra.mxu0 %v692
      %821 = vmatpush.bf16.msra.mxu0 %v691
      %822 = vmatpush.bf16.msra.mxu0 %v690
      %823 = vmatpush.bf16.msra.mxu0 %v689
      %824 = vmatpush.bf16.msra.mxu0 %v688
      %825 = vmatpush.bf16.msra.mxu0 %v687
      %826 = vmatpush.bf16.msra.mxu0 %v686
      %827 = vmatmul.bf16.gmra.mxu0 %v407
      %v828 = vpop.f32.mrf.mxu0
      %v829 = vadd.f32 %v816, %v828
      %v830 = vpop.f32.mrf.mxu0
      %831 = vdwg.mxu0
      %832 = vmatpush.bf16.msra.mxu0 %v701
      %833 = vmatpush.bf16.msra.mxu0 %v700
      %834 = vmatpush.bf16.msra.mxu0 %v699
      %835 = vmatpush.bf16.msra.mxu0 %v698
      %836 = vmatpush.bf16.msra.mxu0 %v697
      %837 = vmatpush.bf16.msra.mxu0 %v696
      %838 = vmatpush.bf16.msra.mxu0 %v695
      %839 = vmatpush.bf16.msra.mxu0 %v694
      %840 = vmatmul.bf16.gmra.mxu0 %v408
      %v841 = vpop.f32.mrf.mxu0
      %v842 = vadd.f32 %v829, %v841
      %v843 = vpop.f32.mrf.mxu0
      %844 = vdwg.mxu0
      %845 = vmatpush.bf16.msra.mxu0 %v709
      %846 = vmatpush.bf16.msra.mxu0 %v708
      %847 = vmatpush.bf16.msra.mxu0 %v707
      %848 = vmatpush.bf16.msra.mxu0 %v706
      %849 = vmatpush.bf16.msra.mxu0 %v705
      %850 = vmatpush.bf16.msra.mxu0 %v704
      %851 = vmatpush.bf16.msra.mxu0 %v703
      %852 = vmatpush.bf16.msra.mxu0 %v702
      %853 = vmatmul.bf16.gmra.mxu0 %v409
      %v854 = vpop.f32.mrf.mxu0
      %v855 = vadd.f32 %v842, %v854
      %v856 = vpop.f32.mrf.mxu0
      %857 = vdwg.mxu0
      %858 = vmatpush.bf16.msra.mxu0 %v717
      %859 = vmatpush.bf16.msra.mxu0 %v716
      %860 = vmatpush.bf16.msra.mxu0 %v715
      %861 = vmatpush.bf16.msra.mxu0 %v714
      %862 = vmatpush.bf16.msra.mxu0 %v713
      %863 = vmatpush.bf16.msra.mxu0 %v712
      %864 = vmatpush.bf16.msra.mxu0 %v711
      %865 = vmatpush.bf16.msra.mxu0 %v710
      %866 = vmatmul.bf16.gmra.mxu0 %v410
      %v867 = vpop.f32.mrf.mxu0
      %v868 = vadd.f32 %v855, %v867
      %v869 = vpop.f32.mrf.mxu0
      %870 = vdwg.mxu0
      %871 = vmatpush.bf16.msra.mxu0 %v725
      %872 = vmatpush.bf16.msra.mxu0 %v724
      %873 = vmatpush.bf16.msra.mxu0 %v723
      %874 = vmatpush.bf16.msra.mxu0 %v722
      %875 = vmatpush.bf16.msra.mxu0 %v721
      %876 = vmatpush.bf16.msra.mxu0 %v720
      %877 = vmatpush.bf16.msra.mxu0 %v719
      %878 = vmatpush.bf16.msra.mxu0 %v718
      %879 = vmatmul.bf16.gmra.mxu0 %v411
      %v880 = vpop.f32.mrf.mxu0
      %v881 = vadd.f32 %v868, %v880
      %v882 = vpop.f32.mrf.mxu0
      %883 = vdwg.mxu0
      %884 = vmatpush.bf16.msra.mxu0 %v733
      %885 = vmatpush.bf16.msra.mxu0 %v732
      %886 = vmatpush.bf16.msra.mxu0 %v731
      %887 = vmatpush.bf16.msra.mxu0 %v730
      %888 = vmatpush.bf16.msra.mxu0 %v729
      %889 = vmatpush.bf16.msra.mxu0 %v728
      %890 = vmatpush.bf16.msra.mxu0 %v727
      %891 = vmatpush.bf16.msra.mxu0 %v726
      %892 = vmatmul.bf16.gmra.mxu0 %v412
      %v893 = vpop.f32.mrf.mxu0
      %v894 = vadd.f32 %v881, %v893
      %v895 = vpop.f32.mrf.mxu0
      %896 = vdwg.mxu0
      %897 = vmatpush.bf16.msra.mxu0 %v741
      %898 = vmatpush.bf16.msra.mxu0 %v740
      %899 = vmatpush.bf16.msra.mxu0 %v739
      %900 = vmatpush.bf16.msra.mxu0 %v738
      %901 = vmatpush.bf16.msra.mxu0 %v737
      %902 = vmatpush.bf16.msra.mxu0 %v736
      %903 = vmatpush.bf16.msra.mxu0 %v735
      %904 = vmatpush.bf16.msra.mxu0 %v734
      %905 = vmatmul.bf16.gmra.mxu0 %v413
      %v906 = vpop.f32.mrf.mxu0
      %v907 = vadd.f32 %v894, %v906
      %v908 = vpop.f32.mrf.mxu0
      %909 = vdwg.mxu0
      %v910 = vmax.f32 %v907, 0.0
      %s911 = scalar_lea.vmem %s1, 512
      %v912 = vld [vmem:[%s911] sm:$0xf]
      %v913 = vld [vmem:[%s911 + $0x4] sm:$0xf]
      %v914 = vld [vmem:[%s911 + $0x8] sm:$0xf]
      %v915 = vld [vmem:[%s911 + $0xc] sm:$0xf]
      %v916 = vld [vmem:[%s911 + $0x10] sm:$0xf]
      %v917 = vld [vmem:[%s911 + $0x14] sm:$0xf]
      %v918 = vld [vmem:[%s911 + $0x18] sm:$0xf]
      %v919 = vld [vmem:[%s911 + $0x1c] sm:$0xf]
      %v920 = vld [vmem:[%s911 + $0x20] sm:$0xf]
      %v921 = vld [vmem:[%s911 + $0x24] sm:$0xf]
      %v922 = vld [vmem:[%s911 + $0x28] sm:$0xf]
      %v923 = vld [vmem:[%s911 + $0x2c] sm:$0xf]
      %v924 = vld [vmem:[%s911 + $0x30] sm:$0xf]
      %v925 = vld [vmem:[%s911 + $0x34] sm:$0xf]
      %v926 = vld [vmem:[%s911 + $0x38] sm:$0xf]
      %v927 = vld [vmem:[%s911 + $0x3c] sm:$0xf]
      %v928 = vld [vmem:[%s911 + $0x40] sm:$0xf]
      %v929 = vld [vmem:[%s911 + $0x44] sm:$0xf]
      %v930 = vld [vmem:[%s911 + $0x48] sm:$0xf]
      %v931 = vld [vmem:[%s911 + $0x4c] sm:$0xf]
      %v932 = vld [vmem:[%s911 + $0x50] sm:$0xf]
      %v933 = vld [vmem:[%s911 + $0x54] sm:$0xf]
      %v934 = vld [vmem:[%s911 + $0x58] sm:$0xf]
      %v935 = vld [vmem:[%s911 + $0x5c] sm:$0xf]
      %v936 = vld [vmem:[%s911 + $0x60] sm:$0xf]
      %v937 = vld [vmem:[%s911 + $0x64] sm:$0xf]
      %v938 = vld [vmem:[%s911 + $0x68] sm:$0xf]
      %v939 = vld [vmem:[%s911 + $0x6c] sm:$0xf]
      %v940 = vld [vmem:[%s911 + $0x70] sm:$0xf]
      %v941 = vld [vmem:[%s911 + $0x74] sm:$0xf]
      %v942 = vld [vmem:[%s911 + $0x78] sm:$0xf]
      %v943 = vld [vmem:[%s911 + $0x7c] sm:$0xf]
      %v944 = vld [vmem:[%s911 + $0x80] sm:$0xf]
      %v945 = vld [vmem:[%s911 + $0x84] sm:$0xf]
      %v946 = vld [vmem:[%s911 + $0x88] sm:$0xf]
      %v947 = vld [vmem:[%s911 + $0x8c] sm:$0xf]
      %v948 = vld [vmem:[%s911 + $0x90] sm:$0xf]
      %v949 = vld [vmem:[%s911 + $0x94] sm:$0xf]
      %v950 = vld [vmem:[%s911 + $0x98] sm:$0xf]
      %v951 = vld [vmem:[%s911 + $0x9c] sm:$0xf]
      %v952 = vld [vmem:[%s911 + $0xa0] sm:$0xf]
      %v953 = vld [vmem:[%s911 + $0xa4] sm:$0xf]
      %v954 = vld [vmem:[%s911 + $0xa8] sm:$0xf]
      %v955 = vld [vmem:[%s911 + $0xac] sm:$0xf]
      %v956 = vld [vmem:[%s911 + $0xb0] sm:$0xf]
      %v957 = vld [vmem:[%s911 + $0xb4] sm:$0xf]
      %v958 = vld [vmem:[%s911 + $0xb8] sm:$0xf]
      %v959 = vld [vmem:[%s911 + $0xbc] sm:$0xf]
      %v960 = vld [vmem:[%s911 + $0xc0] sm:$0xf]
      %v961 = vld [vmem:[%s911 + $0xc4] sm:$0xf]
      %v962 = vld [vmem:[%s911 + $0xc8] sm:$0xf]
      %v963 = vld [vmem:[%s911 + $0xcc] sm:$0xf]
      %v964 = vld [vmem:[%s911 + $0xd0] sm:$0xf]
      %v965 = vld [vmem:[%s911 + $0xd4] sm:$0xf]
      %v966 = vld [vmem:[%s911 + $0xd8] sm:$0xf]
      %v967 = vld [vmem:[%s911 + $0xdc] sm:$0xf]
      %v968 = vld [vmem:[%s911 + $0xe0] sm:$0xf]
      %v969 = vld [vmem:[%s911 + $0xe4] sm:$0xf]
      %v970 = vld [vmem:[%s911 + $0xe8] sm:$0xf]
      %v971 = vld [vmem:[%s911 + $0xec] sm:$0xf]
      %v972 = vld [vmem:[%s911 + $0xf0] sm:$0xf]
      %v973 = vld [vmem:[%s911 + $0xf4] sm:$0xf]
      %v974 = vld [vmem:[%s911 + $0xf8] sm:$0xf]
      %v975 = vld [vmem:[%s911 + $0xfc] sm:$0xf]
      %v976 = vld [vmem:[%s911 + $0x100] sm:$0xf]
      %v977 = vld [vmem:[%s911 + $0x104] sm:$0xf]
      %v978 = vld [vmem:[%s911 + $0x108] sm:$0xf]
      %v979 = vld [vmem:[%s911 + $0x10c] sm:$0xf]
      %v980 = vld [vmem:[%s911 + $0x110] sm:$0xf]
      %v981 = vld [vmem:[%s911 + $0x114] sm:$0xf]
      %v982 = vld [vmem:[%s911 + $0x118] sm:$0xf]
      %v983 = vld [vmem:[%s911 + $0x11c] sm:$0xf]
      %v984 = vld [vmem:[%s911 + $0x120] sm:$0xf]
      %v985 = vld [vmem:[%s911 + $0x124] sm:$0xf]
      %v986 = vld [vmem:[%s911 + $0x128] sm:$0xf]
      %v987 = vld [vmem:[%s911 + $0x12c] sm:$0xf]
      %v988 = vld [vmem:[%s911 + $0x130] sm:$0xf]
      %v989 = vld [vmem:[%s911 + $0x134] sm:$0xf]
      %v990 = vld [vmem:[%s911 + $0x138] sm:$0xf]
      %v991 = vld [vmem:[%s911 + $0x13c] sm:$0xf]
      %v992 = vld [vmem:[%s911 + $0x140] sm:$0xf]
      %v993 = vld [vmem:[%s911 + $0x144] sm:$0xf]
      %v994 = vld [vmem:[%s911 + $0x148] sm:$0xf]
      %v995 = vld [vmem:[%s911 + $0x14c] sm:$0xf]
      %v996 = vld [vmem:[%s911 + $0x150] sm:$0xf]
      %v997 = vld [vmem:[%s911 + $0x154] sm:$0xf]
      %v998 = vld [vmem:[%s911 + $0x158] sm:$0xf]
      %v999 = vld [vmem:[%s911 + $0x15c] sm:$0xf]
      %v1000 = vld [vmem:[%s911 + $0x160] sm:$0xf]
      %v1001 = vld [vmem:[%s911 + $0x164] sm:$0xf]
      %v1002 = vld [vmem:[%s911 + $0x168] sm:$0xf]
      %v1003 = vld [vmem:[%s911 + $0x16c] sm:$0xf]
      %v1004 = vld [vmem:[%s911 + $0x170] sm:$0xf]
      %v1005 = vld [vmem:[%s911 + $0x174] sm:$0xf]
      %v1006 = vld [vmem:[%s911 + $0x178] sm:$0xf]
      %v1007 = vld [vmem:[%s911 + $0x17c] sm:$0xf]
      %v1008 = vld [vmem:[%s911 + $0x180] sm:$0xf]
      %v1009 = vld [vmem:[%s911 + $0x184] sm:$0xf]
      %v1010 = vld [vmem:[%s911 + $0x188] sm:$0xf]
      %v1011 = vld [vmem:[%s911 + $0x18c] sm:$0xf]
      %v1012 = vld [vmem:[%s911 + $0x190] sm:$0xf]
      %v1013 = vld [vmem:[%s911 + $0x194] sm:$0xf]
      %v1014 = vld [vmem:[%s911 + $0x198] sm:$0xf]
      %v1015 = vld [vmem:[%s911 + $0x19c] sm:$0xf]
      %v1016 = vld [vmem:[%s911 + $0x1a0] sm:$0xf]
      %v1017 = vld [vmem:[%s911 + $0x1a4] sm:$0xf]
      %v1018 = vld [vmem:[%s911 + $0x1a8] sm:$0xf]
      %v1019 = vld [vmem:[%s911 + $0x1ac] sm:$0xf]
      %v1020 = vld [vmem:[%s911 + $0x1b0] sm:$0xf]
      %v1021 = vld [vmem:[%s911 + $0x1b4] sm:$0xf]
      %v1022 = vld [vmem:[%s911 + $0x1b8] sm:$0xf]
      %v1023 = vld [vmem:[%s911 + $0x1bc] sm:$0xf]
      %v1024 = vld [vmem:[%s911 + $0x1c0] sm:$0xf]
      %v1025 = vld [vmem:[%s911 + $0x1c4] sm:$0xf]
      %v1026 = vld [vmem:[%s911 + $0x1c8] sm:$0xf]
      %v1027 = vld [vmem:[%s911 + $0x1cc] sm:$0xf]
      %v1028 = vld [vmem:[%s911 + $0x1d0] sm:$0xf]
      %v1029 = vld [vmem:[%s911 + $0x1d4] sm:$0xf]
      %v1030 = vld [vmem:[%s911 + $0x1d8] sm:$0xf]
      %v1031 = vld [vmem:[%s911 + $0x1dc] sm:$0xf]
      %v1032 = vld [vmem:[%s911 + $0x1e0] sm:$0xf]
      %v1033 = vld [vmem:[%s911 + $0x1e4] sm:$0xf]
      %v1034 = vld [vmem:[%s911 + $0x1e8] sm:$0xf]
      %v1035 = vld [vmem:[%s911 + $0x1ec] sm:$0xf]
      %v1036 = vld [vmem:[%s911 + $0x1f0] sm:$0xf]
      %v1037 = vld [vmem:[%s911 + $0x1f4] sm:$0xf]
      %v1038 = vld [vmem:[%s911 + $0x1f8] sm:$0xf]
      %v1039 = vld [vmem:[%s911 + $0x1fc] sm:$0xf]
      %v1168 = vunpack.c.l.b16 %v912
      %v1169 = vunpack.c.l.b16 %v913
      %v1170 = vunpack.c.l.b16 %v914
      %v1171 = vunpack.c.l.b16 %v915
      %v1172 = vunpack.c.l.b16 %v916
      %v1173 = vunpack.c.l.b16 %v917
      %v1174 = vunpack.c.l.b16 %v918
      %v1175 = vunpack.c.l.b16 %v919
      %v1176 = vunpack.c.l.b16 %v920
      %v1177 = vunpack.c.l.b16 %v921
      %v1178 = vunpack.c.l.b16 %v922
      %v1179 = vunpack.c.l.b16 %v923
      %v1180 = vunpack.c.l.b16 %v924
      %v1181 = vunpack.c.l.b16 %v925
      %v1182 = vunpack.c.l.b16 %v926
      %v1183 = vunpack.c.l.b16 %v927
      %v1184 = vunpack.c.l.b16 %v928
      %v1185 = vunpack.c.l.b16 %v929
      %v1186 = vunpack.c.l.b16 %v930
      %v1187 = vunpack.c.l.b16 %v931
      %v1188 = vunpack.c.l.b16 %v932
      %v1189 = vunpack.c.l.b16 %v933
      %v1190 = vunpack.c.l.b16 %v934
      %v1191 = vunpack.c.l.b16 %v935
      %v1192 = vunpack.c.l.b16 %v936
      %v1193 = vunpack.c.l.b16 %v937
      %v1194 = vunpack.c.l.b16 %v938
      %v1195 = vunpack.c.l.b16 %v939
      %v1196 = vunpack.c.l.b16 %v940
      %v1197 = vunpack.c.l.b16 %v941
      %v1198 = vunpack.c.l.b16 %v942
      %v1199 = vunpack.c.l.b16 %v943
      %v1200 = vunpack.c.l.b16 %v944
      %v1201 = vunpack.c.l.b16 %v945
      %v1202 = vunpack.c.l.b16 %v946
      %v1203 = vunpack.c.l.b16 %v947
      %v1204 = vunpack.c.l.b16 %v948
      %v1205 = vunpack.c.l.b16 %v949
      %v1206 = vunpack.c.l.b16 %v950
      %v1207 = vunpack.c.l.b16 %v951
      %v1208 = vunpack.c.l.b16 %v952
      %v1209 = vunpack.c.l.b16 %v953
      %v1210 = vunpack.c.l.b16 %v954
      %v1211 = vunpack.c.l.b16 %v955
      %v1212 = vunpack.c.l.b16 %v956
      %v1213 = vunpack.c.l.b16 %v957
      %v1214 = vunpack.c.l.b16 %v958
      %v1215 = vunpack.c.l.b16 %v959
      %v1216 = vunpack.c.l.b16 %v960
      %v1217 = vunpack.c.l.b16 %v961
      %v1218 = vunpack.c.l.b16 %v962
      %v1219 = vunpack.c.l.b16 %v963
      %v1220 = vunpack.c.l.b16 %v964
      %v1221 = vunpack.c.l.b16 %v965
      %v1222 = vunpack.c.l.b16 %v966
      %v1223 = vunpack.c.l.b16 %v967
      %v1224 = vunpack.c.l.b16 %v968
      %v1225 = vunpack.c.l.b16 %v969
      %v1226 = vunpack.c.l.b16 %v970
      %v1227 = vunpack.c.l.b16 %v971
      %v1228 = vunpack.c.l.b16 %v972
      %v1229 = vunpack.c.l.b16 %v973
      %v1230 = vunpack.c.l.b16 %v974
      %v1231 = vunpack.c.l.b16 %v975
      %v1232 = vunpack.c.l.b16 %v976
      %v1233 = vunpack.c.l.b16 %v977
      %v1234 = vunpack.c.l.b16 %v978
      %v1235 = vunpack.c.l.b16 %v979
      %v1236 = vunpack.c.l.b16 %v980
      %v1237 = vunpack.c.l.b16 %v981
      %v1238 = vunpack.c.l.b16 %v982
      %v1239 = vunpack.c.l.b16 %v983
      %v1240 = vunpack.c.l.b16 %v984
      %v1241 = vunpack.c.l.b16 %v985
      %v1242 = vunpack.c.l.b16 %v986
      %v1243 = vunpack.c.l.b16 %v987
      %v1244 = vunpack.c.l.b16 %v988
      %v1245 = vunpack.c.l.b16 %v989
      %v1246 = vunpack.c.l.b16 %v990
      %v1247 = vunpack.c.l.b16 %v991
      %v1248 = vunpack.c.l.b16 %v992
      %v1249 = vunpack.c.l.b16 %v993
      %v1250 = vunpack.c.l.b16 %v994
      %v1251 = vunpack.c.l.b16 %v995
      %v1252 = vunpack.c.l.b16 %v996
      %v1253 = vunpack.c.l.b16 %v997
      %v1254 = vunpack.c.l.b16 %v998
      %v1255 = vunpack.c.l.b16 %v999
      %v1256 = vunpack.c.l.b16 %v1000
      %v1257 = vunpack.c.l.b16 %v1001
      %v1258 = vunpack.c.l.b16 %v1002
      %v1259 = vunpack.c.l.b16 %v1003
      %v1260 = vunpack.c.l.b16 %v1004
      %v1261 = vunpack.c.l.b16 %v1005
      %v1262 = vunpack.c.l.b16 %v1006
      %v1263 = vunpack.c.l.b16 %v1007
      %v1264 = vunpack.c.l.b16 %v1008
      %v1265 = vunpack.c.l.b16 %v1009
      %v1266 = vunpack.c.l.b16 %v1010
      %v1267 = vunpack.c.l.b16 %v1011
      %v1268 = vunpack.c.l.b16 %v1012
      %v1269 = vunpack.c.l.b16 %v1013
      %v1270 = vunpack.c.l.b16 %v1014
      %v1271 = vunpack.c.l.b16 %v1015
      %v1272 = vunpack.c.l.b16 %v1016
      %v1273 = vunpack.c.l.b16 %v1017
      %v1274 = vunpack.c.l.b16 %v1018
      %v1275 = vunpack.c.l.b16 %v1019
      %v1276 = vunpack.c.l.b16 %v1020
      %v1277 = vunpack.c.l.b16 %v1021
      %v1278 = vunpack.c.l.b16 %v1022
      %v1279 = vunpack.c.l.b16 %v1023
      %v1280 = vunpack.c.l.b16 %v1024
      %v1281 = vunpack.c.l.b16 %v1025
      %v1282 = vunpack.c.l.b16 %v1026
      %v1283 = vunpack.c.l.b16 %v1027
      %v1284 = vunpack.c.l.b16 %v1028
      %v1285 = vunpack.c.l.b16 %v1029
      %v1286 = vunpack.c.l.b16 %v1030
      %v1287 = vunpack.c.l.b16 %v1031
      %v1288 = vunpack.c.l.b16 %v1032
      %v1289 = vunpack.c.l.b16 %v1033
      %v1290 = vunpack.c.l.b16 %v1034
      %v1291 = vunpack.c.l.b16 %v1035
      %v1292 = vunpack.c.l.b16 %v1036
      %v1293 = vunpack.c.l.b16 %v1037
      %v1294 = vunpack.c.l.b16 %v1038
      %v1295 = vunpack.c.l.b16 %v1039
      %v1296 = vpack.c.b16 %v1169, %v1168
      %v1297 = vpack.c.b16 %v1171, %v1170
      %v1298 = vpack.c.b16 %v1173, %v1172
      %v1299 = vpack.c.b16 %v1175, %v1174
      %v1300 = vpack.c.b16 %v1177, %v1176
      %v1301 = vpack.c.b16 %v1179, %v1178
      %v1302 = vpack.c.b16 %v1181, %v1180
      %v1303 = vpack.c.b16 %v1183, %v1182
      %v1304 = vpack.c.b16 %v1185, %v1184
      %v1305 = vpack.c.b16 %v1187, %v1186
      %v1306 = vpack.c.b16 %v1189, %v1188
      %v1307 = vpack.c.b16 %v1191, %v1190
      %v1308 = vpack.c.b16 %v1193, %v1192
      %v1309 = vpack.c.b16 %v1195, %v1194
      %v1310 = vpack.c.b16 %v1197, %v1196
      %v1311 = vpack.c.b16 %v1199, %v1198
      %v1312 = vpack.c.b16 %v1201, %v1200
      %v1313 = vpack.c.b16 %v1203, %v1202
      %v1314 = vpack.c.b16 %v1205, %v1204
      %v1315 = vpack.c.b16 %v1207, %v1206
      %v1316 = vpack.c.b16 %v1209, %v1208
      %v1317 = vpack.c.b16 %v1211, %v1210
      %v1318 = vpack.c.b16 %v1213, %v1212
      %v1319 = vpack.c.b16 %v1215, %v1214
      %v1320 = vpack.c.b16 %v1217, %v1216
      %v1321 = vpack.c.b16 %v1219, %v1218
      %v1322 = vpack.c.b16 %v1221, %v1220
      %v1323 = vpack.c.b16 %v1223, %v1222
      %v1324 = vpack.c.b16 %v1225, %v1224
      %v1325 = vpack.c.b16 %v1227, %v1226
      %v1326 = vpack.c.b16 %v1229, %v1228
      %v1327 = vpack.c.b16 %v1231, %v1230
      %v1328 = vpack.c.b16 %v1233, %v1232
      %v1329 = vpack.c.b16 %v1235, %v1234
      %v1330 = vpack.c.b16 %v1237, %v1236
      %v1331 = vpack.c.b16 %v1239, %v1238
      %v1332 = vpack.c.b16 %v1241, %v1240
      %v1333 = vpack.c.b16 %v1243, %v1242
      %v1334 = vpack.c.b16 %v1245, %v1244
      %v1335 = vpack.c.b16 %v1247, %v1246
      %v1336 = vpack.c.b16 %v1249, %v1248
      %v1337 = vpack.c.b16 %v1251, %v1250
      %v1338 = vpack.c.b16 %v1253, %v1252
      %v1339 = vpack.c.b16 %v1255, %v1254
      %v1340 = vpack.c.b16 %v1257, %v1256
      %v1341 = vpack.c.b16 %v1259, %v1258
      %v1342 = vpack.c.b16 %v1261, %v1260
      %v1343 = vpack.c.b16 %v1263, %v1262
      %v1344 = vpack.c.b16 %v1265, %v1264
      %v1345 = vpack.c.b16 %v1267, %v1266
      %v1346 = vpack.c.b16 %v1269, %v1268
      %v1347 = vpack.c.b16 %v1271, %v1270
      %v1348 = vpack.c.b16 %v1273, %v1272
      %v1349 = vpack.c.b16 %v1275, %v1274
      %v1350 = vpack.c.b16 %v1277, %v1276
      %v1351 = vpack.c.b16 %v1279, %v1278
      %v1352 = vpack.c.b16 %v1281, %v1280
      %v1353 = vpack.c.b16 %v1283, %v1282
      %v1354 = vpack.c.b16 %v1285, %v1284
      %v1355 = vpack.c.b16 %v1287, %v1286
      %v1356 = vpack.c.b16 %v1289, %v1288
      %v1357 = vpack.c.b16 %v1291, %v1290
      %v1358 = vpack.c.b16 %v1293, %v1292
      %v1359 = vpack.c.b16 %v1295, %v1294
      %1424 = vmatpush.bf16.msra.mxu0 %v1303
      %1425 = vmatpush.bf16.msra.mxu0 %v1302
      %1426 = vmatpush.bf16.msra.mxu0 %v1301
      %1427 = vmatpush.bf16.msra.mxu0 %v1300
      %1428 = vmatpush.bf16.msra.mxu0 %v1299
      %1429 = vmatpush.bf16.msra.mxu0 %v1298
      %1430 = vmatpush.bf16.msra.mxu0 %v1297
      %1431 = vmatpush.bf16.msra.mxu0 %v1296
      %1432 = vmatmul.bf16.gmra.mxu0 %v406
      %v1433 = vpop.f32.mrf.mxu0
      %v1434 = vadd.f32 %v392, %v1433
      %v1435 = vpop.f32.mrf.mxu0
      %1436 = vdwg.mxu0
      %1437 = vmatpush.bf16.msra.mxu0 %v1311
      %1438 = vmatpush.bf16.msra.mxu0 %v1310
      %1439 = vmatpush.bf16.msra.mxu0 %v1309
      %1440 = vmatpush.bf16.msra.mxu0 %v1308
      %1441 = vmatpush.bf16.msra.mxu0 %v1307
      %1442 = vmatpush.bf16.msra.mxu0 %v1306
      %1443 = vmatpush.bf16.msra.mxu0 %v1305
      %1444 = vmatpush.bf16.msra.mxu0 %v1304
      %1445 = vmatmul.bf16.gmra.mxu0 %v407
      %v1446 = vpop.f32.mrf.mxu0
      %v1447 = vadd.f32 %v1434, %v1446
      %v1448 = vpop.f32.mrf.mxu0
      %1449 = vdwg.mxu0
      %1450 = vmatpush.bf16.msra.mxu0 %v1319
      %1451 = vmatpush.bf16.msra.mxu0 %v1318
      %1452 = vmatpush.bf16.msra.mxu0 %v1317
      %1453 = vmatpush.bf16.msra.mxu0 %v1316
      %1454 = vmatpush.bf16.msra.mxu0 %v1315
      %1455 = vmatpush.bf16.msra.mxu0 %v1314
      %1456 = vmatpush.bf16.msra.mxu0 %v1313
      %1457 = vmatpush.bf16.msra.mxu0 %v1312
      %1458 = vmatmul.bf16.gmra.mxu0 %v408
      %v1459 = vpop.f32.mrf.mxu0
      %v1460 = vadd.f32 %v1447, %v1459
      %v1461 = vpop.f32.mrf.mxu0
      %1462 = vdwg.mxu0
      %1463 = vmatpush.bf16.msra.mxu0 %v1327
      %1464 = vmatpush.bf16.msra.mxu0 %v1326
      %1465 = vmatpush.bf16.msra.mxu0 %v1325
      %1466 = vmatpush.bf16.msra.mxu0 %v1324
      %1467 = vmatpush.bf16.msra.mxu0 %v1323
      %1468 = vmatpush.bf16.msra.mxu0 %v1322
      %1469 = vmatpush.bf16.msra.mxu0 %v1321
      %1470 = vmatpush.bf16.msra.mxu0 %v1320
      %1471 = vmatmul.bf16.gmra.mxu0 %v409
      %v1472 = vpop.f32.mrf.mxu0
      %v1473 = vadd.f32 %v1460, %v1472
      %v1474 = vpop.f32.mrf.mxu0
      %1475 = vdwg.mxu0
      %1476 = vmatpush.bf16.msra.mxu0 %v1335
      %1477 = vmatpush.bf16.msra.mxu0 %v1334
      %1478 = vmatpush.bf16.msra.mxu0 %v1333
      %1479 = vmatpush.bf16.msra.mxu0 %v1332
      %1480 = vmatpush.bf16.msra.mxu0 %v1331
      %1481 = vmatpush.bf16.msra.mxu0 %v1330
      %1482 = vmatpush.bf16.msra.mxu0 %v1329
      %1483 = vmatpush.bf16.msra.mxu0 %v1328
      %1484 = vmatmul.bf16.gmra.mxu0 %v410
      %v1485 = vpop.f32.mrf.mxu0
      %v1486 = vadd.f32 %v1473, %v1485
      %v1487 = vpop.f32.mrf.mxu0
      %1488 = vdwg.mxu0
      %1489 = vmatpush.bf16.msra.mxu0 %v1343
      %1490 = vmatpush.bf16.msra.mxu0 %v1342
      %1491 = vmatpush.bf16.msra.mxu0 %v1341
      %1492 = vmatpush.bf16.msra.mxu0 %v1340
      %1493 = vmatpush.bf16.msra.mxu0 %v1339
      %1494 = vmatpush.bf16.msra.mxu0 %v1338
      %1495 = vmatpush.bf16.msra.mxu0 %v1337
      %1496 = vmatpush.bf16.msra.mxu0 %v1336
      %1497 = vmatmul.bf16.gmra.mxu0 %v411
      %v1498 = vpop.f32.mrf.mxu0
      %v1499 = vadd.f32 %v1486, %v1498
      %v1500 = vpop.f32.mrf.mxu0
      %1501 = vdwg.mxu0
      %1502 = vmatpush.bf16.msra.mxu0 %v1351
      %1503 = vmatpush.bf16.msra.mxu0 %v1350
      %1504 = vmatpush.bf16.msra.mxu0 %v1349
      %1505 = vmatpush.bf16.msra.mxu0 %v1348
      %1506 = vmatpush.bf16.msra.mxu0 %v1347
      %1507 = vmatpush.bf16.msra.mxu0 %v1346
      %1508 = vmatpush.bf16.msra.mxu0 %v1345
      %1509 = vmatpush.bf16.msra.mxu0 %v1344
      %1510 = vmatmul.bf16.gmra.mxu0 %v412
      %v1511 = vpop.f32.mrf.mxu0
      %v1512 = vadd.f32 %v1499, %v1511
      %v1513 = vpop.f32.mrf.mxu0
      %1514 = vdwg.mxu0
      %1515 = vmatpush.bf16.msra.mxu0 %v1359
      %1516 = vmatpush.bf16.msra.mxu0 %v1358
      %1517 = vmatpush.bf16.msra.mxu0 %v1357
      %1518 = vmatpush.bf16.msra.mxu0 %v1356
      %1519 = vmatpush.bf16.msra.mxu0 %v1355
      %1520 = vmatpush.bf16.msra.mxu0 %v1354
      %1521 = vmatpush.bf16.msra.mxu0 %v1353
      %1522 = vmatpush.bf16.msra.mxu0 %v1352
      %1523 = vmatmul.bf16.gmra.mxu0 %v413
      %v1524 = vpop.f32.mrf.mxu0
      %v1525 = vadd.f32 %v1512, %v1524
      %v1526 = vpop.f32.mrf.mxu0
      %1527 = vdwg.mxu0
      %v1528 = vmax.f32 %v1525, 0.0
      %v1529 = vmax.f32 %v910, %v1528
      %s1530 = scalar_lea.vmem %s1, 1024
      %v1531 = vld [vmem:[%s1530] sm:$0xf]
      %v1532 = vld [vmem:[%s1530 + $0x4] sm:$0xf]
      %v1533 = vld [vmem:[%s1530 + $0x8] sm:$0xf]
      %v1534 = vld [vmem:[%s1530 + $0xc] sm:$0xf]
      %v1535 = vld [vmem:[%s1530 + $0x10] sm:$0xf]
      %v1536 = vld [vmem:[%s1530 + $0x14] sm:$0xf]
      %v1537 = vld [vmem:[%s1530 + $0x18] sm:$0xf]
      %v1538 = vld [vmem:[%s1530 + $0x1c] sm:$0xf]
      %v1539 = vld [vmem:[%s1530 + $0x20] sm:$0xf]
      %v1540 = vld [vmem:[%s1530 + $0x24] sm:$0xf]
      %v1541 = vld [vmem:[%s1530 + $0x28] sm:$0xf]
      %v1542 = vld [vmem:[%s1530 + $0x2c] sm:$0xf]
      %v1543 = vld [vmem:[%s1530 + $0x30] sm:$0xf]
      %v1544 = vld [vmem:[%s1530 + $0x34] sm:$0xf]
      %v1545 = vld [vmem:[%s1530 + $0x38] sm:$0xf]
      %v1546 = vld [vmem:[%s1530 + $0x3c] sm:$0xf]
      %v1547 = vld [vmem:[%s1530 + $0x40] sm:$0xf]
      %v1548 = vld [vmem:[%s1530 + $0x44] sm:$0xf]
      %v1549 = vld [vmem:[%s1530 + $0x48] sm:$0xf]
      %v1550 = vld [vmem:[%s1530 + $0x4c] sm:$0xf]
      %v1551 = vld [vmem:[%s1530 + $0x50] sm:$0xf]
      %v1552 = vld [vmem:[%s1530 + $0x54] sm:$0xf]
      %v1553 = vld [vmem:[%s1530 + $0x58] sm:$0xf]
      %v1554 = vld [vmem:[%s1530 + $0x5c] sm:$0xf]
      %v1555 = vld [vmem:[%s1530 + $0x60] sm:$0xf]
      %v1556 = vld [vmem:[%s1530 + $0x64] sm:$0xf]
      %v1557 = vld [vmem:[%s1530 + $0x68] sm:$0xf]
      %v1558 = vld [vmem:[%s1530 + $0x6c] sm:$0xf]
      %v1559 = vld [vmem:[%s1530 + $0x70] sm:$0xf]
      %v1560 = vld [vmem:[%s1530 + $0x74] sm:$0xf]
      %v1561 = vld [vmem:[%s1530 + $0x78] sm:$0xf]
      %v1562 = vld [vmem:[%s1530 + $0x7c] sm:$0xf]
      %v1563 = vld [vmem:[%s1530 + $0x80] sm:$0xf]
      %v1564 = vld [vmem:[%s1530 + $0x84] sm:$0xf]
      %v1565 = vld [vmem:[%s1530 + $0x88] sm:$0xf]
      %v1566 = vld [vmem:[%s1530 + $0x8c] sm:$0xf]
      %v1567 = vld [vmem:[%s1530 + $0x90] sm:$0xf]
      %v1568 = vld [vmem:[%s1530 + $0x94] sm:$0xf]
      %v1569 = vld [vmem:[%s1530 + $0x98] sm:$0xf]
      %v1570 = vld [vmem:[%s1530 + $0x9c] sm:$0xf]
      %v1571 = vld [vmem:[%s1530 + $0xa0] sm:$0xf]
      %v1572 = vld [vmem:[%s1530 + $0xa4] sm:$0xf]
      %v1573 = vld [vmem:[%s1530 + $0xa8] sm:$0xf]
      %v1574 = vld [vmem:[%s1530 + $0xac] sm:$0xf]
      %v1575 = vld [vmem:[%s1530 + $0xb0] sm:$0xf]
      %v1576 = vld [vmem:[%s1530 + $0xb4] sm:$0xf]
      %v1577 = vld [vmem:[%s1530 + $0xb8] sm:$0xf]
      %v1578 = vld [vmem:[%s1530 + $0xbc] sm:$0xf]
      %v1579 = vld [vmem:[%s1530 + $0xc0] sm:$0xf]
      %v1580 = vld [vmem:[%s1530 + $0xc4] sm:$0xf]
      %v1581 = vld [vmem:[%s1530 + $0xc8] sm:$0xf]
      %v1582 = vld [vmem:[%s1530 + $0xcc] sm:$0xf]
      %v1583 = vld [vmem:[%s1530 + $0xd0] sm:$0xf]
      %v1584 = vld [vmem:[%s1530 + $0xd4] sm:$0xf]
      %v1585 = vld [vmem:[%s1530 + $0xd8] sm:$0xf]
      %v1586 = vld [vmem:[%s1530 + $0xdc] sm:$0xf]
      %v1587 = vld [vmem:[%s1530 + $0xe0] sm:$0xf]
      %v1588 = vld [vmem:[%s1530 + $0xe4] sm:$0xf]
      %v1589 = vld [vmem:[%s1530 + $0xe8] sm:$0xf]
      %v1590 = vld [vmem:[%s1530 + $0xec] sm:$0xf]
      %v1591 = vld [vmem:[%s1530 + $0xf0] sm:$0xf]
      %v1592 = vld [vmem:[%s1530 + $0xf4] sm:$0xf]
      %v1593 = vld [vmem:[%s1530 + $0xf8] sm:$0xf]
      %v1594 = vld [vmem:[%s1530 + $0xfc] sm:$0xf]
      %v1595 = vld [vmem:[%s1530 + $0x100] sm:$0xf]
      %v1596 = vld [vmem:[%s1530 + $0x104] sm:$0xf]
      %v1597 = vld [vmem:[%s1530 + $0x108] sm:$0xf]
      %v1598 = vld [vmem:[%s1530 + $0x10c] sm:$0xf]
      %v1599 = vld [vmem:[%s1530 + $0x110] sm:$0xf]
      %v1600 = vld [vmem:[%s1530 + $0x114] sm:$0xf]
      %v1601 = vld [vmem:[%s1530 + $0x118] sm:$0xf]
      %v1602 = vld [vmem:[%s1530 + $0x11c] sm:$0xf]
      %v1603 = vld [vmem:[%s1530 + $0x120] sm:$0xf]
      %v1604 = vld [vmem:[%s1530 + $0x124] sm:$0xf]
      %v1605 = vld [vmem:[%s1530 + $0x128] sm:$0xf]
      %v1606 = vld [vmem:[%s1530 + $0x12c] sm:$0xf]
      %v1607 = vld [vmem:[%s1530 + $0x130] sm:$0xf]
      %v1608 = vld [vmem:[%s1530 + $0x134] sm:$0xf]
      %v1609 = vld [vmem:[%s1530 + $0x138] sm:$0xf]
      %v1610 = vld [vmem:[%s1530 + $0x13c] sm:$0xf]
      %v1611 = vld [vmem:[%s1530 + $0x140] sm:$0xf]
      %v1612 = vld [vmem:[%s1530 + $0x144] sm:$0xf]
      %v1613 = vld [vmem:[%s1530 + $0x148] sm:$0xf]
      %v1614 = vld [vmem:[%s1530 + $0x14c] sm:$0xf]
      %v1615 = vld [vmem:[%s1530 + $0x150] sm:$0xf]
      %v1616 = vld [vmem:[%s1530 + $0x154] sm:$0xf]
      %v1617 = vld [vmem:[%s1530 + $0x158] sm:$0xf]
      %v1618 = vld [vmem:[%s1530 + $0x15c] sm:$0xf]
      %v1619 = vld [vmem:[%s1530 + $0x160] sm:$0xf]
      %v1620 = vld [vmem:[%s1530 + $0x164] sm:$0xf]
      %v1621 = vld [vmem:[%s1530 + $0x168] sm:$0xf]
      %v1622 = vld [vmem:[%s1530 + $0x16c] sm:$0xf]
      %v1623 = vld [vmem:[%s1530 + $0x170] sm:$0xf]
      %v1624 = vld [vmem:[%s1530 + $0x174] sm:$0xf]
      %v1625 = vld [vmem:[%s1530 + $0x178] sm:$0xf]
      %v1626 = vld [vmem:[%s1530 + $0x17c] sm:$0xf]
      %v1627 = vld [vmem:[%s1530 + $0x180] sm:$0xf]
      %v1628 = vld [vmem:[%s1530 + $0x184] sm:$0xf]
      %v1629 = vld [vmem:[%s1530 + $0x188] sm:$0xf]
      %v1630 = vld [vmem:[%s1530 + $0x18c] sm:$0xf]
      %v1631 = vld [vmem:[%s1530 + $0x190] sm:$0xf]
      %v1632 = vld [vmem:[%s1530 + $0x194] sm:$0xf]
      %v1633 = vld [vmem:[%s1530 + $0x198] sm:$0xf]
      %v1634 = vld [vmem:[%s1530 + $0x19c] sm:$0xf]
      %v1635 = vld [vmem:[%s1530 + $0x1a0] sm:$0xf]
      %v1636 = vld [vmem:[%s1530 + $0x1a4] sm:$0xf]
      %v1637 = vld [vmem:[%s1530 + $0x1a8] sm:$0xf]
      %v1638 = vld [vmem:[%s1530 + $0x1ac] sm:$0xf]
      %v1639 = vld [vmem:[%s1530 + $0x1b0] sm:$0xf]
      %v1640 = vld [vmem:[%s1530 + $0x1b4] sm:$0xf]
      %v1641 = vld [vmem:[%s1530 + $0x1b8] sm:$0xf]
      %v1642 = vld [vmem:[%s1530 + $0x1bc] sm:$0xf]
      %v1643 = vld [vmem:[%s1530 + $0x1c0] sm:$0xf]
      %v1644 = vld [vmem:[%s1530 + $0x1c4] sm:$0xf]
      %v1645 = vld [vmem:[%s1530 + $0x1c8] sm:$0xf]
      %v1646 = vld [vmem:[%s1530 + $0x1cc] sm:$0xf]
      %v1647 = vld [vmem:[%s1530 + $0x1d0] sm:$0xf]
      %v1648 = vld [vmem:[%s1530 + $0x1d4] sm:$0xf]
      %v1649 = vld [vmem:[%s1530 + $0x1d8] sm:$0xf]
      %v1650 = vld [vmem:[%s1530 + $0x1dc] sm:$0xf]
      %v1651 = vld [vmem:[%s1530 + $0x1e0] sm:$0xf]
      %v1652 = vld [vmem:[%s1530 + $0x1e4] sm:$0xf]
      %v1653 = vld [vmem:[%s1530 + $0x1e8] sm:$0xf]
      %v1654 = vld [vmem:[%s1530 + $0x1ec] sm:$0xf]
      %v1655 = vld [vmem:[%s1530 + $0x1f0] sm:$0xf]
      %v1656 = vld [vmem:[%s1530 + $0x1f4] sm:$0xf]
      %v1657 = vld [vmem:[%s1530 + $0x1f8] sm:$0xf]
      %v1658 = vld [vmem:[%s1530 + $0x1fc] sm:$0xf]
      %v1787 = vunpack.c.l.b16 %v1531
      %v1788 = vunpack.c.l.b16 %v1532
      %v1789 = vunpack.c.l.b16 %v1533
      %v1790 = vunpack.c.l.b16 %v1534
      %v1791 = vunpack.c.l.b16 %v1535
      %v1792 = vunpack.c.l.b16 %v1536
      %v1793 = vunpack.c.l.b16 %v1537
      %v1794 = vunpack.c.l.b16 %v1538
      %v1795 = vunpack.c.l.b16 %v1539
      %v1796 = vunpack.c.l.b16 %v1540
      %v1797 = vunpack.c.l.b16 %v1541
      %v1798 = vunpack.c.l.b16 %v1542
      %v1799 = vunpack.c.l.b16 %v1543
      %v1800 = vunpack.c.l.b16 %v1544
      %v1801 = vunpack.c.l.b16 %v1545
      %v1802 = vunpack.c.l.b16 %v1546
      %v1803 = vunpack.c.l.b16 %v1547
      %v1804 = vunpack.c.l.b16 %v1548
      %v1805 = vunpack.c.l.b16 %v1549
      %v1806 = vunpack.c.l.b16 %v1550
      %v1807 = vunpack.c.l.b16 %v1551
      %v1808 = vunpack.c.l.b16 %v1552
      %v1809 = vunpack.c.l.b16 %v1553
      %v1810 = vunpack.c.l.b16 %v1554
      %v1811 = vunpack.c.l.b16 %v1555
      %v1812 = vunpack.c.l.b16 %v1556
      %v1813 = vunpack.c.l.b16 %v1557
      %v1814 = vunpack.c.l.b16 %v1558
      %v1815 = vunpack.c.l.b16 %v1559
      %v1816 = vunpack.c.l.b16 %v1560
      %v1817 = vunpack.c.l.b16 %v1561
      %v1818 = vunpack.c.l.b16 %v1562
      %v1819 = vunpack.c.l.b16 %v1563
      %v1820 = vunpack.c.l.b16 %v1564
      %v1821 = vunpack.c.l.b16 %v1565
      %v1822 = vunpack.c.l.b16 %v1566
      %v1823 = vunpack.c.l.b16 %v1567
      %v1824 = vunpack.c.l.b16 %v1568
      %v1825 = vunpack.c.l.b16 %v1569
      %v1826 = vunpack.c.l.b16 %v1570
      %v1827 = vunpack.c.l.b16 %v1571
      %v1828 = vunpack.c.l.b16 %v1572
      %v1829 = vunpack.c.l.b16 %v1573
      %v1830 = vunpack.c.l.b16 %v1574
      %v1831 = vunpack.c.l.b16 %v1575
      %v1832 = vunpack.c.l.b16 %v1576
      %v1833 = vunpack.c.l.b16 %v1577
      %v1834 = vunpack.c.l.b16 %v1578
      %v1835 = vunpack.c.l.b16 %v1579
      %v1836 = vunpack.c.l.b16 %v1580
      %v1837 = vunpack.c.l.b16 %v1581
      %v1838 = vunpack.c.l.b16 %v1582
      %v1839 = vunpack.c.l.b16 %v1583
      %v1840 = vunpack.c.l.b16 %v1584
      %v1841 = vunpack.c.l.b16 %v1585
      %v1842 = vunpack.c.l.b16 %v1586
      %v1843 = vunpack.c.l.b16 %v1587
      %v1844 = vunpack.c.l.b16 %v1588
      %v1845 = vunpack.c.l.b16 %v1589
      %v1846 = vunpack.c.l.b16 %v1590
      %v1847 = vunpack.c.l.b16 %v1591
      %v1848 = vunpack.c.l.b16 %v1592
      %v1849 = vunpack.c.l.b16 %v1593
      %v1850 = vunpack.c.l.b16 %v1594
      %v1851 = vunpack.c.l.b16 %v1595
      %v1852 = vunpack.c.l.b16 %v1596
      %v1853 = vunpack.c.l.b16 %v1597
      %v1854 = vunpack.c.l.b16 %v1598
      %v1855 = vunpack.c.l.b16 %v1599
      %v1856 = vunpack.c.l.b16 %v1600
      %v1857 = vunpack.c.l.b16 %v1601
      %v1858 = vunpack.c.l.b16 %v1602
      %v1859 = vunpack.c.l.b16 %v1603
      %v1860 = vunpack.c.l.b16 %v1604
      %v1861 = vunpack.c.l.b16 %v1605
      %v1862 = vunpack.c.l.b16 %v1606
      %v1863 = vunpack.c.l.b16 %v1607
      %v1864 = vunpack.c.l.b16 %v1608
      %v1865 = vunpack.c.l.b16 %v1609
      %v1866 = vunpack.c.l.b16 %v1610
      %v1867 = vunpack.c.l.b16 %v1611
      %v1868 = vunpack.c.l.b16 %v1612
      %v1869 = vunpack.c.l.b16 %v1613
      %v1870 = vunpack.c.l.b16 %v1614
      %v1871 = vunpack.c.l.b16 %v1615
      %v1872 = vunpack.c.l.b16 %v1616
      %v1873 = vunpack.c.l.b16 %v1617
      %v1874 = vunpack.c.l.b16 %v1618
      %v1875 = vunpack.c.l.b16 %v1619
      %v1876 = vunpack.c.l.b16 %v1620
      %v1877 = vunpack.c.l.b16 %v1621
      %v1878 = vunpack.c.l.b16 %v1622
      %v1879 = vunpack.c.l.b16 %v1623
      %v1880 = vunpack.c.l.b16 %v1624
      %v1881 = vunpack.c.l.b16 %v1625
      %v1882 = vunpack.c.l.b16 %v1626
      %v1883 = vunpack.c.l.b16 %v1627
      %v1884 = vunpack.c.l.b16 %v1628
      %v1885 = vunpack.c.l.b16 %v1629
      %v1886 = vunpack.c.l.b16 %v1630
      %v1887 = vunpack.c.l.b16 %v1631
      %v1888 = vunpack.c.l.b16 %v1632
      %v1889 = vunpack.c.l.b16 %v1633
      %v1890 = vunpack.c.l.b16 %v1634
      %v1891 = vunpack.c.l.b16 %v1635
      %v1892 = vunpack.c.l.b16 %v1636
      %v1893 = vunpack.c.l.b16 %v1637
      %v1894 = vunpack.c.l.b16 %v1638
      %v1895 = vunpack.c.l.b16 %v1639
      %v1896 = vunpack.c.l.b16 %v1640
      %v1897 = vunpack.c.l.b16 %v1641
      %v1898 = vunpack.c.l.b16 %v1642
      %v1899 = vunpack.c.l.b16 %v1643
      %v1900 = vunpack.c.l.b16 %v1644
      %v1901 = vunpack.c.l.b16 %v1645
      %v1902 = vunpack.c.l.b16 %v1646
      %v1903 = vunpack.c.l.b16 %v1647
      %v1904 = vunpack.c.l.b16 %v1648
      %v1905 = vunpack.c.l.b16 %v1649
      %v1906 = vunpack.c.l.b16 %v1650
      %v1907 = vunpack.c.l.b16 %v1651
      %v1908 = vunpack.c.l.b16 %v1652
      %v1909 = vunpack.c.l.b16 %v1653
      %v1910 = vunpack.c.l.b16 %v1654
      %v1911 = vunpack.c.l.b16 %v1655
      %v1912 = vunpack.c.l.b16 %v1656
      %v1913 = vunpack.c.l.b16 %v1657
      %v1914 = vunpack.c.l.b16 %v1658
      %v1915 = vpack.c.b16 %v1788, %v1787
      %v1916 = vpack.c.b16 %v1790, %v1789
      %v1917 = vpack.c.b16 %v1792, %v1791
      %v1918 = vpack.c.b16 %v1794, %v1793
      %v1919 = vpack.c.b16 %v1796, %v1795
      %v1920 = vpack.c.b16 %v1798, %v1797
      %v1921 = vpack.c.b16 %v1800, %v1799
      %v1922 = vpack.c.b16 %v1802, %v1801
      %v1923 = vpack.c.b16 %v1804, %v1803
      %v1924 = vpack.c.b16 %v1806, %v1805
      %v1925 = vpack.c.b16 %v1808, %v1807
      %v1926 = vpack.c.b16 %v1810, %v1809
      %v1927 = vpack.c.b16 %v1812, %v1811
      %v1928 = vpack.c.b16 %v1814, %v1813
      %v1929 = vpack.c.b16 %v1816, %v1815
      %v1930 = vpack.c.b16 %v1818, %v1817
      %v1931 = vpack.c.b16 %v1820, %v1819
      %v1932 = vpack.c.b16 %v1822, %v1821
      %v1933 = vpack.c.b16 %v1824, %v1823
      %v1934 = vpack.c.b16 %v1826, %v1825
      %v1935 = vpack.c.b16 %v1828, %v1827
      %v1936 = vpack.c.b16 %v1830, %v1829
      %v1937 = vpack.c.b16 %v1832, %v1831
      %v1938 = vpack.c.b16 %v1834, %v1833
      %v1939 = vpack.c.b16 %v1836, %v1835
      %v1940 = vpack.c.b16 %v1838, %v1837
      %v1941 = vpack.c.b16 %v1840, %v1839
      %v1942 = vpack.c.b16 %v1842, %v1841
      %v1943 = vpack.c.b16 %v1844, %v1843
      %v1944 = vpack.c.b16 %v1846, %v1845
      %v1945 = vpack.c.b16 %v1848, %v1847
      %v1946 = vpack.c.b16 %v1850, %v1849
      %v1947 = vpack.c.b16 %v1852, %v1851
      %v1948 = vpack.c.b16 %v1854, %v1853
      %v1949 = vpack.c.b16 %v1856, %v1855
      %v1950 = vpack.c.b16 %v1858, %v1857
      %v1951 = vpack.c.b16 %v1860, %v1859
      %v1952 = vpack.c.b16 %v1862, %v1861
      %v1953 = vpack.c.b16 %v1864, %v1863
      %v1954 = vpack.c.b16 %v1866, %v1865
      %v1955 = vpack.c.b16 %v1868, %v1867
      %v1956 = vpack.c.b16 %v1870, %v1869
      %v1957 = vpack.c.b16 %v1872, %v1871
      %v1958 = vpack.c.b16 %v1874, %v1873
      %v1959 = vpack.c.b16 %v1876, %v1875
      %v1960 = vpack.c.b16 %v1878, %v1877
      %v1961 = vpack.c.b16 %v1880, %v1879
      %v1962 = vpack.c.b16 %v1882, %v1881
      %v1963 = vpack.c.b16 %v1884, %v1883
      %v1964 = vpack.c.b16 %v1886, %v1885
      %v1965 = vpack.c.b16 %v1888, %v1887
      %v1966 = vpack.c.b16 %v1890, %v1889
      %v1967 = vpack.c.b16 %v1892, %v1891
      %v1968 = vpack.c.b16 %v1894, %v1893
      %v1969 = vpack.c.b16 %v1896, %v1895
      %v1970 = vpack.c.b16 %v1898, %v1897
      %v1971 = vpack.c.b16 %v1900, %v1899
      %v1972 = vpack.c.b16 %v1902, %v1901
      %v1973 = vpack.c.b16 %v1904, %v1903
      %v1974 = vpack.c.b16 %v1906, %v1905
      %v1975 = vpack.c.b16 %v1908, %v1907
      %v1976 = vpack.c.b16 %v1910, %v1909
      %v1977 = vpack.c.b16 %v1912, %v1911
      %v1978 = vpack.c.b16 %v1914, %v1913
      %2043 = vmatpush.bf16.msra.mxu0 %v1922
      %2044 = vmatpush.bf16.msra.mxu0 %v1921
      %2045 = vmatpush.bf16.msra.mxu0 %v1920
      %2046 = vmatpush.bf16.msra.mxu0 %v1919
      %2047 = vmatpush.bf16.msra.mxu0 %v1918
      %2048 = vmatpush.bf16.msra.mxu0 %v1917
      %2049 = vmatpush.bf16.msra.mxu0 %v1916
      %2050 = vmatpush.bf16.msra.mxu0 %v1915
      %2051 = vmatmul.bf16.gmra.mxu0 %v406
      %v2052 = vpop.f32.mrf.mxu0
      %v2053 = vadd.f32 %v392, %v2052
      %v2054 = vpop.f32.mrf.mxu0
      %2055 = vdwg.mxu0
      %2056 = vmatpush.bf16.msra.mxu0 %v1930
      %2057 = vmatpush.bf16.msra.mxu0 %v1929
      %2058 = vmatpush.bf16.msra.mxu0 %v1928
      %2059 = vmatpush.bf16.msra.mxu0 %v1927
      %2060 = vmatpush.bf16.msra.mxu0 %v1926
      %2061 = vmatpush.bf16.msra.mxu0 %v1925
      %2062 = vmatpush.bf16.msra.mxu0 %v1924
      %2063 = vmatpush.bf16.msra.mxu0 %v1923
      %2064 = vmatmul.bf16.gmra.mxu0 %v407
      %v2065 = vpop.f32.mrf.mxu0
      %v2066 = vadd.f32 %v2053, %v2065
      %v2067 = vpop.f32.mrf.mxu0
      %2068 = vdwg.mxu0
      %2069 = vmatpush.bf16.msra.mxu0 %v1938
      %2070 = vmatpush.bf16.msra.mxu0 %v1937
      %2071 = vmatpush.bf16.msra.mxu0 %v1936
      %2072 = vmatpush.bf16.msra.mxu0 %v1935
      %2073 = vmatpush.bf16.msra.mxu0 %v1934
      %2074 = vmatpush.bf16.msra.mxu0 %v1933
      %2075 = vmatpush.bf16.msra.mxu0 %v1932
      %2076 = vmatpush.bf16.msra.mxu0 %v1931
      %2077 = vmatmul.bf16.gmra.mxu0 %v408
      %v2078 = vpop.f32.mrf.mxu0
      %v2079 = vadd.f32 %v2066, %v2078
      %v2080 = vpop.f32.mrf.mxu0
      %2081 = vdwg.mxu0
      %2082 = vmatpush.bf16.msra.mxu0 %v1946
      %2083 = vmatpush.bf16.msra.mxu0 %v1945
      %2084 = vmatpush.bf16.msra.mxu0 %v1944
      %2085 = vmatpush.bf16.msra.mxu0 %v1943
      %2086 = vmatpush.bf16.msra.mxu0 %v1942
      %2087 = vmatpush.bf16.msra.mxu0 %v1941
      %2088 = vmatpush.bf16.msra.mxu0 %v1940
      %2089 = vmatpush.bf16.msra.mxu0 %v1939
      %2090 = vmatmul.bf16.gmra.mxu0 %v409
      %v2091 = vpop.f32.mrf.mxu0
      %v2092 = vadd.f32 %v2079, %v2091
      %v2093 = vpop.f32.mrf.mxu0
      %2094 = vdwg.mxu0
      %2095 = vmatpush.bf16.msra.mxu0 %v1954
      %2096 = vmatpush.bf16.msra.mxu0 %v1953
      %2097 = vmatpush.bf16.msra.mxu0 %v1952
      %2098 = vmatpush.bf16.msra.mxu0 %v1951
      %2099 = vmatpush.bf16.msra.mxu0 %v1950
      %2100 = vmatpush.bf16.msra.mxu0 %v1949
      %2101 = vmatpush.bf16.msra.mxu0 %v1948
      %2102 = vmatpush.bf16.msra.mxu0 %v1947
      %2103 = vmatmul.bf16.gmra.mxu0 %v410
      %v2104 = vpop.f32.mrf.mxu0
      %v2105 = vadd.f32 %v2092, %v2104
      %v2106 = vpop.f32.mrf.mxu0
      %2107 = vdwg.mxu0
      %2108 = vmatpush.bf16.msra.mxu0 %v1962
      %2109 = vmatpush.bf16.msra.mxu0 %v1961
      %2110 = vmatpush.bf16.msra.mxu0 %v1960
      %2111 = vmatpush.bf16.msra.mxu0 %v1959
      %2112 = vmatpush.bf16.msra.mxu0 %v1958
      %2113 = vmatpush.bf16.msra.mxu0 %v1957
      %2114 = vmatpush.bf16.msra.mxu0 %v1956
      %2115 = vmatpush.bf16.msra.mxu0 %v1955
      %2116 = vmatmul.bf16.gmra.mxu0 %v411
      %v2117 = vpop.f32.mrf.mxu0
      %v2118 = vadd.f32 %v2105, %v2117
      %v2119 = vpop.f32.mrf.mxu0
      %2120 = vdwg.mxu0
      %2121 = vmatpush.bf16.msra.mxu0 %v1970
      %2122 = vmatpush.bf16.msra.mxu0 %v1969
      %2123 = vmatpush.bf16.msra.mxu0 %v1968
      %2124 = vmatpush.bf16.msra.mxu0 %v1967
      %2125 = vmatpush.bf16.msra.mxu0 %v1966
      %2126 = vmatpush.bf16.msra.mxu0 %v1965
      %2127 = vmatpush.bf16.msra.mxu0 %v1964
      %2128 = vmatpush.bf16.msra.mxu0 %v1963
      %2129 = vmatmul.bf16.gmra.mxu0 %v412
      %v2130 = vpop.f32.mrf.mxu0
      %v2131 = vadd.f32 %v2118, %v2130
      %v2132 = vpop.f32.mrf.mxu0
      %2133 = vdwg.mxu0
      %2134 = vmatpush.bf16.msra.mxu0 %v1978
      %2135 = vmatpush.bf16.msra.mxu0 %v1977
      %2136 = vmatpush.bf16.msra.mxu0 %v1976
      %2137 = vmatpush.bf16.msra.mxu0 %v1975
      %2138 = vmatpush.bf16.msra.mxu0 %v1974
      %2139 = vmatpush.bf16.msra.mxu0 %v1973
      %2140 = vmatpush.bf16.msra.mxu0 %v1972
      %2141 = vmatpush.bf16.msra.mxu0 %v1971
      %2142 = vmatmul.bf16.gmra.mxu0 %v413
      %v2143 = vpop.f32.mrf.mxu0
      %v2144 = vadd.f32 %v2131, %v2143
      %v2145 = vpop.f32.mrf.mxu0
      %2146 = vdwg.mxu0
      %v2147 = vmax.f32 %v2144, 0.0
      %v2148 = vmax.f32 %v1529, %v2147
      %s2149 = scalar_lea.vmem %s1, 1536
      %v2150 = vld [vmem:[%s2149] sm:$0xf]
      %v2151 = vld [vmem:[%s2149 + $0x4] sm:$0xf]
      %v2152 = vld [vmem:[%s2149 + $0x8] sm:$0xf]
      %v2153 = vld [vmem:[%s2149 + $0xc] sm:$0xf]
      %v2154 = vld [vmem:[%s2149 + $0x10] sm:$0xf]
      %v2155 = vld [vmem:[%s2149 + $0x14] sm:$0xf]
      %v2156 = vld [vmem:[%s2149 + $0x18] sm:$0xf]
      %v2157 = vld [vmem:[%s2149 + $0x1c] sm:$0xf]
      %v2158 = vld [vmem:[%s2149 + $0x20] sm:$0xf]
      %v2159 = vld [vmem:[%s2149 + $0x24] sm:$0xf]
      %v2160 = vld [vmem:[%s2149 + $0x28] sm:$0xf]
      %v2161 = vld [vmem:[%s2149 + $0x2c] sm:$0xf]
      %v2162 = vld [vmem:[%s2149 + $0x30] sm:$0xf]
      %v2163 = vld [vmem:[%s2149 + $0x34] sm:$0xf]
      %v2164 = vld [vmem:[%s2149 + $0x38] sm:$0xf]
      %v2165 = vld [vmem:[%s2149 + $0x3c] sm:$0xf]
      %v2166 = vld [vmem:[%s2149 + $0x40] sm:$0xf]
      %v2167 = vld [vmem:[%s2149 + $0x44] sm:$0xf]
      %v2168 = vld [vmem:[%s2149 + $0x48] sm:$0xf]
      %v2169 = vld [vmem:[%s2149 + $0x4c] sm:$0xf]
      %v2170 = vld [vmem:[%s2149 + $0x50] sm:$0xf]
      %v2171 = vld [vmem:[%s2149 + $0x54] sm:$0xf]
      %v2172 = vld [vmem:[%s2149 + $0x58] sm:$0xf]
      %v2173 = vld [vmem:[%s2149 + $0x5c] sm:$0xf]
      %v2174 = vld [vmem:[%s2149 + $0x60] sm:$0xf]
      %v2175 = vld [vmem:[%s2149 + $0x64] sm:$0xf]
      %v2176 = vld [vmem:[%s2149 + $0x68] sm:$0xf]
      %v2177 = vld [vmem:[%s2149 + $0x6c] sm:$0xf]
      %v2178 = vld [vmem:[%s2149 + $0x70] sm:$0xf]
      %v2179 = vld [vmem:[%s2149 + $0x74] sm:$0xf]
      %v2180 = vld [vmem:[%s2149 + $0x78] sm:$0xf]
      %v2181 = vld [vmem:[%s2149 + $0x7c] sm:$0xf]
      %v2182 = vld [vmem:[%s2149 + $0x80] sm:$0xf]
      %v2183 = vld [vmem:[%s2149 + $0x84] sm:$0xf]
      %v2184 = vld [vmem:[%s2149 + $0x88] sm:$0xf]
      %v2185 = vld [vmem:[%s2149 + $0x8c] sm:$0xf]
      %v2186 = vld [vmem:[%s2149 + $0x90] sm:$0xf]
      %v2187 = vld [vmem:[%s2149 + $0x94] sm:$0xf]
      %v2188 = vld [vmem:[%s2149 + $0x98] sm:$0xf]
      %v2189 = vld [vmem:[%s2149 + $0x9c] sm:$0xf]
      %v2190 = vld [vmem:[%s2149 + $0xa0] sm:$0xf]
      %v2191 = vld [vmem:[%s2149 + $0xa4] sm:$0xf]
      %v2192 = vld [vmem:[%s2149 + $0xa8] sm:$0xf]
      %v2193 = vld [vmem:[%s2149 + $0xac] sm:$0xf]
      %v2194 = vld [vmem:[%s2149 + $0xb0] sm:$0xf]
      %v2195 = vld [vmem:[%s2149 + $0xb4] sm:$0xf]
      %v2196 = vld [vmem:[%s2149 + $0xb8] sm:$0xf]
      %v2197 = vld [vmem:[%s2149 + $0xbc] sm:$0xf]
      %v2198 = vld [vmem:[%s2149 + $0xc0] sm:$0xf]
      %v2199 = vld [vmem:[%s2149 + $0xc4] sm:$0xf]
      %v2200 = vld [vmem:[%s2149 + $0xc8] sm:$0xf]
      %v2201 = vld [vmem:[%s2149 + $0xcc] sm:$0xf]
      %v2202 = vld [vmem:[%s2149 + $0xd0] sm:$0xf]
      %v2203 = vld [vmem:[%s2149 + $0xd4] sm:$0xf]
      %v2204 = vld [vmem:[%s2149 + $0xd8] sm:$0xf]
      %v2205 = vld [vmem:[%s2149 + $0xdc] sm:$0xf]
      %v2206 = vld [vmem:[%s2149 + $0xe0] sm:$0xf]
      %v2207 = vld [vmem:[%s2149 + $0xe4] sm:$0xf]
      %v2208 = vld [vmem:[%s2149 + $0xe8] sm:$0xf]
      %v2209 = vld [vmem:[%s2149 + $0xec] sm:$0xf]
      %v2210 = vld [vmem:[%s2149 + $0xf0] sm:$0xf]
      %v2211 = vld [vmem:[%s2149 + $0xf4] sm:$0xf]
      %v2212 = vld [vmem:[%s2149 + $0xf8] sm:$0xf]
      %v2213 = vld [vmem:[%s2149 + $0xfc] sm:$0xf]
      %v2214 = vld [vmem:[%s2149 + $0x100] sm:$0xf]
      %v2215 = vld [vmem:[%s2149 + $0x104] sm:$0xf]
      %v2216 = vld [vmem:[%s2149 + $0x108] sm:$0xf]
      %v2217 = vld [vmem:[%s2149 + $0x10c] sm:$0xf]
      %v2218 = vld [vmem:[%s2149 + $0x110] sm:$0xf]
      %v2219 = vld [vmem:[%s2149 + $0x114] sm:$0xf]
      %v2220 = vld [vmem:[%s2149 + $0x118] sm:$0xf]
      %v2221 = vld [vmem:[%s2149 + $0x11c] sm:$0xf]
      %v2222 = vld [vmem:[%s2149 + $0x120] sm:$0xf]
      %v2223 = vld [vmem:[%s2149 + $0x124] sm:$0xf]
      %v2224 = vld [vmem:[%s2149 + $0x128] sm:$0xf]
      %v2225 = vld [vmem:[%s2149 + $0x12c] sm:$0xf]
      %v2226 = vld [vmem:[%s2149 + $0x130] sm:$0xf]
      %v2227 = vld [vmem:[%s2149 + $0x134] sm:$0xf]
      %v2228 = vld [vmem:[%s2149 + $0x138] sm:$0xf]
      %v2229 = vld [vmem:[%s2149 + $0x13c] sm:$0xf]
      %v2230 = vld [vmem:[%s2149 + $0x140] sm:$0xf]
      %v2231 = vld [vmem:[%s2149 + $0x144] sm:$0xf]
      %v2232 = vld [vmem:[%s2149 + $0x148] sm:$0xf]
      %v2233 = vld [vmem:[%s2149 + $0x14c] sm:$0xf]
      %v2234 = vld [vmem:[%s2149 + $0x150] sm:$0xf]
      %v2235 = vld [vmem:[%s2149 + $0x154] sm:$0xf]
      %v2236 = vld [vmem:[%s2149 + $0x158] sm:$0xf]
      %v2237 = vld [vmem:[%s2149 + $0x15c] sm:$0xf]
      %v2238 = vld [vmem:[%s2149 + $0x160] sm:$0xf]
      %v2239 = vld [vmem:[%s2149 + $0x164] sm:$0xf]
      %v2240 = vld [vmem:[%s2149 + $0x168] sm:$0xf]
      %v2241 = vld [vmem:[%s2149 + $0x16c] sm:$0xf]
      %v2242 = vld [vmem:[%s2149 + $0x170] sm:$0xf]
      %v2243 = vld [vmem:[%s2149 + $0x174] sm:$0xf]
      %v2244 = vld [vmem:[%s2149 + $0x178] sm:$0xf]
      %v2245 = vld [vmem:[%s2149 + $0x17c] sm:$0xf]
      %v2246 = vld [vmem:[%s2149 + $0x180] sm:$0xf]
      %v2247 = vld [vmem:[%s2149 + $0x184] sm:$0xf]
      %v2248 = vld [vmem:[%s2149 + $0x188] sm:$0xf]
      %v2249 = vld [vmem:[%s2149 + $0x18c] sm:$0xf]
      %v2250 = vld [vmem:[%s2149 + $0x190] sm:$0xf]
      %v2251 = vld [vmem:[%s2149 + $0x194] sm:$0xf]
      %v2252 = vld [vmem:[%s2149 + $0x198] sm:$0xf]
      %v2253 = vld [vmem:[%s2149 + $0x19c] sm:$0xf]
      %v2254 = vld [vmem:[%s2149 + $0x1a0] sm:$0xf]
      %v2255 = vld [vmem:[%s2149 + $0x1a4] sm:$0xf]
      %v2256 = vld [vmem:[%s2149 + $0x1a8] sm:$0xf]
      %v2257 = vld [vmem:[%s2149 + $0x1ac] sm:$0xf]
      %v2258 = vld [vmem:[%s2149 + $0x1b0] sm:$0xf]
      %v2259 = vld [vmem:[%s2149 + $0x1b4] sm:$0xf]
      %v2260 = vld [vmem:[%s2149 + $0x1b8] sm:$0xf]
      %v2261 = vld [vmem:[%s2149 + $0x1bc] sm:$0xf]
      %v2262 = vld [vmem:[%s2149 + $0x1c0] sm:$0xf]
      %v2263 = vld [vmem:[%s2149 + $0x1c4] sm:$0xf]
      %v2264 = vld [vmem:[%s2149 + $0x1c8] sm:$0xf]
      %v2265 = vld [vmem:[%s2149 + $0x1cc] sm:$0xf]
      %v2266 = vld [vmem:[%s2149 + $0x1d0] sm:$0xf]
      %v2267 = vld [vmem:[%s2149 + $0x1d4] sm:$0xf]
      %v2268 = vld [vmem:[%s2149 + $0x1d8] sm:$0xf]
      %v2269 = vld [vmem:[%s2149 + $0x1dc] sm:$0xf]
      %v2270 = vld [vmem:[%s2149 + $0x1e0] sm:$0xf]
      %v2271 = vld [vmem:[%s2149 + $0x1e4] sm:$0xf]
      %v2272 = vld [vmem:[%s2149 + $0x1e8] sm:$0xf]
      %v2273 = vld [vmem:[%s2149 + $0x1ec] sm:$0xf]
      %v2274 = vld [vmem:[%s2149 + $0x1f0] sm:$0xf]
      %v2275 = vld [vmem:[%s2149 + $0x1f4] sm:$0xf]
      %v2276 = vld [vmem:[%s2149 + $0x1f8] sm:$0xf]
      %v2277 = vld [vmem:[%s2149 + $0x1fc] sm:$0xf]
      %v2406 = vunpack.c.l.b16 %v2150
      %v2407 = vunpack.c.l.b16 %v2151
      %v2408 = vunpack.c.l.b16 %v2152
      %v2409 = vunpack.c.l.b16 %v2153
      %v2410 = vunpack.c.l.b16 %v2154
      %v2411 = vunpack.c.l.b16 %v2155
      %v2412 = vunpack.c.l.b16 %v2156
      %v2413 = vunpack.c.l.b16 %v2157
      %v2414 = vunpack.c.l.b16 %v2158
      %v2415 = vunpack.c.l.b16 %v2159
      %v2416 = vunpack.c.l.b16 %v2160
      %v2417 = vunpack.c.l.b16 %v2161
      %v2418 = vunpack.c.l.b16 %v2162
      %v2419 = vunpack.c.l.b16 %v2163
      %v2420 = vunpack.c.l.b16 %v2164
      %v2421 = vunpack.c.l.b16 %v2165
      %v2422 = vunpack.c.l.b16 %v2166
      %v2423 = vunpack.c.l.b16 %v2167
      %v2424 = vunpack.c.l.b16 %v2168
      %v2425 = vunpack.c.l.b16 %v2169
      %v2426 = vunpack.c.l.b16 %v2170
      %v2427 = vunpack.c.l.b16 %v2171
      %v2428 = vunpack.c.l.b16 %v2172
      %v2429 = vunpack.c.l.b16 %v2173
      %v2430 = vunpack.c.l.b16 %v2174
      %v2431 = vunpack.c.l.b16 %v2175
      %v2432 = vunpack.c.l.b16 %v2176
      %v2433 = vunpack.c.l.b16 %v2177
      %v2434 = vunpack.c.l.b16 %v2178
      %v2435 = vunpack.c.l.b16 %v2179
      %v2436 = vunpack.c.l.b16 %v2180
      %v2437 = vunpack.c.l.b16 %v2181
      %v2438 = vunpack.c.l.b16 %v2182
      %v2439 = vunpack.c.l.b16 %v2183
      %v2440 = vunpack.c.l.b16 %v2184
      %v2441 = vunpack.c.l.b16 %v2185
      %v2442 = vunpack.c.l.b16 %v2186
      %v2443 = vunpack.c.l.b16 %v2187
      %v2444 = vunpack.c.l.b16 %v2188
      %v2445 = vunpack.c.l.b16 %v2189
      %v2446 = vunpack.c.l.b16 %v2190
      %v2447 = vunpack.c.l.b16 %v2191
      %v2448 = vunpack.c.l.b16 %v2192
      %v2449 = vunpack.c.l.b16 %v2193
      %v2450 = vunpack.c.l.b16 %v2194
      %v2451 = vunpack.c.l.b16 %v2195
      %v2452 = vunpack.c.l.b16 %v2196
      %v2453 = vunpack.c.l.b16 %v2197
      %v2454 = vunpack.c.l.b16 %v2198
      %v2455 = vunpack.c.l.b16 %v2199
      %v2456 = vunpack.c.l.b16 %v2200
      %v2457 = vunpack.c.l.b16 %v2201
      %v2458 = vunpack.c.l.b16 %v2202
      %v2459 = vunpack.c.l.b16 %v2203
      %v2460 = vunpack.c.l.b16 %v2204
      %v2461 = vunpack.c.l.b16 %v2205
      %v2462 = vunpack.c.l.b16 %v2206
      %v2463 = vunpack.c.l.b16 %v2207
      %v2464 = vunpack.c.l.b16 %v2208
      %v2465 = vunpack.c.l.b16 %v2209
      %v2466 = vunpack.c.l.b16 %v2210
      %v2467 = vunpack.c.l.b16 %v2211
      %v2468 = vunpack.c.l.b16 %v2212
      %v2469 = vunpack.c.l.b16 %v2213
      %v2470 = vunpack.c.l.b16 %v2214
      %v2471 = vunpack.c.l.b16 %v2215
      %v2472 = vunpack.c.l.b16 %v2216
      %v2473 = vunpack.c.l.b16 %v2217
      %v2474 = vunpack.c.l.b16 %v2218
      %v2475 = vunpack.c.l.b16 %v2219
      %v2476 = vunpack.c.l.b16 %v2220
      %v2477 = vunpack.c.l.b16 %v2221
      %v2478 = vunpack.c.l.b16 %v2222
      %v2479 = vunpack.c.l.b16 %v2223
      %v2480 = vunpack.c.l.b16 %v2224
      %v2481 = vunpack.c.l.b16 %v2225
      %v2482 = vunpack.c.l.b16 %v2226
      %v2483 = vunpack.c.l.b16 %v2227
      %v2484 = vunpack.c.l.b16 %v2228
      %v2485 = vunpack.c.l.b16 %v2229
      %v2486 = vunpack.c.l.b16 %v2230
      %v2487 = vunpack.c.l.b16 %v2231
      %v2488 = vunpack.c.l.b16 %v2232
      %v2489 = vunpack.c.l.b16 %v2233
      %v2490 = vunpack.c.l.b16 %v2234
      %v2491 = vunpack.c.l.b16 %v2235
      %v2492 = vunpack.c.l.b16 %v2236
      %v2493 = vunpack.c.l.b16 %v2237
      %v2494 = vunpack.c.l.b16 %v2238
      %v2495 = vunpack.c.l.b16 %v2239
      %v2496 = vunpack.c.l.b16 %v2240
      %v2497 = vunpack.c.l.b16 %v2241
      %v2498 = vunpack.c.l.b16 %v2242
      %v2499 = vunpack.c.l.b16 %v2243
      %v2500 = vunpack.c.l.b16 %v2244
      %v2501 = vunpack.c.l.b16 %v2245
      %v2502 = vunpack.c.l.b16 %v2246
      %v2503 = vunpack.c.l.b16 %v2247
      %v2504 = vunpack.c.l.b16 %v2248
      %v2505 = vunpack.c.l.b16 %v2249
      %v2506 = vunpack.c.l.b16 %v2250
      %v2507 = vunpack.c.l.b16 %v2251
      %v2508 = vunpack.c.l.b16 %v2252
      %v2509 = vunpack.c.l.b16 %v2253
      %v2510 = vunpack.c.l.b16 %v2254
      %v2511 = vunpack.c.l.b16 %v2255
      %v2512 = vunpack.c.l.b16 %v2256
      %v2513 = vunpack.c.l.b16 %v2257
      %v2514 = vunpack.c.l.b16 %v2258
      %v2515 = vunpack.c.l.b16 %v2259
      %v2516 = vunpack.c.l.b16 %v2260
      %v2517 = vunpack.c.l.b16 %v2261
      %v2518 = vunpack.c.l.b16 %v2262
      %v2519 = vunpack.c.l.b16 %v2263
      %v2520 = vunpack.c.l.b16 %v2264
      %v2521 = vunpack.c.l.b16 %v2265
      %v2522 = vunpack.c.l.b16 %v2266
      %v2523 = vunpack.c.l.b16 %v2267
      %v2524 = vunpack.c.l.b16 %v2268
      %v2525 = vunpack.c.l.b16 %v2269
      %v2526 = vunpack.c.l.b16 %v2270
      %v2527 = vunpack.c.l.b16 %v2271
      %v2528 = vunpack.c.l.b16 %v2272
      %v2529 = vunpack.c.l.b16 %v2273
      %v2530 = vunpack.c.l.b16 %v2274
      %v2531 = vunpack.c.l.b16 %v2275
      %v2532 = vunpack.c.l.b16 %v2276
      %v2533 = vunpack.c.l.b16 %v2277
      %v2534 = vpack.c.b16 %v2407, %v2406
      %v2535 = vpack.c.b16 %v2409, %v2408
      %v2536 = vpack.c.b16 %v2411, %v2410
      %v2537 = vpack.c.b16 %v2413, %v2412
      %v2538 = vpack.c.b16 %v2415, %v2414
      %v2539 = vpack.c.b16 %v2417, %v2416
      %v2540 = vpack.c.b16 %v2419, %v2418
      %v2541 = vpack.c.b16 %v2421, %v2420
      %v2542 = vpack.c.b16 %v2423, %v2422
      %v2543 = vpack.c.b16 %v2425, %v2424
      %v2544 = vpack.c.b16 %v2427, %v2426
      %v2545 = vpack.c.b16 %v2429, %v2428
      %v2546 = vpack.c.b16 %v2431, %v2430
      %v2547 = vpack.c.b16 %v2433, %v2432
      %v2548 = vpack.c.b16 %v2435, %v2434
      %v2549 = vpack.c.b16 %v2437, %v2436
      %v2550 = vpack.c.b16 %v2439, %v2438
      %v2551 = vpack.c.b16 %v2441, %v2440
      %v2552 = vpack.c.b16 %v2443, %v2442
      %v2553 = vpack.c.b16 %v2445, %v2444
      %v2554 = vpack.c.b16 %v2447, %v2446
      %v2555 = vpack.c.b16 %v2449, %v2448
      %v2556 = vpack.c.b16 %v2451, %v2450
      %v2557 = vpack.c.b16 %v2453, %v2452
      %v2558 = vpack.c.b16 %v2455, %v2454
      %v2559 = vpack.c.b16 %v2457, %v2456
      %v2560 = vpack.c.b16 %v2459, %v2458
      %v2561 = vpack.c.b16 %v2461, %v2460
      %v2562 = vpack.c.b16 %v2463, %v2462
      %v2563 = vpack.c.b16 %v2465, %v2464
      %v2564 = vpack.c.b16 %v2467, %v2466
      %v2565 = vpack.c.b16 %v2469, %v2468
      %v2566 = vpack.c.b16 %v2471, %v2470
      %v2567 = vpack.c.b16 %v2473, %v2472
      %v2568 = vpack.c.b16 %v2475, %v2474
      %v2569 = vpack.c.b16 %v2477, %v2476
      %v2570 = vpack.c.b16 %v2479, %v2478
      %v2571 = vpack.c.b16 %v2481, %v2480
      %v2572 = vpack.c.b16 %v2483, %v2482
      %v2573 = vpack.c.b16 %v2485, %v2484
      %v2574 = vpack.c.b16 %v2487, %v2486
      %v2575 = vpack.c.b16 %v2489, %v2488
      %v2576 = vpack.c.b16 %v2491, %v2490
      %v2577 = vpack.c.b16 %v2493, %v2492
      %v2578 = vpack.c.b16 %v2495, %v2494
      %v2579 = vpack.c.b16 %v2497, %v2496
      %v2580 = vpack.c.b16 %v2499, %v2498
      %v2581 = vpack.c.b16 %v2501, %v2500
      %v2582 = vpack.c.b16 %v2503, %v2502
      %v2583 = vpack.c.b16 %v2505, %v2504
      %v2584 = vpack.c.b16 %v2507, %v2506
      %v2585 = vpack.c.b16 %v2509, %v2508
      %v2586 = vpack.c.b16 %v2511, %v2510
      %v2587 = vpack.c.b16 %v2513, %v2512
      %v2588 = vpack.c.b16 %v2515, %v2514
      %v2589 = vpack.c.b16 %v2517, %v2516
      %v2590 = vpack.c.b16 %v2519, %v2518
      %v2591 = vpack.c.b16 %v2521, %v2520
      %v2592 = vpack.c.b16 %v2523, %v2522
      %v2593 = vpack.c.b16 %v2525, %v2524
      %v2594 = vpack.c.b16 %v2527, %v2526
      %v2595 = vpack.c.b16 %v2529, %v2528
      %v2596 = vpack.c.b16 %v2531, %v2530
      %v2597 = vpack.c.b16 %v2533, %v2532
      %2662 = vmatpush.bf16.msra.mxu0 %v2541
      %2663 = vmatpush.bf16.msra.mxu0 %v2540
      %2664 = vmatpush.bf16.msra.mxu0 %v2539
      %2665 = vmatpush.bf16.msra.mxu0 %v2538
      %2666 = vmatpush.bf16.msra.mxu0 %v2537
      %2667 = vmatpush.bf16.msra.mxu0 %v2536
      %2668 = vmatpush.bf16.msra.mxu0 %v2535
      %2669 = vmatpush.bf16.msra.mxu0 %v2534
      %2670 = vmatmul.bf16.gmra.mxu0 %v406
      %v2671 = vpop.f32.mrf.mxu0
      %v2672 = vadd.f32 %v392, %v2671
      %v2673 = vpop.f32.mrf.mxu0
      %2674 = vdwg.mxu0
      %2675 = vmatpush.bf16.msra.mxu0 %v2549
      %2676 = vmatpush.bf16.msra.mxu0 %v2548
      %2677 = vmatpush.bf16.msra.mxu0 %v2547
      %2678 = vmatpush.bf16.msra.mxu0 %v2546
      %2679 = vmatpush.bf16.msra.mxu0 %v2545
      %2680 = vmatpush.bf16.msra.mxu0 %v2544
      %2681 = vmatpush.bf16.msra.mxu0 %v2543
      %2682 = vmatpush.bf16.msra.mxu0 %v2542
      %2683 = vmatmul.bf16.gmra.mxu0 %v407
      %v2684 = vpop.f32.mrf.mxu0
      %v2685 = vadd.f32 %v2672, %v2684
      %v2686 = vpop.f32.mrf.mxu0
      %2687 = vdwg.mxu0
      %2688 = vmatpush.bf16.msra.mxu0 %v2557
      %2689 = vmatpush.bf16.msra.mxu0 %v2556
      %2690 = vmatpush.bf16.msra.mxu0 %v2555
      %2691 = vmatpush.bf16.msra.mxu0 %v2554
      %2692 = vmatpush.bf16.msra.mxu0 %v2553
      %2693 = vmatpush.bf16.msra.mxu0 %v2552
      %2694 = vmatpush.bf16.msra.mxu0 %v2551
      %2695 = vmatpush.bf16.msra.mxu0 %v2550
      %2696 = vmatmul.bf16.gmra.mxu0 %v408
      %v2697 = vpop.f32.mrf.mxu0
      %v2698 = vadd.f32 %v2685, %v2697
      %v2699 = vpop.f32.mrf.mxu0
      %2700 = vdwg.mxu0
      %2701 = vmatpush.bf16.msra.mxu0 %v2565
      %2702 = vmatpush.bf16.msra.mxu0 %v2564
      %2703 = vmatpush.bf16.msra.mxu0 %v2563
      %2704 = vmatpush.bf16.msra.mxu0 %v2562
      %2705 = vmatpush.bf16.msra.mxu0 %v2561
      %2706 = vmatpush.bf16.msra.mxu0 %v2560
      %2707 = vmatpush.bf16.msra.mxu0 %v2559
      %2708 = vmatpush.bf16.msra.mxu0 %v2558
      %2709 = vmatmul.bf16.gmra.mxu0 %v409
      %v2710 = vpop.f32.mrf.mxu0
      %v2711 = vadd.f32 %v2698, %v2710
      %v2712 = vpop.f32.mrf.mxu0
      %2713 = vdwg.mxu0
      %2714 = vmatpush.bf16.msra.mxu0 %v2573
      %2715 = vmatpush.bf16.msra.mxu0 %v2572
      %2716 = vmatpush.bf16.msra.mxu0 %v2571
      %2717 = vmatpush.bf16.msra.mxu0 %v2570
      %2718 = vmatpush.bf16.msra.mxu0 %v2569
      %2719 = vmatpush.bf16.msra.mxu0 %v2568
      %2720 = vmatpush.bf16.msra.mxu0 %v2567
      %2721 = vmatpush.bf16.msra.mxu0 %v2566
      %2722 = vmatmul.bf16.gmra.mxu0 %v410
      %v2723 = vpop.f32.mrf.mxu0
      %v2724 = vadd.f32 %v2711, %v2723
      %v2725 = vpop.f32.mrf.mxu0
      %2726 = vdwg.mxu0
      %2727 = vmatpush.bf16.msra.mxu0 %v2581
      %2728 = vmatpush.bf16.msra.mxu0 %v2580
      %2729 = vmatpush.bf16.msra.mxu0 %v2579
      %2730 = vmatpush.bf16.msra.mxu0 %v2578
      %2731 = vmatpush.bf16.msra.mxu0 %v2577
      %2732 = vmatpush.bf16.msra.mxu0 %v2576
      %2733 = vmatpush.bf16.msra.mxu0 %v2575
      %2734 = vmatpush.bf16.msra.mxu0 %v2574
      %2735 = vmatmul.bf16.gmra.mxu0 %v411
      %v2736 = vpop.f32.mrf.mxu0
      %v2737 = vadd.f32 %v2724, %v2736
      %v2738 = vpop.f32.mrf.mxu0
      %2739 = vdwg.mxu0
      %2740 = vmatpush.bf16.msra.mxu0 %v2589
      %2741 = vmatpush.bf16.msra.mxu0 %v2588
      %2742 = vmatpush.bf16.msra.mxu0 %v2587
      %2743 = vmatpush.bf16.msra.mxu0 %v2586
      %2744 = vmatpush.bf16.msra.mxu0 %v2585
      %2745 = vmatpush.bf16.msra.mxu0 %v2584
      %2746 = vmatpush.bf16.msra.mxu0 %v2583
      %2747 = vmatpush.bf16.msra.mxu0 %v2582
      %2748 = vmatmul.bf16.gmra.mxu0 %v412
      %v2749 = vpop.f32.mrf.mxu0
      %v2750 = vadd.f32 %v2737, %v2749
      %v2751 = vpop.f32.mrf.mxu0
      %2752 = vdwg.mxu0
      %2753 = vmatpush.bf16.msra.mxu0 %v2597
      %2754 = vmatpush.bf16.msra.mxu0 %v2596
      %2755 = vmatpush.bf16.msra.mxu0 %v2595
      %2756 = vmatpush.bf16.msra.mxu0 %v2594
      %2757 = vmatpush.bf16.msra.mxu0 %v2593
      %2758 = vmatpush.bf16.msra.mxu0 %v2592
      %2759 = vmatpush.bf16.msra.mxu0 %v2591
      %2760 = vmatpush.bf16.msra.mxu0 %v2590
      %2761 = vmatmul.bf16.gmra.mxu0 %v413
      %v2762 = vpop.f32.mrf.mxu0
      %v2763 = vadd.f32 %v2750, %v2762
      %v2764 = vpop.f32.mrf.mxu0
      %2765 = vdwg.mxu0
      %v2766 = vmax.f32 %v2763, 0.0
      %v2767 = vmax.f32 %v2148, %v2766
      %v2768 = vpack.c.bf16 %v2767, %v2767
      %v2769 = vld [vmem:[%s3] sm:$0xf]
      %v2770 = vld [vmem:[%s3 + $0x4] sm:$0xf]
      %v2771 = vld [vmem:[%s3 + $0x8] sm:$0xf]
      %v2772 = vld [vmem:[%s3 + $0xc] sm:$0xf]
      %v2773 = vld [vmem:[%s3 + $0x10] sm:$0xf]
      %v2774 = vld [vmem:[%s3 + $0x14] sm:$0xf]
      %v2775 = vld [vmem:[%s3 + $0x18] sm:$0xf]
      %v2776 = vld [vmem:[%s3 + $0x1c] sm:$0xf]
      %v2777 = vld [vmem:[%s4] sm:$0x1]
      %v2779 = vperm.slane %v2777, 0
      %v2789 = vunpack.c.l.b16 %v2769
      %v2790 = vunpack.c.l.b16 %v2770
      %v2791 = vunpack.c.l.b16 %v2771
      %v2792 = vunpack.c.l.b16 %v2772
      %v2793 = vunpack.c.l.b16 %v2773
      %v2794 = vunpack.c.l.b16 %v2774
      %v2795 = vunpack.c.l.b16 %v2775
      %v2796 = vunpack.c.l.b16 %v2776
      %v2797 = vpack.c.b16 %v2790, %v2789
      %v2798 = vpack.c.b16 %v2792, %v2791
      %v2799 = vpack.c.b16 %v2794, %v2793
      %v2800 = vpack.c.b16 %v2796, %v2795
      %vm2805 = vcmask 523264
      %v2807 = vsel %vm2805, %v2768, 0
      %2809 = vmatpush.bf16.msra.mxu0 0
      %2810 = vmatpush.bf16.msra.mxu0 0
      %2811 = vmatpush.bf16.msra.mxu0 0
      %2812 = vmatpush.bf16.msra.mxu0 0
      %2813 = vmatpush.bf16.msra.mxu0 %v2800
      %2814 = vmatpush.bf16.msra.mxu0 %v2799
      %2815 = vmatpush.bf16.msra.mxu0 %v2798
      %2816 = vmatpush.bf16.msra.mxu0 %v2797
      %2817 = vmatmul.bf16.gmra.mxu0 %v2807
      %v2818 = vpop.f32.mrf.mxu0
      %v2819 = vadd.f32 %v2779, %v2818
      %v2820 = vpop.f32.mrf.mxu0
      %2821 = vdwg.mxu0
      %vm2822 = vcmask 285696
      %v2823 = vsel %vm2822, %v2819, -inf
      %2824 = vmax.xlane.f32.xlu0 %v2823
      %v2825 = vpop.xlane.xlu0 %2824
      %v2826 = vsub.f32 %v2819, %v2825
      %v2827 = vmul.f32 %v2826, 1.442695
      %v2828 = vpow.pop %v2827
      %v2829 = vsel %vm2822, %v2828, 0.0
      %2830 = vadd.xlane.f32.xlu0 %v2829
      %v2831 = vpop.xlane.xlu0 %2830
      %v2832 = vlog2.pop %v2831
      %v2833 = vmul.f32 %v2832, 0.6931472
      %v2834 = vadd.f32 %v2825, %v2833
      %v2835 = vsub.f32 %v2819, %v2834
      %2836 = vst.msk [vmem:[%s256] sm:$0xff] %vm2822, %v2835
      %p2837 = scmp.lt.s32.totalorder %s20, 1
      %s2838 = scalar_select %p2837, %s20, 1
      %p2839 = scmp.lt.s32.totalorder %s21, 0
      %s2840 = scalar_select %p2839, %s21, 0
      %s2841 = sadd.s32 %s2840, %s2838
      %s2842 = smul.addr %s2841, 8
      %s2843 = scalar_lea.vmem %s5, %s2842
      // Predicated region
      $region41: #{cnn_for_audio_forward.7} parent=39 // pred_check
        %p2844 = pneg %p160
      $region42: #{cnn_for_audio_forward.7} parent=39 // pred_check_branch
        %2846 = sbr.rel (%p2844) target = $region44
      $region43: #{cnn_for_audio_forward.7} parent=39 // pred_region
        _
      $region44: #{cnn_for_audio_forward.7} parent=39 // pred_fallthru
        _
    $region40: #{cnn_for_audio_forward.7} parent=5 // pred_fallthru
      _
    %p2847 = scmp.le.s32.totalorder 2, %s11
    // Predicated region
    $region45: #{cnn_for_audio_forward.7} parent=5 // pred_check
      %p2848 = pneg %p2847
    $region46: #{cnn_for_audio_forward.7} parent=5 // pred_check_branch
      %2850 = sbr.rel (%p2848) target = $region48
    $region47: #{cnn_for_audio_forward.7} parent=5 // pred_region
      %s2851 = ssub.s32 %s11, 2
      // Predicated region
      $region49: #{cnn_for_audio_forward.7} parent=47 // pred_check
        %p2852 = pneg %p166
      $region50: #{cnn_for_audio_forward.7} parent=47 // pred_check_branch
        %2854 = sbr.rel (%p2852) target = $region52
      $region51: #{cnn_for_audio_forward.7} parent=47 // pred_region
        %p2855 = scmp.lt.s32.totalorder %s22, 1
        %s2856 = scalar_select %p2855, %s22, 1
        %p2857 = scmp.lt.s32.totalorder %s23, 0
        %s2858 = scalar_select %p2857, %s23, 0
        %s2859 = sadd.s32 %s2858, %s2856
        %s2860 = smul.addr %s2859, 8
        %s2861 = scalar_lea.vmem %s5, %s2860
      $region52: #{cnn_for_audio_forward.7} parent=47 // pred_fallthru
        _
    $region48: #{cnn_for_audio_forward.7} parent=5 // pred_fallthru
      _
  $region6: #{cnn_for_audio_forward.7} parent=0 // loop_footer
    %s15 = sadd.s32 1, %s11
  $region7: #{cnn_for_audio_forward.7} parent=0 // loop_footer_branch
    %10 = sbr.rel target = $region3
  $region8: #{cnn_for_audio_forward.7} parent=0 // loop_exit
    _

</llo_original>
